<compile_context>
chip_gen: v6e
topology: v6e:2x2x1
jax: 0.10.0
libtpu: 0.0.40
codegen_flags: <defaults>
</compile_context>

<pallas_src>
import functools

import numpy as np
import jax
import jax.numpy as jnp
from jax import lax
from jax.experimental import pallas as pl
from jax.experimental.pallas import tpu as pltpu

LOG10 = float(np.log(10.0))   # exponent used by mod_sigmoid
LN_EPS = 1e-5                 # PyTorch LayerNorm default eps
BB = 8                        # batch rows per grid step (one full sublane tile)


# ----------------------------------------------------------------------------
# Kernel: full decoder forward for one batch group of BB (padded) sequences.
# Activations are 2-D (rows, features) with rows = time-major (t*BB + b).
# ----------------------------------------------------------------------------
def _decoder_kernel(
    # activations, time-major (T, BB, C) blocks
    z_ref, f0_ref, lo_ref,
    # f0 MLP (in_size == 1 -> layer 0 is a rank-1 broadcast, not a matmul)
    f0_w0, f0_w12, f0_b, f0_g, f0_be,
    # lo MLP
    lo_w0, lo_w12, lo_b, lo_g, lo_be,
    # z MLP
    z_w0, z_w12, z_b, z_g, z_be,
    # fi MLP (post-GRU)
    fi_w0, fi_w12, fi_b, fi_g, fi_be,
    # GRU parameters, gate-major: wih (3_in, 3_gate, H, H), whh (3_gate, H, H)
    wih_ref, whh_ref, bih_ref, bhh_ref,
    # fused lane-padded dense heads: cols = [amp | alpha | filter | reverb | 0pad]
    wh_ref, bh_ref,
    # output (T, BB, D_pad)
    out_ref,
    # scratch
    gi_scr, ys_scr,
    *, seq_len, n_hidden, n_partial, n_filter):
  T, H = seq_len, n_hidden
  N = T * BB
  bf16 = jnp.bfloat16

  def layernorm_relu(x, g, b):
    mu = jnp.mean(x, axis=-1, keepdims=True)
    xc = x - mu
    var = jnp.mean(xc * xc, axis=-1, keepdims=True)
    return jnp.maximum(xc * lax.rsqrt(var + LN_EPS) * g + b, 0.0)

  def mlp_tail(h, w12_r, b_r, g_r, be_r):
    # layers 1 and 2: Linear -> LayerNorm -> ReLU (bf16 MXU operands, f32 acc)
    for l in range(2):
      h = (jnp.dot(h.astype(bf16), w12_r[l], preferred_element_type=jnp.float32)
           + b_r[l + 1:l + 2, :])
      h = layernorm_relu(h, g_r[l + 1:l + 2, :], be_r[l + 1:l + 2, :])
    return h

  def scalar_mlp(x_ref, w0_r, w12_r, b_r, g_r, be_r):
    # width-1 input: layer 0 is a rank-1 broadcast on the VPU (no MXU, no pad)
    col = x_ref[...].reshape(N, 1)                      # (N, 1) f32
    h = col * w0_r[...] + b_r[0:1, :]                   # (N, H)
    h = layernorm_relu(h, g_r[0:1, :], be_r[0:1, :])
    return mlp_tail(h, w12_r, b_r, g_r, be_r)

  def dense_mlp(x, w0_r, w12_r, b_r, g_r, be_r):
    h = (jnp.dot(x.astype(bf16), w0_r[...], preferred_element_type=jnp.float32)
         + b_r[0:1, :])
    h = layernorm_relu(h, g_r[0:1, :], be_r[0:1, :])
    return mlp_tail(h, w12_r, b_r, g_r, be_r)

  f0h = scalar_mlp(f0_ref, f0_w0, f0_w12, f0_b, f0_g, f0_be)        # (N, H)
  loh = scalar_mlp(lo_ref, lo_w0, lo_w12, lo_b, lo_g, lo_be)        # (N, H)
  zh = dense_mlp(z_ref[...].reshape(N, -1), z_w0, z_w12, z_b, z_g, z_be)

  # GRU input projections for every timestep, split per gate so the serial
  # loop never slices the lane dim.  torch.cat([z, f0, lo], -1) is folded into
  # three partial matmuls per gate (weights indexed straight from the ref).
  zh16, f0h16, loh16 = zh.astype(bf16), f0h.astype(bf16), loh.astype(bf16)
  for gate in range(3):
    gi = (jnp.dot(zh16, wih_ref[0, gate], preferred_element_type=jnp.float32)
          + jnp.dot(f0h16, wih_ref[1, gate], preferred_element_type=jnp.float32)
          + jnp.dot(loh16, wih_ref[2, gate], preferred_element_type=jnp.float32)
          + bih_ref[gate])                                          # (N, H)
    gi_scr[gate] = gi.reshape(T, BB, H)

  # Recurrent weights hoisted once; they stay resident across the time loop.
  whh_r, whh_u, whh_n = whh_ref[0], whh_ref[1], whh_ref[2]          # (H, H) bf16
  bhh_r, bhh_u, bhh_n = bhh_ref[0], bhh_ref[1], bhh_ref[2]          # (1, H) f32

  def gru_step(t, h):
    h16 = h.astype(bf16)
    gh_r = jnp.dot(h16, whh_r, preferred_element_type=jnp.float32) + bhh_r
    gh_u = jnp.dot(h16, whh_u, preferred_element_type=jnp.float32) + bhh_u
    gh_n = jnp.dot(h16, whh_n, preferred_element_type=jnp.float32) + bhh_n
    r = jax.nn.sigmoid(gi_scr[0, t] + gh_r)
    u = jax.nn.sigmoid(gi_scr[1, t] + gh_u)
    n = jnp.tanh(gi_scr[2, t] + r * gh_n)
    h_new = (1.0 - u) * n + u * h
    ys_scr[t] = h_new                                   # aligned leading-axis store
    return h_new

  h0 = jnp.zeros((BB, H), jnp.float32)                  # hx = None -> zeros
  lax.fori_loop(0, T, gru_step, h0, unroll=True)

  x = dense_mlp(ys_scr[...].reshape(N, H), fi_w0, fi_w12, fi_b, fi_g, fi_be)

  # fused heads: lane-dense (N, D_pad) matmul; padded cols are exactly zero.
  d = (jnp.dot(x.astype(bf16), wh_ref[...], preferred_element_type=jnp.float32)
       + bh_ref[...])                                   # (N, D_pad)

  col = lax.broadcasted_iota(jnp.int32, d.shape, 1)
  n_sig = 1 + n_partial + n_filter
  # stable log(sigmoid(d)): no -inf intermediate for strongly negative d
  log_sig = jnp.where(d >= 0.0, 0.0, d) - jnp.log(1.0 + jnp.exp(-jnp.abs(d)))
  mod_sig = 2.0 * jnp.exp(LOG10 * log_sig) + 1e-7
  out = jnp.where(col < n_sig, mod_sig, d)              # reverb cols stay linear
  amask = jnp.logical_and(col >= 1, col < 1 + n_partial)
  asum = jnp.sum(jnp.where(amask, out, 0.0), axis=-1, keepdims=True)
  out = jnp.where(amask, out * pl.reciprocal(asum, approx=True), out)
  out_ref[...] = out.reshape(out_ref.shape)


# ----------------------------------------------------------------------------
# Wrapper: layout glue (NTC -> time-major, batch/lane padding) + pallas_call
# ----------------------------------------------------------------------------
def decoder_pallas(params, z_in, f0, lo, *, n_hidden, n_partial, filter_size):
  B, _, T = z_in.shape
  H = n_hidden
  F = filter_size // 2 + 1
  D = 1 + n_partial + F + 2
  D_pad = ((D + 127) // 128) * 128          # lane-dense head/output width
  B_pad = ((B + BB - 1) // BB) * BB         # sublane-full batch groups
  n_groups = B_pad // BB
  bf16 = jnp.bfloat16

  # glue: (B, T, C) -> time-major (T, B_pad, C) with zero batch padding
  def to_tm(a):
    a = jnp.transpose(a, (1, 0, 2))
    return jnp.pad(a, ((0, 0), (0, B_pad - B), (0, 0)))

  z_tm = to_tm(jnp.transpose(z_in, (0, 2, 1)))          # z.transpose(1, 2)
  f0_tm = to_tm(f0)
  lo_tm = to_tm(lo)

  def mlp_args(p, *, scalar_in):
    # (1, H) layer-0 weight of the scalar MLPs stays f32 (VPU broadcast path)
    w0 = p['w0'] if scalar_in else p['w0'].astype(bf16)
    return [w0, p['w12'].astype(bf16), p['b'], p['g'], p['be']]

  # GRU weights reordered gate-major so the kernel never slices the lane dim.
  wih = params['gru']['wih'].reshape(3, H, 3, H).transpose(0, 2, 1, 3).astype(bf16)
  whh = params['gru']['whh'].reshape(H, 3, H).transpose(1, 0, 2).astype(bf16)
  bih = params['gru']['bih'].reshape(3, 1, H)
  bhh = params['gru']['bhh'].reshape(3, 1, H)

  # fused + lane-padded dense heads (zero columns beyond D)
  wh = jnp.zeros((H, D_pad), bf16).at[:, :D].set(params['heads']['w'].astype(bf16))
  bh = jnp.zeros((1, D_pad), jnp.float32).at[:, :D].set(params['heads']['b'][None, :])

  args = ([z_tm, f0_tm, lo_tm]
          + mlp_args(params['f0'], scalar_in=True)
          + mlp_args(params['lo'], scalar_in=True)
          + mlp_args(params['z'], scalar_in=False)
          + mlp_args(params['fi'], scalar_in=False)
          + [wih, whh, bih, bhh, wh, bh])

  def batch_block(c):                       # activations/output: one batch group
    return pl.BlockSpec((T, BB, c), lambda g: (0, g, 0))

  def full_block(a):                        # weights: whole array, fetched once
    return pl.BlockSpec(a.shape, lambda g, nd=a.ndim: (0,) * nd)

  in_specs = ([batch_block(z_tm.shape[-1]), batch_block(1), batch_block(1)]
              + [full_block(a) for a in args[3:]])

  kernel = functools.partial(_decoder_kernel, seq_len=T, n_hidden=H,
                             n_partial=n_partial, n_filter=F)
  out_tm = pl.pallas_call(
      kernel,
      out_shape=jax.ShapeDtypeStruct((T, B_pad, D_pad), jnp.float32),
      grid=(n_groups,),
      in_specs=in_specs,
      out_specs=batch_block(D_pad),
      scratch_shapes=[pltpu.VMEM((3, T, BB, H), jnp.float32),   # per-gate GRU inputs
                      pltpu.VMEM((T, BB, H), jnp.float32)],     # GRU hidden states
      compiler_params=pltpu.CompilerParams(
          dimension_semantics=("parallel",),        # batch groups across TCs (v7x)
          vmem_limit_bytes=32 * 1024 * 1024),       # raise v5e's 16 MiB default
  )(*args)

  # glue: (T, B_pad, D_pad) -> (B, T, D); drop batch/lane padding
  return jnp.transpose(out_tm[:, :B, :D], (1, 0, 2))


# ----------------------------------------------------------------------------
# Deterministic parameter init (shapes follow the nn.Module __init__)
# ----------------------------------------------------------------------------
def init_params(key, latent_dims, n_hidden, n_partial, filter_size):
  H = n_hidden
  F = filter_size // 2 + 1
  kit = iter(jax.random.split(key, 64))

  def linear(in_s, out_s):
    bound = 1.0 / float(np.sqrt(in_s))
    w = jax.random.uniform(next(kit), (in_s, out_s), jnp.float32, -bound, bound)
    b = jax.random.uniform(next(kit), (out_s,), jnp.float32, -bound, bound)
    return w, b

  def mlp(in_s):
    w0, b0 = linear(in_s, H)
    w1, b1 = linear(H, H)
    w2, b2 = linear(H, H)
    return dict(w0=w0, w12=jnp.stack([w1, w2]),
                b=jnp.stack([b0, b1, b2]),
                g=jnp.ones((3, H), jnp.float32),      # LayerNorm gamma
                be=jnp.zeros((3, H), jnp.float32))    # LayerNorm beta

  params = dict(f0=mlp(1), lo=mlp(1), z=mlp(latent_dims), fi=mlp(H))

  wih, bih = linear(3 * H, 3 * H)   # input-major [3H_in, 3H_gates], gates r|u|n
  whh, bhh = linear(H, 3 * H)
  params['gru'] = dict(wih=wih, whh=whh, bih=bih, bhh=bhh)

  wa, ba = linear(H, 1)
  wal, bal = linear(H, n_partial)
  wf, bf = linear(H, F)
  wr, br = linear(H, 2)
  params['heads'] = dict(w=jnp.concatenate([wa, wal, wf, wr], axis=1),
                         b=jnp.concatenate([ba, bal, bf, br]))
  return params


# ----------------------------------------------------------------------------
# Pure-JAX reference (mirrors the PyTorch forward) for validation
# ----------------------------------------------------------------------------
def _mlp_ref(x, p):
  ws = [p['w0'], p['w12'][0], p['w12'][1]]
  for l in range(3):
    x = x @ ws[l] + p['b'][l]
    mu = x.mean(-1, keepdims=True)
    var = ((x - mu) ** 2).mean(-1, keepdims=True)
    x = (x - mu) / jnp.sqrt(var + LN_EPS) * p['g'][l] + p['be'][l]
    x = jnp.maximum(x, 0.0)
  return x


def _mod_sigmoid_ref(x):
  return 2.0 * jax.nn.sigmoid(x) ** LOG10 + 1e-7


def decoder_reference(params, z_in, f0, lo, *, n_partial, n_filter):
  B, _, T = z_in.shape
  H = params['gru']['whh'].shape[0]
  z = jnp.transpose(z_in, (0, 2, 1))
  f0h, loh, zh = _mlp_ref(f0, params['f0']), _mlp_ref(lo, params['lo']), _mlp_ref(z, params['z'])
  xcat = jnp.concatenate([zh, f0h, loh], axis=-1)
  gi = xcat @ params['gru']['wih'] + params['gru']['bih']
  whh, bhh = params['gru']['whh'], params['gru']['bhh']
  h = jnp.zeros((B, H), jnp.float32)
  ys = []
  for t in range(T):
    gi_t = gi[:, t, :]
    gh_t = h @ whh + bhh
    r = jax.nn.sigmoid(gi_t[:, :H] + gh_t[:, :H])
    u = jax.nn.sigmoid(gi_t[:, H:2 * H] + gh_t[:, H:2 * H])
    n = jnp.tanh(gi_t[:, 2 * H:] + r * gh_t[:, 2 * H:])
    h = (1.0 - u) * n + u * h
    ys.append(h)
  x = _mlp_ref(jnp.stack(ys, axis=1), params['fi'])
  d = x @ params['heads']['w'] + params['heads']['b']
  P, F = n_partial, n_filter
  amp = _mod_sigmoid_ref(d[..., :1])
  alpha = _mod_sigmoid_ref(d[..., 1:1 + P])
  filt = _mod_sigmoid_ref(d[..., 1 + P:1 + P + F])
  rev = d[..., 1 + P + F:]
  alpha = alpha / jnp.sum(alpha, -1, keepdims=True)
  return jnp.concatenate([amp, alpha, filt, rev], axis=-1)


if __name__ == "__main__":
  B, T = 2, 8
  latent_dims, n_hidden, n_partial, filter_size = 16, 32, 8, 64
  F = filter_size // 2 + 1

  key = jax.random.PRNGKey(0)
  kp, kz, kf, kl = jax.random.split(key, 4)
  params = init_params(kp, latent_dims, n_hidden, n_partial, filter_size)

  # forward(z=(z, (f0, lo))):  z is (B, latent, T), f0/lo are (B, T, 1)
  z_in = jax.random.normal(kz, (B, latent_dims, T), jnp.float32)
  f0 = jax.random.normal(kf, (B, T, 1), jnp.float32)
  lo = jax.random.normal(kl, (B, T, 1), jnp.float32)

  out = decoder_pallas(params, z_in, f0, lo, n_hidden=n_hidden,
                       n_partial=n_partial, filter_size=filter_size)
  out = jax.block_until_ready(out)

  ref = jax.block_until_ready(
      decoder_reference(params, z_in, f0, lo, n_partial=n_partial, n_filter=F))

  assert out.shape == (B, T, 1 + n_partial + F + 2)
  # tolerance accounts for bf16 MXU operands (f32 accumulation) in the kernel
  np.testing.assert_allclose(np.asarray(out), np.asarray(ref), rtol=3e-2, atol=3e-2)
  print("KERNEL_OK")
</pallas_src>

<mosaic_0001>
module attributes {stable_mosaic.version = 11 : i64} {
  func.func @_decoder_kernel(%arg0: i32, %arg1: memref<8x8x16xf32, #tpu.memory_space<vmem>>, %arg2: memref<8x8x1xf32, #tpu.memory_space<vmem>>, %arg3: memref<8x8x1xf32, #tpu.memory_space<vmem>>, %arg4: memref<1x32xf32, #tpu.memory_space<vmem>>, %arg5: memref<2x32x32xbf16, #tpu.memory_space<vmem>>, %arg6: memref<3x32xf32, #tpu.memory_space<vmem>>, %arg7: memref<3x32xf32, #tpu.memory_space<vmem>>, %arg8: memref<3x32xf32, #tpu.memory_space<vmem>>, %arg9: memref<1x32xf32, #tpu.memory_space<vmem>>, %arg10: memref<2x32x32xbf16, #tpu.memory_space<vmem>>, %arg11: memref<3x32xf32, #tpu.memory_space<vmem>>, %arg12: memref<3x32xf32, #tpu.memory_space<vmem>>, %arg13: memref<3x32xf32, #tpu.memory_space<vmem>>, %arg14: memref<16x32xbf16, #tpu.memory_space<vmem>>, %arg15: memref<2x32x32xbf16, #tpu.memory_space<vmem>>, %arg16: memref<3x32xf32, #tpu.memory_space<vmem>>, %arg17: memref<3x32xf32, #tpu.memory_space<vmem>>, %arg18: memref<3x32xf32, #tpu.memory_space<vmem>>, %arg19: memref<32x32xbf16, #tpu.memory_space<vmem>>, %arg20: memref<2x32x32xbf16, #tpu.memory_space<vmem>>, %arg21: memref<3x32xf32, #tpu.memory_space<vmem>>, %arg22: memref<3x32xf32, #tpu.memory_space<vmem>>, %arg23: memref<3x32xf32, #tpu.memory_space<vmem>>, %arg24: memref<3x3x32x32xbf16, #tpu.memory_space<vmem>>, %arg25: memref<3x32x32xbf16, #tpu.memory_space<vmem>>, %arg26: memref<3x1x32xf32, #tpu.memory_space<vmem>>, %arg27: memref<3x1x32xf32, #tpu.memory_space<vmem>>, %arg28: memref<32x128xbf16, #tpu.memory_space<vmem>>, %arg29: memref<1x128xf32, #tpu.memory_space<vmem>>, %arg30: memref<8x8x128xf32, #tpu.memory_space<vmem>>, %arg31: memref<3x8x8x32xf32, #tpu.memory_space<vmem>>, %arg32: memref<8x8x32xf32, #tpu.memory_space<vmem>>) attributes {dimension_semantics = [#tpu.dimension_semantics<parallel>], iteration_bounds = array<i64: 1>, scalar_prefetch = 0 : i64, scratch_operands = 2 : i64, tpu.core_type = #tpu.core_type<tc>, window_params = [{transform_indices = @transform_0, window_bounds = array<i64: 8, 8, 16>}, {transform_indices = @transform_1, window_bounds = array<i64: 8, 8, 1>}, {transform_indices = @transform_2, window_bounds = array<i64: 8, 8, 1>}, {pipeline_mode = #tpu.pipeline_mode<synchronous>, transform_indices = @transform_3, window_bounds = array<i64: 1, 32>}, {pipeline_mode = #tpu.pipeline_mode<synchronous>, transform_indices = @transform_4, window_bounds = array<i64: 2, 32, 32>}, {pipeline_mode = #tpu.pipeline_mode<synchronous>, transform_indices = @transform_5, window_bounds = array<i64: 3, 32>}, {pipeline_mode = #tpu.pipeline_mode<synchronous>, transform_indices = @transform_6, window_bounds = array<i64: 3, 32>}, {pipeline_mode = #tpu.pipeline_mode<synchronous>, transform_indices = @transform_7, window_bounds = array<i64: 3, 32>}, {pipeline_mode = #tpu.pipeline_mode<synchronous>, transform_indices = @transform_8, window_bounds = array<i64: 1, 32>}, {pipeline_mode = #tpu.pipeline_mode<synchronous>, transform_indices = @transform_9, window_bounds = array<i64: 2, 32, 32>}, {pipeline_mode = #tpu.pipeline_mode<synchronous>, transform_indices = @transform_10, window_bounds = array<i64: 3, 32>}, {pipeline_mode = #tpu.pipeline_mode<synchronous>, transform_indices = @transform_11, window_bounds = array<i64: 3, 32>}, {pipeline_mode = #tpu.pipeline_mode<synchronous>, transform_indices = @transform_12, window_bounds = array<i64: 3, 32>}, {pipeline_mode = #tpu.pipeline_mode<synchronous>, transform_indices = @transform_13, window_bounds = array<i64: 16, 32>}, {pipeline_mode = #tpu.pipeline_mode<synchronous>, transform_indices = @transform_14, window_bounds = array<i64: 2, 32, 32>}, {pipeline_mode = #tpu.pipeline_mode<synchronous>, transform_indices = @transform_15, window_bounds = array<i64: 3, 32>}, {pipeline_mode = #tpu.pipeline_mode<synchronous>, transform_indices = @transform_16, window_bounds = array<i64: 3, 32>}, {pipeline_mode = #tpu.pipeline_mode<synchronous>, transform_indices = @transform_17, window_bounds = array<i64: 3, 32>}, {pipeline_mode = #tpu.pipeline_mode<synchronous>, transform_indices = @transform_18, window_bounds = array<i64: 32, 32>}, {pipeline_mode = #tpu.pipeline_mode<synchronous>, transform_indices = @transform_19, window_bounds = array<i64: 2, 32, 32>}, {pipeline_mode = #tpu.pipeline_mode<synchronous>, transform_indices = @transform_20, window_bounds = array<i64: 3, 32>}, {pipeline_mode = #tpu.pipeline_mode<synchronous>, transform_indices = @transform_21, window_bounds = array<i64: 3, 32>}, {pipeline_mode = #tpu.pipeline_mode<synchronous>, transform_indices = @transform_22, window_bounds = array<i64: 3, 32>}, {pipeline_mode = #tpu.pipeline_mode<synchronous>, transform_indices = @transform_23, window_bounds = array<i64: 3, 3, 32, 32>}, {pipeline_mode = #tpu.pipeline_mode<synchronous>, transform_indices = @transform_24, window_bounds = array<i64: 3, 32, 32>}, {pipeline_mode = #tpu.pipeline_mode<synchronous>, transform_indices = @transform_25, window_bounds = array<i64: 3, 1, 32>}, {pipeline_mode = #tpu.pipeline_mode<synchronous>, transform_indices = @transform_26, window_bounds = array<i64: 3, 1, 32>}, {pipeline_mode = #tpu.pipeline_mode<synchronous>, transform_indices = @transform_27, window_bounds = array<i64: 32, 128>}, {pipeline_mode = #tpu.pipeline_mode<synchronous>, transform_indices = @transform_28, window_bounds = array<i64: 1, 128>}, {transform_indices = @transform_29, window_bounds = array<i64: 8, 8, 128>}]} {
    %c0 = arith.constant 0 : index
    %c0_0 = arith.constant 0 : index
    %c0_1 = arith.constant 0 : index
    %0 = vector.load %arg2[%c0, %c0_0, %c0_1] : memref<8x8x1xf32, #tpu.memory_space<vmem>>, vector<8x8x1xf32>
    %1 = vector.shape_cast %0 : vector<8x8x1xf32> to vector<64x1xf32>
    %c0_2 = arith.constant 0 : index
    %c0_3 = arith.constant 0 : index
    %2 = vector.load %arg4[%c0_2, %c0_3] : memref<1x32xf32, #tpu.memory_space<vmem>>, vector<1x32xf32>
    %3 = vector.broadcast %1 : vector<64x1xf32> to vector<64x32xf32>
    %4 = vector.broadcast %2 : vector<1x32xf32> to vector<64x32xf32>
    %5 = arith.mulf %3, %4 : vector<64x32xf32>
    %c0_4 = arith.constant 0 : index
    %c0_5 = arith.constant 0 : index
    %6 = vector.load %arg6[%c0_4, %c0_5] : memref<3x32xf32, #tpu.memory_space<vmem>>, vector<1x32xf32>
    %7 = vector.broadcast %6 : vector<1x32xf32> to vector<64x32xf32>
    %8 = arith.addf %5, %7 : vector<64x32xf32>
    %c0_6 = arith.constant 0 : index
    %c0_7 = arith.constant 0 : index
    %9 = vector.load %arg7[%c0_6, %c0_7] : memref<3x32xf32, #tpu.memory_space<vmem>>, vector<1x32xf32>
    %c0_8 = arith.constant 0 : index
    %c0_9 = arith.constant 0 : index
    %10 = vector.load %arg8[%c0_8, %c0_9] : memref<3x32xf32, #tpu.memory_space<vmem>>, vector<1x32xf32>
    %cst = arith.constant dense<0.000000e+00> : vector<64xf32>
    %11 = vector.multi_reduction <add>, %8, %cst [1] : vector<64x32xf32> to vector<64xf32>
    %12 = vector.shape_cast %11 : vector<64xf32> to vector<64x1xf32>
    %cst_10 = arith.constant 3.200000e+01 : f32
    %13 = vector.broadcast %cst_10 : f32 to vector<64x1xf32>
    %14 = arith.divf %12, %13 : vector<64x1xf32>
    %15 = vector.broadcast %14 : vector<64x1xf32> to vector<64x32xf32>
    %16 = arith.subf %8, %15 : vector<64x32xf32>
    %17 = arith.mulf %16, %16 : vector<64x32xf32>
    %cst_11 = arith.constant dense<0.000000e+00> : vector<64xf32>
    %18 = vector.multi_reduction <add>, %17, %cst_11 [1] : vector<64x32xf32> to vector<64xf32>
    %19 = vector.shape_cast %18 : vector<64xf32> to vector<64x1xf32>
    %cst_12 = arith.constant 3.200000e+01 : f32
    %20 = vector.broadcast %cst_12 : f32 to vector<64x1xf32>
    %21 = arith.divf %19, %20 : vector<64x1xf32>
    %cst_13 = arith.constant 9.99999974E-6 : f32
    %22 = vector.broadcast %cst_13 : f32 to vector<64x1xf32>
    %23 = arith.addf %21, %22 : vector<64x1xf32>
    %24 = math.rsqrt %23 : vector<64x1xf32>
    %25 = vector.broadcast %24 : vector<64x1xf32> to vector<64x32xf32>
    %26 = arith.mulf %16, %25 : vector<64x32xf32>
    %27 = vector.broadcast %9 : vector<1x32xf32> to vector<64x32xf32>
    %28 = arith.mulf %26, %27 : vector<64x32xf32>
    %29 = vector.broadcast %10 : vector<1x32xf32> to vector<64x32xf32>
    %30 = arith.addf %28, %29 : vector<64x32xf32>
    %cst_14 = arith.constant 0.000000e+00 : f32
    %31 = vector.broadcast %cst_14 : f32 to vector<64x32xf32>
    %32 = arith.maximumf %30, %31 : vector<64x32xf32>
    %33 = arith.truncf %32 : vector<64x32xf32> to vector<64x32xbf16>
    %c0_15 = arith.constant 0 : index
    %c0_16 = arith.constant 0 : index
    %c0_17 = arith.constant 0 : index
    %34 = vector.load %arg5[%c0_15, %c0_16, %c0_17] : memref<2x32x32xbf16, #tpu.memory_space<vmem>>, vector<1x32x32xbf16>
    %35 = vector.shape_cast %34 : vector<1x32x32xbf16> to vector<32x32xbf16>
    %cst_18 = arith.constant dense<0.000000e+00> : vector<64x32xf32>
    %36 = tpu.matmul %33, %35, %cst_18 {dimension_numbers = #tpu.dot_dimension_numbers<[1], [0], [0], [1], [0, 0, 1, 1], [], []>} : vector<64x32xbf16>, vector<32x32xbf16>, vector<64x32xf32> -> vector<64x32xf32>
    %c1 = arith.constant 1 : index
    %c0_19 = arith.constant 0 : index
    %37 = vector.load %arg6[%c1, %c0_19] : memref<3x32xf32, #tpu.memory_space<vmem>>, vector<1x32xf32>
    %38 = vector.broadcast %37 : vector<1x32xf32> to vector<64x32xf32>
    %39 = arith.addf %36, %38 : vector<64x32xf32>
    %c1_20 = arith.constant 1 : index
    %c0_21 = arith.constant 0 : index
    %40 = vector.load %arg7[%c1_20, %c0_21] : memref<3x32xf32, #tpu.memory_space<vmem>>, vector<1x32xf32>
    %c1_22 = arith.constant 1 : index
    %c0_23 = arith.constant 0 : index
    %41 = vector.load %arg8[%c1_22, %c0_23] : memref<3x32xf32, #tpu.memory_space<vmem>>, vector<1x32xf32>
    %cst_24 = arith.constant dense<0.000000e+00> : vector<64xf32>
    %42 = vector.multi_reduction <add>, %39, %cst_24 [1] : vector<64x32xf32> to vector<64xf32>
    %43 = vector.shape_cast %42 : vector<64xf32> to vector<64x1xf32>
    %cst_25 = arith.constant 3.200000e+01 : f32
    %44 = vector.broadcast %cst_25 : f32 to vector<64x1xf32>
    %45 = arith.divf %43, %44 : vector<64x1xf32>
    %46 = vector.broadcast %45 : vector<64x1xf32> to vector<64x32xf32>
    %47 = arith.subf %39, %46 : vector<64x32xf32>
    %48 = arith.mulf %47, %47 : vector<64x32xf32>
    %cst_26 = arith.constant dense<0.000000e+00> : vector<64xf32>
    %49 = vector.multi_reduction <add>, %48, %cst_26 [1] : vector<64x32xf32> to vector<64xf32>
    %50 = vector.shape_cast %49 : vector<64xf32> to vector<64x1xf32>
    %cst_27 = arith.constant 3.200000e+01 : f32
    %51 = vector.broadcast %cst_27 : f32 to vector<64x1xf32>
    %52 = arith.divf %50, %51 : vector<64x1xf32>
    %cst_28 = arith.constant 9.99999974E-6 : f32
    %53 = vector.broadcast %cst_28 : f32 to vector<64x1xf32>
    %54 = arith.addf %52, %53 : vector<64x1xf32>
    %55 = math.rsqrt %54 : vector<64x1xf32>
    %56 = vector.broadcast %55 : vector<64x1xf32> to vector<64x32xf32>
    %57 = arith.mulf %47, %56 : vector<64x32xf32>
    %58 = vector.broadcast %40 : vector<1x32xf32> to vector<64x32xf32>
    %59 = arith.mulf %57, %58 : vector<64x32xf32>
    %60 = vector.broadcast %41 : vector<1x32xf32> to vector<64x32xf32>
    %61 = arith.addf %59, %60 : vector<64x32xf32>
    %cst_29 = arith.constant 0.000000e+00 : f32
    %62 = vector.broadcast %cst_29 : f32 to vector<64x32xf32>
    %63 = arith.maximumf %61, %62 : vector<64x32xf32>
    %64 = arith.truncf %63 : vector<64x32xf32> to vector<64x32xbf16>
    %c1_30 = arith.constant 1 : index
    %c0_31 = arith.constant 0 : index
    %c0_32 = arith.constant 0 : index
    %65 = vector.load %arg5[%c1_30, %c0_31, %c0_32] : memref<2x32x32xbf16, #tpu.memory_space<vmem>>, vector<1x32x32xbf16>
    %66 = vector.shape_cast %65 : vector<1x32x32xbf16> to vector<32x32xbf16>
    %cst_33 = arith.constant dense<0.000000e+00> : vector<64x32xf32>
    %67 = tpu.matmul %64, %66, %cst_33 {dimension_numbers = #tpu.dot_dimension_numbers<[1], [0], [0], [1], [0, 0, 1, 1], [], []>} : vector<64x32xbf16>, vector<32x32xbf16>, vector<64x32xf32> -> vector<64x32xf32>
    %c2 = arith.constant 2 : index
    %c0_34 = arith.constant 0 : index
    %68 = vector.load %arg6[%c2, %c0_34] : memref<3x32xf32, #tpu.memory_space<vmem>>, vector<1x32xf32>
    %69 = vector.broadcast %68 : vector<1x32xf32> to vector<64x32xf32>
    %70 = arith.addf %67, %69 : vector<64x32xf32>
    %c2_35 = arith.constant 2 : index
    %c0_36 = arith.constant 0 : index
    %71 = vector.load %arg7[%c2_35, %c0_36] : memref<3x32xf32, #tpu.memory_space<vmem>>, vector<1x32xf32>
    %c2_37 = arith.constant 2 : index
    %c0_38 = arith.constant 0 : index
    %72 = vector.load %arg8[%c2_37, %c0_38] : memref<3x32xf32, #tpu.memory_space<vmem>>, vector<1x32xf32>
    %cst_39 = arith.constant dense<0.000000e+00> : vector<64xf32>
    %73 = vector.multi_reduction <add>, %70, %cst_39 [1] : vector<64x32xf32> to vector<64xf32>
    %74 = vector.shape_cast %73 : vector<64xf32> to vector<64x1xf32>
    %cst_40 = arith.constant 3.200000e+01 : f32
    %75 = vector.broadcast %cst_40 : f32 to vector<64x1xf32>
    %76 = arith.divf %74, %75 : vector<64x1xf32>
    %77 = vector.broadcast %76 : vector<64x1xf32> to vector<64x32xf32>
    %78 = arith.subf %70, %77 : vector<64x32xf32>
    %79 = arith.mulf %78, %78 : vector<64x32xf32>
    %cst_41 = arith.constant dense<0.000000e+00> : vector<64xf32>
    %80 = vector.multi_reduction <add>, %79, %cst_41 [1] : vector<64x32xf32> to vector<64xf32>
    %81 = vector.shape_cast %80 : vector<64xf32> to vector<64x1xf32>
    %cst_42 = arith.constant 3.200000e+01 : f32
    %82 = vector.broadcast %cst_42 : f32 to vector<64x1xf32>
    %83 = arith.divf %81, %82 : vector<64x1xf32>
    %cst_43 = arith.constant 9.99999974E-6 : f32
    %84 = vector.broadcast %cst_43 : f32 to vector<64x1xf32>
    %85 = arith.addf %83, %84 : vector<64x1xf32>
    %86 = math.rsqrt %85 : vector<64x1xf32>
    %87 = vector.broadcast %86 : vector<64x1xf32> to vector<64x32xf32>
    %88 = arith.mulf %78, %87 : vector<64x32xf32>
    %89 = vector.broadcast %71 : vector<1x32xf32> to vector<64x32xf32>
    %90 = arith.mulf %88, %89 : vector<64x32xf32>
    %91 = vector.broadcast %72 : vector<1x32xf32> to vector<64x32xf32>
    %92 = arith.addf %90, %91 : vector<64x32xf32>
    %cst_44 = arith.constant 0.000000e+00 : f32
    %93 = vector.broadcast %cst_44 : f32 to vector<64x32xf32>
    %94 = arith.maximumf %92, %93 : vector<64x32xf32>
    %c0_45 = arith.constant 0 : index
    %c0_46 = arith.constant 0 : index
    %c0_47 = arith.constant 0 : index
    %95 = vector.load %arg3[%c0_45, %c0_46, %c0_47] : memref<8x8x1xf32, #tpu.memory_space<vmem>>, vector<8x8x1xf32>
    %96 = vector.shape_cast %95 : vector<8x8x1xf32> to vector<64x1xf32>
    %c0_48 = arith.constant 0 : index
    %c0_49 = arith.constant 0 : index
    %97 = vector.load %arg9[%c0_48, %c0_49] : memref<1x32xf32, #tpu.memory_space<vmem>>, vector<1x32xf32>
    %98 = vector.broadcast %96 : vector<64x1xf32> to vector<64x32xf32>
    %99 = vector.broadcast %97 : vector<1x32xf32> to vector<64x32xf32>
    %100 = arith.mulf %98, %99 : vector<64x32xf32>
    %c0_50 = arith.constant 0 : index
    %c0_51 = arith.constant 0 : index
    %101 = vector.load %arg11[%c0_50, %c0_51] : memref<3x32xf32, #tpu.memory_space<vmem>>, vector<1x32xf32>
    %102 = vector.broadcast %101 : vector<1x32xf32> to vector<64x32xf32>
    %103 = arith.addf %100, %102 : vector<64x32xf32>
    %c0_52 = arith.constant 0 : index
    %c0_53 = arith.constant 0 : index
    %104 = vector.load %arg12[%c0_52, %c0_53] : memref<3x32xf32, #tpu.memory_space<vmem>>, vector<1x32xf32>
    %c0_54 = arith.constant 0 : index
    %c0_55 = arith.constant 0 : index
    %105 = vector.load %arg13[%c0_54, %c0_55] : memref<3x32xf32, #tpu.memory_space<vmem>>, vector<1x32xf32>
    %cst_56 = arith.constant dense<0.000000e+00> : vector<64xf32>
    %106 = vector.multi_reduction <add>, %103, %cst_56 [1] : vector<64x32xf32> to vector<64xf32>
    %107 = vector.shape_cast %106 : vector<64xf32> to vector<64x1xf32>
    %cst_57 = arith.constant 3.200000e+01 : f32
    %108 = vector.broadcast %cst_57 : f32 to vector<64x1xf32>
    %109 = arith.divf %107, %108 : vector<64x1xf32>
    %110 = vector.broadcast %109 : vector<64x1xf32> to vector<64x32xf32>
    %111 = arith.subf %103, %110 : vector<64x32xf32>
    %112 = arith.mulf %111, %111 : vector<64x32xf32>
    %cst_58 = arith.constant dense<0.000000e+00> : vector<64xf32>
    %113 = vector.multi_reduction <add>, %112, %cst_58 [1] : vector<64x32xf32> to vector<64xf32>
    %114 = vector.shape_cast %113 : vector<64xf32> to vector<64x1xf32>
    %cst_59 = arith.constant 3.200000e+01 : f32
    %115 = vector.broadcast %cst_59 : f32 to vector<64x1xf32>
    %116 = arith.divf %114, %115 : vector<64x1xf32>
    %cst_60 = arith.constant 9.99999974E-6 : f32
    %117 = vector.broadcast %cst_60 : f32 to vector<64x1xf32>
    %118 = arith.addf %116, %117 : vector<64x1xf32>
    %119 = math.rsqrt %118 : vector<64x1xf32>
    %120 = vector.broadcast %119 : vector<64x1xf32> to vector<64x32xf32>
    %121 = arith.mulf %111, %120 : vector<64x32xf32>
    %122 = vector.broadcast %104 : vector<1x32xf32> to vector<64x32xf32>
    %123 = arith.mulf %121, %122 : vector<64x32xf32>
    %124 = vector.broadcast %105 : vector<1x32xf32> to vector<64x32xf32>
    %125 = arith.addf %123, %124 : vector<64x32xf32>
    %cst_61 = arith.constant 0.000000e+00 : f32
    %126 = vector.broadcast %cst_61 : f32 to vector<64x32xf32>
    %127 = arith.maximumf %125, %126 : vector<64x32xf32>
    %128 = arith.truncf %127 : vector<64x32xf32> to vector<64x32xbf16>
    %c0_62 = arith.constant 0 : index
    %c0_63 = arith.constant 0 : index
    %c0_64 = arith.constant 0 : index
    %129 = vector.load %arg10[%c0_62, %c0_63, %c0_64] : memref<2x32x32xbf16, #tpu.memory_space<vmem>>, vector<1x32x32xbf16>
    %130 = vector.shape_cast %129 : vector<1x32x32xbf16> to vector<32x32xbf16>
    %cst_65 = arith.constant dense<0.000000e+00> : vector<64x32xf32>
    %131 = tpu.matmul %128, %130, %cst_65 {dimension_numbers = #tpu.dot_dimension_numbers<[1], [0], [0], [1], [0, 0, 1, 1], [], []>} : vector<64x32xbf16>, vector<32x32xbf16>, vector<64x32xf32> -> vector<64x32xf32>
    %c1_66 = arith.constant 1 : index
    %c0_67 = arith.constant 0 : index
    %132 = vector.load %arg11[%c1_66, %c0_67] : memref<3x32xf32, #tpu.memory_space<vmem>>, vector<1x32xf32>
    %133 = vector.broadcast %132 : vector<1x32xf32> to vector<64x32xf32>
    %134 = arith.addf %131, %133 : vector<64x32xf32>
    %c1_68 = arith.constant 1 : index
    %c0_69 = arith.constant 0 : index
    %135 = vector.load %arg12[%c1_68, %c0_69] : memref<3x32xf32, #tpu.memory_space<vmem>>, vector<1x32xf32>
    %c1_70 = arith.constant 1 : index
    %c0_71 = arith.constant 0 : index
    %136 = vector.load %arg13[%c1_70, %c0_71] : memref<3x32xf32, #tpu.memory_space<vmem>>, vector<1x32xf32>
    %cst_72 = arith.constant dense<0.000000e+00> : vector<64xf32>
    %137 = vector.multi_reduction <add>, %134, %cst_72 [1] : vector<64x32xf32> to vector<64xf32>
    %138 = vector.shape_cast %137 : vector<64xf32> to vector<64x1xf32>
    %cst_73 = arith.constant 3.200000e+01 : f32
    %139 = vector.broadcast %cst_73 : f32 to vector<64x1xf32>
    %140 = arith.divf %138, %139 : vector<64x1xf32>
    %141 = vector.broadcast %140 : vector<64x1xf32> to vector<64x32xf32>
    %142 = arith.subf %134, %141 : vector<64x32xf32>
    %143 = arith.mulf %142, %142 : vector<64x32xf32>
    %cst_74 = arith.constant dense<0.000000e+00> : vector<64xf32>
    %144 = vector.multi_reduction <add>, %143, %cst_74 [1] : vector<64x32xf32> to vector<64xf32>
    %145 = vector.shape_cast %144 : vector<64xf32> to vector<64x1xf32>
    %cst_75 = arith.constant 3.200000e+01 : f32
    %146 = vector.broadcast %cst_75 : f32 to vector<64x1xf32>
    %147 = arith.divf %145, %146 : vector<64x1xf32>
    %cst_76 = arith.constant 9.99999974E-6 : f32
    %148 = vector.broadcast %cst_76 : f32 to vector<64x1xf32>
    %149 = arith.addf %147, %148 : vector<64x1xf32>
    %150 = math.rsqrt %149 : vector<64x1xf32>
    %151 = vector.broadcast %150 : vector<64x1xf32> to vector<64x32xf32>
    %152 = arith.mulf %142, %151 : vector<64x32xf32>
    %153 = vector.broadcast %135 : vector<1x32xf32> to vector<64x32xf32>
    %154 = arith.mulf %152, %153 : vector<64x32xf32>
    %155 = vector.broadcast %136 : vector<1x32xf32> to vector<64x32xf32>
    %156 = arith.addf %154, %155 : vector<64x32xf32>
    %cst_77 = arith.constant 0.000000e+00 : f32
    %157 = vector.broadcast %cst_77 : f32 to vector<64x32xf32>
    %158 = arith.maximumf %156, %157 : vector<64x32xf32>
    %159 = arith.truncf %158 : vector<64x32xf32> to vector<64x32xbf16>
    %c1_78 = arith.constant 1 : index
    %c0_79 = arith.constant 0 : index
    %c0_80 = arith.constant 0 : index
    %160 = vector.load %arg10[%c1_78, %c0_79, %c0_80] : memref<2x32x32xbf16, #tpu.memory_space<vmem>>, vector<1x32x32xbf16>
    %161 = vector.shape_cast %160 : vector<1x32x32xbf16> to vector<32x32xbf16>
    %cst_81 = arith.constant dense<0.000000e+00> : vector<64x32xf32>
    %162 = tpu.matmul %159, %161, %cst_81 {dimension_numbers = #tpu.dot_dimension_numbers<[1], [0], [0], [1], [0, 0, 1, 1], [], []>} : vector<64x32xbf16>, vector<32x32xbf16>, vector<64x32xf32> -> vector<64x32xf32>
    %c2_82 = arith.constant 2 : index
    %c0_83 = arith.constant 0 : index
    %163 = vector.load %arg11[%c2_82, %c0_83] : memref<3x32xf32, #tpu.memory_space<vmem>>, vector<1x32xf32>
    %164 = vector.broadcast %163 : vector<1x32xf32> to vector<64x32xf32>
    %165 = arith.addf %162, %164 : vector<64x32xf32>
    %c2_84 = arith.constant 2 : index
    %c0_85 = arith.constant 0 : index
    %166 = vector.load %arg12[%c2_84, %c0_85] : memref<3x32xf32, #tpu.memory_space<vmem>>, vector<1x32xf32>
    %c2_86 = arith.constant 2 : index
    %c0_87 = arith.constant 0 : index
    %167 = vector.load %arg13[%c2_86, %c0_87] : memref<3x32xf32, #tpu.memory_space<vmem>>, vector<1x32xf32>
    %cst_88 = arith.constant dense<0.000000e+00> : vector<64xf32>
    %168 = vector.multi_reduction <add>, %165, %cst_88 [1] : vector<64x32xf32> to vector<64xf32>
    %169 = vector.shape_cast %168 : vector<64xf32> to vector<64x1xf32>
    %cst_89 = arith.constant 3.200000e+01 : f32
    %170 = vector.broadcast %cst_89 : f32 to vector<64x1xf32>
    %171 = arith.divf %169, %170 : vector<64x1xf32>
    %172 = vector.broadcast %171 : vector<64x1xf32> to vector<64x32xf32>
    %173 = arith.subf %165, %172 : vector<64x32xf32>
    %174 = arith.mulf %173, %173 : vector<64x32xf32>
    %cst_90 = arith.constant dense<0.000000e+00> : vector<64xf32>
    %175 = vector.multi_reduction <add>, %174, %cst_90 [1] : vector<64x32xf32> to vector<64xf32>
    %176 = vector.shape_cast %175 : vector<64xf32> to vector<64x1xf32>
    %cst_91 = arith.constant 3.200000e+01 : f32
    %177 = vector.broadcast %cst_91 : f32 to vector<64x1xf32>
    %178 = arith.divf %176, %177 : vector<64x1xf32>
    %cst_92 = arith.constant 9.99999974E-6 : f32
    %179 = vector.broadcast %cst_92 : f32 to vector<64x1xf32>
    %180 = arith.addf %178, %179 : vector<64x1xf32>
    %181 = math.rsqrt %180 : vector<64x1xf32>
    %182 = vector.broadcast %181 : vector<64x1xf32> to vector<64x32xf32>
    %183 = arith.mulf %173, %182 : vector<64x32xf32>
    %184 = vector.broadcast %166 : vector<1x32xf32> to vector<64x32xf32>
    %185 = arith.mulf %183, %184 : vector<64x32xf32>
    %186 = vector.broadcast %167 : vector<1x32xf32> to vector<64x32xf32>
    %187 = arith.addf %185, %186 : vector<64x32xf32>
    %cst_93 = arith.constant 0.000000e+00 : f32
    %188 = vector.broadcast %cst_93 : f32 to vector<64x32xf32>
    %189 = arith.maximumf %187, %188 : vector<64x32xf32>
    %c0_94 = arith.constant 0 : index
    %c0_95 = arith.constant 0 : index
    %c0_96 = arith.constant 0 : index
    %190 = vector.load %arg1[%c0_94, %c0_95, %c0_96] : memref<8x8x16xf32, #tpu.memory_space<vmem>>, vector<8x8x16xf32>
    %191 = vector.shape_cast %190 : vector<8x8x16xf32> to vector<64x16xf32>
    %192 = arith.truncf %191 : vector<64x16xf32> to vector<64x16xbf16>
    %c0_97 = arith.constant 0 : index
    %c0_98 = arith.constant 0 : index
    %193 = vector.load %arg14[%c0_97, %c0_98] : memref<16x32xbf16, #tpu.memory_space<vmem>>, vector<16x32xbf16>
    %cst_99 = arith.constant dense<0.000000e+00> : vector<64x32xf32>
    %194 = tpu.matmul %192, %193, %cst_99 {dimension_numbers = #tpu.dot_dimension_numbers<[1], [0], [0], [1], [0, 0, 1, 1], [], []>} : vector<64x16xbf16>, vector<16x32xbf16>, vector<64x32xf32> -> vector<64x32xf32>
    %c0_100 = arith.constant 0 : index
    %c0_101 = arith.constant 0 : index
    %195 = vector.load %arg16[%c0_100, %c0_101] : memref<3x32xf32, #tpu.memory_space<vmem>>, vector<1x32xf32>
    %196 = vector.broadcast %195 : vector<1x32xf32> to vector<64x32xf32>
    %197 = arith.addf %194, %196 : vector<64x32xf32>
    %c0_102 = arith.constant 0 : index
    %c0_103 = arith.constant 0 : index
    %198 = vector.load %arg17[%c0_102, %c0_103] : memref<3x32xf32, #tpu.memory_space<vmem>>, vector<1x32xf32>
    %c0_104 = arith.constant 0 : index
    %c0_105 = arith.constant 0 : index
    %199 = vector.load %arg18[%c0_104, %c0_105] : memref<3x32xf32, #tpu.memory_space<vmem>>, vector<1x32xf32>
    %cst_106 = arith.constant dense<0.000000e+00> : vector<64xf32>
    %200 = vector.multi_reduction <add>, %197, %cst_106 [1] : vector<64x32xf32> to vector<64xf32>
    %201 = vector.shape_cast %200 : vector<64xf32> to vector<64x1xf32>
    %cst_107 = arith.constant 3.200000e+01 : f32
    %202 = vector.broadcast %cst_107 : f32 to vector<64x1xf32>
    %203 = arith.divf %201, %202 : vector<64x1xf32>
    %204 = vector.broadcast %203 : vector<64x1xf32> to vector<64x32xf32>
    %205 = arith.subf %197, %204 : vector<64x32xf32>
    %206 = arith.mulf %205, %205 : vector<64x32xf32>
    %cst_108 = arith.constant dense<0.000000e+00> : vector<64xf32>
    %207 = vector.multi_reduction <add>, %206, %cst_108 [1] : vector<64x32xf32> to vector<64xf32>
    %208 = vector.shape_cast %207 : vector<64xf32> to vector<64x1xf32>
    %cst_109 = arith.constant 3.200000e+01 : f32
    %209 = vector.broadcast %cst_109 : f32 to vector<64x1xf32>
    %210 = arith.divf %208, %209 : vector<64x1xf32>
    %cst_110 = arith.constant 9.99999974E-6 : f32
    %211 = vector.broadcast %cst_110 : f32 to vector<64x1xf32>
    %212 = arith.addf %210, %211 : vector<64x1xf32>
    %213 = math.rsqrt %212 : vector<64x1xf32>
    %214 = vector.broadcast %213 : vector<64x1xf32> to vector<64x32xf32>
    %215 = arith.mulf %205, %214 : vector<64x32xf32>
    %216 = vector.broadcast %198 : vector<1x32xf32> to vector<64x32xf32>
    %217 = arith.mulf %215, %216 : vector<64x32xf32>
    %218 = vector.broadcast %199 : vector<1x32xf32> to vector<64x32xf32>
    %219 = arith.addf %217, %218 : vector<64x32xf32>
    %cst_111 = arith.constant 0.000000e+00 : f32
    %220 = vector.broadcast %cst_111 : f32 to vector<64x32xf32>
    %221 = arith.maximumf %219, %220 : vector<64x32xf32>
    %222 = arith.truncf %221 : vector<64x32xf32> to vector<64x32xbf16>
    %c0_112 = arith.constant 0 : index
    %c0_113 = arith.constant 0 : index
    %c0_114 = arith.constant 0 : index
    %223 = vector.load %arg15[%c0_112, %c0_113, %c0_114] : memref<2x32x32xbf16, #tpu.memory_space<vmem>>, vector<1x32x32xbf16>
    %224 = vector.shape_cast %223 : vector<1x32x32xbf16> to vector<32x32xbf16>
    %cst_115 = arith.constant dense<0.000000e+00> : vector<64x32xf32>
    %225 = tpu.matmul %222, %224, %cst_115 {dimension_numbers = #tpu.dot_dimension_numbers<[1], [0], [0], [1], [0, 0, 1, 1], [], []>} : vector<64x32xbf16>, vector<32x32xbf16>, vector<64x32xf32> -> vector<64x32xf32>
    %c1_116 = arith.constant 1 : index
    %c0_117 = arith.constant 0 : index
    %226 = vector.load %arg16[%c1_116, %c0_117] : memref<3x32xf32, #tpu.memory_space<vmem>>, vector<1x32xf32>
    %227 = vector.broadcast %226 : vector<1x32xf32> to vector<64x32xf32>
    %228 = arith.addf %225, %227 : vector<64x32xf32>
    %c1_118 = arith.constant 1 : index
    %c0_119 = arith.constant 0 : index
    %229 = vector.load %arg17[%c1_118, %c0_119] : memref<3x32xf32, #tpu.memory_space<vmem>>, vector<1x32xf32>
    %c1_120 = arith.constant 1 : index
    %c0_121 = arith.constant 0 : index
    %230 = vector.load %arg18[%c1_120, %c0_121] : memref<3x32xf32, #tpu.memory_space<vmem>>, vector<1x32xf32>
    %cst_122 = arith.constant dense<0.000000e+00> : vector<64xf32>
    %231 = vector.multi_reduction <add>, %228, %cst_122 [1] : vector<64x32xf32> to vector<64xf32>
    %232 = vector.shape_cast %231 : vector<64xf32> to vector<64x1xf32>
    %cst_123 = arith.constant 3.200000e+01 : f32
    %233 = vector.broadcast %cst_123 : f32 to vector<64x1xf32>
    %234 = arith.divf %232, %233 : vector<64x1xf32>
    %235 = vector.broadcast %234 : vector<64x1xf32> to vector<64x32xf32>
    %236 = arith.subf %228, %235 : vector<64x32xf32>
    %237 = arith.mulf %236, %236 : vector<64x32xf32>
    %cst_124 = arith.constant dense<0.000000e+00> : vector<64xf32>
    %238 = vector.multi_reduction <add>, %237, %cst_124 [1] : vector<64x32xf32> to vector<64xf32>
    %239 = vector.shape_cast %238 : vector<64xf32> to vector<64x1xf32>
    %cst_125 = arith.constant 3.200000e+01 : f32
    %240 = vector.broadcast %cst_125 : f32 to vector<64x1xf32>
    %241 = arith.divf %239, %240 : vector<64x1xf32>
    %cst_126 = arith.constant 9.99999974E-6 : f32
    %242 = vector.broadcast %cst_126 : f32 to vector<64x1xf32>
    %243 = arith.addf %241, %242 : vector<64x1xf32>
    %244 = math.rsqrt %243 : vector<64x1xf32>
    %245 = vector.broadcast %244 : vector<64x1xf32> to vector<64x32xf32>
    %246 = arith.mulf %236, %245 : vector<64x32xf32>
    %247 = vector.broadcast %229 : vector<1x32xf32> to vector<64x32xf32>
    %248 = arith.mulf %246, %247 : vector<64x32xf32>
    %249 = vector.broadcast %230 : vector<1x32xf32> to vector<64x32xf32>
    %250 = arith.addf %248, %249 : vector<64x32xf32>
    %cst_127 = arith.constant 0.000000e+00 : f32
    %251 = vector.broadcast %cst_127 : f32 to vector<64x32xf32>
    %252 = arith.maximumf %250, %251 : vector<64x32xf32>
    %253 = arith.truncf %252 : vector<64x32xf32> to vector<64x32xbf16>
    %c1_128 = arith.constant 1 : index
    %c0_129 = arith.constant 0 : index
    %c0_130 = arith.constant 0 : index
    %254 = vector.load %arg15[%c1_128, %c0_129, %c0_130] : memref<2x32x32xbf16, #tpu.memory_space<vmem>>, vector<1x32x32xbf16>
    %255 = vector.shape_cast %254 : vector<1x32x32xbf16> to vector<32x32xbf16>
    %cst_131 = arith.constant dense<0.000000e+00> : vector<64x32xf32>
    %256 = tpu.matmul %253, %255, %cst_131 {dimension_numbers = #tpu.dot_dimension_numbers<[1], [0], [0], [1], [0, 0, 1, 1], [], []>} : vector<64x32xbf16>, vector<32x32xbf16>, vector<64x32xf32> -> vector<64x32xf32>
    %c2_132 = arith.constant 2 : index
    %c0_133 = arith.constant 0 : index
    %257 = vector.load %arg16[%c2_132, %c0_133] : memref<3x32xf32, #tpu.memory_space<vmem>>, vector<1x32xf32>
    %258 = vector.broadcast %257 : vector<1x32xf32> to vector<64x32xf32>
    %259 = arith.addf %256, %258 : vector<64x32xf32>
    %c2_134 = arith.constant 2 : index
    %c0_135 = arith.constant 0 : index
    %260 = vector.load %arg17[%c2_134, %c0_135] : memref<3x32xf32, #tpu.memory_space<vmem>>, vector<1x32xf32>
    %c2_136 = arith.constant 2 : index
    %c0_137 = arith.constant 0 : index
    %261 = vector.load %arg18[%c2_136, %c0_137] : memref<3x32xf32, #tpu.memory_space<vmem>>, vector<1x32xf32>
    %cst_138 = arith.constant dense<0.000000e+00> : vector<64xf32>
    %262 = vector.multi_reduction <add>, %259, %cst_138 [1] : vector<64x32xf32> to vector<64xf32>
    %263 = vector.shape_cast %262 : vector<64xf32> to vector<64x1xf32>
    %cst_139 = arith.constant 3.200000e+01 : f32
    %264 = vector.broadcast %cst_139 : f32 to vector<64x1xf32>
    %265 = arith.divf %263, %264 : vector<64x1xf32>
    %266 = vector.broadcast %265 : vector<64x1xf32> to vector<64x32xf32>
    %267 = arith.subf %259, %266 : vector<64x32xf32>
    %268 = arith.mulf %267, %267 : vector<64x32xf32>
    %cst_140 = arith.constant dense<0.000000e+00> : vector<64xf32>
    %269 = vector.multi_reduction <add>, %268, %cst_140 [1] : vector<64x32xf32> to vector<64xf32>
    %270 = vector.shape_cast %269 : vector<64xf32> to vector<64x1xf32>
    %cst_141 = arith.constant 3.200000e+01 : f32
    %271 = vector.broadcast %cst_141 : f32 to vector<64x1xf32>
    %272 = arith.divf %270, %271 : vector<64x1xf32>
    %cst_142 = arith.constant 9.99999974E-6 : f32
    %273 = vector.broadcast %cst_142 : f32 to vector<64x1xf32>
    %274 = arith.addf %272, %273 : vector<64x1xf32>
    %275 = math.rsqrt %274 : vector<64x1xf32>
    %276 = vector.broadcast %275 : vector<64x1xf32> to vector<64x32xf32>
    %277 = arith.mulf %267, %276 : vector<64x32xf32>
    %278 = vector.broadcast %260 : vector<1x32xf32> to vector<64x32xf32>
    %279 = arith.mulf %277, %278 : vector<64x32xf32>
    %280 = vector.broadcast %261 : vector<1x32xf32> to vector<64x32xf32>
    %281 = arith.addf %279, %280 : vector<64x32xf32>
    %cst_143 = arith.constant 0.000000e+00 : f32
    %282 = vector.broadcast %cst_143 : f32 to vector<64x32xf32>
    %283 = arith.maximumf %281, %282 : vector<64x32xf32>
    %284 = arith.truncf %283 : vector<64x32xf32> to vector<64x32xbf16>
    %285 = arith.truncf %94 : vector<64x32xf32> to vector<64x32xbf16>
    %286 = arith.truncf %189 : vector<64x32xf32> to vector<64x32xbf16>
    %c0_144 = arith.constant 0 : index
    %c0_145 = arith.constant 0 : index
    %c0_146 = arith.constant 0 : index
    %c0_147 = arith.constant 0 : index
    %287 = vector.load %arg24[%c0_144, %c0_145, %c0_146, %c0_147] : memref<3x3x32x32xbf16, #tpu.memory_space<vmem>>, vector<1x1x32x32xbf16>
    %288 = vector.shape_cast %287 : vector<1x1x32x32xbf16> to vector<32x32xbf16>
    %cst_148 = arith.constant dense<0.000000e+00> : vector<64x32xf32>
    %289 = tpu.matmul %284, %288, %cst_148 {dimension_numbers = #tpu.dot_dimension_numbers<[1], [0], [0], [1], [0, 0, 1, 1], [], []>} : vector<64x32xbf16>, vector<32x32xbf16>, vector<64x32xf32> -> vector<64x32xf32>
    %c1_149 = arith.constant 1 : index
    %c0_150 = arith.constant 0 : index
    %c0_151 = arith.constant 0 : index
    %c0_152 = arith.constant 0 : index
    %290 = vector.load %arg24[%c1_149, %c0_150, %c0_151, %c0_152] : memref<3x3x32x32xbf16, #tpu.memory_space<vmem>>, vector<1x1x32x32xbf16>
    %291 = vector.shape_cast %290 : vector<1x1x32x32xbf16> to vector<32x32xbf16>
    %cst_153 = arith.constant dense<0.000000e+00> : vector<64x32xf32>
    %292 = tpu.matmul %285, %291, %cst_153 {dimension_numbers = #tpu.dot_dimension_numbers<[1], [0], [0], [1], [0, 0, 1, 1], [], []>} : vector<64x32xbf16>, vector<32x32xbf16>, vector<64x32xf32> -> vector<64x32xf32>
    %293 = arith.addf %289, %292 : vector<64x32xf32>
    %c2_154 = arith.constant 2 : index
    %c0_155 = arith.constant 0 : index
    %c0_156 = arith.constant 0 : index
    %c0_157 = arith.constant 0 : index
    %294 = vector.load %arg24[%c2_154, %c0_155, %c0_156, %c0_157] : memref<3x3x32x32xbf16, #tpu.memory_space<vmem>>, vector<1x1x32x32xbf16>
    %295 = vector.shape_cast %294 : vector<1x1x32x32xbf16> to vector<32x32xbf16>
    %cst_158 = arith.constant dense<0.000000e+00> : vector<64x32xf32>
    %296 = tpu.matmul %286, %295, %cst_158 {dimension_numbers = #tpu.dot_dimension_numbers<[1], [0], [0], [1], [0, 0, 1, 1], [], []>} : vector<64x32xbf16>, vector<32x32xbf16>, vector<64x32xf32> -> vector<64x32xf32>
    %297 = arith.addf %293, %296 : vector<64x32xf32>
    %c0_159 = arith.constant 0 : index
    %c0_160 = arith.constant 0 : index
    %c0_161 = arith.constant 0 : index
    %298 = vector.load %arg26[%c0_159, %c0_160, %c0_161] : memref<3x1x32xf32, #tpu.memory_space<vmem>>, vector<1x1x32xf32>
    %299 = vector.shape_cast %298 : vector<1x1x32xf32> to vector<1x32xf32>
    %300 = vector.broadcast %299 : vector<1x32xf32> to vector<64x32xf32>
    %301 = arith.addf %297, %300 : vector<64x32xf32>
    %302 = vector.shape_cast %301 : vector<64x32xf32> to vector<8x8x32xf32>
    %c0_162 = arith.constant 0 : index
    %c0_163 = arith.constant 0 : index
    %c0_164 = arith.constant 0 : index
    %c0_165 = arith.constant 0 : index
    %303 = vector.load %arg31[%c0_162, %c0_163, %c0_164, %c0_165] : memref<3x8x8x32xf32, #tpu.memory_space<vmem>>, vector<1x8x8x32xf32>
    %304 = vector.shape_cast %303 : vector<1x8x8x32xf32> to vector<8x8x32xf32>
    %305 = vector.shape_cast %302 : vector<8x8x32xf32> to vector<1x8x8x32xf32>
    tpu.vector_store %arg31[%c0_162, %c0_163, %c0_164, %c0_165], %305 {strides = array<i32>} : memref<3x8x8x32xf32, #tpu.memory_space<vmem>>, vector<1x8x8x32xf32>,
    %c0_166 = arith.constant 0 : index
    %c1_167 = arith.constant 1 : index
    %c0_168 = arith.constant 0 : index
    %c0_169 = arith.constant 0 : index
    %306 = vector.load %arg24[%c0_166, %c1_167, %c0_168, %c0_169] : memref<3x3x32x32xbf16, #tpu.memory_space<vmem>>, vector<1x1x32x32xbf16>
    %307 = vector.shape_cast %306 : vector<1x1x32x32xbf16> to vector<32x32xbf16>
    %cst_170 = arith.constant dense<0.000000e+00> : vector<64x32xf32>
    %308 = tpu.matmul %284, %307, %cst_170 {dimension_numbers = #tpu.dot_dimension_numbers<[1], [0], [0], [1], [0, 0, 1, 1], [], []>} : vector<64x32xbf16>, vector<32x32xbf16>, vector<64x32xf32> -> vector<64x32xf32>
    %c1_171 = arith.constant 1 : index
    %c1_172 = arith.constant 1 : index
    %c0_173 = arith.constant 0 : index
    %c0_174 = arith.constant 0 : index
    %309 = vector.load %arg24[%c1_171, %c1_172, %c0_173, %c0_174] : memref<3x3x32x32xbf16, #tpu.memory_space<vmem>>, vector<1x1x32x32xbf16>
    %310 = vector.shape_cast %309 : vector<1x1x32x32xbf16> to vector<32x32xbf16>
    %cst_175 = arith.constant dense<0.000000e+00> : vector<64x32xf32>
    %311 = tpu.matmul %285, %310, %cst_175 {dimension_numbers = #tpu.dot_dimension_numbers<[1], [0], [0], [1], [0, 0, 1, 1], [], []>} : vector<64x32xbf16>, vector<32x32xbf16>, vector<64x32xf32> -> vector<64x32xf32>
    %312 = arith.addf %308, %311 : vector<64x32xf32>
    %c2_176 = arith.constant 2 : index
    %c1_177 = arith.constant 1 : index
    %c0_178 = arith.constant 0 : index
    %c0_179 = arith.constant 0 : index
    %313 = vector.load %arg24[%c2_176, %c1_177, %c0_178, %c0_179] : memref<3x3x32x32xbf16, #tpu.memory_space<vmem>>, vector<1x1x32x32xbf16>
    %314 = vector.shape_cast %313 : vector<1x1x32x32xbf16> to vector<32x32xbf16>
    %cst_180 = arith.constant dense<0.000000e+00> : vector<64x32xf32>
    %315 = tpu.matmul %286, %314, %cst_180 {dimension_numbers = #tpu.dot_dimension_numbers<[1], [0], [0], [1], [0, 0, 1, 1], [], []>} : vector<64x32xbf16>, vector<32x32xbf16>, vector<64x32xf32> -> vector<64x32xf32>
    %316 = arith.addf %312, %315 : vector<64x32xf32>
    %c1_181 = arith.constant 1 : index
    %c0_182 = arith.constant 0 : index
    %c0_183 = arith.constant 0 : index
    %317 = vector.load %arg26[%c1_181, %c0_182, %c0_183] : memref<3x1x32xf32, #tpu.memory_space<vmem>>, vector<1x1x32xf32>
    %318 = vector.shape_cast %317 : vector<1x1x32xf32> to vector<1x32xf32>
    %319 = vector.broadcast %318 : vector<1x32xf32> to vector<64x32xf32>
    %320 = arith.addf %316, %319 : vector<64x32xf32>
    %321 = vector.shape_cast %320 : vector<64x32xf32> to vector<8x8x32xf32>
    %c1_184 = arith.constant 1 : index
    %c0_185 = arith.constant 0 : index
    %c0_186 = arith.constant 0 : index
    %c0_187 = arith.constant 0 : index
    %322 = vector.load %arg31[%c1_184, %c0_185, %c0_186, %c0_187] : memref<3x8x8x32xf32, #tpu.memory_space<vmem>>, vector<1x8x8x32xf32>
    %323 = vector.shape_cast %322 : vector<1x8x8x32xf32> to vector<8x8x32xf32>
    %324 = vector.shape_cast %321 : vector<8x8x32xf32> to vector<1x8x8x32xf32>
    tpu.vector_store %arg31[%c1_184, %c0_185, %c0_186, %c0_187], %324 {strides = array<i32>} : memref<3x8x8x32xf32, #tpu.memory_space<vmem>>, vector<1x8x8x32xf32>,
    %c0_188 = arith.constant 0 : index
    %c2_189 = arith.constant 2 : index
    %c0_190 = arith.constant 0 : index
    %c0_191 = arith.constant 0 : index
    %325 = vector.load %arg24[%c0_188, %c2_189, %c0_190, %c0_191] : memref<3x3x32x32xbf16, #tpu.memory_space<vmem>>, vector<1x1x32x32xbf16>
    %326 = vector.shape_cast %325 : vector<1x1x32x32xbf16> to vector<32x32xbf16>
    %cst_192 = arith.constant dense<0.000000e+00> : vector<64x32xf32>
    %327 = tpu.matmul %284, %326, %cst_192 {dimension_numbers = #tpu.dot_dimension_numbers<[1], [0], [0], [1], [0, 0, 1, 1], [], []>} : vector<64x32xbf16>, vector<32x32xbf16>, vector<64x32xf32> -> vector<64x32xf32>
    %c1_193 = arith.constant 1 : index
    %c2_194 = arith.constant 2 : index
    %c0_195 = arith.constant 0 : index
    %c0_196 = arith.constant 0 : index
    %328 = vector.load %arg24[%c1_193, %c2_194, %c0_195, %c0_196] : memref<3x3x32x32xbf16, #tpu.memory_space<vmem>>, vector<1x1x32x32xbf16>
    %329 = vector.shape_cast %328 : vector<1x1x32x32xbf16> to vector<32x32xbf16>
    %cst_197 = arith.constant dense<0.000000e+00> : vector<64x32xf32>
    %330 = tpu.matmul %285, %329, %cst_197 {dimension_numbers = #tpu.dot_dimension_numbers<[1], [0], [0], [1], [0, 0, 1, 1], [], []>} : vector<64x32xbf16>, vector<32x32xbf16>, vector<64x32xf32> -> vector<64x32xf32>
    %331 = arith.addf %327, %330 : vector<64x32xf32>
    %c2_198 = arith.constant 2 : index
    %c2_199 = arith.constant 2 : index
    %c0_200 = arith.constant 0 : index
    %c0_201 = arith.constant 0 : index
    %332 = vector.load %arg24[%c2_198, %c2_199, %c0_200, %c0_201] : memref<3x3x32x32xbf16, #tpu.memory_space<vmem>>, vector<1x1x32x32xbf16>
    %333 = vector.shape_cast %332 : vector<1x1x32x32xbf16> to vector<32x32xbf16>
    %cst_202 = arith.constant dense<0.000000e+00> : vector<64x32xf32>
    %334 = tpu.matmul %286, %333, %cst_202 {dimension_numbers = #tpu.dot_dimension_numbers<[1], [0], [0], [1], [0, 0, 1, 1], [], []>} : vector<64x32xbf16>, vector<32x32xbf16>, vector<64x32xf32> -> vector<64x32xf32>
    %335 = arith.addf %331, %334 : vector<64x32xf32>
    %c2_203 = arith.constant 2 : index
    %c0_204 = arith.constant 0 : index
    %c0_205 = arith.constant 0 : index
    %336 = vector.load %arg26[%c2_203, %c0_204, %c0_205] : memref<3x1x32xf32, #tpu.memory_space<vmem>>, vector<1x1x32xf32>
    %337 = vector.shape_cast %336 : vector<1x1x32xf32> to vector<1x32xf32>
    %338 = vector.broadcast %337 : vector<1x32xf32> to vector<64x32xf32>
    %339 = arith.addf %335, %338 : vector<64x32xf32>
    %340 = vector.shape_cast %339 : vector<64x32xf32> to vector<8x8x32xf32>
    %c2_206 = arith.constant 2 : index
    %c0_207 = arith.constant 0 : index
    %c0_208 = arith.constant 0 : index
    %c0_209 = arith.constant 0 : index
    %341 = vector.load %arg31[%c2_206, %c0_207, %c0_208, %c0_209] : memref<3x8x8x32xf32, #tpu.memory_space<vmem>>, vector<1x8x8x32xf32>
    %342 = vector.shape_cast %341 : vector<1x8x8x32xf32> to vector<8x8x32xf32>
    %343 = vector.shape_cast %340 : vector<8x8x32xf32> to vector<1x8x8x32xf32>
    tpu.vector_store %arg31[%c2_206, %c0_207, %c0_208, %c0_209], %343 {strides = array<i32>} : memref<3x8x8x32xf32, #tpu.memory_space<vmem>>, vector<1x8x8x32xf32>,
    %c0_210 = arith.constant 0 : index
    %c0_211 = arith.constant 0 : index
    %c0_212 = arith.constant 0 : index
    %344 = vector.load %arg25[%c0_210, %c0_211, %c0_212] : memref<3x32x32xbf16, #tpu.memory_space<vmem>>, vector<1x32x32xbf16>
    %345 = vector.shape_cast %344 : vector<1x32x32xbf16> to vector<32x32xbf16>
    %c1_213 = arith.constant 1 : index
    %c0_214 = arith.constant 0 : index
    %c0_215 = arith.constant 0 : index
    %346 = vector.load %arg25[%c1_213, %c0_214, %c0_215] : memref<3x32x32xbf16, #tpu.memory_space<vmem>>, vector<1x32x32xbf16>
    %347 = vector.shape_cast %346 : vector<1x32x32xbf16> to vector<32x32xbf16>
    %c2_216 = arith.constant 2 : index
    %c0_217 = arith.constant 0 : index
    %c0_218 = arith.constant 0 : index
    %348 = vector.load %arg25[%c2_216, %c0_217, %c0_218] : memref<3x32x32xbf16, #tpu.memory_space<vmem>>, vector<1x32x32xbf16>
    %349 = vector.shape_cast %348 : vector<1x32x32xbf16> to vector<32x32xbf16>
    %c0_219 = arith.constant 0 : index
    %c0_220 = arith.constant 0 : index
    %c0_221 = arith.constant 0 : index
    %350 = vector.load %arg27[%c0_219, %c0_220, %c0_221] : memref<3x1x32xf32, #tpu.memory_space<vmem>>, vector<1x1x32xf32>
    %351 = vector.shape_cast %350 : vector<1x1x32xf32> to vector<1x32xf32>
    %c1_222 = arith.constant 1 : index
    %c0_223 = arith.constant 0 : index
    %c0_224 = arith.constant 0 : index
    %352 = vector.load %arg27[%c1_222, %c0_223, %c0_224] : memref<3x1x32xf32, #tpu.memory_space<vmem>>, vector<1x1x32xf32>
    %353 = vector.shape_cast %352 : vector<1x1x32xf32> to vector<1x32xf32>
    %c2_225 = arith.constant 2 : index
    %c0_226 = arith.constant 0 : index
    %c0_227 = arith.constant 0 : index
    %354 = vector.load %arg27[%c2_225, %c0_226, %c0_227] : memref<3x1x32xf32, #tpu.memory_space<vmem>>, vector<1x1x32xf32>
    %355 = vector.shape_cast %354 : vector<1x1x32xf32> to vector<1x32xf32>
    %cst_228 = arith.constant 0.000000e+00 : f32
    %356 = vector.broadcast %cst_228 : f32 to vector<8x32xf32>
    %c0_i32 = arith.constant 0 : i32
    %357 = arith.truncf %356 : vector<8x32xf32> to vector<8x32xbf16>
    %cst_229 = arith.constant dense<0.000000e+00> : vector<8x32xf32>
    %358 = tpu.matmul %357, %345, %cst_229 {dimension_numbers = #tpu.dot_dimension_numbers<[1], [0], [0], [1], [0, 0, 1, 1], [], []>} : vector<8x32xbf16>, vector<32x32xbf16>, vector<8x32xf32> -> vector<8x32xf32>
    %359 = vector.broadcast %351 : vector<1x32xf32> to vector<8x32xf32>
    %360 = arith.addf %358, %359 : vector<8x32xf32>
    %cst_230 = arith.constant dense<0.000000e+00> : vector<8x32xf32>
    %361 = tpu.matmul %357, %347, %cst_230 {dimension_numbers = #tpu.dot_dimension_numbers<[1], [0], [0], [1], [0, 0, 1, 1], [], []>} : vector<8x32xbf16>, vector<32x32xbf16>, vector<8x32xf32> -> vector<8x32xf32>
    %362 = vector.broadcast %353 : vector<1x32xf32> to vector<8x32xf32>
    %363 = arith.addf %361, %362 : vector<8x32xf32>
    %cst_231 = arith.constant dense<0.000000e+00> : vector<8x32xf32>
    %364 = tpu.matmul %357, %349, %cst_231 {dimension_numbers = #tpu.dot_dimension_numbers<[1], [0], [0], [1], [0, 0, 1, 1], [], []>} : vector<8x32xbf16>, vector<32x32xbf16>, vector<8x32xf32> -> vector<8x32xf32>
    %365 = vector.broadcast %355 : vector<1x32xf32> to vector<8x32xf32>
    %366 = arith.addf %364, %365 : vector<8x32xf32>
    %c0_232 = arith.constant 0 : index
    %367 = arith.index_cast %c0_i32 : i32 to index
    %c0_233 = arith.constant 0 : index
    %c0_234 = arith.constant 0 : index
    %368 = vector.load %arg31[%c0_232, %367, %c0_233, %c0_234] : memref<3x8x8x32xf32, #tpu.memory_space<vmem>>, vector<1x1x8x32xf32>
    %369 = vector.shape_cast %368 : vector<1x1x8x32xf32> to vector<8x32xf32>
    %370 = arith.addf %369, %360 : vector<8x32xf32>
    %371 = arith.negf %370 : vector<8x32xf32>
    %372 = math.exp %371 : vector<8x32xf32>
    %cst_235 = arith.constant 1.000000e+00 : f32
    %373 = vector.broadcast %cst_235 : f32 to vector<8x32xf32>
    %374 = arith.addf %373, %372 : vector<8x32xf32>
    %375 = arith.divf %373, %374 : vector<8x32xf32>
    %c1_236 = arith.constant 1 : index
    %376 = arith.index_cast %c0_i32 : i32 to index
    %c0_237 = arith.constant 0 : index
    %c0_238 = arith.constant 0 : index
    %377 = vector.load %arg31[%c1_236, %376, %c0_237, %c0_238] : memref<3x8x8x32xf32, #tpu.memory_space<vmem>>, vector<1x1x8x32xf32>
    %378 = vector.shape_cast %377 : vector<1x1x8x32xf32> to vector<8x32xf32>
    %379 = arith.addf %378, %363 : vector<8x32xf32>
    %380 = arith.negf %379 : vector<8x32xf32>
    %381 = math.exp %380 : vector<8x32xf32>
    %cst_239 = arith.constant 1.000000e+00 : f32
    %382 = vector.broadcast %cst_239 : f32 to vector<8x32xf32>
    %383 = arith.addf %382, %381 : vector<8x32xf32>
    %384 = arith.divf %382, %383 : vector<8x32xf32>
    %c2_240 = arith.constant 2 : index
    %385 = arith.index_cast %c0_i32 : i32 to index
    %c0_241 = arith.constant 0 : index
    %c0_242 = arith.constant 0 : index
    %386 = vector.load %arg31[%c2_240, %385, %c0_241, %c0_242] : memref<3x8x8x32xf32, #tpu.memory_space<vmem>>, vector<1x1x8x32xf32>
    %387 = vector.shape_cast %386 : vector<1x1x8x32xf32> to vector<8x32xf32>
    %388 = arith.mulf %375, %366 : vector<8x32xf32>
    %389 = arith.addf %387, %388 : vector<8x32xf32>
    %390 = math.tanh %389 : vector<8x32xf32>
    %cst_243 = arith.constant 1.000000e+00 : f32
    %391 = vector.broadcast %cst_243 : f32 to vector<8x32xf32>
    %392 = arith.subf %391, %384 : vector<8x32xf32>
    %393 = arith.mulf %392, %390 : vector<8x32xf32>
    %394 = arith.mulf %384, %356 : vector<8x32xf32>
    %395 = arith.addf %393, %394 : vector<8x32xf32>
    %396 = arith.index_cast %c0_i32 : i32 to index
    %c0_244 = arith.constant 0 : index
    %c0_245 = arith.constant 0 : index
    %397 = vector.load %arg32[%396, %c0_244, %c0_245] : memref<8x8x32xf32, #tpu.memory_space<vmem>>, vector<1x8x32xf32>
    %398 = vector.shape_cast %397 : vector<1x8x32xf32> to vector<8x32xf32>
    %399 = vector.shape_cast %395 : vector<8x32xf32> to vector<1x8x32xf32>
    tpu.vector_store %arg32[%396, %c0_244, %c0_245], %399 {strides = array<i32>} : memref<8x8x32xf32, #tpu.memory_space<vmem>>, vector<1x8x32xf32>,
    %c1_i32 = arith.constant 1 : i32
    %400 = arith.truncf %395 : vector<8x32xf32> to vector<8x32xbf16>
    %cst_246 = arith.constant dense<0.000000e+00> : vector<8x32xf32>
    %401 = tpu.matmul %400, %345, %cst_246 {dimension_numbers = #tpu.dot_dimension_numbers<[1], [0], [0], [1], [0, 0, 1, 1], [], []>} : vector<8x32xbf16>, vector<32x32xbf16>, vector<8x32xf32> -> vector<8x32xf32>
    %402 = vector.broadcast %351 : vector<1x32xf32> to vector<8x32xf32>
    %403 = arith.addf %401, %402 : vector<8x32xf32>
    %cst_247 = arith.constant dense<0.000000e+00> : vector<8x32xf32>
    %404 = tpu.matmul %400, %347, %cst_247 {dimension_numbers = #tpu.dot_dimension_numbers<[1], [0], [0], [1], [0, 0, 1, 1], [], []>} : vector<8x32xbf16>, vector<32x32xbf16>, vector<8x32xf32> -> vector<8x32xf32>
    %405 = vector.broadcast %353 : vector<1x32xf32> to vector<8x32xf32>
    %406 = arith.addf %404, %405 : vector<8x32xf32>
    %cst_248 = arith.constant dense<0.000000e+00> : vector<8x32xf32>
    %407 = tpu.matmul %400, %349, %cst_248 {dimension_numbers = #tpu.dot_dimension_numbers<[1], [0], [0], [1], [0, 0, 1, 1], [], []>} : vector<8x32xbf16>, vector<32x32xbf16>, vector<8x32xf32> -> vector<8x32xf32>
    %408 = vector.broadcast %355 : vector<1x32xf32> to vector<8x32xf32>
    %409 = arith.addf %407, %408 : vector<8x32xf32>
    %c0_249 = arith.constant 0 : index
    %410 = arith.index_cast %c1_i32 : i32 to index
    %c0_250 = arith.constant 0 : index
    %c0_251 = arith.constant 0 : index
    %411 = vector.load %arg31[%c0_249, %410, %c0_250, %c0_251] : memref<3x8x8x32xf32, #tpu.memory_space<vmem>>, vector<1x1x8x32xf32>
    %412 = vector.shape_cast %411 : vector<1x1x8x32xf32> to vector<8x32xf32>
    %413 = arith.addf %412, %403 : vector<8x32xf32>
    %414 = arith.negf %413 : vector<8x32xf32>
    %415 = math.exp %414 : vector<8x32xf32>
    %cst_252 = arith.constant 1.000000e+00 : f32
    %416 = vector.broadcast %cst_252 : f32 to vector<8x32xf32>
    %417 = arith.addf %416, %415 : vector<8x32xf32>
    %418 = arith.divf %416, %417 : vector<8x32xf32>
    %c1_253 = arith.constant 1 : index
    %419 = arith.index_cast %c1_i32 : i32 to index
    %c0_254 = arith.constant 0 : index
    %c0_255 = arith.constant 0 : index
    %420 = vector.load %arg31[%c1_253, %419, %c0_254, %c0_255] : memref<3x8x8x32xf32, #tpu.memory_space<vmem>>, vector<1x1x8x32xf32>
    %421 = vector.shape_cast %420 : vector<1x1x8x32xf32> to vector<8x32xf32>
    %422 = arith.addf %421, %406 : vector<8x32xf32>
    %423 = arith.negf %422 : vector<8x32xf32>
    %424 = math.exp %423 : vector<8x32xf32>
    %cst_256 = arith.constant 1.000000e+00 : f32
    %425 = vector.broadcast %cst_256 : f32 to vector<8x32xf32>
    %426 = arith.addf %425, %424 : vector<8x32xf32>
    %427 = arith.divf %425, %426 : vector<8x32xf32>
    %c2_257 = arith.constant 2 : index
    %428 = arith.index_cast %c1_i32 : i32 to index
    %c0_258 = arith.constant 0 : index
    %c0_259 = arith.constant 0 : index
    %429 = vector.load %arg31[%c2_257, %428, %c0_258, %c0_259] : memref<3x8x8x32xf32, #tpu.memory_space<vmem>>, vector<1x1x8x32xf32>
    %430 = vector.shape_cast %429 : vector<1x1x8x32xf32> to vector<8x32xf32>
    %431 = arith.mulf %418, %409 : vector<8x32xf32>
    %432 = arith.addf %430, %431 : vector<8x32xf32>
    %433 = math.tanh %432 : vector<8x32xf32>
    %cst_260 = arith.constant 1.000000e+00 : f32
    %434 = vector.broadcast %cst_260 : f32 to vector<8x32xf32>
    %435 = arith.subf %434, %427 : vector<8x32xf32>
    %436 = arith.mulf %435, %433 : vector<8x32xf32>
    %437 = arith.mulf %427, %395 : vector<8x32xf32>
    %438 = arith.addf %436, %437 : vector<8x32xf32>
    %439 = arith.index_cast %c1_i32 : i32 to index
    %c0_261 = arith.constant 0 : index
    %c0_262 = arith.constant 0 : index
    %440 = vector.load %arg32[%439, %c0_261, %c0_262] : memref<8x8x32xf32, #tpu.memory_space<vmem>>, vector<1x8x32xf32>
    %441 = vector.shape_cast %440 : vector<1x8x32xf32> to vector<8x32xf32>
    %442 = vector.shape_cast %438 : vector<8x32xf32> to vector<1x8x32xf32>
    tpu.vector_store %arg32[%439, %c0_261, %c0_262], %442 {strides = array<i32>} : memref<8x8x32xf32, #tpu.memory_space<vmem>>, vector<1x8x32xf32>,
    %c2_i32 = arith.constant 2 : i32
    %443 = arith.truncf %438 : vector<8x32xf32> to vector<8x32xbf16>
    %cst_263 = arith.constant dense<0.000000e+00> : vector<8x32xf32>
    %444 = tpu.matmul %443, %345, %cst_263 {dimension_numbers = #tpu.dot_dimension_numbers<[1], [0], [0], [1], [0, 0, 1, 1], [], []>} : vector<8x32xbf16>, vector<32x32xbf16>, vector<8x32xf32> -> vector<8x32xf32>
    %445 = vector.broadcast %351 : vector<1x32xf32> to vector<8x32xf32>
    %446 = arith.addf %444, %445 : vector<8x32xf32>
    %cst_264 = arith.constant dense<0.000000e+00> : vector<8x32xf32>
    %447 = tpu.matmul %443, %347, %cst_264 {dimension_numbers = #tpu.dot_dimension_numbers<[1], [0], [0], [1], [0, 0, 1, 1], [], []>} : vector<8x32xbf16>, vector<32x32xbf16>, vector<8x32xf32> -> vector<8x32xf32>
    %448 = vector.broadcast %353 : vector<1x32xf32> to vector<8x32xf32>
    %449 = arith.addf %447, %448 : vector<8x32xf32>
    %cst_265 = arith.constant dense<0.000000e+00> : vector<8x32xf32>
    %450 = tpu.matmul %443, %349, %cst_265 {dimension_numbers = #tpu.dot_dimension_numbers<[1], [0], [0], [1], [0, 0, 1, 1], [], []>} : vector<8x32xbf16>, vector<32x32xbf16>, vector<8x32xf32> -> vector<8x32xf32>
    %451 = vector.broadcast %355 : vector<1x32xf32> to vector<8x32xf32>
    %452 = arith.addf %450, %451 : vector<8x32xf32>
    %c0_266 = arith.constant 0 : index
    %453 = arith.index_cast %c2_i32 : i32 to index
    %c0_267 = arith.constant 0 : index
    %c0_268 = arith.constant 0 : index
    %454 = vector.load %arg31[%c0_266, %453, %c0_267, %c0_268] : memref<3x8x8x32xf32, #tpu.memory_space<vmem>>, vector<1x1x8x32xf32>
    %455 = vector.shape_cast %454 : vector<1x1x8x32xf32> to vector<8x32xf32>
    %456 = arith.addf %455, %446 : vector<8x32xf32>
    %457 = arith.negf %456 : vector<8x32xf32>
    %458 = math.exp %457 : vector<8x32xf32>
    %cst_269 = arith.constant 1.000000e+00 : f32
    %459 = vector.broadcast %cst_269 : f32 to vector<8x32xf32>
    %460 = arith.addf %459, %458 : vector<8x32xf32>
    %461 = arith.divf %459, %460 : vector<8x32xf32>
    %c1_270 = arith.constant 1 : index
    %462 = arith.index_cast %c2_i32 : i32 to index
    %c0_271 = arith.constant 0 : index
    %c0_272 = arith.constant 0 : index
    %463 = vector.load %arg31[%c1_270, %462, %c0_271, %c0_272] : memref<3x8x8x32xf32, #tpu.memory_space<vmem>>, vector<1x1x8x32xf32>
    %464 = vector.shape_cast %463 : vector<1x1x8x32xf32> to vector<8x32xf32>
    %465 = arith.addf %464, %449 : vector<8x32xf32>
    %466 = arith.negf %465 : vector<8x32xf32>
    %467 = math.exp %466 : vector<8x32xf32>
    %cst_273 = arith.constant 1.000000e+00 : f32
    %468 = vector.broadcast %cst_273 : f32 to vector<8x32xf32>
    %469 = arith.addf %468, %467 : vector<8x32xf32>
    %470 = arith.divf %468, %469 : vector<8x32xf32>
    %c2_274 = arith.constant 2 : index
    %471 = arith.index_cast %c2_i32 : i32 to index
    %c0_275 = arith.constant 0 : index
    %c0_276 = arith.constant 0 : index
    %472 = vector.load %arg31[%c2_274, %471, %c0_275, %c0_276] : memref<3x8x8x32xf32, #tpu.memory_space<vmem>>, vector<1x1x8x32xf32>
    %473 = vector.shape_cast %472 : vector<1x1x8x32xf32> to vector<8x32xf32>
    %474 = arith.mulf %461, %452 : vector<8x32xf32>
    %475 = arith.addf %473, %474 : vector<8x32xf32>
    %476 = math.tanh %475 : vector<8x32xf32>
    %cst_277 = arith.constant 1.000000e+00 : f32
    %477 = vector.broadcast %cst_277 : f32 to vector<8x32xf32>
    %478 = arith.subf %477, %470 : vector<8x32xf32>
    %479 = arith.mulf %478, %476 : vector<8x32xf32>
    %480 = arith.mulf %470, %438 : vector<8x32xf32>
    %481 = arith.addf %479, %480 : vector<8x32xf32>
    %482 = arith.index_cast %c2_i32 : i32 to index
    %c0_278 = arith.constant 0 : index
    %c0_279 = arith.constant 0 : index
    %483 = vector.load %arg32[%482, %c0_278, %c0_279] : memref<8x8x32xf32, #tpu.memory_space<vmem>>, vector<1x8x32xf32>
    %484 = vector.shape_cast %483 : vector<1x8x32xf32> to vector<8x32xf32>
    %485 = vector.shape_cast %481 : vector<8x32xf32> to vector<1x8x32xf32>
    tpu.vector_store %arg32[%482, %c0_278, %c0_279], %485 {strides = array<i32>} : memref<8x8x32xf32, #tpu.memory_space<vmem>>, vector<1x8x32xf32>,
    %c3_i32 = arith.constant 3 : i32
    %486 = arith.truncf %481 : vector<8x32xf32> to vector<8x32xbf16>
    %cst_280 = arith.constant dense<0.000000e+00> : vector<8x32xf32>
    %487 = tpu.matmul %486, %345, %cst_280 {dimension_numbers = #tpu.dot_dimension_numbers<[1], [0], [0], [1], [0, 0, 1, 1], [], []>} : vector<8x32xbf16>, vector<32x32xbf16>, vector<8x32xf32> -> vector<8x32xf32>
    %488 = vector.broadcast %351 : vector<1x32xf32> to vector<8x32xf32>
    %489 = arith.addf %487, %488 : vector<8x32xf32>
    %cst_281 = arith.constant dense<0.000000e+00> : vector<8x32xf32>
    %490 = tpu.matmul %486, %347, %cst_281 {dimension_numbers = #tpu.dot_dimension_numbers<[1], [0], [0], [1], [0, 0, 1, 1], [], []>} : vector<8x32xbf16>, vector<32x32xbf16>, vector<8x32xf32> -> vector<8x32xf32>
    %491 = vector.broadcast %353 : vector<1x32xf32> to vector<8x32xf32>
    %492 = arith.addf %490, %491 : vector<8x32xf32>
    %cst_282 = arith.constant dense<0.000000e+00> : vector<8x32xf32>
    %493 = tpu.matmul %486, %349, %cst_282 {dimension_numbers = #tpu.dot_dimension_numbers<[1], [0], [0], [1], [0, 0, 1, 1], [], []>} : vector<8x32xbf16>, vector<32x32xbf16>, vector<8x32xf32> -> vector<8x32xf32>
    %494 = vector.broadcast %355 : vector<1x32xf32> to vector<8x32xf32>
    %495 = arith.addf %493, %494 : vector<8x32xf32>
    %c0_283 = arith.constant 0 : index
    %496 = arith.index_cast %c3_i32 : i32 to index
    %c0_284 = arith.constant 0 : index
    %c0_285 = arith.constant 0 : index
    %497 = vector.load %arg31[%c0_283, %496, %c0_284, %c0_285] : memref<3x8x8x32xf32, #tpu.memory_space<vmem>>, vector<1x1x8x32xf32>
    %498 = vector.shape_cast %497 : vector<1x1x8x32xf32> to vector<8x32xf32>
    %499 = arith.addf %498, %489 : vector<8x32xf32>
    %500 = arith.negf %499 : vector<8x32xf32>
    %501 = math.exp %500 : vector<8x32xf32>
    %cst_286 = arith.constant 1.000000e+00 : f32
    %502 = vector.broadcast %cst_286 : f32 to vector<8x32xf32>
    %503 = arith.addf %502, %501 : vector<8x32xf32>
    %504 = arith.divf %502, %503 : vector<8x32xf32>
    %c1_287 = arith.constant 1 : index
    %505 = arith.index_cast %c3_i32 : i32 to index
    %c0_288 = arith.constant 0 : index
    %c0_289 = arith.constant 0 : index
    %506 = vector.load %arg31[%c1_287, %505, %c0_288, %c0_289] : memref<3x8x8x32xf32, #tpu.memory_space<vmem>>, vector<1x1x8x32xf32>
    %507 = vector.shape_cast %506 : vector<1x1x8x32xf32> to vector<8x32xf32>
    %508 = arith.addf %507, %492 : vector<8x32xf32>
    %509 = arith.negf %508 : vector<8x32xf32>
    %510 = math.exp %509 : vector<8x32xf32>
    %cst_290 = arith.constant 1.000000e+00 : f32
    %511 = vector.broadcast %cst_290 : f32 to vector<8x32xf32>
    %512 = arith.addf %511, %510 : vector<8x32xf32>
    %513 = arith.divf %511, %512 : vector<8x32xf32>
    %c2_291 = arith.constant 2 : index
    %514 = arith.index_cast %c3_i32 : i32 to index
    %c0_292 = arith.constant 0 : index
    %c0_293 = arith.constant 0 : index
    %515 = vector.load %arg31[%c2_291, %514, %c0_292, %c0_293] : memref<3x8x8x32xf32, #tpu.memory_space<vmem>>, vector<1x1x8x32xf32>
    %516 = vector.shape_cast %515 : vector<1x1x8x32xf32> to vector<8x32xf32>
    %517 = arith.mulf %504, %495 : vector<8x32xf32>
    %518 = arith.addf %516, %517 : vector<8x32xf32>
    %519 = math.tanh %518 : vector<8x32xf32>
    %cst_294 = arith.constant 1.000000e+00 : f32
    %520 = vector.broadcast %cst_294 : f32 to vector<8x32xf32>
    %521 = arith.subf %520, %513 : vector<8x32xf32>
    %522 = arith.mulf %521, %519 : vector<8x32xf32>
    %523 = arith.mulf %513, %481 : vector<8x32xf32>
    %524 = arith.addf %522, %523 : vector<8x32xf32>
    %525 = arith.index_cast %c3_i32 : i32 to index
    %c0_295 = arith.constant 0 : index
    %c0_296 = arith.constant 0 : index
    %526 = vector.load %arg32[%525, %c0_295, %c0_296] : memref<8x8x32xf32, #tpu.memory_space<vmem>>, vector<1x8x32xf32>
    %527 = vector.shape_cast %526 : vector<1x8x32xf32> to vector<8x32xf32>
    %528 = vector.shape_cast %524 : vector<8x32xf32> to vector<1x8x32xf32>
    tpu.vector_store %arg32[%525, %c0_295, %c0_296], %528 {strides = array<i32>} : memref<8x8x32xf32, #tpu.memory_space<vmem>>, vector<1x8x32xf32>,
    %c4_i32 = arith.constant 4 : i32
    %529 = arith.truncf %524 : vector<8x32xf32> to vector<8x32xbf16>
    %cst_297 = arith.constant dense<0.000000e+00> : vector<8x32xf32>
    %530 = tpu.matmul %529, %345, %cst_297 {dimension_numbers = #tpu.dot_dimension_numbers<[1], [0], [0], [1], [0, 0, 1, 1], [], []>} : vector<8x32xbf16>, vector<32x32xbf16>, vector<8x32xf32> -> vector<8x32xf32>
    %531 = vector.broadcast %351 : vector<1x32xf32> to vector<8x32xf32>
    %532 = arith.addf %530, %531 : vector<8x32xf32>
    %cst_298 = arith.constant dense<0.000000e+00> : vector<8x32xf32>
    %533 = tpu.matmul %529, %347, %cst_298 {dimension_numbers = #tpu.dot_dimension_numbers<[1], [0], [0], [1], [0, 0, 1, 1], [], []>} : vector<8x32xbf16>, vector<32x32xbf16>, vector<8x32xf32> -> vector<8x32xf32>
    %534 = vector.broadcast %353 : vector<1x32xf32> to vector<8x32xf32>
    %535 = arith.addf %533, %534 : vector<8x32xf32>
    %cst_299 = arith.constant dense<0.000000e+00> : vector<8x32xf32>
    %536 = tpu.matmul %529, %349, %cst_299 {dimension_numbers = #tpu.dot_dimension_numbers<[1], [0], [0], [1], [0, 0, 1, 1], [], []>} : vector<8x32xbf16>, vector<32x32xbf16>, vector<8x32xf32> -> vector<8x32xf32>
    %537 = vector.broadcast %355 : vector<1x32xf32> to vector<8x32xf32>
    %538 = arith.addf %536, %537 : vector<8x32xf32>
    %c0_300 = arith.constant 0 : index
    %539 = arith.index_cast %c4_i32 : i32 to index
    %c0_301 = arith.constant 0 : index
    %c0_302 = arith.constant 0 : index
    %540 = vector.load %arg31[%c0_300, %539, %c0_301, %c0_302] : memref<3x8x8x32xf32, #tpu.memory_space<vmem>>, vector<1x1x8x32xf32>
    %541 = vector.shape_cast %540 : vector<1x1x8x32xf32> to vector<8x32xf32>
    %542 = arith.addf %541, %532 : vector<8x32xf32>
    %543 = arith.negf %542 : vector<8x32xf32>
    %544 = math.exp %543 : vector<8x32xf32>
    %cst_303 = arith.constant 1.000000e+00 : f32
    %545 = vector.broadcast %cst_303 : f32 to vector<8x32xf32>
    %546 = arith.addf %545, %544 : vector<8x32xf32>
    %547 = arith.divf %545, %546 : vector<8x32xf32>
    %c1_304 = arith.constant 1 : index
    %548 = arith.index_cast %c4_i32 : i32 to index
    %c0_305 = arith.constant 0 : index
    %c0_306 = arith.constant 0 : index
    %549 = vector.load %arg31[%c1_304, %548, %c0_305, %c0_306] : memref<3x8x8x32xf32, #tpu.memory_space<vmem>>, vector<1x1x8x32xf32>
    %550 = vector.shape_cast %549 : vector<1x1x8x32xf32> to vector<8x32xf32>
    %551 = arith.addf %550, %535 : vector<8x32xf32>
    %552 = arith.negf %551 : vector<8x32xf32>
    %553 = math.exp %552 : vector<8x32xf32>
    %cst_307 = arith.constant 1.000000e+00 : f32
    %554 = vector.broadcast %cst_307 : f32 to vector<8x32xf32>
    %555 = arith.addf %554, %553 : vector<8x32xf32>
    %556 = arith.divf %554, %555 : vector<8x32xf32>
    %c2_308 = arith.constant 2 : index
    %557 = arith.index_cast %c4_i32 : i32 to index
    %c0_309 = arith.constant 0 : index
    %c0_310 = arith.constant 0 : index
    %558 = vector.load %arg31[%c2_308, %557, %c0_309, %c0_310] : memref<3x8x8x32xf32, #tpu.memory_space<vmem>>, vector<1x1x8x32xf32>
    %559 = vector.shape_cast %558 : vector<1x1x8x32xf32> to vector<8x32xf32>
    %560 = arith.mulf %547, %538 : vector<8x32xf32>
    %561 = arith.addf %559, %560 : vector<8x32xf32>
    %562 = math.tanh %561 : vector<8x32xf32>
    %cst_311 = arith.constant 1.000000e+00 : f32
    %563 = vector.broadcast %cst_311 : f32 to vector<8x32xf32>
    %564 = arith.subf %563, %556 : vector<8x32xf32>
    %565 = arith.mulf %564, %562 : vector<8x32xf32>
    %566 = arith.mulf %556, %524 : vector<8x32xf32>
    %567 = arith.addf %565, %566 : vector<8x32xf32>
    %568 = arith.index_cast %c4_i32 : i32 to index
    %c0_312 = arith.constant 0 : index
    %c0_313 = arith.constant 0 : index
    %569 = vector.load %arg32[%568, %c0_312, %c0_313] : memref<8x8x32xf32, #tpu.memory_space<vmem>>, vector<1x8x32xf32>
    %570 = vector.shape_cast %569 : vector<1x8x32xf32> to vector<8x32xf32>
    %571 = vector.shape_cast %567 : vector<8x32xf32> to vector<1x8x32xf32>
    tpu.vector_store %arg32[%568, %c0_312, %c0_313], %571 {strides = array<i32>} : memref<8x8x32xf32, #tpu.memory_space<vmem>>, vector<1x8x32xf32>,
    %c5_i32 = arith.constant 5 : i32
    %572 = arith.truncf %567 : vector<8x32xf32> to vector<8x32xbf16>
    %cst_314 = arith.constant dense<0.000000e+00> : vector<8x32xf32>
    %573 = tpu.matmul %572, %345, %cst_314 {dimension_numbers = #tpu.dot_dimension_numbers<[1], [0], [0], [1], [0, 0, 1, 1], [], []>} : vector<8x32xbf16>, vector<32x32xbf16>, vector<8x32xf32> -> vector<8x32xf32>
    %574 = vector.broadcast %351 : vector<1x32xf32> to vector<8x32xf32>
    %575 = arith.addf %573, %574 : vector<8x32xf32>
    %cst_315 = arith.constant dense<0.000000e+00> : vector<8x32xf32>
    %576 = tpu.matmul %572, %347, %cst_315 {dimension_numbers = #tpu.dot_dimension_numbers<[1], [0], [0], [1], [0, 0, 1, 1], [], []>} : vector<8x32xbf16>, vector<32x32xbf16>, vector<8x32xf32> -> vector<8x32xf32>
    %577 = vector.broadcast %353 : vector<1x32xf32> to vector<8x32xf32>
    %578 = arith.addf %576, %577 : vector<8x32xf32>
    %cst_316 = arith.constant dense<0.000000e+00> : vector<8x32xf32>
    %579 = tpu.matmul %572, %349, %cst_316 {dimension_numbers = #tpu.dot_dimension_numbers<[1], [0], [0], [1], [0, 0, 1, 1], [], []>} : vector<8x32xbf16>, vector<32x32xbf16>, vector<8x32xf32> -> vector<8x32xf32>
    %580 = vector.broadcast %355 : vector<1x32xf32> to vector<8x32xf32>
    %581 = arith.addf %579, %580 : vector<8x32xf32>
    %c0_317 = arith.constant 0 : index
    %582 = arith.index_cast %c5_i32 : i32 to index
    %c0_318 = arith.constant 0 : index
    %c0_319 = arith.constant 0 : index
    %583 = vector.load %arg31[%c0_317, %582, %c0_318, %c0_319] : memref<3x8x8x32xf32, #tpu.memory_space<vmem>>, vector<1x1x8x32xf32>
    %584 = vector.shape_cast %583 : vector<1x1x8x32xf32> to vector<8x32xf32>
    %585 = arith.addf %584, %575 : vector<8x32xf32>
    %586 = arith.negf %585 : vector<8x32xf32>
    %587 = math.exp %586 : vector<8x32xf32>
    %cst_320 = arith.constant 1.000000e+00 : f32
    %588 = vector.broadcast %cst_320 : f32 to vector<8x32xf32>
    %589 = arith.addf %588, %587 : vector<8x32xf32>
    %590 = arith.divf %588, %589 : vector<8x32xf32>
    %c1_321 = arith.constant 1 : index
    %591 = arith.index_cast %c5_i32 : i32 to index
    %c0_322 = arith.constant 0 : index
    %c0_323 = arith.constant 0 : index
    %592 = vector.load %arg31[%c1_321, %591, %c0_322, %c0_323] : memref<3x8x8x32xf32, #tpu.memory_space<vmem>>, vector<1x1x8x32xf32>
    %593 = vector.shape_cast %592 : vector<1x1x8x32xf32> to vector<8x32xf32>
    %594 = arith.addf %593, %578 : vector<8x32xf32>
    %595 = arith.negf %594 : vector<8x32xf32>
    %596 = math.exp %595 : vector<8x32xf32>
    %cst_324 = arith.constant 1.000000e+00 : f32
    %597 = vector.broadcast %cst_324 : f32 to vector<8x32xf32>
    %598 = arith.addf %597, %596 : vector<8x32xf32>
    %599 = arith.divf %597, %598 : vector<8x32xf32>
    %c2_325 = arith.constant 2 : index
    %600 = arith.index_cast %c5_i32 : i32 to index
    %c0_326 = arith.constant 0 : index
    %c0_327 = arith.constant 0 : index
    %601 = vector.load %arg31[%c2_325, %600, %c0_326, %c0_327] : memref<3x8x8x32xf32, #tpu.memory_space<vmem>>, vector<1x1x8x32xf32>
    %602 = vector.shape_cast %601 : vector<1x1x8x32xf32> to vector<8x32xf32>
    %603 = arith.mulf %590, %581 : vector<8x32xf32>
    %604 = arith.addf %602, %603 : vector<8x32xf32>
    %605 = math.tanh %604 : vector<8x32xf32>
    %cst_328 = arith.constant 1.000000e+00 : f32
    %606 = vector.broadcast %cst_328 : f32 to vector<8x32xf32>
    %607 = arith.subf %606, %599 : vector<8x32xf32>
    %608 = arith.mulf %607, %605 : vector<8x32xf32>
    %609 = arith.mulf %599, %567 : vector<8x32xf32>
    %610 = arith.addf %608, %609 : vector<8x32xf32>
    %611 = arith.index_cast %c5_i32 : i32 to index
    %c0_329 = arith.constant 0 : index
    %c0_330 = arith.constant 0 : index
    %612 = vector.load %arg32[%611, %c0_329, %c0_330] : memref<8x8x32xf32, #tpu.memory_space<vmem>>, vector<1x8x32xf32>
    %613 = vector.shape_cast %612 : vector<1x8x32xf32> to vector<8x32xf32>
    %614 = vector.shape_cast %610 : vector<8x32xf32> to vector<1x8x32xf32>
    tpu.vector_store %arg32[%611, %c0_329, %c0_330], %614 {strides = array<i32>} : memref<8x8x32xf32, #tpu.memory_space<vmem>>, vector<1x8x32xf32>,
    %c6_i32 = arith.constant 6 : i32
    %615 = arith.truncf %610 : vector<8x32xf32> to vector<8x32xbf16>
    %cst_331 = arith.constant dense<0.000000e+00> : vector<8x32xf32>
    %616 = tpu.matmul %615, %345, %cst_331 {dimension_numbers = #tpu.dot_dimension_numbers<[1], [0], [0], [1], [0, 0, 1, 1], [], []>} : vector<8x32xbf16>, vector<32x32xbf16>, vector<8x32xf32> -> vector<8x32xf32>
    %617 = vector.broadcast %351 : vector<1x32xf32> to vector<8x32xf32>
    %618 = arith.addf %616, %617 : vector<8x32xf32>
    %cst_332 = arith.constant dense<0.000000e+00> : vector<8x32xf32>
    %619 = tpu.matmul %615, %347, %cst_332 {dimension_numbers = #tpu.dot_dimension_numbers<[1], [0], [0], [1], [0, 0, 1, 1], [], []>} : vector<8x32xbf16>, vector<32x32xbf16>, vector<8x32xf32> -> vector<8x32xf32>
    %620 = vector.broadcast %353 : vector<1x32xf32> to vector<8x32xf32>
    %621 = arith.addf %619, %620 : vector<8x32xf32>
    %cst_333 = arith.constant dense<0.000000e+00> : vector<8x32xf32>
    %622 = tpu.matmul %615, %349, %cst_333 {dimension_numbers = #tpu.dot_dimension_numbers<[1], [0], [0], [1], [0, 0, 1, 1], [], []>} : vector<8x32xbf16>, vector<32x32xbf16>, vector<8x32xf32> -> vector<8x32xf32>
    %623 = vector.broadcast %355 : vector<1x32xf32> to vector<8x32xf32>
    %624 = arith.addf %622, %623 : vector<8x32xf32>
    %c0_334 = arith.constant 0 : index
    %625 = arith.index_cast %c6_i32 : i32 to index
    %c0_335 = arith.constant 0 : index
    %c0_336 = arith.constant 0 : index
    %626 = vector.load %arg31[%c0_334, %625, %c0_335, %c0_336] : memref<3x8x8x32xf32, #tpu.memory_space<vmem>>, vector<1x1x8x32xf32>
    %627 = vector.shape_cast %626 : vector<1x1x8x32xf32> to vector<8x32xf32>
    %628 = arith.addf %627, %618 : vector<8x32xf32>
    %629 = arith.negf %628 : vector<8x32xf32>
    %630 = math.exp %629 : vector<8x32xf32>
    %cst_337 = arith.constant 1.000000e+00 : f32
    %631 = vector.broadcast %cst_337 : f32 to vector<8x32xf32>
    %632 = arith.addf %631, %630 : vector<8x32xf32>
    %633 = arith.divf %631, %632 : vector<8x32xf32>
    %c1_338 = arith.constant 1 : index
    %634 = arith.index_cast %c6_i32 : i32 to index
    %c0_339 = arith.constant 0 : index
    %c0_340 = arith.constant 0 : index
    %635 = vector.load %arg31[%c1_338, %634, %c0_339, %c0_340] : memref<3x8x8x32xf32, #tpu.memory_space<vmem>>, vector<1x1x8x32xf32>
    %636 = vector.shape_cast %635 : vector<1x1x8x32xf32> to vector<8x32xf32>
    %637 = arith.addf %636, %621 : vector<8x32xf32>
    %638 = arith.negf %637 : vector<8x32xf32>
    %639 = math.exp %638 : vector<8x32xf32>
    %cst_341 = arith.constant 1.000000e+00 : f32
    %640 = vector.broadcast %cst_341 : f32 to vector<8x32xf32>
    %641 = arith.addf %640, %639 : vector<8x32xf32>
    %642 = arith.divf %640, %641 : vector<8x32xf32>
    %c2_342 = arith.constant 2 : index
    %643 = arith.index_cast %c6_i32 : i32 to index
    %c0_343 = arith.constant 0 : index
    %c0_344 = arith.constant 0 : index
    %644 = vector.load %arg31[%c2_342, %643, %c0_343, %c0_344] : memref<3x8x8x32xf32, #tpu.memory_space<vmem>>, vector<1x1x8x32xf32>
    %645 = vector.shape_cast %644 : vector<1x1x8x32xf32> to vector<8x32xf32>
    %646 = arith.mulf %633, %624 : vector<8x32xf32>
    %647 = arith.addf %645, %646 : vector<8x32xf32>
    %648 = math.tanh %647 : vector<8x32xf32>
    %cst_345 = arith.constant 1.000000e+00 : f32
    %649 = vector.broadcast %cst_345 : f32 to vector<8x32xf32>
    %650 = arith.subf %649, %642 : vector<8x32xf32>
    %651 = arith.mulf %650, %648 : vector<8x32xf32>
    %652 = arith.mulf %642, %610 : vector<8x32xf32>
    %653 = arith.addf %651, %652 : vector<8x32xf32>
    %654 = arith.index_cast %c6_i32 : i32 to index
    %c0_346 = arith.constant 0 : index
    %c0_347 = arith.constant 0 : index
    %655 = vector.load %arg32[%654, %c0_346, %c0_347] : memref<8x8x32xf32, #tpu.memory_space<vmem>>, vector<1x8x32xf32>
    %656 = vector.shape_cast %655 : vector<1x8x32xf32> to vector<8x32xf32>
    %657 = vector.shape_cast %653 : vector<8x32xf32> to vector<1x8x32xf32>
    tpu.vector_store %arg32[%654, %c0_346, %c0_347], %657 {strides = array<i32>} : memref<8x8x32xf32, #tpu.memory_space<vmem>>, vector<1x8x32xf32>,
    %c7_i32 = arith.constant 7 : i32
    %658 = arith.truncf %653 : vector<8x32xf32> to vector<8x32xbf16>
    %cst_348 = arith.constant dense<0.000000e+00> : vector<8x32xf32>
    %659 = tpu.matmul %658, %345, %cst_348 {dimension_numbers = #tpu.dot_dimension_numbers<[1], [0], [0], [1], [0, 0, 1, 1], [], []>} : vector<8x32xbf16>, vector<32x32xbf16>, vector<8x32xf32> -> vector<8x32xf32>
    %660 = vector.broadcast %351 : vector<1x32xf32> to vector<8x32xf32>
    %661 = arith.addf %659, %660 : vector<8x32xf32>
    %cst_349 = arith.constant dense<0.000000e+00> : vector<8x32xf32>
    %662 = tpu.matmul %658, %347, %cst_349 {dimension_numbers = #tpu.dot_dimension_numbers<[1], [0], [0], [1], [0, 0, 1, 1], [], []>} : vector<8x32xbf16>, vector<32x32xbf16>, vector<8x32xf32> -> vector<8x32xf32>
    %663 = vector.broadcast %353 : vector<1x32xf32> to vector<8x32xf32>
    %664 = arith.addf %662, %663 : vector<8x32xf32>
    %cst_350 = arith.constant dense<0.000000e+00> : vector<8x32xf32>
    %665 = tpu.matmul %658, %349, %cst_350 {dimension_numbers = #tpu.dot_dimension_numbers<[1], [0], [0], [1], [0, 0, 1, 1], [], []>} : vector<8x32xbf16>, vector<32x32xbf16>, vector<8x32xf32> -> vector<8x32xf32>
    %666 = vector.broadcast %355 : vector<1x32xf32> to vector<8x32xf32>
    %667 = arith.addf %665, %666 : vector<8x32xf32>
    %c0_351 = arith.constant 0 : index
    %668 = arith.index_cast %c7_i32 : i32 to index
    %c0_352 = arith.constant 0 : index
    %c0_353 = arith.constant 0 : index
    %669 = vector.load %arg31[%c0_351, %668, %c0_352, %c0_353] : memref<3x8x8x32xf32, #tpu.memory_space<vmem>>, vector<1x1x8x32xf32>
    %670 = vector.shape_cast %669 : vector<1x1x8x32xf32> to vector<8x32xf32>
    %671 = arith.addf %670, %661 : vector<8x32xf32>
    %672 = arith.negf %671 : vector<8x32xf32>
    %673 = math.exp %672 : vector<8x32xf32>
    %cst_354 = arith.constant 1.000000e+00 : f32
    %674 = vector.broadcast %cst_354 : f32 to vector<8x32xf32>
    %675 = arith.addf %674, %673 : vector<8x32xf32>
    %676 = arith.divf %674, %675 : vector<8x32xf32>
    %c1_355 = arith.constant 1 : index
    %677 = arith.index_cast %c7_i32 : i32 to index
    %c0_356 = arith.constant 0 : index
    %c0_357 = arith.constant 0 : index
    %678 = vector.load %arg31[%c1_355, %677, %c0_356, %c0_357] : memref<3x8x8x32xf32, #tpu.memory_space<vmem>>, vector<1x1x8x32xf32>
    %679 = vector.shape_cast %678 : vector<1x1x8x32xf32> to vector<8x32xf32>
    %680 = arith.addf %679, %664 : vector<8x32xf32>
    %681 = arith.negf %680 : vector<8x32xf32>
    %682 = math.exp %681 : vector<8x32xf32>
    %cst_358 = arith.constant 1.000000e+00 : f32
    %683 = vector.broadcast %cst_358 : f32 to vector<8x32xf32>
    %684 = arith.addf %683, %682 : vector<8x32xf32>
    %685 = arith.divf %683, %684 : vector<8x32xf32>
    %c2_359 = arith.constant 2 : index
    %686 = arith.index_cast %c7_i32 : i32 to index
    %c0_360 = arith.constant 0 : index
    %c0_361 = arith.constant 0 : index
    %687 = vector.load %arg31[%c2_359, %686, %c0_360, %c0_361] : memref<3x8x8x32xf32, #tpu.memory_space<vmem>>, vector<1x1x8x32xf32>
    %688 = vector.shape_cast %687 : vector<1x1x8x32xf32> to vector<8x32xf32>
    %689 = arith.mulf %676, %667 : vector<8x32xf32>
    %690 = arith.addf %688, %689 : vector<8x32xf32>
    %691 = math.tanh %690 : vector<8x32xf32>
    %cst_362 = arith.constant 1.000000e+00 : f32
    %692 = vector.broadcast %cst_362 : f32 to vector<8x32xf32>
    %693 = arith.subf %692, %685 : vector<8x32xf32>
    %694 = arith.mulf %693, %691 : vector<8x32xf32>
    %695 = arith.mulf %685, %653 : vector<8x32xf32>
    %696 = arith.addf %694, %695 : vector<8x32xf32>
    %697 = arith.index_cast %c7_i32 : i32 to index
    %c0_363 = arith.constant 0 : index
    %c0_364 = arith.constant 0 : index
    %698 = vector.load %arg32[%697, %c0_363, %c0_364] : memref<8x8x32xf32, #tpu.memory_space<vmem>>, vector<1x8x32xf32>
    %699 = vector.shape_cast %698 : vector<1x8x32xf32> to vector<8x32xf32>
    %700 = vector.shape_cast %696 : vector<8x32xf32> to vector<1x8x32xf32>
    tpu.vector_store %arg32[%697, %c0_363, %c0_364], %700 {strides = array<i32>} : memref<8x8x32xf32, #tpu.memory_space<vmem>>, vector<1x8x32xf32>,
    %c8_i32 = arith.constant 8 : i32
    %c0_365 = arith.constant 0 : index
    %c0_366 = arith.constant 0 : index
    %c0_367 = arith.constant 0 : index
    %701 = vector.load %arg32[%c0_365, %c0_366, %c0_367] : memref<8x8x32xf32, #tpu.memory_space<vmem>>, vector<8x8x32xf32>
    %702 = vector.shape_cast %701 : vector<8x8x32xf32> to vector<64x32xf32>
    %703 = arith.truncf %702 : vector<64x32xf32> to vector<64x32xbf16>
    %c0_368 = arith.constant 0 : index
    %c0_369 = arith.constant 0 : index
    %704 = vector.load %arg19[%c0_368, %c0_369] : memref<32x32xbf16, #tpu.memory_space<vmem>>, vector<32x32xbf16>
    %cst_370 = arith.constant dense<0.000000e+00> : vector<64x32xf32>
    %705 = tpu.matmul %703, %704, %cst_370 {dimension_numbers = #tpu.dot_dimension_numbers<[1], [0], [0], [1], [0, 0, 1, 1], [], []>} : vector<64x32xbf16>, vector<32x32xbf16>, vector<64x32xf32> -> vector<64x32xf32>
    %c0_371 = arith.constant 0 : index
    %c0_372 = arith.constant 0 : index
    %706 = vector.load %arg21[%c0_371, %c0_372] : memref<3x32xf32, #tpu.memory_space<vmem>>, vector<1x32xf32>
    %707 = vector.broadcast %706 : vector<1x32xf32> to vector<64x32xf32>
    %708 = arith.addf %705, %707 : vector<64x32xf32>
    %c0_373 = arith.constant 0 : index
    %c0_374 = arith.constant 0 : index
    %709 = vector.load %arg22[%c0_373, %c0_374] : memref<3x32xf32, #tpu.memory_space<vmem>>, vector<1x32xf32>
    %c0_375 = arith.constant 0 : index
    %c0_376 = arith.constant 0 : index
    %710 = vector.load %arg23[%c0_375, %c0_376] : memref<3x32xf32, #tpu.memory_space<vmem>>, vector<1x32xf32>
    %cst_377 = arith.constant dense<0.000000e+00> : vector<64xf32>
    %711 = vector.multi_reduction <add>, %708, %cst_377 [1] : vector<64x32xf32> to vector<64xf32>
    %712 = vector.shape_cast %711 : vector<64xf32> to vector<64x1xf32>
    %cst_378 = arith.constant 3.200000e+01 : f32
    %713 = vector.broadcast %cst_378 : f32 to vector<64x1xf32>
    %714 = arith.divf %712, %713 : vector<64x1xf32>
    %715 = vector.broadcast %714 : vector<64x1xf32> to vector<64x32xf32>
    %716 = arith.subf %708, %715 : vector<64x32xf32>
    %717 = arith.mulf %716, %716 : vector<64x32xf32>
    %cst_379 = arith.constant dense<0.000000e+00> : vector<64xf32>
    %718 = vector.multi_reduction <add>, %717, %cst_379 [1] : vector<64x32xf32> to vector<64xf32>
    %719 = vector.shape_cast %718 : vector<64xf32> to vector<64x1xf32>
    %cst_380 = arith.constant 3.200000e+01 : f32
    %720 = vector.broadcast %cst_380 : f32 to vector<64x1xf32>
    %721 = arith.divf %719, %720 : vector<64x1xf32>
    %cst_381 = arith.constant 9.99999974E-6 : f32
    %722 = vector.broadcast %cst_381 : f32 to vector<64x1xf32>
    %723 = arith.addf %721, %722 : vector<64x1xf32>
    %724 = math.rsqrt %723 : vector<64x1xf32>
    %725 = vector.broadcast %724 : vector<64x1xf32> to vector<64x32xf32>
    %726 = arith.mulf %716, %725 : vector<64x32xf32>
    %727 = vector.broadcast %709 : vector<1x32xf32> to vector<64x32xf32>
    %728 = arith.mulf %726, %727 : vector<64x32xf32>
    %729 = vector.broadcast %710 : vector<1x32xf32> to vector<64x32xf32>
    %730 = arith.addf %728, %729 : vector<64x32xf32>
    %cst_382 = arith.constant 0.000000e+00 : f32
    %731 = vector.broadcast %cst_382 : f32 to vector<64x32xf32>
    %732 = arith.maximumf %730, %731 : vector<64x32xf32>
    %733 = arith.truncf %732 : vector<64x32xf32> to vector<64x32xbf16>
    %c0_383 = arith.constant 0 : index
    %c0_384 = arith.constant 0 : index
    %c0_385 = arith.constant 0 : index
    %734 = vector.load %arg20[%c0_383, %c0_384, %c0_385] : memref<2x32x32xbf16, #tpu.memory_space<vmem>>, vector<1x32x32xbf16>
    %735 = vector.shape_cast %734 : vector<1x32x32xbf16> to vector<32x32xbf16>
    %cst_386 = arith.constant dense<0.000000e+00> : vector<64x32xf32>
    %736 = tpu.matmul %733, %735, %cst_386 {dimension_numbers = #tpu.dot_dimension_numbers<[1], [0], [0], [1], [0, 0, 1, 1], [], []>} : vector<64x32xbf16>, vector<32x32xbf16>, vector<64x32xf32> -> vector<64x32xf32>
    %c1_387 = arith.constant 1 : index
    %c0_388 = arith.constant 0 : index
    %737 = vector.load %arg21[%c1_387, %c0_388] : memref<3x32xf32, #tpu.memory_space<vmem>>, vector<1x32xf32>
    %738 = vector.broadcast %737 : vector<1x32xf32> to vector<64x32xf32>
    %739 = arith.addf %736, %738 : vector<64x32xf32>
    %c1_389 = arith.constant 1 : index
    %c0_390 = arith.constant 0 : index
    %740 = vector.load %arg22[%c1_389, %c0_390] : memref<3x32xf32, #tpu.memory_space<vmem>>, vector<1x32xf32>
    %c1_391 = arith.constant 1 : index
    %c0_392 = arith.constant 0 : index
    %741 = vector.load %arg23[%c1_391, %c0_392] : memref<3x32xf32, #tpu.memory_space<vmem>>, vector<1x32xf32>
    %cst_393 = arith.constant dense<0.000000e+00> : vector<64xf32>
    %742 = vector.multi_reduction <add>, %739, %cst_393 [1] : vector<64x32xf32> to vector<64xf32>
    %743 = vector.shape_cast %742 : vector<64xf32> to vector<64x1xf32>
    %cst_394 = arith.constant 3.200000e+01 : f32
    %744 = vector.broadcast %cst_394 : f32 to vector<64x1xf32>
    %745 = arith.divf %743, %744 : vector<64x1xf32>
    %746 = vector.broadcast %745 : vector<64x1xf32> to vector<64x32xf32>
    %747 = arith.subf %739, %746 : vector<64x32xf32>
    %748 = arith.mulf %747, %747 : vector<64x32xf32>
    %cst_395 = arith.constant dense<0.000000e+00> : vector<64xf32>
    %749 = vector.multi_reduction <add>, %748, %cst_395 [1] : vector<64x32xf32> to vector<64xf32>
    %750 = vector.shape_cast %749 : vector<64xf32> to vector<64x1xf32>
    %cst_396 = arith.constant 3.200000e+01 : f32
    %751 = vector.broadcast %cst_396 : f32 to vector<64x1xf32>
    %752 = arith.divf %750, %751 : vector<64x1xf32>
    %cst_397 = arith.constant 9.99999974E-6 : f32
    %753 = vector.broadcast %cst_397 : f32 to vector<64x1xf32>
    %754 = arith.addf %752, %753 : vector<64x1xf32>
    %755 = math.rsqrt %754 : vector<64x1xf32>
    %756 = vector.broadcast %755 : vector<64x1xf32> to vector<64x32xf32>
    %757 = arith.mulf %747, %756 : vector<64x32xf32>
    %758 = vector.broadcast %740 : vector<1x32xf32> to vector<64x32xf32>
    %759 = arith.mulf %757, %758 : vector<64x32xf32>
    %760 = vector.broadcast %741 : vector<1x32xf32> to vector<64x32xf32>
    %761 = arith.addf %759, %760 : vector<64x32xf32>
    %cst_398 = arith.constant 0.000000e+00 : f32
    %762 = vector.broadcast %cst_398 : f32 to vector<64x32xf32>
    %763 = arith.maximumf %761, %762 : vector<64x32xf32>
    %764 = arith.truncf %763 : vector<64x32xf32> to vector<64x32xbf16>
    %c1_399 = arith.constant 1 : index
    %c0_400 = arith.constant 0 : index
    %c0_401 = arith.constant 0 : index
    %765 = vector.load %arg20[%c1_399, %c0_400, %c0_401] : memref<2x32x32xbf16, #tpu.memory_space<vmem>>, vector<1x32x32xbf16>
    %766 = vector.shape_cast %765 : vector<1x32x32xbf16> to vector<32x32xbf16>
    %cst_402 = arith.constant dense<0.000000e+00> : vector<64x32xf32>
    %767 = tpu.matmul %764, %766, %cst_402 {dimension_numbers = #tpu.dot_dimension_numbers<[1], [0], [0], [1], [0, 0, 1, 1], [], []>} : vector<64x32xbf16>, vector<32x32xbf16>, vector<64x32xf32> -> vector<64x32xf32>
    %c2_403 = arith.constant 2 : index
    %c0_404 = arith.constant 0 : index
    %768 = vector.load %arg21[%c2_403, %c0_404] : memref<3x32xf32, #tpu.memory_space<vmem>>, vector<1x32xf32>
    %769 = vector.broadcast %768 : vector<1x32xf32> to vector<64x32xf32>
    %770 = arith.addf %767, %769 : vector<64x32xf32>
    %c2_405 = arith.constant 2 : index
    %c0_406 = arith.constant 0 : index
    %771 = vector.load %arg22[%c2_405, %c0_406] : memref<3x32xf32, #tpu.memory_space<vmem>>, vector<1x32xf32>
    %c2_407 = arith.constant 2 : index
    %c0_408 = arith.constant 0 : index
    %772 = vector.load %arg23[%c2_407, %c0_408] : memref<3x32xf32, #tpu.memory_space<vmem>>, vector<1x32xf32>
    %cst_409 = arith.constant dense<0.000000e+00> : vector<64xf32>
    %773 = vector.multi_reduction <add>, %770, %cst_409 [1] : vector<64x32xf32> to vector<64xf32>
    %774 = vector.shape_cast %773 : vector<64xf32> to vector<64x1xf32>
    %cst_410 = arith.constant 3.200000e+01 : f32
    %775 = vector.broadcast %cst_410 : f32 to vector<64x1xf32>
    %776 = arith.divf %774, %775 : vector<64x1xf32>
    %777 = vector.broadcast %776 : vector<64x1xf32> to vector<64x32xf32>
    %778 = arith.subf %770, %777 : vector<64x32xf32>
    %779 = arith.mulf %778, %778 : vector<64x32xf32>
    %cst_411 = arith.constant dense<0.000000e+00> : vector<64xf32>
    %780 = vector.multi_reduction <add>, %779, %cst_411 [1] : vector<64x32xf32> to vector<64xf32>
    %781 = vector.shape_cast %780 : vector<64xf32> to vector<64x1xf32>
    %cst_412 = arith.constant 3.200000e+01 : f32
    %782 = vector.broadcast %cst_412 : f32 to vector<64x1xf32>
    %783 = arith.divf %781, %782 : vector<64x1xf32>
    %cst_413 = arith.constant 9.99999974E-6 : f32
    %784 = vector.broadcast %cst_413 : f32 to vector<64x1xf32>
    %785 = arith.addf %783, %784 : vector<64x1xf32>
    %786 = math.rsqrt %785 : vector<64x1xf32>
    %787 = vector.broadcast %786 : vector<64x1xf32> to vector<64x32xf32>
    %788 = arith.mulf %778, %787 : vector<64x32xf32>
    %789 = vector.broadcast %771 : vector<1x32xf32> to vector<64x32xf32>
    %790 = arith.mulf %788, %789 : vector<64x32xf32>
    %791 = vector.broadcast %772 : vector<1x32xf32> to vector<64x32xf32>
    %792 = arith.addf %790, %791 : vector<64x32xf32>
    %cst_414 = arith.constant 0.000000e+00 : f32
    %793 = vector.broadcast %cst_414 : f32 to vector<64x32xf32>
    %794 = arith.maximumf %792, %793 : vector<64x32xf32>
    %795 = arith.truncf %794 : vector<64x32xf32> to vector<64x32xbf16>
    %c0_415 = arith.constant 0 : index
    %c0_416 = arith.constant 0 : index
    %796 = vector.load %arg28[%c0_415, %c0_416] : memref<32x128xbf16, #tpu.memory_space<vmem>>, vector<32x128xbf16>
    %cst_417 = arith.constant dense<0.000000e+00> : vector<64x128xf32>
    %797 = tpu.matmul %795, %796, %cst_417 {dimension_numbers = #tpu.dot_dimension_numbers<[1], [0], [0], [1], [0, 0, 1, 1], [], []>} : vector<64x32xbf16>, vector<32x128xbf16>, vector<64x128xf32> -> vector<64x128xf32>
    %c0_418 = arith.constant 0 : index
    %c0_419 = arith.constant 0 : index
    %798 = vector.load %arg29[%c0_418, %c0_419] : memref<1x128xf32, #tpu.memory_space<vmem>>, vector<1x128xf32>
    %799 = vector.broadcast %798 : vector<1x128xf32> to vector<64x128xf32>
    %800 = arith.addf %797, %799 : vector<64x128xf32>
    %801 = tpu.iota {dimensions = array<i32: 1>} : vector<64x128xi32>
    %cst_420 = arith.constant 0.000000e+00 : f32
    %802 = vector.broadcast %cst_420 : f32 to vector<64x128xf32>
    %803 = arith.cmpf oge, %800, %802 : vector<64x128xf32>
    %cst_421 = arith.constant 0.000000e+00 : f32
    %804 = vector.broadcast %cst_421 : f32 to vector<64x128xf32>
    %805 = arith.select %803, %804, %800 : vector<64x128xi1>, vector<64x128xf32>
    %806 = math.absf %800 : vector<64x128xf32>
    %cst_422 = arith.constant 0.000000e+00 : f32
    %807 = vector.broadcast %cst_422 : f32 to vector<64x128xf32>
    %808 = arith.subf %807, %806 : vector<64x128xf32>
    %809 = math.exp %808 : vector<64x128xf32>
    %cst_423 = arith.constant 1.000000e+00 : f32
    %810 = vector.broadcast %cst_423 : f32 to vector<64x128xf32>
    %811 = arith.addf %810, %809 : vector<64x128xf32>
    %812 = math.log %811 : vector<64x128xf32>
    %813 = arith.subf %805, %812 : vector<64x128xf32>
    %cst_424 = arith.constant 2.30258512 : f32
    %814 = vector.broadcast %cst_424 : f32 to vector<64x128xf32>
    %815 = arith.mulf %814, %813 : vector<64x128xf32>
    %816 = math.exp %815 : vector<64x128xf32>
    %cst_425 = arith.constant 2.000000e+00 : f32
    %817 = vector.broadcast %cst_425 : f32 to vector<64x128xf32>
    %818 = arith.mulf %817, %816 : vector<64x128xf32>
    %cst_426 = arith.constant 1.000000e-07 : f32
    %819 = vector.broadcast %cst_426 : f32 to vector<64x128xf32>
    %820 = arith.addf %818, %819 : vector<64x128xf32>
    %c42_i32 = arith.constant 42 : i32
    %821 = vector.broadcast %c42_i32 : i32 to vector<64x128xi32>
    %822 = arith.cmpi slt, %801, %821 : vector<64x128xi32>
    %823 = arith.select %822, %820, %800 : vector<64x128xi1>, vector<64x128xf32>
    %c1_i32_427 = arith.constant 1 : i32
    %824 = vector.broadcast %c1_i32_427 : i32 to vector<64x128xi32>
    %825 = arith.cmpi sge, %801, %824 : vector<64x128xi32>
    %c9_i32 = arith.constant 9 : i32
    %826 = vector.broadcast %c9_i32 : i32 to vector<64x128xi32>
    %827 = arith.cmpi slt, %801, %826 : vector<64x128xi32>
    %828 = arith.andi %825, %827 : vector<64x128xi1>
    %cst_428 = arith.constant 0.000000e+00 : f32
    %829 = vector.broadcast %cst_428 : f32 to vector<64x128xf32>
    %830 = arith.select %828, %823, %829 : vector<64x128xi1>, vector<64x128xf32>
    %cst_429 = arith.constant dense<0.000000e+00> : vector<64xf32>
    %831 = vector.multi_reduction <add>, %830, %cst_429 [1] : vector<64x128xf32> to vector<64xf32>
    %832 = vector.shape_cast %831 : vector<64xf32> to vector<64x1xf32>
    %833 = tpu.reciprocal %832 {approx = true} : vector<64x1xf32> -> vector<64x1xf32>
    %834 = vector.broadcast %833 : vector<64x1xf32> to vector<64x128xf32>
    %835 = arith.mulf %823, %834 : vector<64x128xf32>
    %836 = arith.select %828, %835, %823 : vector<64x128xi1>, vector<64x128xf32>
    %837 = vector.shape_cast %836 : vector<64x128xf32> to vector<8x8x128xf32>
    %c0_430 = arith.constant 0 : index
    %c0_431 = arith.constant 0 : index
    %c0_432 = arith.constant 0 : index
    %838 = vector.load %arg30[%c0_430, %c0_431, %c0_432] : memref<8x8x128xf32, #tpu.memory_space<vmem>>, vector<8x8x128xf32>
    tpu.vector_store %arg30[%c0_430, %c0_431, %c0_432], %837 {strides = array<i32>} : memref<8x8x128xf32, #tpu.memory_space<vmem>>, vector<8x8x128xf32>,
    return
  }
  func.func @transform_0(%arg0: i32) -> (i32, i32, i32) {
    %c0_i32 = arith.constant 0 : i32
    %c0_i32_0 = arith.constant 0 : i32
    %c0_i32_1 = arith.constant 0 : i32
    return %c0_i32, %arg0, %c0_i32_0 : i32, i32, i32
  }
  func.func @transform_1(%arg0: i32) -> (i32, i32, i32) {
    %c0_i32 = arith.constant 0 : i32
    %c0_i32_0 = arith.constant 0 : i32
    %c0_i32_1 = arith.constant 0 : i32
    return %c0_i32, %arg0, %c0_i32_0 : i32, i32, i32
  }
  func.func @transform_2(%arg0: i32) -> (i32, i32, i32) {
    %c0_i32 = arith.constant 0 : i32
    %c0_i32_0 = arith.constant 0 : i32
    %c0_i32_1 = arith.constant 0 : i32
    return %c0_i32, %arg0, %c0_i32_0 : i32, i32, i32
  }
  func.func @transform_3(%arg0: i32) -> (i32, i32) {
    %c0_i32 = arith.constant 0 : i32
    %c0_i32_0 = arith.constant 0 : i32
    %c0_i32_1 = arith.constant 0 : i32
    return %c0_i32, %c0_i32_0 : i32, i32
  }
  func.func @transform_4(%arg0: i32) -> (i32, i32, i32) {
    %c0_i32 = arith.constant 0 : i32
    %c0_i32_0 = arith.constant 0 : i32
    %c0_i32_1 = arith.constant 0 : i32
    %c0_i32_2 = arith.constant 0 : i32
    return %c0_i32, %c0_i32_0, %c0_i32_1 : i32, i32, i32
  }
  func.func @transform_5(%arg0: i32) -> (i32, i32) {
    %c0_i32 = arith.constant 0 : i32
    %c0_i32_0 = arith.constant 0 : i32
    %c0_i32_1 = arith.constant 0 : i32
    return %c0_i32, %c0_i32_0 : i32, i32
  }
  func.func @transform_6(%arg0: i32) -> (i32, i32) {
    %c0_i32 = arith.constant 0 : i32
    %c0_i32_0 = arith.constant 0 : i32
    %c0_i32_1 = arith.constant 0 : i32
    return %c0_i32, %c0_i32_0 : i32, i32
  }
  func.func @transform_7(%arg0: i32) -> (i32, i32) {
    %c0_i32 = arith.constant 0 : i32
    %c0_i32_0 = arith.constant 0 : i32
    %c0_i32_1 = arith.constant 0 : i32
    return %c0_i32, %c0_i32_0 : i32, i32
  }
  func.func @transform_8(%arg0: i32) -> (i32, i32) {
    %c0_i32 = arith.constant 0 : i32
    %c0_i32_0 = arith.constant 0 : i32
    %c0_i32_1 = arith.constant 0 : i32
    return %c0_i32, %c0_i32_0 : i32, i32
  }
  func.func @transform_9(%arg0: i32) -> (i32, i32, i32) {
    %c0_i32 = arith.constant 0 : i32
    %c0_i32_0 = arith.constant 0 : i32
    %c0_i32_1 = arith.constant 0 : i32
    %c0_i32_2 = arith.constant 0 : i32
    return %c0_i32, %c0_i32_0, %c0_i32_1 : i32, i32, i32
  }
  func.func @transform_10(%arg0: i32) -> (i32, i32) {
    %c0_i32 = arith.constant 0 : i32
    %c0_i32_0 = arith.constant 0 : i32
    %c0_i32_1 = arith.constant 0 : i32
    return %c0_i32, %c0_i32_0 : i32, i32
  }
  func.func @transform_11(%arg0: i32) -> (i32, i32) {
    %c0_i32 = arith.constant 0 : i32
    %c0_i32_0 = arith.constant 0 : i32
    %c0_i32_1 = arith.constant 0 : i32
    return %c0_i32, %c0_i32_0 : i32, i32
  }
  func.func @transform_12(%arg0: i32) -> (i32, i32) {
    %c0_i32 = arith.constant 0 : i32
    %c0_i32_0 = arith.constant 0 : i32
    %c0_i32_1 = arith.constant 0 : i32
    return %c0_i32, %c0_i32_0 : i32, i32
  }
  func.func @transform_13(%arg0: i32) -> (i32, i32) {
    %c0_i32 = arith.constant 0 : i32
    %c0_i32_0 = arith.constant 0 : i32
    %c0_i32_1 = arith.constant 0 : i32
    return %c0_i32, %c0_i32_0 : i32, i32
  }
  func.func @transform_14(%arg0: i32) -> (i32, i32, i32) {
    %c0_i32 = arith.constant 0 : i32
    %c0_i32_0 = arith.constant 0 : i32
    %c0_i32_1 = arith.constant 0 : i32
    %c0_i32_2 = arith.constant 0 : i32
    return %c0_i32, %c0_i32_0, %c0_i32_1 : i32, i32, i32
  }
  func.func @transform_15(%arg0: i32) -> (i32, i32) {
    %c0_i32 = arith.constant 0 : i32
    %c0_i32_0 = arith.constant 0 : i32
    %c0_i32_1 = arith.constant 0 : i32
    return %c0_i32, %c0_i32_0 : i32, i32
  }
  func.func @transform_16(%arg0: i32) -> (i32, i32) {
    %c0_i32 = arith.constant 0 : i32
    %c0_i32_0 = arith.constant 0 : i32
    %c0_i32_1 = arith.constant 0 : i32
    return %c0_i32, %c0_i32_0 : i32, i32
  }
  func.func @transform_17(%arg0: i32) -> (i32, i32) {
    %c0_i32 = arith.constant 0 : i32
    %c0_i32_0 = arith.constant 0 : i32
    %c0_i32_1 = arith.constant 0 : i32
    return %c0_i32, %c0_i32_0 : i32, i32
  }
  func.func @transform_18(%arg0: i32) -> (i32, i32) {
    %c0_i32 = arith.constant 0 : i32
    %c0_i32_0 = arith.constant 0 : i32
    %c0_i32_1 = arith.constant 0 : i32
    return %c0_i32, %c0_i32_0 : i32, i32
  }
  func.func @transform_19(%arg0: i32) -> (i32, i32, i32) {
    %c0_i32 = arith.constant 0 : i32
    %c0_i32_0 = arith.constant 0 : i32
    %c0_i32_1 = arith.constant 0 : i32
    %c0_i32_2 = arith.constant 0 : i32
    return %c0_i32, %c0_i32_0, %c0_i32_1 : i32, i32, i32
  }
  func.func @transform_20(%arg0: i32) -> (i32, i32) {
    %c0_i32 = arith.constant 0 : i32
    %c0_i32_0 = arith.constant 0 : i32
    %c0_i32_1 = arith.constant 0 : i32
    return %c0_i32, %c0_i32_0 : i32, i32
  }
  func.func @transform_21(%arg0: i32) -> (i32, i32) {
    %c0_i32 = arith.constant 0 : i32
    %c0_i32_0 = arith.constant 0 : i32
    %c0_i32_1 = arith.constant 0 : i32
    return %c0_i32, %c0_i32_0 : i32, i32
  }
  func.func @transform_22(%arg0: i32) -> (i32, i32) {
    %c0_i32 = arith.constant 0 : i32
    %c0_i32_0 = arith.constant 0 : i32
    %c0_i32_1 = arith.constant 0 : i32
    return %c0_i32, %c0_i32_0 : i32, i32
  }
  func.func @transform_23(%arg0: i32) -> (i32, i32, i32, i32) {
    %c0_i32 = arith.constant 0 : i32
    %c0_i32_0 = arith.constant 0 : i32
    %c0_i32_1 = arith.constant 0 : i32
    %c0_i32_2 = arith.constant 0 : i32
    %c0_i32_3 = arith.constant 0 : i32
    return %c0_i32, %c0_i32_0, %c0_i32_1, %c0_i32_2 : i32, i32, i32, i32
  }
  func.func @transform_24(%arg0: i32) -> (i32, i32, i32) {
    %c0_i32 = arith.constant 0 : i32
    %c0_i32_0 = arith.constant 0 : i32
    %c0_i32_1 = arith.constant 0 : i32
    %c0_i32_2 = arith.constant 0 : i32
    return %c0_i32, %c0_i32_0, %c0_i32_1 : i32, i32, i32
  }
  func.func @transform_25(%arg0: i32) -> (i32, i32, i32) {
    %c0_i32 = arith.constant 0 : i32
    %c0_i32_0 = arith.constant 0 : i32
    %c0_i32_1 = arith.constant 0 : i32
    %c0_i32_2 = arith.constant 0 : i32
    return %c0_i32, %c0_i32_0, %c0_i32_1 : i32, i32, i32
  }
  func.func @transform_26(%arg0: i32) -> (i32, i32, i32) {
    %c0_i32 = arith.constant 0 : i32
    %c0_i32_0 = arith.constant 0 : i32
    %c0_i32_1 = arith.constant 0 : i32
    %c0_i32_2 = arith.constant 0 : i32
    return %c0_i32, %c0_i32_0, %c0_i32_1 : i32, i32, i32
  }
  func.func @transform_27(%arg0: i32) -> (i32, i32) {
    %c0_i32 = arith.constant 0 : i32
    %c0_i32_0 = arith.constant 0 : i32
    %c0_i32_1 = arith.constant 0 : i32
    return %c0_i32, %c0_i32_0 : i32, i32
  }
  func.func @transform_28(%arg0: i32) -> (i32, i32) {
    %c0_i32 = arith.constant 0 : i32
    %c0_i32_0 = arith.constant 0 : i32
    %c0_i32_1 = arith.constant 0 : i32
    return %c0_i32, %c0_i32_0 : i32, i32
  }
  func.func @transform_29(%arg0: i32) -> (i32, i32, i32) {
    %c0_i32 = arith.constant 0 : i32
    %c0_i32_0 = arith.constant 0 : i32
    %c0_i32_1 = arith.constant 0 : i32
    return %c0_i32, %arg0, %c0_i32_0 : i32, i32, i32
  }
}

</mosaic_0001>

<llo_original>
// kernel: tpu_custom_call.1
$region0: #{tpu_custom_call.1}
  #allocation0 [shape = 'u32[]', space=smem, size = 0x4, offset = 0x4, fixed_abs, tag = 'smem constant byte address 0x4 - core index']
  #allocation1 [shape = 'u32[144,128]{1,0:T(1,128)}', space=vmem, size = 0x12000, scoped, tag = 'internal scratch']
  #allocation2 [shape = 'f32[3,8,8,32]{3,2,1,0:T(8,128)}', space=vmem, size = 0x18000, scoped, tag = 'scratch operand']
  #allocation3 [shape = 'f32[8,8,32]{2,1,0:T(8,128)}', space=vmem, size = 0x8000, scoped, tag = 'scratch operand']
  %s0 = inlined_call_operand.smem [shape: u32[30], index: -1, kind: input, shape index: {}]
  %s1 = sld [smem:[%s0]]
  %s2 = scalar_lea.smem %s0, 1
  %s3 = sld [smem:[%s2]]
  %s4 = scalar_lea.smem %s0, 2
  %s5 = sld [smem:[%s4]]
  %s6 = scalar_lea.smem %s0, 3
  %s7 = sld [smem:[%s6]]
  %s8 = scalar_lea.smem %s0, 4
  %s9 = sld [smem:[%s8]]
  %s10 = scalar_lea.smem %s0, 5
  %s11 = sld [smem:[%s10]]
  %s12 = scalar_lea.smem %s0, 6
  %s13 = sld [smem:[%s12]]
  %s14 = scalar_lea.smem %s0, 7
  %s15 = sld [smem:[%s14]]
  %s16 = scalar_lea.smem %s0, 8
  %s17 = sld [smem:[%s16]]
  %s18 = scalar_lea.smem %s0, 9
  %s19 = sld [smem:[%s18]]
  %s20 = scalar_lea.smem %s0, 10
  %s21 = sld [smem:[%s20]]
  %s22 = scalar_lea.smem %s0, 11
  %s23 = sld [smem:[%s22]]
  %s24 = scalar_lea.smem %s0, 12
  %s25 = sld [smem:[%s24]]
  %s26 = scalar_lea.smem %s0, 13
  %s27 = sld [smem:[%s26]]
  %s28 = scalar_lea.smem %s0, 14
  %s29 = sld [smem:[%s28]]
  %s30 = scalar_lea.smem %s0, 15
  %s31 = sld [smem:[%s30]]
  %s32 = scalar_lea.smem %s0, 16
  %s33 = sld [smem:[%s32]]
  %s34 = scalar_lea.smem %s0, 17
  %s35 = sld [smem:[%s34]]
  %s36 = scalar_lea.smem %s0, 18
  %s37 = sld [smem:[%s36]]
  %s38 = scalar_lea.smem %s0, 19
  %s39 = sld [smem:[%s38]]
  %s40 = scalar_lea.smem %s0, 20
  %s41 = sld [smem:[%s40]]
  %s42 = scalar_lea.smem %s0, 21
  %s43 = sld [smem:[%s42]]
  %s44 = scalar_lea.smem %s0, 22
  %s45 = sld [smem:[%s44]]
  %s46 = scalar_lea.smem %s0, 23
  %s47 = sld [smem:[%s46]]
  %s48 = scalar_lea.smem %s0, 24
  %s49 = sld [smem:[%s48]]
  %s50 = scalar_lea.smem %s0, 25
  %s51 = sld [smem:[%s50]]
  %s52 = scalar_lea.smem %s0, 26
  %s53 = sld [smem:[%s52]]
  %s54 = scalar_lea.smem %s0, 27
  %s55 = sld [smem:[%s54]]
  %s56 = scalar_lea.smem %s0, 28
  %s57 = sld [smem:[%s56]]
  %s58 = scalar_lea.smem %s0, 29
  %s59 = sld [smem:[%s58]]
  %s60 = sld [smem:[#allocation0]]
  $region210: #{tpu_custom_call.1} parent=0
    _
  %s62 = ssub.s32 1, %s60
  %s63 = scalar_select 0, %s62, %s60
  $region1: #{tpu_custom_call.1} parent=0
    #allocation4 [shape = 'u8[32768]{0}', space=vmem, size = 0x8000, scoped, tag = 'input window, operand 0, single buffered']
    #allocation5 [shape = 's32[1]{0}', space=sflag, size = 0x4, scoped, tag = 'scoped memory for tpu_custom_call.1']
    #allocation6 [shape = 's32[1]{0}', space=sflag, size = 0x4, scoped, tag = 'scoped memory for tpu_custom_call.1']
    #allocation7 [shape = 'u8[512]{0}', space=vmem, size = 0x400, scoped, tag = 'input window, operand 3, single buffered']
    #allocation8 [shape = 's32[1]{0}', space=sflag, size = 0x4, scoped, tag = 'scoped memory for tpu_custom_call.1']
    #allocation9 [shape = 'u8[2048]{0}', space=vmem, size = 0x800, scoped, tag = 'input window, operand 5, single buffered']
    #allocation10 [shape = 'u8[2048]{0}', space=vmem, size = 0x800, scoped, tag = 'input window, operand 6, single buffered']
    #allocation11 [shape = 's32[1]{0}', space=sflag, size = 0x4, scoped, tag = 'scoped memory for tpu_custom_call.1']
    #allocation12 [shape = 'u8[2048]{0}', space=vmem, size = 0x800, scoped, tag = 'input window, operand 7, single buffered']
    #allocation13 [shape = 'u8[512]{0}', space=vmem, size = 0x400, scoped, tag = 'input window, operand 8, single buffered']
    #allocation14 [shape = 's32[1]{0}', space=sflag, size = 0x4, scoped, tag = 'scoped memory for tpu_custom_call.1']
    #allocation15 [shape = 'u8[16384]{0}', space=vmem, size = 0x4000, scoped, tag = 'input window, operand 9, single buffered']
    #allocation16 [shape = 'u8[2048]{0}', space=vmem, size = 0x800, scoped, tag = 'input window, operand 10, single buffered']
    #allocation17 [shape = 's32[1]{0}', space=sflag, size = 0x4, scoped, tag = 'scoped memory for tpu_custom_call.1']
    #allocation18 [shape = 'u8[2048]{0}', space=vmem, size = 0x800, scoped, tag = 'input window, operand 11, single buffered']
    #allocation19 [shape = 'u8[2048]{0}', space=vmem, size = 0x800, scoped, tag = 'input window, operand 12, single buffered']
    #allocation20 [shape = 's32[1]{0}', space=sflag, size = 0x4, scoped, tag = 'scoped memory for tpu_custom_call.1']
    #allocation21 [shape = 'u8[16384]{0}', space=vmem, size = 0x4000, scoped, tag = 'input window, operand 14, single buffered']
    #allocation22 [shape = 'u8[2048]{0}', space=vmem, size = 0x800, scoped, tag = 'input window, operand 15, single buffered']
    #allocation23 [shape = 's32[1]{0}', space=sflag, size = 0x4, scoped, tag = 'scoped memory for tpu_custom_call.1']
    #allocation24 [shape = 'u8[2048]{0}', space=vmem, size = 0x800, scoped, tag = 'input window, operand 16, single buffered']
    #allocation25 [shape = 'u8[2048]{0}', space=vmem, size = 0x800, scoped, tag = 'input window, operand 17, single buffered']
    #allocation26 [shape = 's32[1]{0}', space=sflag, size = 0x4, scoped, tag = 'scoped memory for tpu_custom_call.1']
    #allocation27 [shape = 'u8[8192]{0}', space=vmem, size = 0x2000, scoped, tag = 'input window, operand 18, single buffered']
    #allocation28 [shape = 'u8[16384]{0}', space=vmem, size = 0x4000, scoped, tag = 'input window, operand 19, single buffered']
    #allocation29 [shape = 's32[1]{0}', space=sflag, size = 0x4, scoped, tag = 'scoped memory for tpu_custom_call.1']
    #allocation30 [shape = 'u8[2048]{0}', space=vmem, size = 0x800, scoped, tag = 'input window, operand 20, single buffered']
    #allocation31 [shape = 'u8[2048]{0}', space=vmem, size = 0x800, scoped, tag = 'input window, operand 21, single buffered']
    #allocation32 [shape = 's32[1]{0}', space=sflag, size = 0x4, scoped, tag = 'scoped memory for tpu_custom_call.1']
    #allocation33 [shape = 'u8[2048]{0}', space=vmem, size = 0x800, scoped, tag = 'input window, operand 22, single buffered']
    #allocation34 [shape = 'u8[24576]{0}', space=vmem, size = 0x6000, scoped, tag = 'input window, operand 24, single buffered']
    #allocation35 [shape = 's32[1]{0}', space=sflag, size = 0x4, scoped, tag = 'scoped memory for tpu_custom_call.1']
    #allocation36 [shape = 'u8[8192]{0}', space=vmem, size = 0x2000, scoped, tag = 'input window, operand 27, single buffered']
    #allocation37 [shape = 'u8[32768]{0}', space=vmem, size = 0x8000, scoped, tag = 'output window, operand 0, single buffered']
    %64 = vsyncpa [#allocation5], 0
    %65 = vsyncpa [#allocation8], 0
    %66 = vsyncpa [#allocation11], 0
    %67 = vsyncpa [#allocation14], 0
    %68 = vsyncpa [#allocation17], 0
    %69 = vsyncpa [#allocation20], 0
    %70 = vsyncpa [#allocation23], 0
    %71 = vsyncpa [#allocation26], 0
    %72 = vsyncpa [#allocation29], 0
    %73 = vsyncpa [#allocation32], 0
    %74 = vsyncpa [#allocation35], 0
    %75 = vsyncpa [#allocation6], 0
    // Predicated region
    $region2: #{tpu_custom_call.1} parent=1 // pred_check
      _
    $region3: #{tpu_custom_call.1} parent=1 // pred_check_branch
      %77 = sbr.rel (0) target = $region5
    $region4: #{tpu_custom_call.1} parent=1 // pred_region
      %s79 = ssub.s32 1024, 1024
      %80 = vsyncadd [#allocation5], %s79
      %s81 = sshll.u32 [#allocation4], 4
      %s82 = int_to_ptr.vmem [resolvable:$true] %s81
      %87 = dma.hbm_to_vmem [thread:$0]  %s1, 1024, %s82, [#allocation5], 128, 128, 8
    $region5: #{tpu_custom_call.1} parent=1 // pred_fallthru
      _
    // Predicated region
    $region6: #{tpu_custom_call.1} parent=1 // pred_check
      _
    $region7: #{tpu_custom_call.1} parent=1 // pred_check_branch
      %89 = sbr.rel (0) target = $region9
    $region8: #{tpu_custom_call.1} parent=1 // pred_region
      _
    $region9: #{tpu_custom_call.1} parent=1 // pred_fallthru
      _
    // Predicated region
    $region10: #{tpu_custom_call.1} parent=1 // pred_check
      _
    $region11: #{tpu_custom_call.1} parent=1 // pred_check_branch
      %91 = sbr.rel (0) target = $region13
    $region12: #{tpu_custom_call.1} parent=1 // pred_region
      _
    $region13: #{tpu_custom_call.1} parent=1 // pred_fallthru
      _
    // Predicated region
    $region14: #{tpu_custom_call.1} parent=1 // pred_check
      _
    $region15: #{tpu_custom_call.1} parent=1 // pred_check_branch
      %93 = sbr.rel (0) target = $region17
    $region16: #{tpu_custom_call.1} parent=1 // pred_region
      %s95 = ssub.s32 16, 16
      %96 = vsyncadd [#allocation8], %s95
      %s98 = sshll.u32 [#allocation7], 4
      %s99 = int_to_ptr.vmem [resolvable:$true] %s98
      %101 = dma.hbm_to_vmem [thread:$0]  %s7, 16, %s99, [#allocation8]
    $region17: #{tpu_custom_call.1} parent=1 // pred_fallthru
      _
    // Predicated region
    $region18: #{tpu_custom_call.1} parent=1 // pred_check
      _
    $region19: #{tpu_custom_call.1} parent=1 // pred_check_branch
      %103 = sbr.rel (0) target = $region21
    $region20: #{tpu_custom_call.1} parent=1 // pred_region
      _
    $region21: #{tpu_custom_call.1} parent=1 // pred_fallthru
      _
    // Predicated region
    $region22: #{tpu_custom_call.1} parent=1 // pred_check
      _
    $region23: #{tpu_custom_call.1} parent=1 // pred_check_branch
      %105 = sbr.rel (0) target = $region25
    $region24: #{tpu_custom_call.1} parent=1 // pred_region
      %s107 = ssub.s32 64, 64
      %108 = vsyncadd [#allocation8], %s107
      %s110 = sshll.u32 [#allocation9], 4
      %s111 = int_to_ptr.vmem [resolvable:$true] %s110
      %113 = dma.hbm_to_vmem [thread:$0]  %s11, 64, %s111, [#allocation8]
    $region25: #{tpu_custom_call.1} parent=1 // pred_fallthru
      _
    // Predicated region
    $region26: #{tpu_custom_call.1} parent=1 // pred_check
      _
    $region27: #{tpu_custom_call.1} parent=1 // pred_check_branch
      %115 = sbr.rel (0) target = $region29
    $region28: #{tpu_custom_call.1} parent=1 // pred_region
      %s117 = ssub.s32 64, 64
      %118 = vsyncadd [#allocation11], %s117
      %s120 = sshll.u32 [#allocation10], 4
      %s121 = int_to_ptr.vmem [resolvable:$true] %s120
      %123 = dma.hbm_to_vmem [thread:$0]  %s13, 64, %s121, [#allocation11]
    $region29: #{tpu_custom_call.1} parent=1 // pred_fallthru
      _
    // Predicated region
    $region30: #{tpu_custom_call.1} parent=1 // pred_check
      _
    $region31: #{tpu_custom_call.1} parent=1 // pred_check_branch
      %125 = sbr.rel (0) target = $region33
    $region32: #{tpu_custom_call.1} parent=1 // pred_region
      %s127 = ssub.s32 64, 64
      %128 = vsyncadd [#allocation11], %s127
      %s130 = sshll.u32 [#allocation12], 4
      %s131 = int_to_ptr.vmem [resolvable:$true] %s130
      %133 = dma.hbm_to_vmem [thread:$0]  %s15, 64, %s131, [#allocation11]
    $region33: #{tpu_custom_call.1} parent=1 // pred_fallthru
      _
    // Predicated region
    $region34: #{tpu_custom_call.1} parent=1 // pred_check
      _
    $region35: #{tpu_custom_call.1} parent=1 // pred_check_branch
      %135 = sbr.rel (0) target = $region37
    $region36: #{tpu_custom_call.1} parent=1 // pred_region
      %s137 = ssub.s32 16, 16
      %138 = vsyncadd [#allocation14], %s137
      %s140 = sshll.u32 [#allocation13], 4
      %s141 = int_to_ptr.vmem [resolvable:$true] %s140
      %143 = dma.hbm_to_vmem [thread:$0]  %s17, 16, %s141, [#allocation14]
    $region37: #{tpu_custom_call.1} parent=1 // pred_fallthru
      _
    // Predicated region
    $region38: #{tpu_custom_call.1} parent=1 // pred_check
      _
    $region39: #{tpu_custom_call.1} parent=1 // pred_check_branch
      %145 = sbr.rel (0) target = $region41
    $region40: #{tpu_custom_call.1} parent=1 // pred_region
      %s147 = ssub.s32 512, 512
      %148 = vsyncadd [#allocation14], %s147
      %s149 = sshll.u32 [#allocation15], 4
      %s150 = int_to_ptr.vmem [resolvable:$true] %s149
      %155 = dma.hbm_to_vmem [thread:$0]  %s19, 512, %s150, [#allocation14], 64, 64, 4
    $region41: #{tpu_custom_call.1} parent=1 // pred_fallthru
      _
    // Predicated region
    $region42: #{tpu_custom_call.1} parent=1 // pred_check
      _
    $region43: #{tpu_custom_call.1} parent=1 // pred_check_branch
      %157 = sbr.rel (0) target = $region45
    $region44: #{tpu_custom_call.1} parent=1 // pred_region
      %s159 = ssub.s32 64, 64
      %160 = vsyncadd [#allocation17], %s159
      %s162 = sshll.u32 [#allocation16], 4
      %s163 = int_to_ptr.vmem [resolvable:$true] %s162
      %165 = dma.hbm_to_vmem [thread:$0]  %s21, 64, %s163, [#allocation17]
    $region45: #{tpu_custom_call.1} parent=1 // pred_fallthru
      _
    // Predicated region
    $region46: #{tpu_custom_call.1} parent=1 // pred_check
      _
    $region47: #{tpu_custom_call.1} parent=1 // pred_check_branch
      %167 = sbr.rel (0) target = $region49
    $region48: #{tpu_custom_call.1} parent=1 // pred_region
      %s169 = ssub.s32 64, 64
      %170 = vsyncadd [#allocation17], %s169
      %s172 = sshll.u32 [#allocation18], 4
      %s173 = int_to_ptr.vmem [resolvable:$true] %s172
      %175 = dma.hbm_to_vmem [thread:$0]  %s23, 64, %s173, [#allocation17]
    $region49: #{tpu_custom_call.1} parent=1 // pred_fallthru
      _
    // Predicated region
    $region50: #{tpu_custom_call.1} parent=1 // pred_check
      _
    $region51: #{tpu_custom_call.1} parent=1 // pred_check_branch
      %177 = sbr.rel (0) target = $region53
    $region52: #{tpu_custom_call.1} parent=1 // pred_region
      %s179 = ssub.s32 64, 64
      %180 = vsyncadd [#allocation20], %s179
      %s182 = sshll.u32 [#allocation19], 4
      %s183 = int_to_ptr.vmem [resolvable:$true] %s182
      %185 = dma.hbm_to_vmem [thread:$0]  %s25, 64, %s183, [#allocation20]
    $region53: #{tpu_custom_call.1} parent=1 // pred_fallthru
      _
    // Predicated region
    $region54: #{tpu_custom_call.1} parent=1 // pred_check
      _
    $region55: #{tpu_custom_call.1} parent=1 // pred_check_branch
      %187 = sbr.rel (0) target = $region57
    $region56: #{tpu_custom_call.1} parent=1 // pred_region
      _
    $region57: #{tpu_custom_call.1} parent=1 // pred_fallthru
      _
    // Predicated region
    $region58: #{tpu_custom_call.1} parent=1 // pred_check
      _
    $region59: #{tpu_custom_call.1} parent=1 // pred_check_branch
      %189 = sbr.rel (0) target = $region61
    $region60: #{tpu_custom_call.1} parent=1 // pred_region
      %s191 = ssub.s32 512, 512
      %192 = vsyncadd [#allocation20], %s191
      %s193 = sshll.u32 [#allocation21], 4
      %s194 = int_to_ptr.vmem [resolvable:$true] %s193
      %199 = dma.hbm_to_vmem [thread:$0]  %s29, 512, %s194, [#allocation20], 64, 64, 4
    $region61: #{tpu_custom_call.1} parent=1 // pred_fallthru
      _
    // Predicated region
    $region62: #{tpu_custom_call.1} parent=1 // pred_check
      _
    $region63: #{tpu_custom_call.1} parent=1 // pred_check_branch
      %201 = sbr.rel (0) target = $region65
    $region64: #{tpu_custom_call.1} parent=1 // pred_region
      %s203 = ssub.s32 64, 64
      %204 = vsyncadd [#allocation23], %s203
      %s206 = sshll.u32 [#allocation22], 4
      %s207 = int_to_ptr.vmem [resolvable:$true] %s206
      %209 = dma.hbm_to_vmem [thread:$0]  %s31, 64, %s207, [#allocation23]
    $region65: #{tpu_custom_call.1} parent=1 // pred_fallthru
      _
    // Predicated region
    $region66: #{tpu_custom_call.1} parent=1 // pred_check
      _
    $region67: #{tpu_custom_call.1} parent=1 // pred_check_branch
      %211 = sbr.rel (0) target = $region69
    $region68: #{tpu_custom_call.1} parent=1 // pred_region
      %s213 = ssub.s32 64, 64
      %214 = vsyncadd [#allocation23], %s213
      %s216 = sshll.u32 [#allocation24], 4
      %s217 = int_to_ptr.vmem [resolvable:$true] %s216
      %219 = dma.hbm_to_vmem [thread:$0]  %s33, 64, %s217, [#allocation23]
    $region69: #{tpu_custom_call.1} parent=1 // pred_fallthru
      _
    // Predicated region
    $region70: #{tpu_custom_call.1} parent=1 // pred_check
      _
    $region71: #{tpu_custom_call.1} parent=1 // pred_check_branch
      %221 = sbr.rel (0) target = $region73
    $region72: #{tpu_custom_call.1} parent=1 // pred_region
      %s223 = ssub.s32 64, 64
      %224 = vsyncadd [#allocation26], %s223
      %s226 = sshll.u32 [#allocation25], 4
      %s227 = int_to_ptr.vmem [resolvable:$true] %s226
      %229 = dma.hbm_to_vmem [thread:$0]  %s35, 64, %s227, [#allocation26]
    $region73: #{tpu_custom_call.1} parent=1 // pred_fallthru
      _
    // Predicated region
    $region74: #{tpu_custom_call.1} parent=1 // pred_check
      _
    $region75: #{tpu_custom_call.1} parent=1 // pred_check_branch
      %231 = sbr.rel (0) target = $region77
    $region76: #{tpu_custom_call.1} parent=1 // pred_region
      %s233 = ssub.s32 256, 256
      %234 = vsyncadd [#allocation26], %s233
      %s235 = sshll.u32 [#allocation27], 4
      %s236 = int_to_ptr.vmem [resolvable:$true] %s235
      %241 = dma.hbm_to_vmem [thread:$0]  %s37, 256, %s236, [#allocation26], 64, 64, 4
    $region77: #{tpu_custom_call.1} parent=1 // pred_fallthru
      _
    // Predicated region
    $region78: #{tpu_custom_call.1} parent=1 // pred_check
      _
    $region79: #{tpu_custom_call.1} parent=1 // pred_check_branch
      %243 = sbr.rel (0) target = $region81
    $region80: #{tpu_custom_call.1} parent=1 // pred_region
      %s245 = ssub.s32 512, 512
      %246 = vsyncadd [#allocation29], %s245
      %s247 = sshll.u32 [#allocation28], 4
      %s248 = int_to_ptr.vmem [resolvable:$true] %s247
      %253 = dma.hbm_to_vmem [thread:$0]  %s39, 512, %s248, [#allocation29], 64, 64, 4
    $region81: #{tpu_custom_call.1} parent=1 // pred_fallthru
      _
    // Predicated region
    $region82: #{tpu_custom_call.1} parent=1 // pred_check
      _
    $region83: #{tpu_custom_call.1} parent=1 // pred_check_branch
      %255 = sbr.rel (0) target = $region85
    $region84: #{tpu_custom_call.1} parent=1 // pred_region
      %s257 = ssub.s32 64, 64
      %258 = vsyncadd [#allocation29], %s257
      %s260 = sshll.u32 [#allocation30], 4
      %s261 = int_to_ptr.vmem [resolvable:$true] %s260
      %263 = dma.hbm_to_vmem [thread:$0]  %s41, 64, %s261, [#allocation29]
    $region85: #{tpu_custom_call.1} parent=1 // pred_fallthru
      _
    // Predicated region
    $region86: #{tpu_custom_call.1} parent=1 // pred_check
      _
    $region87: #{tpu_custom_call.1} parent=1 // pred_check_branch
      %265 = sbr.rel (0) target = $region89
    $region88: #{tpu_custom_call.1} parent=1 // pred_region
      %s267 = ssub.s32 64, 64
      %268 = vsyncadd [#allocation32], %s267
      %s270 = sshll.u32 [#allocation31], 4
      %s271 = int_to_ptr.vmem [resolvable:$true] %s270
      %273 = dma.hbm_to_vmem [thread:$0]  %s43, 64, %s271, [#allocation32]
    $region89: #{tpu_custom_call.1} parent=1 // pred_fallthru
      _
    // Predicated region
    $region90: #{tpu_custom_call.1} parent=1 // pred_check
      _
    $region91: #{tpu_custom_call.1} parent=1 // pred_check_branch
      %275 = sbr.rel (0) target = $region93
    $region92: #{tpu_custom_call.1} parent=1 // pred_region
      %s277 = ssub.s32 64, 64
      %278 = vsyncadd [#allocation32], %s277
      %s280 = sshll.u32 [#allocation33], 4
      %s281 = int_to_ptr.vmem [resolvable:$true] %s280
      %283 = dma.hbm_to_vmem [thread:$0]  %s45, 64, %s281, [#allocation32]
    $region93: #{tpu_custom_call.1} parent=1 // pred_fallthru
      _
    // Predicated region
    $region94: #{tpu_custom_call.1} parent=1 // pred_check
      _
    $region95: #{tpu_custom_call.1} parent=1 // pred_check_branch
      %285 = sbr.rel (0) target = $region97
    $region96: #{tpu_custom_call.1} parent=1 // pred_region
      _
    $region97: #{tpu_custom_call.1} parent=1 // pred_fallthru
      _
    // Predicated region
    $region98: #{tpu_custom_call.1} parent=1 // pred_check
      _
    $region99: #{tpu_custom_call.1} parent=1 // pred_check_branch
      %287 = sbr.rel (0) target = $region101
    $region100: #{tpu_custom_call.1} parent=1 // pred_region
      %s289 = ssub.s32 768, 768
      %290 = vsyncadd [#allocation35], %s289
      %s291 = sshll.u32 [#allocation34], 4
      %s292 = int_to_ptr.vmem [resolvable:$true] %s291
      %297 = dma.hbm_to_vmem [thread:$0]  %s49, 768, %s292, [#allocation35], 64, 64, 4
    $region101: #{tpu_custom_call.1} parent=1 // pred_fallthru
      _
    // Predicated region
    $region102: #{tpu_custom_call.1} parent=1 // pred_check
      _
    $region103: #{tpu_custom_call.1} parent=1 // pred_check_branch
      %299 = sbr.rel (0) target = $region105
    $region104: #{tpu_custom_call.1} parent=1 // pred_region
      _
    $region105: #{tpu_custom_call.1} parent=1 // pred_fallthru
      _
    // Predicated region
    $region106: #{tpu_custom_call.1} parent=1 // pred_check
      _
    $region107: #{tpu_custom_call.1} parent=1 // pred_check_branch
      %301 = sbr.rel (0) target = $region109
    $region108: #{tpu_custom_call.1} parent=1 // pred_region
      _
    $region109: #{tpu_custom_call.1} parent=1 // pred_fallthru
      _
    // Predicated region
    $region110: #{tpu_custom_call.1} parent=1 // pred_check
      _
    $region111: #{tpu_custom_call.1} parent=1 // pred_check_branch
      %303 = sbr.rel (0) target = $region113
    $region112: #{tpu_custom_call.1} parent=1 // pred_region
      %s305 = ssub.s32 256, 256
      %306 = vsyncadd [#allocation35], %s305
      %s307 = sshll.u32 [#allocation36], 4
      %s308 = int_to_ptr.vmem [resolvable:$true] %s307
      %313 = dma.hbm_to_vmem [thread:$0]  %s55, 256, %s308, [#allocation35], 64, 64, 4
    $region113: #{tpu_custom_call.1} parent=1 // pred_fallthru
      _
    // Predicated region
    $region114: #{tpu_custom_call.1} parent=1 // pred_check
      _
    $region115: #{tpu_custom_call.1} parent=1 // pred_check_branch
      %315 = sbr.rel (0) target = $region117
    $region116: #{tpu_custom_call.1} parent=1 // pred_region
      _
    $region117: #{tpu_custom_call.1} parent=1 // pred_fallthru
      _
    // Predicated region
    $region118: #{tpu_custom_call.1} parent=1 // pred_check
      _
    $region119: #{tpu_custom_call.1} parent=1 // pred_check_branch
      %317 = sbr.rel (0) target = $region121
    $region120: #{tpu_custom_call.1} parent=1 // pred_region
      %318 = dma.done [#allocation5], 1024
    $region121: #{tpu_custom_call.1} parent=1 // pred_fallthru
      _
    // Predicated region
    $region122: #{tpu_custom_call.1} parent=1 // pred_check
      _
    $region123: #{tpu_custom_call.1} parent=1 // pred_check_branch
      %320 = sbr.rel (0) target = $region125
    $region124: #{tpu_custom_call.1} parent=1 // pred_region
      %321 = dma.done [#allocation8], 16
    $region125: #{tpu_custom_call.1} parent=1 // pred_fallthru
      _
    // Predicated region
    $region126: #{tpu_custom_call.1} parent=1 // pred_check
      _
    $region127: #{tpu_custom_call.1} parent=1 // pred_check_branch
      %323 = sbr.rel (0) target = $region129
    $region128: #{tpu_custom_call.1} parent=1 // pred_region
      %324 = dma.done [#allocation8], 64
    $region129: #{tpu_custom_call.1} parent=1 // pred_fallthru
      _
    // Predicated region
    $region130: #{tpu_custom_call.1} parent=1 // pred_check
      _
    $region131: #{tpu_custom_call.1} parent=1 // pred_check_branch
      %326 = sbr.rel (0) target = $region133
    $region132: #{tpu_custom_call.1} parent=1 // pred_region
      %327 = dma.done [#allocation11], 64
    $region133: #{tpu_custom_call.1} parent=1 // pred_fallthru
      _
    // Predicated region
    $region134: #{tpu_custom_call.1} parent=1 // pred_check
      _
    $region135: #{tpu_custom_call.1} parent=1 // pred_check_branch
      %329 = sbr.rel (0) target = $region137
    $region136: #{tpu_custom_call.1} parent=1 // pred_region
      %330 = dma.done [#allocation11], 64
    $region137: #{tpu_custom_call.1} parent=1 // pred_fallthru
      _
    // Predicated region
    $region138: #{tpu_custom_call.1} parent=1 // pred_check
      _
    $region139: #{tpu_custom_call.1} parent=1 // pred_check_branch
      %332 = sbr.rel (0) target = $region141
    $region140: #{tpu_custom_call.1} parent=1 // pred_region
      %333 = dma.done [#allocation14], 16
    $region141: #{tpu_custom_call.1} parent=1 // pred_fallthru
      _
    // Predicated region
    $region142: #{tpu_custom_call.1} parent=1 // pred_check
      _
    $region143: #{tpu_custom_call.1} parent=1 // pred_check_branch
      %335 = sbr.rel (0) target = $region145
    $region144: #{tpu_custom_call.1} parent=1 // pred_region
      %336 = dma.done [#allocation14], 512
    $region145: #{tpu_custom_call.1} parent=1 // pred_fallthru
      _
    // Predicated region
    $region146: #{tpu_custom_call.1} parent=1 // pred_check
      _
    $region147: #{tpu_custom_call.1} parent=1 // pred_check_branch
      %338 = sbr.rel (0) target = $region149
    $region148: #{tpu_custom_call.1} parent=1 // pred_region
      %339 = dma.done [#allocation17], 64
    $region149: #{tpu_custom_call.1} parent=1 // pred_fallthru
      _
    // Predicated region
    $region150: #{tpu_custom_call.1} parent=1 // pred_check
      _
    $region151: #{tpu_custom_call.1} parent=1 // pred_check_branch
      %341 = sbr.rel (0) target = $region153
    $region152: #{tpu_custom_call.1} parent=1 // pred_region
      %342 = dma.done [#allocation17], 64
    $region153: #{tpu_custom_call.1} parent=1 // pred_fallthru
      _
    // Predicated region
    $region154: #{tpu_custom_call.1} parent=1 // pred_check
      _
    $region155: #{tpu_custom_call.1} parent=1 // pred_check_branch
      %344 = sbr.rel (0) target = $region157
    $region156: #{tpu_custom_call.1} parent=1 // pred_region
      %345 = dma.done [#allocation20], 64
    $region157: #{tpu_custom_call.1} parent=1 // pred_fallthru
      _
    // Predicated region
    $region158: #{tpu_custom_call.1} parent=1 // pred_check
      _
    $region159: #{tpu_custom_call.1} parent=1 // pred_check_branch
      %347 = sbr.rel (0) target = $region161
    $region160: #{tpu_custom_call.1} parent=1 // pred_region
      %348 = dma.done [#allocation20], 512
    $region161: #{tpu_custom_call.1} parent=1 // pred_fallthru
      _
    // Predicated region
    $region162: #{tpu_custom_call.1} parent=1 // pred_check
      _
    $region163: #{tpu_custom_call.1} parent=1 // pred_check_branch
      %350 = sbr.rel (0) target = $region165
    $region164: #{tpu_custom_call.1} parent=1 // pred_region
      %351 = dma.done [#allocation23], 64
    $region165: #{tpu_custom_call.1} parent=1 // pred_fallthru
      _
    // Predicated region
    $region166: #{tpu_custom_call.1} parent=1 // pred_check
      _
    $region167: #{tpu_custom_call.1} parent=1 // pred_check_branch
      %353 = sbr.rel (0) target = $region169
    $region168: #{tpu_custom_call.1} parent=1 // pred_region
      %354 = dma.done [#allocation23], 64
    $region169: #{tpu_custom_call.1} parent=1 // pred_fallthru
      _
    // Predicated region
    $region170: #{tpu_custom_call.1} parent=1 // pred_check
      _
    $region171: #{tpu_custom_call.1} parent=1 // pred_check_branch
      %356 = sbr.rel (0) target = $region173
    $region172: #{tpu_custom_call.1} parent=1 // pred_region
      %357 = dma.done [#allocation26], 64
    $region173: #{tpu_custom_call.1} parent=1 // pred_fallthru
      _
    // Predicated region
    $region174: #{tpu_custom_call.1} parent=1 // pred_check
      _
    $region175: #{tpu_custom_call.1} parent=1 // pred_check_branch
      %359 = sbr.rel (0) target = $region177
    $region176: #{tpu_custom_call.1} parent=1 // pred_region
      %360 = dma.done [#allocation26], 256
    $region177: #{tpu_custom_call.1} parent=1 // pred_fallthru
      _
    // Predicated region
    $region178: #{tpu_custom_call.1} parent=1 // pred_check
      _
    $region179: #{tpu_custom_call.1} parent=1 // pred_check_branch
      %362 = sbr.rel (0) target = $region181
    $region180: #{tpu_custom_call.1} parent=1 // pred_region
      %363 = dma.done [#allocation29], 512
    $region181: #{tpu_custom_call.1} parent=1 // pred_fallthru
      _
    // Predicated region
    $region182: #{tpu_custom_call.1} parent=1 // pred_check
      _
    $region183: #{tpu_custom_call.1} parent=1 // pred_check_branch
      %365 = sbr.rel (0) target = $region185
    $region184: #{tpu_custom_call.1} parent=1 // pred_region
      %366 = dma.done [#allocation29], 64
    $region185: #{tpu_custom_call.1} parent=1 // pred_fallthru
      _
    // Predicated region
    $region186: #{tpu_custom_call.1} parent=1 // pred_check
      _
    $region187: #{tpu_custom_call.1} parent=1 // pred_check_branch
      %368 = sbr.rel (0) target = $region189
    $region188: #{tpu_custom_call.1} parent=1 // pred_region
      %369 = dma.done [#allocation32], 64
    $region189: #{tpu_custom_call.1} parent=1 // pred_fallthru
      _
    // Predicated region
    $region190: #{tpu_custom_call.1} parent=1 // pred_check
      _
    $region191: #{tpu_custom_call.1} parent=1 // pred_check_branch
      %371 = sbr.rel (0) target = $region193
    $region192: #{tpu_custom_call.1} parent=1 // pred_region
      %372 = dma.done [#allocation32], 64
    $region193: #{tpu_custom_call.1} parent=1 // pred_fallthru
      _
    // Predicated region
    $region194: #{tpu_custom_call.1} parent=1 // pred_check
      _
    $region195: #{tpu_custom_call.1} parent=1 // pred_check_branch
      %374 = sbr.rel (0) target = $region197
    $region196: #{tpu_custom_call.1} parent=1 // pred_region
      %375 = dma.done [#allocation35], 768
    $region197: #{tpu_custom_call.1} parent=1 // pred_fallthru
      _
    // Predicated region
    $region198: #{tpu_custom_call.1} parent=1 // pred_check
      _
    $region199: #{tpu_custom_call.1} parent=1 // pred_check_branch
      %377 = sbr.rel (0) target = $region201
    $region200: #{tpu_custom_call.1} parent=1 // pred_region
      %378 = dma.done [#allocation35], 256
    $region201: #{tpu_custom_call.1} parent=1 // pred_fallthru
      _
    %v380 = vld [vmem:[%s3] sm:$0xff]
    %v381 = vld [vmem:[%s3 + $0x8] sm:$0xff]
    %v382 = vld [vmem:[%s3 + $0x10] sm:$0xff]
    %v383 = vld [vmem:[%s3 + $0x18] sm:$0xff]
    %v384 = vld [vmem:[%s3 + $0x20] sm:$0xff]
    %v385 = vld [vmem:[%s3 + $0x28] sm:$0xff]
    %v386 = vld [vmem:[%s3 + $0x30] sm:$0xff]
    %v387 = vld [vmem:[%s3 + $0x38] sm:$0xff]
    %v388 = vld [vmem:[#allocation7] sm:$0x1]
    %390 = vset.pattern.permute.xlu0 0
    %391 = vperm.xlu0 %390, %v380
    %v392 = vpop.permute.xlu0 %391
    %395 = vset.pattern.permute.xlu0 0
    %396 = vperm.xlu0 %395, %v381
    %v397 = vpop.permute.xlu0 %396
    %400 = vset.pattern.permute.xlu0 0
    %401 = vperm.xlu0 %400, %v382
    %v402 = vpop.permute.xlu0 %401
    %405 = vset.pattern.permute.xlu0 0
    %406 = vperm.xlu0 %405, %v383
    %v407 = vpop.permute.xlu0 %406
    %410 = vset.pattern.permute.xlu0 0
    %411 = vperm.xlu0 %410, %v384
    %v412 = vpop.permute.xlu0 %411
    %415 = vset.pattern.permute.xlu0 0
    %416 = vperm.xlu0 %415, %v385
    %v417 = vpop.permute.xlu0 %416
    %420 = vset.pattern.permute.xlu0 0
    %421 = vperm.xlu0 %420, %v386
    %v422 = vpop.permute.xlu0 %421
    %425 = vset.pattern.permute.xlu0 0
    %426 = vperm.xlu0 %425, %v387
    %v427 = vpop.permute.xlu0 %426
    %v430 = vlaneseq
    %v431 = vshrl.u32 %v430, 7
    %v432 = vsub.s32 0, %v431
    %v433 = vrot.slane %v388, %v432
    %v435 = vmul.f32 %v392, %v433
    %v436 = vmul.f32 %v397, %v433
    %v437 = vmul.f32 %v402, %v433
    %v438 = vmul.f32 %v407, %v433
    %v439 = vmul.f32 %v412, %v433
    %v440 = vmul.f32 %v417, %v433
    %v441 = vmul.f32 %v422, %v433
    %v442 = vmul.f32 %v427, %v433
    %v443 = vld [vmem:[#allocation9] sm:$0x1]
    %v444 = vlaneseq
    %v445 = vshrl.u32 %v444, 7
    %v446 = vsub.s32 0, %v445
    %v447 = vrot.slane %v443, %v446
    %v448 = vadd.f32 %v435, %v447
    %v449 = vadd.f32 %v436, %v447
    %v450 = vadd.f32 %v437, %v447
    %v451 = vadd.f32 %v438, %v447
    %v452 = vadd.f32 %v439, %v447
    %v453 = vadd.f32 %v440, %v447
    %v454 = vadd.f32 %v441, %v447
    %v455 = vadd.f32 %v442, %v447
    %v456 = vld [vmem:[#allocation10] sm:$0x1]
    %v457 = vld [vmem:[#allocation12] sm:$0x1]
    %vm458 = vcmask 261120
    %v459 = vsel %vm458, %v448, 0.0
    %460 = vadd.xlane.f32.xlu0 %v459
    %v461 = vpop.xlane.xlu0 %460
    %v462 = vsel %vm458, %v449, 0.0
    %463 = vadd.xlane.f32.xlu0 %v462
    %v464 = vpop.xlane.xlu0 %463
    %v465 = vsel %vm458, %v450, 0.0
    %466 = vadd.xlane.f32.xlu0 %v465
    %v467 = vpop.xlane.xlu0 %466
    %v468 = vsel %vm458, %v451, 0.0
    %469 = vadd.xlane.f32.xlu0 %v468
    %v470 = vpop.xlane.xlu0 %469
    %v471 = vsel %vm458, %v452, 0.0
    %472 = vadd.xlane.f32.xlu0 %v471
    %v473 = vpop.xlane.xlu0 %472
    %v474 = vsel %vm458, %v453, 0.0
    %475 = vadd.xlane.f32.xlu0 %v474
    %v476 = vpop.xlane.xlu0 %475
    %v477 = vsel %vm458, %v454, 0.0
    %478 = vadd.xlane.f32.xlu0 %v477
    %v479 = vpop.xlane.xlu0 %478
    %v480 = vsel %vm458, %v455, 0.0
    %481 = vadd.xlane.f32.xlu0 %v480
    %v482 = vpop.xlane.xlu0 %481
    %v483 = vrcp.pop 32.0
    %v484 = vmul.f32 %v461, %v483
    %v485 = vmul.f32 %v464, %v483
    %v486 = vmul.f32 %v467, %v483
    %v487 = vmul.f32 %v470, %v483
    %v488 = vmul.f32 %v473, %v483
    %v489 = vmul.f32 %v476, %v483
    %v490 = vmul.f32 %v479, %v483
    %v491 = vmul.f32 %v482, %v483
    %v492 = vsub.f32 %v448, %v484
    %v493 = vsub.f32 %v449, %v485
    %v494 = vsub.f32 %v450, %v486
    %v495 = vsub.f32 %v451, %v487
    %v496 = vsub.f32 %v452, %v488
    %v497 = vsub.f32 %v453, %v489
    %v498 = vsub.f32 %v454, %v490
    %v499 = vsub.f32 %v455, %v491
    %v500 = vmul.f32 %v492, %v492
    %v501 = vmul.f32 %v493, %v493
    %v502 = vmul.f32 %v494, %v494
    %v503 = vmul.f32 %v495, %v495
    %v504 = vmul.f32 %v496, %v496
    %v505 = vmul.f32 %v497, %v497
    %v506 = vmul.f32 %v498, %v498
    %v507 = vmul.f32 %v499, %v499
    %v508 = vsel %vm458, %v500, 0.0
    %509 = vadd.xlane.f32.xlu0 %v508
    %v510 = vpop.xlane.xlu0 %509
    %v511 = vsel %vm458, %v501, 0.0
    %512 = vadd.xlane.f32.xlu0 %v511
    %v513 = vpop.xlane.xlu0 %512
    %v514 = vsel %vm458, %v502, 0.0
    %515 = vadd.xlane.f32.xlu0 %v514
    %v516 = vpop.xlane.xlu0 %515
    %v517 = vsel %vm458, %v503, 0.0
    %518 = vadd.xlane.f32.xlu0 %v517
    %v519 = vpop.xlane.xlu0 %518
    %v520 = vsel %vm458, %v504, 0.0
    %521 = vadd.xlane.f32.xlu0 %v520
    %v522 = vpop.xlane.xlu0 %521
    %v523 = vsel %vm458, %v505, 0.0
    %524 = vadd.xlane.f32.xlu0 %v523
    %v525 = vpop.xlane.xlu0 %524
    %v526 = vsel %vm458, %v506, 0.0
    %527 = vadd.xlane.f32.xlu0 %v526
    %v528 = vpop.xlane.xlu0 %527
    %v529 = vsel %vm458, %v507, 0.0
    %530 = vadd.xlane.f32.xlu0 %v529
    %v531 = vpop.xlane.xlu0 %530
    %v532 = vmul.f32 %v510, %v483
    %v533 = vmul.f32 %v513, %v483
    %v534 = vmul.f32 %v516, %v483
    %v535 = vmul.f32 %v519, %v483
    %v536 = vmul.f32 %v522, %v483
    %v537 = vmul.f32 %v525, %v483
    %v538 = vmul.f32 %v528, %v483
    %v539 = vmul.f32 %v531, %v483
    %v540 = vadd.f32 %v532, 1e-05
    %v541 = vadd.f32 %v533, 1e-05
    %v542 = vadd.f32 %v534, 1e-05
    %v543 = vadd.f32 %v535, 1e-05
    %v544 = vadd.f32 %v536, 1e-05
    %v545 = vadd.f32 %v537, 1e-05
    %v546 = vadd.f32 %v538, 1e-05
    %v547 = vadd.f32 %v539, 1e-05
    %v548 = vrsqrt.pop %v540
    %v549 = vrsqrt.pop %v541
    %v550 = vrsqrt.pop %v542
    %v551 = vrsqrt.pop %v543
    %v552 = vrsqrt.pop %v544
    %v553 = vrsqrt.pop %v545
    %v554 = vrsqrt.pop %v546
    %v555 = vrsqrt.pop %v547
    %v556 = vmul.f32 %v492, %v548
    %v557 = vmul.f32 %v493, %v549
    %v558 = vmul.f32 %v494, %v550
    %v559 = vmul.f32 %v495, %v551
    %v560 = vmul.f32 %v496, %v552
    %v561 = vmul.f32 %v497, %v553
    %v562 = vmul.f32 %v498, %v554
    %v563 = vmul.f32 %v499, %v555
    %v564 = vlaneseq
    %v565 = vshrl.u32 %v564, 7
    %v566 = vsub.s32 0, %v565
    %v567 = vrot.slane %v456, %v566
    %v568 = vmul.f32 %v556, %v567
    %v569 = vmul.f32 %v557, %v567
    %v570 = vmul.f32 %v558, %v567
    %v571 = vmul.f32 %v559, %v567
    %v572 = vmul.f32 %v560, %v567
    %v573 = vmul.f32 %v561, %v567
    %v574 = vmul.f32 %v562, %v567
    %v575 = vmul.f32 %v563, %v567
    %v576 = vlaneseq
    %v577 = vshrl.u32 %v576, 7
    %v578 = vsub.s32 0, %v577
    %v579 = vrot.slane %v457, %v578
    %v580 = vadd.f32 %v568, %v579
    %v581 = vadd.f32 %v569, %v579
    %v582 = vadd.f32 %v570, %v579
    %v583 = vadd.f32 %v571, %v579
    %v584 = vadd.f32 %v572, %v579
    %v585 = vadd.f32 %v573, %v579
    %v586 = vadd.f32 %v574, %v579
    %v587 = vadd.f32 %v575, %v579
    %v588 = vmax.f32 %v580, 0.0
    %v589 = vmax.f32 %v581, 0.0
    %v590 = vmax.f32 %v582, 0.0
    %v591 = vmax.f32 %v583, 0.0
    %v592 = vmax.f32 %v584, 0.0
    %v593 = vmax.f32 %v585, 0.0
    %v594 = vmax.f32 %v586, 0.0
    %v595 = vmax.f32 %v587, 0.0
    %v596 = vpack.c.bf16 %v589, %v588
    %v597 = vpack.c.bf16 %v591, %v590
    %v598 = vpack.c.bf16 %v593, %v592
    %v599 = vpack.c.bf16 %v595, %v594
    %v600 = vld [vmem:[%s9] sm:$0xf]
    %v601 = vld [vmem:[%s9 + $0x4] sm:$0xf]
    %v602 = vld [vmem:[%s9 + $0x8] sm:$0xf]
    %v603 = vld [vmem:[%s9 + $0xc] sm:$0xf]
    %v604 = vld [vmem:[#allocation9 + $0x1] sm:$0x1]
    %v605 = vlaneseq
    %v606 = vshrl.u32 %v605, 7
    %v607 = vsub.s32 0, %v606
    %v608 = vrot.slane %v604, %v607
    %v613 = vunpack.c.l.b16 %v600
    %v614 = vunpack.c.l.b16 %v601
    %v615 = vunpack.c.l.b16 %v602
    %v616 = vunpack.c.l.b16 %v603
    %v617 = vpack.c.b16 %v614, %v613
    %v618 = vpack.c.b16 %v616, %v615
    %v622 = vsel %vm458, %v596, 0
    %v625 = vsel %vm458, %v597, 0
    %v628 = vsel %vm458, %v598, 0
    %v631 = vsel %vm458, %v599, 0
    %633 = vmatprep.subr.bf16.mxu0 0
    %634 = vmatpush1.bf16.msra.mxu0 0
    %635 = vmatprep.subr.bf16.mxu0 0
    %636 = vmatpush1.bf16.msra.mxu0 0
    %637 = vmatprep.subr.bf16.mxu0 0
    %638 = vmatpush1.bf16.msra.mxu0 0
    %639 = vmatprep.subr.bf16.mxu0 0
    %640 = vmatpush1.bf16.msra.mxu0 0
    %641 = vmatprep.subr.bf16.mxu0 0
    %642 = vmatpush1.bf16.msra.mxu0 0
    %643 = vmatprep.subr.bf16.mxu0 0
    %644 = vmatpush1.bf16.msra.mxu0 0
    %645 = vmatprep.subr.bf16.mxu0 0
    %646 = vmatpush1.bf16.msra.mxu0 %v618
    %647 = vmatprep.subr.bf16.mxu0 0
    %648 = vmatpush1.bf16.msra.mxu0 %v617
    %649 = vmatprep.subr.bf16.mxu0 0
    %650 = vmatpush2.bf16.msra.mxu0 0
    %651 = vmatprep.subr.bf16.mxu0 0
    %652 = vmatpush2.bf16.msra.mxu0 0
    %653 = vmatprep.subr.bf16.mxu0 0
    %654 = vmatpush2.bf16.msra.mxu0 0
    %655 = vmatprep.subr.bf16.mxu0 0
    %656 = vmatpush2.bf16.msra.mxu0 0
    %657 = vmatprep.subr.bf16.mxu0 0
    %658 = vmatpush2.bf16.msra.mxu0 0
    %659 = vmatprep.subr.bf16.mxu0 0
    %660 = vmatpush2.bf16.msra.mxu0 0
    %661 = vmatprep.subr.bf16.mxu0 0
    %662 = vmatpush2.bf16.msra.mxu0 0
    %663 = vmatprep.subr.bf16.mxu0 0
    %664 = vmatpush2.bf16.msra.mxu0 0
    %665 = vmatprep.mubr.bf16.mxu0 0
    %666 = vmatmul.mubr.bf16.gmra.mxu0 %v622
    %v667 = vpop.f32.mrf.mxu0
    %v668 = vadd.f32 %v608, %v667
    %v669 = vpop.f32.mrf.mxu0
    %v670 = vpop.f32.mrf.mxu0
    %v671 = vadd.f32 %v608, %v670
    %v672 = vpop.f32.mrf.mxu0
    %673 = vmatprep.mubr.bf16.mxu0 0
    %674 = vmatmul.mubr.bf16.gmra.mxu0 %v625
    %v675 = vpop.f32.mrf.mxu0
    %v676 = vadd.f32 %v608, %v675
    %v677 = vpop.f32.mrf.mxu0
    %v678 = vpop.f32.mrf.mxu0
    %v679 = vadd.f32 %v608, %v678
    %v680 = vpop.f32.mrf.mxu0
    %681 = vmatprep.mubr.bf16.mxu0 0
    %682 = vmatmul.mubr.bf16.gmra.mxu0 %v628
    %v683 = vpop.f32.mrf.mxu0
    %v684 = vadd.f32 %v608, %v683
    %v685 = vpop.f32.mrf.mxu0
    %v686 = vpop.f32.mrf.mxu0
    %v687 = vadd.f32 %v608, %v686
    %v688 = vpop.f32.mrf.mxu0
    %689 = vmatprep.mubr.bf16.mxu0 0
    %690 = vmatmul.mubr.bf16.gmra.mxu0 %v631
    %v691 = vpop.f32.mrf.mxu0
    %v692 = vadd.f32 %v608, %v691
    %v693 = vpop.f32.mrf.mxu0
    %v694 = vpop.f32.mrf.mxu0
    %v695 = vadd.f32 %v608, %v694
    %v696 = vpop.f32.mrf.mxu0
    %697 = vdwg.mxu0
    %v698 = vld [vmem:[#allocation10 + $0x1] sm:$0x1]
    %v699 = vld [vmem:[#allocation12 + $0x1] sm:$0x1]
    %v700 = vsel %vm458, %v668, 0.0
    %701 = vadd.xlane.f32.xlu0 %v700
    %v702 = vpop.xlane.xlu0 %701
    %v703 = vsel %vm458, %v671, 0.0
    %704 = vadd.xlane.f32.xlu0 %v703
    %v705 = vpop.xlane.xlu0 %704
    %v706 = vsel %vm458, %v676, 0.0
    %707 = vadd.xlane.f32.xlu0 %v706
    %v708 = vpop.xlane.xlu0 %707
    %v709 = vsel %vm458, %v679, 0.0
    %710 = vadd.xlane.f32.xlu0 %v709
    %v711 = vpop.xlane.xlu0 %710
    %v712 = vsel %vm458, %v684, 0.0
    %713 = vadd.xlane.f32.xlu0 %v712
    %v714 = vpop.xlane.xlu0 %713
    %v715 = vsel %vm458, %v687, 0.0
    %716 = vadd.xlane.f32.xlu0 %v715
    %v717 = vpop.xlane.xlu0 %716
    %v718 = vsel %vm458, %v692, 0.0
    %719 = vadd.xlane.f32.xlu0 %v718
    %v720 = vpop.xlane.xlu0 %719
    %v721 = vsel %vm458, %v695, 0.0
    %722 = vadd.xlane.f32.xlu0 %v721
    %v723 = vpop.xlane.xlu0 %722
    %v724 = vmul.f32 %v702, %v483
    %v725 = vmul.f32 %v705, %v483
    %v726 = vmul.f32 %v708, %v483
    %v727 = vmul.f32 %v711, %v483
    %v728 = vmul.f32 %v714, %v483
    %v729 = vmul.f32 %v717, %v483
    %v730 = vmul.f32 %v720, %v483
    %v731 = vmul.f32 %v723, %v483
    %v732 = vsub.f32 %v668, %v724
    %v733 = vsub.f32 %v671, %v725
    %v734 = vsub.f32 %v676, %v726
    %v735 = vsub.f32 %v679, %v727
    %v736 = vsub.f32 %v684, %v728
    %v737 = vsub.f32 %v687, %v729
    %v738 = vsub.f32 %v692, %v730
    %v739 = vsub.f32 %v695, %v731
    %v740 = vmul.f32 %v732, %v732
    %v741 = vmul.f32 %v733, %v733
    %v742 = vmul.f32 %v734, %v734
    %v743 = vmul.f32 %v735, %v735
    %v744 = vmul.f32 %v736, %v736
    %v745 = vmul.f32 %v737, %v737
    %v746 = vmul.f32 %v738, %v738
    %v747 = vmul.f32 %v739, %v739
    %v748 = vsel %vm458, %v740, 0.0
    %749 = vadd.xlane.f32.xlu0 %v748
    %v750 = vpop.xlane.xlu0 %749
    %v751 = vsel %vm458, %v741, 0.0
    %752 = vadd.xlane.f32.xlu0 %v751
    %v753 = vpop.xlane.xlu0 %752
    %v754 = vsel %vm458, %v742, 0.0
    %755 = vadd.xlane.f32.xlu0 %v754
    %v756 = vpop.xlane.xlu0 %755
    %v757 = vsel %vm458, %v743, 0.0
    %758 = vadd.xlane.f32.xlu0 %v757
    %v759 = vpop.xlane.xlu0 %758
    %v760 = vsel %vm458, %v744, 0.0
    %761 = vadd.xlane.f32.xlu0 %v760
    %v762 = vpop.xlane.xlu0 %761
    %v763 = vsel %vm458, %v745, 0.0
    %764 = vadd.xlane.f32.xlu0 %v763
    %v765 = vpop.xlane.xlu0 %764
    %v766 = vsel %vm458, %v746, 0.0
    %767 = vadd.xlane.f32.xlu0 %v766
    %v768 = vpop.xlane.xlu0 %767
    %v769 = vsel %vm458, %v747, 0.0
    %770 = vadd.xlane.f32.xlu0 %v769
    %v771 = vpop.xlane.xlu0 %770
    %v772 = vmul.f32 %v750, %v483
    %v773 = vmul.f32 %v753, %v483
    %v774 = vmul.f32 %v756, %v483
    %v775 = vmul.f32 %v759, %v483
    %v776 = vmul.f32 %v762, %v483
    %v777 = vmul.f32 %v765, %v483
    %v778 = vmul.f32 %v768, %v483
    %v779 = vmul.f32 %v771, %v483
    %v780 = vadd.f32 %v772, 1e-05
    %v781 = vadd.f32 %v773, 1e-05
    %v782 = vadd.f32 %v774, 1e-05
    %v783 = vadd.f32 %v775, 1e-05
    %v784 = vadd.f32 %v776, 1e-05
    %v785 = vadd.f32 %v777, 1e-05
    %v786 = vadd.f32 %v778, 1e-05
    %v787 = vadd.f32 %v779, 1e-05
    %v788 = vrsqrt.pop %v780
    %v789 = vrsqrt.pop %v781
    %v790 = vrsqrt.pop %v782
    %v791 = vrsqrt.pop %v783
    %v792 = vrsqrt.pop %v784
    %v793 = vrsqrt.pop %v785
    %v794 = vrsqrt.pop %v786
    %v795 = vrsqrt.pop %v787
    %v796 = vmul.f32 %v732, %v788
    %v797 = vmul.f32 %v733, %v789
    %v798 = vmul.f32 %v734, %v790
    %v799 = vmul.f32 %v735, %v791
    %v800 = vmul.f32 %v736, %v792
    %v801 = vmul.f32 %v737, %v793
    %v802 = vmul.f32 %v738, %v794
    %v803 = vmul.f32 %v739, %v795
    %v804 = vlaneseq
    %v805 = vshrl.u32 %v804, 7
    %v806 = vsub.s32 0, %v805
    %v807 = vrot.slane %v698, %v806
    %v808 = vmul.f32 %v796, %v807
    %v809 = vmul.f32 %v797, %v807
    %v810 = vmul.f32 %v798, %v807
    %v811 = vmul.f32 %v799, %v807
    %v812 = vmul.f32 %v800, %v807
    %v813 = vmul.f32 %v801, %v807
    %v814 = vmul.f32 %v802, %v807
    %v815 = vmul.f32 %v803, %v807
    %v816 = vlaneseq
    %v817 = vshrl.u32 %v816, 7
    %v818 = vsub.s32 0, %v817
    %v819 = vrot.slane %v699, %v818
    %v820 = vadd.f32 %v808, %v819
    %v821 = vadd.f32 %v809, %v819
    %v822 = vadd.f32 %v810, %v819
    %v823 = vadd.f32 %v811, %v819
    %v824 = vadd.f32 %v812, %v819
    %v825 = vadd.f32 %v813, %v819
    %v826 = vadd.f32 %v814, %v819
    %v827 = vadd.f32 %v815, %v819
    %v828 = vmax.f32 %v820, 0.0
    %v829 = vmax.f32 %v821, 0.0
    %v830 = vmax.f32 %v822, 0.0
    %v831 = vmax.f32 %v823, 0.0
    %v832 = vmax.f32 %v824, 0.0
    %v833 = vmax.f32 %v825, 0.0
    %v834 = vmax.f32 %v826, 0.0
    %v835 = vmax.f32 %v827, 0.0
    %v836 = vpack.c.bf16 %v829, %v828
    %v837 = vpack.c.bf16 %v831, %v830
    %v838 = vpack.c.bf16 %v833, %v832
    %v839 = vpack.c.bf16 %v835, %v834
    %s840 = scalar_lea.vmem %s9, 16
    %v841 = vld [vmem:[%s840] sm:$0xf]
    %v842 = vld [vmem:[%s840 + $0x4] sm:$0xf]
    %v843 = vld [vmem:[%s840 + $0x8] sm:$0xf]
    %v844 = vld [vmem:[%s840 + $0xc] sm:$0xf]
    %v845 = vld [vmem:[#allocation9 + $0x2] sm:$0x1]
    %v846 = vlaneseq
    %v847 = vshrl.u32 %v846, 7
    %v848 = vsub.s32 0, %v847
    %v849 = vrot.slane %v845, %v848
    %v854 = vunpack.c.l.b16 %v841
    %v855 = vunpack.c.l.b16 %v842
    %v856 = vunpack.c.l.b16 %v843
    %v857 = vunpack.c.l.b16 %v844
    %v858 = vpack.c.b16 %v855, %v854
    %v859 = vpack.c.b16 %v857, %v856
    %v863 = vsel %vm458, %v836, 0
    %v866 = vsel %vm458, %v837, 0
    %v869 = vsel %vm458, %v838, 0
    %v872 = vsel %vm458, %v839, 0
    %874 = vmatprep.subr.bf16.mxu0 0
    %875 = vmatpush1.bf16.msra.mxu0 0
    %876 = vmatprep.subr.bf16.mxu0 0
    %877 = vmatpush1.bf16.msra.mxu0 0
    %878 = vmatprep.subr.bf16.mxu0 0
    %879 = vmatpush1.bf16.msra.mxu0 0
    %880 = vmatprep.subr.bf16.mxu0 0
    %881 = vmatpush1.bf16.msra.mxu0 0
    %882 = vmatprep.subr.bf16.mxu0 0
    %883 = vmatpush1.bf16.msra.mxu0 0
    %884 = vmatprep.subr.bf16.mxu0 0
    %885 = vmatpush1.bf16.msra.mxu0 0
    %886 = vmatprep.subr.bf16.mxu0 0
    %887 = vmatpush1.bf16.msra.mxu0 %v859
    %888 = vmatprep.subr.bf16.mxu0 0
    %889 = vmatpush1.bf16.msra.mxu0 %v858
    %890 = vmatprep.subr.bf16.mxu0 0
    %891 = vmatpush2.bf16.msra.mxu0 0
    %892 = vmatprep.subr.bf16.mxu0 0
    %893 = vmatpush2.bf16.msra.mxu0 0
    %894 = vmatprep.subr.bf16.mxu0 0
    %895 = vmatpush2.bf16.msra.mxu0 0
    %896 = vmatprep.subr.bf16.mxu0 0
    %897 = vmatpush2.bf16.msra.mxu0 0
    %898 = vmatprep.subr.bf16.mxu0 0
    %899 = vmatpush2.bf16.msra.mxu0 0
    %900 = vmatprep.subr.bf16.mxu0 0
    %901 = vmatpush2.bf16.msra.mxu0 0
    %902 = vmatprep.subr.bf16.mxu0 0
    %903 = vmatpush2.bf16.msra.mxu0 0
    %904 = vmatprep.subr.bf16.mxu0 0
    %905 = vmatpush2.bf16.msra.mxu0 0
    %906 = vmatprep.mubr.bf16.mxu0 0
    %907 = vmatmul.mubr.bf16.gmra.mxu0 %v863
    %v908 = vpop.f32.mrf.mxu0
    %v909 = vadd.f32 %v849, %v908
    %v910 = vpop.f32.mrf.mxu0
    %v911 = vpop.f32.mrf.mxu0
    %v912 = vadd.f32 %v849, %v911
    %v913 = vpop.f32.mrf.mxu0
    %914 = vmatprep.mubr.bf16.mxu0 0
    %915 = vmatmul.mubr.bf16.gmra.mxu0 %v866
    %v916 = vpop.f32.mrf.mxu0
    %v917 = vadd.f32 %v849, %v916
    %v918 = vpop.f32.mrf.mxu0
    %v919 = vpop.f32.mrf.mxu0
    %v920 = vadd.f32 %v849, %v919
    %v921 = vpop.f32.mrf.mxu0
    %922 = vmatprep.mubr.bf16.mxu0 0
    %923 = vmatmul.mubr.bf16.gmra.mxu0 %v869
    %v924 = vpop.f32.mrf.mxu0
    %v925 = vadd.f32 %v849, %v924
    %v926 = vpop.f32.mrf.mxu0
    %v927 = vpop.f32.mrf.mxu0
    %v928 = vadd.f32 %v849, %v927
    %v929 = vpop.f32.mrf.mxu0
    %930 = vmatprep.mubr.bf16.mxu0 0
    %931 = vmatmul.mubr.bf16.gmra.mxu0 %v872
    %v932 = vpop.f32.mrf.mxu0
    %v933 = vadd.f32 %v849, %v932
    %v934 = vpop.f32.mrf.mxu0
    %v935 = vpop.f32.mrf.mxu0
    %v936 = vadd.f32 %v849, %v935
    %v937 = vpop.f32.mrf.mxu0
    %938 = vdwg.mxu0
    %v939 = vld [vmem:[#allocation10 + $0x2] sm:$0x1]
    %v940 = vld [vmem:[#allocation12 + $0x2] sm:$0x1]
    %v941 = vsel %vm458, %v909, 0.0
    %942 = vadd.xlane.f32.xlu0 %v941
    %v943 = vpop.xlane.xlu0 %942
    %v944 = vsel %vm458, %v912, 0.0
    %945 = vadd.xlane.f32.xlu0 %v944
    %v946 = vpop.xlane.xlu0 %945
    %v947 = vsel %vm458, %v917, 0.0
    %948 = vadd.xlane.f32.xlu0 %v947
    %v949 = vpop.xlane.xlu0 %948
    %v950 = vsel %vm458, %v920, 0.0
    %951 = vadd.xlane.f32.xlu0 %v950
    %v952 = vpop.xlane.xlu0 %951
    %v953 = vsel %vm458, %v925, 0.0
    %954 = vadd.xlane.f32.xlu0 %v953
    %v955 = vpop.xlane.xlu0 %954
    %v956 = vsel %vm458, %v928, 0.0
    %957 = vadd.xlane.f32.xlu0 %v956
    %v958 = vpop.xlane.xlu0 %957
    %v959 = vsel %vm458, %v933, 0.0
    %960 = vadd.xlane.f32.xlu0 %v959
    %v961 = vpop.xlane.xlu0 %960
    %v962 = vsel %vm458, %v936, 0.0
    %963 = vadd.xlane.f32.xlu0 %v962
    %v964 = vpop.xlane.xlu0 %963
    %v965 = vmul.f32 %v943, %v483
    %v966 = vmul.f32 %v946, %v483
    %v967 = vmul.f32 %v949, %v483
    %v968 = vmul.f32 %v952, %v483
    %v969 = vmul.f32 %v955, %v483
    %v970 = vmul.f32 %v958, %v483
    %v971 = vmul.f32 %v961, %v483
    %v972 = vmul.f32 %v964, %v483
    %v973 = vsub.f32 %v909, %v965
    %v974 = vsub.f32 %v912, %v966
    %v975 = vsub.f32 %v917, %v967
    %v976 = vsub.f32 %v920, %v968
    %v977 = vsub.f32 %v925, %v969
    %v978 = vsub.f32 %v928, %v970
    %v979 = vsub.f32 %v933, %v971
    %v980 = vsub.f32 %v936, %v972
    %v981 = vmul.f32 %v973, %v973
    %v982 = vmul.f32 %v974, %v974
    %v983 = vmul.f32 %v975, %v975
    %v984 = vmul.f32 %v976, %v976
    %v985 = vmul.f32 %v977, %v977
    %v986 = vmul.f32 %v978, %v978
    %v987 = vmul.f32 %v979, %v979
    %v988 = vmul.f32 %v980, %v980
    %v989 = vsel %vm458, %v981, 0.0
    %990 = vadd.xlane.f32.xlu0 %v989
    %v991 = vpop.xlane.xlu0 %990
    %v992 = vsel %vm458, %v982, 0.0
    %993 = vadd.xlane.f32.xlu0 %v992
    %v994 = vpop.xlane.xlu0 %993
    %v995 = vsel %vm458, %v983, 0.0
    %996 = vadd.xlane.f32.xlu0 %v995
    %v997 = vpop.xlane.xlu0 %996
    %v998 = vsel %vm458, %v984, 0.0
    %999 = vadd.xlane.f32.xlu0 %v998
    %v1000 = vpop.xlane.xlu0 %999
    %v1001 = vsel %vm458, %v985, 0.0
    %1002 = vadd.xlane.f32.xlu0 %v1001
    %v1003 = vpop.xlane.xlu0 %1002
    %v1004 = vsel %vm458, %v986, 0.0
    %1005 = vadd.xlane.f32.xlu0 %v1004
    %v1006 = vpop.xlane.xlu0 %1005
    %v1007 = vsel %vm458, %v987, 0.0
    %1008 = vadd.xlane.f32.xlu0 %v1007
    %v1009 = vpop.xlane.xlu0 %1008
    %v1010 = vsel %vm458, %v988, 0.0
    %1011 = vadd.xlane.f32.xlu0 %v1010
    %v1012 = vpop.xlane.xlu0 %1011
    %v1013 = vmul.f32 %v991, %v483
    %v1014 = vmul.f32 %v994, %v483
    %v1015 = vmul.f32 %v997, %v483
    %v1016 = vmul.f32 %v1000, %v483
    %v1017 = vmul.f32 %v1003, %v483
    %v1018 = vmul.f32 %v1006, %v483
    %v1019 = vmul.f32 %v1009, %v483
    %v1020 = vmul.f32 %v1012, %v483
    %v1021 = vadd.f32 %v1013, 1e-05
    %v1022 = vadd.f32 %v1014, 1e-05
    %v1023 = vadd.f32 %v1015, 1e-05
    %v1024 = vadd.f32 %v1016, 1e-05
    %v1025 = vadd.f32 %v1017, 1e-05
    %v1026 = vadd.f32 %v1018, 1e-05
    %v1027 = vadd.f32 %v1019, 1e-05
    %v1028 = vadd.f32 %v1020, 1e-05
    %v1029 = vrsqrt.pop %v1021
    %v1030 = vrsqrt.pop %v1022
    %v1031 = vrsqrt.pop %v1023
    %v1032 = vrsqrt.pop %v1024
    %v1033 = vrsqrt.pop %v1025
    %v1034 = vrsqrt.pop %v1026
    %v1035 = vrsqrt.pop %v1027
    %v1036 = vrsqrt.pop %v1028
    %v1037 = vmul.f32 %v973, %v1029
    %v1038 = vmul.f32 %v974, %v1030
    %v1039 = vmul.f32 %v975, %v1031
    %v1040 = vmul.f32 %v976, %v1032
    %v1041 = vmul.f32 %v977, %v1033
    %v1042 = vmul.f32 %v978, %v1034
    %v1043 = vmul.f32 %v979, %v1035
    %v1044 = vmul.f32 %v980, %v1036
    %v1045 = vlaneseq
    %v1046 = vshrl.u32 %v1045, 7
    %v1047 = vsub.s32 0, %v1046
    %v1048 = vrot.slane %v939, %v1047
    %v1049 = vmul.f32 %v1037, %v1048
    %v1050 = vmul.f32 %v1038, %v1048
    %v1051 = vmul.f32 %v1039, %v1048
    %v1052 = vmul.f32 %v1040, %v1048
    %v1053 = vmul.f32 %v1041, %v1048
    %v1054 = vmul.f32 %v1042, %v1048
    %v1055 = vmul.f32 %v1043, %v1048
    %v1056 = vmul.f32 %v1044, %v1048
    %v1057 = vlaneseq
    %v1058 = vshrl.u32 %v1057, 7
    %v1059 = vsub.s32 0, %v1058
    %v1060 = vrot.slane %v940, %v1059
    %v1061 = vadd.f32 %v1049, %v1060
    %v1062 = vadd.f32 %v1050, %v1060
    %v1063 = vadd.f32 %v1051, %v1060
    %v1064 = vadd.f32 %v1052, %v1060
    %v1065 = vadd.f32 %v1053, %v1060
    %v1066 = vadd.f32 %v1054, %v1060
    %v1067 = vadd.f32 %v1055, %v1060
    %v1068 = vadd.f32 %v1056, %v1060
    %v1069 = vmax.f32 %v1061, 0.0
    %v1070 = vmax.f32 %v1062, 0.0
    %v1071 = vmax.f32 %v1063, 0.0
    %v1072 = vmax.f32 %v1064, 0.0
    %v1073 = vmax.f32 %v1065, 0.0
    %v1074 = vmax.f32 %v1066, 0.0
    %v1075 = vmax.f32 %v1067, 0.0
    %v1076 = vmax.f32 %v1068, 0.0
    %v1077 = vld [vmem:[%s5] sm:$0xff]
    %v1078 = vld [vmem:[%s5 + $0x8] sm:$0xff]
    %v1079 = vld [vmem:[%s5 + $0x10] sm:$0xff]
    %v1080 = vld [vmem:[%s5 + $0x18] sm:$0xff]
    %v1081 = vld [vmem:[%s5 + $0x20] sm:$0xff]
    %v1082 = vld [vmem:[%s5 + $0x28] sm:$0xff]
    %v1083 = vld [vmem:[%s5 + $0x30] sm:$0xff]
    %v1084 = vld [vmem:[%s5 + $0x38] sm:$0xff]
    %v1085 = vld [vmem:[#allocation13] sm:$0x1]
    %1087 = vset.pattern.permute.xlu0 0
    %1088 = vperm.xlu0 %1087, %v1077
    %v1089 = vpop.permute.xlu0 %1088
    %1092 = vset.pattern.permute.xlu0 0
    %1093 = vperm.xlu0 %1092, %v1078
    %v1094 = vpop.permute.xlu0 %1093
    %1097 = vset.pattern.permute.xlu0 0
    %1098 = vperm.xlu0 %1097, %v1079
    %v1099 = vpop.permute.xlu0 %1098
    %1102 = vset.pattern.permute.xlu0 0
    %1103 = vperm.xlu0 %1102, %v1080
    %v1104 = vpop.permute.xlu0 %1103
    %1107 = vset.pattern.permute.xlu0 0
    %1108 = vperm.xlu0 %1107, %v1081
    %v1109 = vpop.permute.xlu0 %1108
    %1112 = vset.pattern.permute.xlu0 0
    %1113 = vperm.xlu0 %1112, %v1082
    %v1114 = vpop.permute.xlu0 %1113
    %1117 = vset.pattern.permute.xlu0 0
    %1118 = vperm.xlu0 %1117, %v1083
    %v1119 = vpop.permute.xlu0 %1118
    %1122 = vset.pattern.permute.xlu0 0
    %1123 = vperm.xlu0 %1122, %v1084
    %v1124 = vpop.permute.xlu0 %1123
    %v1127 = vlaneseq
    %v1128 = vshrl.u32 %v1127, 7
    %v1129 = vsub.s32 0, %v1128
    %v1130 = vrot.slane %v1085, %v1129
    %v1132 = vmul.f32 %v1089, %v1130
    %v1133 = vmul.f32 %v1094, %v1130
    %v1134 = vmul.f32 %v1099, %v1130
    %v1135 = vmul.f32 %v1104, %v1130
    %v1136 = vmul.f32 %v1109, %v1130
    %v1137 = vmul.f32 %v1114, %v1130
    %v1138 = vmul.f32 %v1119, %v1130
    %v1139 = vmul.f32 %v1124, %v1130
    %v1140 = vld [vmem:[#allocation16] sm:$0x1]
    %v1141 = vlaneseq
    %v1142 = vshrl.u32 %v1141, 7
    %v1143 = vsub.s32 0, %v1142
    %v1144 = vrot.slane %v1140, %v1143
    %v1145 = vadd.f32 %v1132, %v1144
    %v1146 = vadd.f32 %v1133, %v1144
    %v1147 = vadd.f32 %v1134, %v1144
    %v1148 = vadd.f32 %v1135, %v1144
    %v1149 = vadd.f32 %v1136, %v1144
    %v1150 = vadd.f32 %v1137, %v1144
    %v1151 = vadd.f32 %v1138, %v1144
    %v1152 = vadd.f32 %v1139, %v1144
    %v1153 = vld [vmem:[#allocation18] sm:$0x1]
    %v1154 = vld [vmem:[#allocation19] sm:$0x1]
    %v1155 = vsel %vm458, %v1145, 0.0
    %1156 = vadd.xlane.f32.xlu0 %v1155
    %v1157 = vpop.xlane.xlu0 %1156
    %v1158 = vsel %vm458, %v1146, 0.0
    %1159 = vadd.xlane.f32.xlu0 %v1158
    %v1160 = vpop.xlane.xlu0 %1159
    %v1161 = vsel %vm458, %v1147, 0.0
    %1162 = vadd.xlane.f32.xlu0 %v1161
    %v1163 = vpop.xlane.xlu0 %1162
    %v1164 = vsel %vm458, %v1148, 0.0
    %1165 = vadd.xlane.f32.xlu0 %v1164
    %v1166 = vpop.xlane.xlu0 %1165
    %v1167 = vsel %vm458, %v1149, 0.0
    %1168 = vadd.xlane.f32.xlu0 %v1167
    %v1169 = vpop.xlane.xlu0 %1168
    %v1170 = vsel %vm458, %v1150, 0.0
    %1171 = vadd.xlane.f32.xlu0 %v1170
    %v1172 = vpop.xlane.xlu0 %1171
    %v1173 = vsel %vm458, %v1151, 0.0
    %1174 = vadd.xlane.f32.xlu0 %v1173
    %v1175 = vpop.xlane.xlu0 %1174
    %v1176 = vsel %vm458, %v1152, 0.0
    %1177 = vadd.xlane.f32.xlu0 %v1176
    %v1178 = vpop.xlane.xlu0 %1177
    %v1179 = vmul.f32 %v1157, %v483
    %v1180 = vmul.f32 %v1160, %v483
    %v1181 = vmul.f32 %v1163, %v483
    %v1182 = vmul.f32 %v1166, %v483
    %v1183 = vmul.f32 %v1169, %v483
    %v1184 = vmul.f32 %v1172, %v483
    %v1185 = vmul.f32 %v1175, %v483
    %v1186 = vmul.f32 %v1178, %v483
    %v1187 = vsub.f32 %v1145, %v1179
    %v1188 = vsub.f32 %v1146, %v1180
    %v1189 = vsub.f32 %v1147, %v1181
    %v1190 = vsub.f32 %v1148, %v1182
    %v1191 = vsub.f32 %v1149, %v1183
    %v1192 = vsub.f32 %v1150, %v1184
    %v1193 = vsub.f32 %v1151, %v1185
    %v1194 = vsub.f32 %v1152, %v1186
    %v1195 = vmul.f32 %v1187, %v1187
    %v1196 = vmul.f32 %v1188, %v1188
    %v1197 = vmul.f32 %v1189, %v1189
    %v1198 = vmul.f32 %v1190, %v1190
    %v1199 = vmul.f32 %v1191, %v1191
    %v1200 = vmul.f32 %v1192, %v1192
    %v1201 = vmul.f32 %v1193, %v1193
    %v1202 = vmul.f32 %v1194, %v1194
    %v1203 = vsel %vm458, %v1195, 0.0
    %1204 = vadd.xlane.f32.xlu0 %v1203
    %v1205 = vpop.xlane.xlu0 %1204
    %v1206 = vsel %vm458, %v1196, 0.0
    %1207 = vadd.xlane.f32.xlu0 %v1206
    %v1208 = vpop.xlane.xlu0 %1207
    %v1209 = vsel %vm458, %v1197, 0.0
    %1210 = vadd.xlane.f32.xlu0 %v1209
    %v1211 = vpop.xlane.xlu0 %1210
    %v1212 = vsel %vm458, %v1198, 0.0
    %1213 = vadd.xlane.f32.xlu0 %v1212
    %v1214 = vpop.xlane.xlu0 %1213
    %v1215 = vsel %vm458, %v1199, 0.0
    %1216 = vadd.xlane.f32.xlu0 %v1215
    %v1217 = vpop.xlane.xlu0 %1216
    %v1218 = vsel %vm458, %v1200, 0.0
    %1219 = vadd.xlane.f32.xlu0 %v1218
    %v1220 = vpop.xlane.xlu0 %1219
    %v1221 = vsel %vm458, %v1201, 0.0
    %1222 = vadd.xlane.f32.xlu0 %v1221
    %v1223 = vpop.xlane.xlu0 %1222
    %v1224 = vsel %vm458, %v1202, 0.0
    %1225 = vadd.xlane.f32.xlu0 %v1224
    %v1226 = vpop.xlane.xlu0 %1225
    %v1227 = vmul.f32 %v1205, %v483
    %v1228 = vmul.f32 %v1208, %v483
    %v1229 = vmul.f32 %v1211, %v483
    %v1230 = vmul.f32 %v1214, %v483
    %v1231 = vmul.f32 %v1217, %v483
    %v1232 = vmul.f32 %v1220, %v483
    %v1233 = vmul.f32 %v1223, %v483
    %v1234 = vmul.f32 %v1226, %v483
    %v1235 = vadd.f32 %v1227, 1e-05
    %v1236 = vadd.f32 %v1228, 1e-05
    %v1237 = vadd.f32 %v1229, 1e-05
    %v1238 = vadd.f32 %v1230, 1e-05
    %v1239 = vadd.f32 %v1231, 1e-05
    %v1240 = vadd.f32 %v1232, 1e-05
    %v1241 = vadd.f32 %v1233, 1e-05
    %v1242 = vadd.f32 %v1234, 1e-05
    %v1243 = vrsqrt.pop %v1235
    %v1244 = vrsqrt.pop %v1236
    %v1245 = vrsqrt.pop %v1237
    %v1246 = vrsqrt.pop %v1238
    %v1247 = vrsqrt.pop %v1239
    %v1248 = vrsqrt.pop %v1240
    %v1249 = vrsqrt.pop %v1241
    %v1250 = vrsqrt.pop %v1242
    %v1251 = vmul.f32 %v1187, %v1243
    %v1252 = vmul.f32 %v1188, %v1244
    %v1253 = vmul.f32 %v1189, %v1245
    %v1254 = vmul.f32 %v1190, %v1246
    %v1255 = vmul.f32 %v1191, %v1247
    %v1256 = vmul.f32 %v1192, %v1248
    %v1257 = vmul.f32 %v1193, %v1249
    %v1258 = vmul.f32 %v1194, %v1250
    %v1259 = vlaneseq
    %v1260 = vshrl.u32 %v1259, 7
    %v1261 = vsub.s32 0, %v1260
    %v1262 = vrot.slane %v1153, %v1261
    %v1263 = vmul.f32 %v1251, %v1262
    %v1264 = vmul.f32 %v1252, %v1262
    %v1265 = vmul.f32 %v1253, %v1262
    %v1266 = vmul.f32 %v1254, %v1262
    %v1267 = vmul.f32 %v1255, %v1262
    %v1268 = vmul.f32 %v1256, %v1262
    %v1269 = vmul.f32 %v1257, %v1262
    %v1270 = vmul.f32 %v1258, %v1262
    %v1271 = vlaneseq
    %v1272 = vshrl.u32 %v1271, 7
    %v1273 = vsub.s32 0, %v1272
    %v1274 = vrot.slane %v1154, %v1273
    %v1275 = vadd.f32 %v1263, %v1274
    %v1276 = vadd.f32 %v1264, %v1274
    %v1277 = vadd.f32 %v1265, %v1274
    %v1278 = vadd.f32 %v1266, %v1274
    %v1279 = vadd.f32 %v1267, %v1274
    %v1280 = vadd.f32 %v1268, %v1274
    %v1281 = vadd.f32 %v1269, %v1274
    %v1282 = vadd.f32 %v1270, %v1274
    %v1283 = vmax.f32 %v1275, 0.0
    %v1284 = vmax.f32 %v1276, 0.0
    %v1285 = vmax.f32 %v1277, 0.0
    %v1286 = vmax.f32 %v1278, 0.0
    %v1287 = vmax.f32 %v1279, 0.0
    %v1288 = vmax.f32 %v1280, 0.0
    %v1289 = vmax.f32 %v1281, 0.0
    %v1290 = vmax.f32 %v1282, 0.0
    %v1291 = vpack.c.bf16 %v1284, %v1283
    %v1292 = vpack.c.bf16 %v1286, %v1285
    %v1293 = vpack.c.bf16 %v1288, %v1287
    %v1294 = vpack.c.bf16 %v1290, %v1289
    %v1295 = vld [vmem:[#allocation15] sm:$0xf]
    %v1296 = vld [vmem:[#allocation15 + $0x4] sm:$0xf]
    %v1297 = vld [vmem:[#allocation15 + $0x8] sm:$0xf]
    %v1298 = vld [vmem:[#allocation15 + $0xc] sm:$0xf]
    %v1299 = vld [vmem:[#allocation16 + $0x1] sm:$0x1]
    %v1300 = vlaneseq
    %v1301 = vshrl.u32 %v1300, 7
    %v1302 = vsub.s32 0, %v1301
    %v1303 = vrot.slane %v1299, %v1302
    %v1308 = vunpack.c.l.b16 %v1295
    %v1309 = vunpack.c.l.b16 %v1296
    %v1310 = vunpack.c.l.b16 %v1297
    %v1311 = vunpack.c.l.b16 %v1298
    %v1312 = vpack.c.b16 %v1309, %v1308
    %v1313 = vpack.c.b16 %v1311, %v1310
    %v1317 = vsel %vm458, %v1291, 0
    %v1320 = vsel %vm458, %v1292, 0
    %v1323 = vsel %vm458, %v1293, 0
    %v1326 = vsel %vm458, %v1294, 0
    %1328 = vmatprep.subr.bf16.mxu0 0
    %1329 = vmatpush1.bf16.msra.mxu0 0
    %1330 = vmatprep.subr.bf16.mxu0 0
    %1331 = vmatpush1.bf16.msra.mxu0 0
    %1332 = vmatprep.subr.bf16.mxu0 0
    %1333 = vmatpush1.bf16.msra.mxu0 0
    %1334 = vmatprep.subr.bf16.mxu0 0
    %1335 = vmatpush1.bf16.msra.mxu0 0
    %1336 = vmatprep.subr.bf16.mxu0 0
    %1337 = vmatpush1.bf16.msra.mxu0 0
    %1338 = vmatprep.subr.bf16.mxu0 0
    %1339 = vmatpush1.bf16.msra.mxu0 0
    %1340 = vmatprep.subr.bf16.mxu0 0
    %1341 = vmatpush1.bf16.msra.mxu0 %v1313
    %1342 = vmatprep.subr.bf16.mxu0 0
    %1343 = vmatpush1.bf16.msra.mxu0 %v1312
    %1344 = vmatprep.subr.bf16.mxu0 0
    %1345 = vmatpush2.bf16.msra.mxu0 0
    %1346 = vmatprep.subr.bf16.mxu0 0
    %1347 = vmatpush2.bf16.msra.mxu0 0
    %1348 = vmatprep.subr.bf16.mxu0 0
    %1349 = vmatpush2.bf16.msra.mxu0 0
    %1350 = vmatprep.subr.bf16.mxu0 0
    %1351 = vmatpush2.bf16.msra.mxu0 0
    %1352 = vmatprep.subr.bf16.mxu0 0
    %1353 = vmatpush2.bf16.msra.mxu0 0
    %1354 = vmatprep.subr.bf16.mxu0 0
    %1355 = vmatpush2.bf16.msra.mxu0 0
    %1356 = vmatprep.subr.bf16.mxu0 0
    %1357 = vmatpush2.bf16.msra.mxu0 0
    %1358 = vmatprep.subr.bf16.mxu0 0
    %1359 = vmatpush2.bf16.msra.mxu0 0
    %1360 = vmatprep.mubr.bf16.mxu0 0
    %1361 = vmatmul.mubr.bf16.gmra.mxu0 %v1317
    %v1362 = vpop.f32.mrf.mxu0
    %v1363 = vadd.f32 %v1303, %v1362
    %v1364 = vpop.f32.mrf.mxu0
    %v1365 = vpop.f32.mrf.mxu0
    %v1366 = vadd.f32 %v1303, %v1365
    %v1367 = vpop.f32.mrf.mxu0
    %1368 = vmatprep.mubr.bf16.mxu0 0
    %1369 = vmatmul.mubr.bf16.gmra.mxu0 %v1320
    %v1370 = vpop.f32.mrf.mxu0
    %v1371 = vadd.f32 %v1303, %v1370
    %v1372 = vpop.f32.mrf.mxu0
    %v1373 = vpop.f32.mrf.mxu0
    %v1374 = vadd.f32 %v1303, %v1373
    %v1375 = vpop.f32.mrf.mxu0
    %1376 = vmatprep.mubr.bf16.mxu0 0
    %1377 = vmatmul.mubr.bf16.gmra.mxu0 %v1323
    %v1378 = vpop.f32.mrf.mxu0
    %v1379 = vadd.f32 %v1303, %v1378
    %v1380 = vpop.f32.mrf.mxu0
    %v1381 = vpop.f32.mrf.mxu0
    %v1382 = vadd.f32 %v1303, %v1381
    %v1383 = vpop.f32.mrf.mxu0
    %1384 = vmatprep.mubr.bf16.mxu0 0
    %1385 = vmatmul.mubr.bf16.gmra.mxu0 %v1326
    %v1386 = vpop.f32.mrf.mxu0
    %v1387 = vadd.f32 %v1303, %v1386
    %v1388 = vpop.f32.mrf.mxu0
    %v1389 = vpop.f32.mrf.mxu0
    %v1390 = vadd.f32 %v1303, %v1389
    %v1391 = vpop.f32.mrf.mxu0
    %1392 = vdwg.mxu0
    %v1393 = vld [vmem:[#allocation18 + $0x1] sm:$0x1]
    %v1394 = vld [vmem:[#allocation19 + $0x1] sm:$0x1]
    %v1395 = vsel %vm458, %v1363, 0.0
    %1396 = vadd.xlane.f32.xlu0 %v1395
    %v1397 = vpop.xlane.xlu0 %1396
    %v1398 = vsel %vm458, %v1366, 0.0
    %1399 = vadd.xlane.f32.xlu0 %v1398
    %v1400 = vpop.xlane.xlu0 %1399
    %v1401 = vsel %vm458, %v1371, 0.0
    %1402 = vadd.xlane.f32.xlu0 %v1401
    %v1403 = vpop.xlane.xlu0 %1402
    %v1404 = vsel %vm458, %v1374, 0.0
    %1405 = vadd.xlane.f32.xlu0 %v1404
    %v1406 = vpop.xlane.xlu0 %1405
    %v1407 = vsel %vm458, %v1379, 0.0
    %1408 = vadd.xlane.f32.xlu0 %v1407
    %v1409 = vpop.xlane.xlu0 %1408
    %v1410 = vsel %vm458, %v1382, 0.0
    %1411 = vadd.xlane.f32.xlu0 %v1410
    %v1412 = vpop.xlane.xlu0 %1411
    %v1413 = vsel %vm458, %v1387, 0.0
    %1414 = vadd.xlane.f32.xlu0 %v1413
    %v1415 = vpop.xlane.xlu0 %1414
    %v1416 = vsel %vm458, %v1390, 0.0
    %1417 = vadd.xlane.f32.xlu0 %v1416
    %v1418 = vpop.xlane.xlu0 %1417
    %v1419 = vmul.f32 %v1397, %v483
    %v1420 = vmul.f32 %v1400, %v483
    %v1421 = vmul.f32 %v1403, %v483
    %v1422 = vmul.f32 %v1406, %v483
    %v1423 = vmul.f32 %v1409, %v483
    %v1424 = vmul.f32 %v1412, %v483
    %v1425 = vmul.f32 %v1415, %v483
    %v1426 = vmul.f32 %v1418, %v483
    %v1427 = vsub.f32 %v1363, %v1419
    %v1428 = vsub.f32 %v1366, %v1420
    %v1429 = vsub.f32 %v1371, %v1421
    %v1430 = vsub.f32 %v1374, %v1422
    %v1431 = vsub.f32 %v1379, %v1423
    %v1432 = vsub.f32 %v1382, %v1424
    %v1433 = vsub.f32 %v1387, %v1425
    %v1434 = vsub.f32 %v1390, %v1426
    %v1435 = vmul.f32 %v1427, %v1427
    %v1436 = vmul.f32 %v1428, %v1428
    %v1437 = vmul.f32 %v1429, %v1429
    %v1438 = vmul.f32 %v1430, %v1430
    %v1439 = vmul.f32 %v1431, %v1431
    %v1440 = vmul.f32 %v1432, %v1432
    %v1441 = vmul.f32 %v1433, %v1433
    %v1442 = vmul.f32 %v1434, %v1434
    %v1443 = vsel %vm458, %v1435, 0.0
    %1444 = vadd.xlane.f32.xlu0 %v1443
    %v1445 = vpop.xlane.xlu0 %1444
    %v1446 = vsel %vm458, %v1436, 0.0
    %1447 = vadd.xlane.f32.xlu0 %v1446
    %v1448 = vpop.xlane.xlu0 %1447
    %v1449 = vsel %vm458, %v1437, 0.0
    %1450 = vadd.xlane.f32.xlu0 %v1449
    %v1451 = vpop.xlane.xlu0 %1450
    %v1452 = vsel %vm458, %v1438, 0.0
    %1453 = vadd.xlane.f32.xlu0 %v1452
    %v1454 = vpop.xlane.xlu0 %1453
    %v1455 = vsel %vm458, %v1439, 0.0
    %1456 = vadd.xlane.f32.xlu0 %v1455
    %v1457 = vpop.xlane.xlu0 %1456
    %v1458 = vsel %vm458, %v1440, 0.0
    %1459 = vadd.xlane.f32.xlu0 %v1458
    %v1460 = vpop.xlane.xlu0 %1459
    %v1461 = vsel %vm458, %v1441, 0.0
    %1462 = vadd.xlane.f32.xlu0 %v1461
    %v1463 = vpop.xlane.xlu0 %1462
    %v1464 = vsel %vm458, %v1442, 0.0
    %1465 = vadd.xlane.f32.xlu0 %v1464
    %v1466 = vpop.xlane.xlu0 %1465
    %v1467 = vmul.f32 %v1445, %v483
    %v1468 = vmul.f32 %v1448, %v483
    %v1469 = vmul.f32 %v1451, %v483
    %v1470 = vmul.f32 %v1454, %v483
    %v1471 = vmul.f32 %v1457, %v483
    %v1472 = vmul.f32 %v1460, %v483
    %v1473 = vmul.f32 %v1463, %v483
    %v1474 = vmul.f32 %v1466, %v483
    %v1475 = vadd.f32 %v1467, 1e-05
    %v1476 = vadd.f32 %v1468, 1e-05
    %v1477 = vadd.f32 %v1469, 1e-05
    %v1478 = vadd.f32 %v1470, 1e-05
    %v1479 = vadd.f32 %v1471, 1e-05
    %v1480 = vadd.f32 %v1472, 1e-05
    %v1481 = vadd.f32 %v1473, 1e-05
    %v1482 = vadd.f32 %v1474, 1e-05
    %v1483 = vrsqrt.pop %v1475
    %v1484 = vrsqrt.pop %v1476
    %v1485 = vrsqrt.pop %v1477
    %v1486 = vrsqrt.pop %v1478
    %v1487 = vrsqrt.pop %v1479
    %v1488 = vrsqrt.pop %v1480
    %v1489 = vrsqrt.pop %v1481
    %v1490 = vrsqrt.pop %v1482
    %v1491 = vmul.f32 %v1427, %v1483
    %v1492 = vmul.f32 %v1428, %v1484
    %v1493 = vmul.f32 %v1429, %v1485
    %v1494 = vmul.f32 %v1430, %v1486
    %v1495 = vmul.f32 %v1431, %v1487
    %v1496 = vmul.f32 %v1432, %v1488
    %v1497 = vmul.f32 %v1433, %v1489
    %v1498 = vmul.f32 %v1434, %v1490
    %v1499 = vlaneseq
    %v1500 = vshrl.u32 %v1499, 7
    %v1501 = vsub.s32 0, %v1500
    %v1502 = vrot.slane %v1393, %v1501
    %v1503 = vmul.f32 %v1491, %v1502
    %v1504 = vmul.f32 %v1492, %v1502
    %v1505 = vmul.f32 %v1493, %v1502
    %v1506 = vmul.f32 %v1494, %v1502
    %v1507 = vmul.f32 %v1495, %v1502
    %v1508 = vmul.f32 %v1496, %v1502
    %v1509 = vmul.f32 %v1497, %v1502
    %v1510 = vmul.f32 %v1498, %v1502
    %v1511 = vlaneseq
    %v1512 = vshrl.u32 %v1511, 7
    %v1513 = vsub.s32 0, %v1512
    %v1514 = vrot.slane %v1394, %v1513
    %v1515 = vadd.f32 %v1503, %v1514
    %v1516 = vadd.f32 %v1504, %v1514
    %v1517 = vadd.f32 %v1505, %v1514
    %v1518 = vadd.f32 %v1506, %v1514
    %v1519 = vadd.f32 %v1507, %v1514
    %v1520 = vadd.f32 %v1508, %v1514
    %v1521 = vadd.f32 %v1509, %v1514
    %v1522 = vadd.f32 %v1510, %v1514
    %v1523 = vmax.f32 %v1515, 0.0
    %v1524 = vmax.f32 %v1516, 0.0
    %v1525 = vmax.f32 %v1517, 0.0
    %v1526 = vmax.f32 %v1518, 0.0
    %v1527 = vmax.f32 %v1519, 0.0
    %v1528 = vmax.f32 %v1520, 0.0
    %v1529 = vmax.f32 %v1521, 0.0
    %v1530 = vmax.f32 %v1522, 0.0
    %v1531 = vpack.c.bf16 %v1524, %v1523
    %v1532 = vpack.c.bf16 %v1526, %v1525
    %v1533 = vpack.c.bf16 %v1528, %v1527
    %v1534 = vpack.c.bf16 %v1530, %v1529
    %s1535 = scalar_lea.vmem [#allocation15], 16
    %v1536 = vld [vmem:[%s1535] sm:$0xf]
    %v1537 = vld [vmem:[%s1535 + $0x4] sm:$0xf]
    %v1538 = vld [vmem:[%s1535 + $0x8] sm:$0xf]
    %v1539 = vld [vmem:[%s1535 + $0xc] sm:$0xf]
    %v1540 = vld [vmem:[#allocation16 + $0x2] sm:$0x1]
    %v1541 = vlaneseq
    %v1542 = vshrl.u32 %v1541, 7
    %v1543 = vsub.s32 0, %v1542
    %v1544 = vrot.slane %v1540, %v1543
    %v1549 = vunpack.c.l.b16 %v1536
    %v1550 = vunpack.c.l.b16 %v1537
    %v1551 = vunpack.c.l.b16 %v1538
    %v1552 = vunpack.c.l.b16 %v1539
    %v1553 = vpack.c.b16 %v1550, %v1549
    %v1554 = vpack.c.b16 %v1552, %v1551
    %v1558 = vsel %vm458, %v1531, 0
    %v1561 = vsel %vm458, %v1532, 0
    %v1564 = vsel %vm458, %v1533, 0
    %v1567 = vsel %vm458, %v1534, 0
    %1569 = vmatprep.subr.bf16.mxu0 0
    %1570 = vmatpush1.bf16.msra.mxu0 0
    %1571 = vmatprep.subr.bf16.mxu0 0
    %1572 = vmatpush1.bf16.msra.mxu0 0
    %1573 = vmatprep.subr.bf16.mxu0 0
    %1574 = vmatpush1.bf16.msra.mxu0 0
    %1575 = vmatprep.subr.bf16.mxu0 0
    %1576 = vmatpush1.bf16.msra.mxu0 0
    %1577 = vmatprep.subr.bf16.mxu0 0
    %1578 = vmatpush1.bf16.msra.mxu0 0
    %1579 = vmatprep.subr.bf16.mxu0 0
    %1580 = vmatpush1.bf16.msra.mxu0 0
    %1581 = vmatprep.subr.bf16.mxu0 0
    %1582 = vmatpush1.bf16.msra.mxu0 %v1554
    %1583 = vmatprep.subr.bf16.mxu0 0
    %1584 = vmatpush1.bf16.msra.mxu0 %v1553
    %1585 = vmatprep.subr.bf16.mxu0 0
    %1586 = vmatpush2.bf16.msra.mxu0 0
    %1587 = vmatprep.subr.bf16.mxu0 0
    %1588 = vmatpush2.bf16.msra.mxu0 0
    %1589 = vmatprep.subr.bf16.mxu0 0
    %1590 = vmatpush2.bf16.msra.mxu0 0
    %1591 = vmatprep.subr.bf16.mxu0 0
    %1592 = vmatpush2.bf16.msra.mxu0 0
    %1593 = vmatprep.subr.bf16.mxu0 0
    %1594 = vmatpush2.bf16.msra.mxu0 0
    %1595 = vmatprep.subr.bf16.mxu0 0
    %1596 = vmatpush2.bf16.msra.mxu0 0
    %1597 = vmatprep.subr.bf16.mxu0 0
    %1598 = vmatpush2.bf16.msra.mxu0 0
    %1599 = vmatprep.subr.bf16.mxu0 0
    %1600 = vmatpush2.bf16.msra.mxu0 0
    %1601 = vmatprep.mubr.bf16.mxu0 0
    %1602 = vmatmul.mubr.bf16.gmra.mxu0 %v1558
    %v1603 = vpop.f32.mrf.mxu0
    %v1604 = vadd.f32 %v1544, %v1603
    %v1605 = vpop.f32.mrf.mxu0
    %v1606 = vpop.f32.mrf.mxu0
    %v1607 = vadd.f32 %v1544, %v1606
    %v1608 = vpop.f32.mrf.mxu0
    %1609 = vmatprep.mubr.bf16.mxu0 0
    %1610 = vmatmul.mubr.bf16.gmra.mxu0 %v1561
    %v1611 = vpop.f32.mrf.mxu0
    %v1612 = vadd.f32 %v1544, %v1611
    %v1613 = vpop.f32.mrf.mxu0
    %v1614 = vpop.f32.mrf.mxu0
    %v1615 = vadd.f32 %v1544, %v1614
    %v1616 = vpop.f32.mrf.mxu0
    %1617 = vmatprep.mubr.bf16.mxu0 0
    %1618 = vmatmul.mubr.bf16.gmra.mxu0 %v1564
    %v1619 = vpop.f32.mrf.mxu0
    %v1620 = vadd.f32 %v1544, %v1619
    %v1621 = vpop.f32.mrf.mxu0
    %v1622 = vpop.f32.mrf.mxu0
    %v1623 = vadd.f32 %v1544, %v1622
    %v1624 = vpop.f32.mrf.mxu0
    %1625 = vmatprep.mubr.bf16.mxu0 0
    %1626 = vmatmul.mubr.bf16.gmra.mxu0 %v1567
    %v1627 = vpop.f32.mrf.mxu0
    %v1628 = vadd.f32 %v1544, %v1627
    %v1629 = vpop.f32.mrf.mxu0
    %v1630 = vpop.f32.mrf.mxu0
    %v1631 = vadd.f32 %v1544, %v1630
    %v1632 = vpop.f32.mrf.mxu0
    %1633 = vdwg.mxu0
    %v1634 = vld [vmem:[#allocation18 + $0x2] sm:$0x1]
    %v1635 = vld [vmem:[#allocation19 + $0x2] sm:$0x1]
    %v1636 = vsel %vm458, %v1604, 0.0
    %1637 = vadd.xlane.f32.xlu0 %v1636
    %v1638 = vpop.xlane.xlu0 %1637
    %v1639 = vsel %vm458, %v1607, 0.0
    %1640 = vadd.xlane.f32.xlu0 %v1639
    %v1641 = vpop.xlane.xlu0 %1640
    %v1642 = vsel %vm458, %v1612, 0.0
    %1643 = vadd.xlane.f32.xlu0 %v1642
    %v1644 = vpop.xlane.xlu0 %1643
    %v1645 = vsel %vm458, %v1615, 0.0
    %1646 = vadd.xlane.f32.xlu0 %v1645
    %v1647 = vpop.xlane.xlu0 %1646
    %v1648 = vsel %vm458, %v1620, 0.0
    %1649 = vadd.xlane.f32.xlu0 %v1648
    %v1650 = vpop.xlane.xlu0 %1649
    %v1651 = vsel %vm458, %v1623, 0.0
    %1652 = vadd.xlane.f32.xlu0 %v1651
    %v1653 = vpop.xlane.xlu0 %1652
    %v1654 = vsel %vm458, %v1628, 0.0
    %1655 = vadd.xlane.f32.xlu0 %v1654
    %v1656 = vpop.xlane.xlu0 %1655
    %v1657 = vsel %vm458, %v1631, 0.0
    %1658 = vadd.xlane.f32.xlu0 %v1657
    %v1659 = vpop.xlane.xlu0 %1658
    %v1660 = vmul.f32 %v1638, %v483
    %v1661 = vmul.f32 %v1641, %v483
    %v1662 = vmul.f32 %v1644, %v483
    %v1663 = vmul.f32 %v1647, %v483
    %v1664 = vmul.f32 %v1650, %v483
    %v1665 = vmul.f32 %v1653, %v483
    %v1666 = vmul.f32 %v1656, %v483
    %v1667 = vmul.f32 %v1659, %v483
    %v1668 = vsub.f32 %v1604, %v1660
    %v1669 = vsub.f32 %v1607, %v1661
    %v1670 = vsub.f32 %v1612, %v1662
    %v1671 = vsub.f32 %v1615, %v1663
    %v1672 = vsub.f32 %v1620, %v1664
    %v1673 = vsub.f32 %v1623, %v1665
    %v1674 = vsub.f32 %v1628, %v1666
    %v1675 = vsub.f32 %v1631, %v1667
    %v1676 = vmul.f32 %v1668, %v1668
    %v1677 = vmul.f32 %v1669, %v1669
    %v1678 = vmul.f32 %v1670, %v1670
    %v1679 = vmul.f32 %v1671, %v1671
    %v1680 = vmul.f32 %v1672, %v1672
    %v1681 = vmul.f32 %v1673, %v1673
    %v1682 = vmul.f32 %v1674, %v1674
    %v1683 = vmul.f32 %v1675, %v1675
    %v1684 = vsel %vm458, %v1676, 0.0
    %1685 = vadd.xlane.f32.xlu0 %v1684
    %v1686 = vpop.xlane.xlu0 %1685
    %v1687 = vsel %vm458, %v1677, 0.0
    %1688 = vadd.xlane.f32.xlu0 %v1687
    %v1689 = vpop.xlane.xlu0 %1688
    %v1690 = vsel %vm458, %v1678, 0.0
    %1691 = vadd.xlane.f32.xlu0 %v1690
    %v1692 = vpop.xlane.xlu0 %1691
    %v1693 = vsel %vm458, %v1679, 0.0
    %1694 = vadd.xlane.f32.xlu0 %v1693
    %v1695 = vpop.xlane.xlu0 %1694
    %v1696 = vsel %vm458, %v1680, 0.0
    %1697 = vadd.xlane.f32.xlu0 %v1696
    %v1698 = vpop.xlane.xlu0 %1697
    %v1699 = vsel %vm458, %v1681, 0.0
    %1700 = vadd.xlane.f32.xlu0 %v1699
    %v1701 = vpop.xlane.xlu0 %1700
    %v1702 = vsel %vm458, %v1682, 0.0
    %1703 = vadd.xlane.f32.xlu0 %v1702
    %v1704 = vpop.xlane.xlu0 %1703
    %v1705 = vsel %vm458, %v1683, 0.0
    %1706 = vadd.xlane.f32.xlu0 %v1705
    %v1707 = vpop.xlane.xlu0 %1706
    %v1708 = vmul.f32 %v1686, %v483
    %v1709 = vmul.f32 %v1689, %v483
    %v1710 = vmul.f32 %v1692, %v483
    %v1711 = vmul.f32 %v1695, %v483
    %v1712 = vmul.f32 %v1698, %v483
    %v1713 = vmul.f32 %v1701, %v483
    %v1714 = vmul.f32 %v1704, %v483
    %v1715 = vmul.f32 %v1707, %v483
    %v1716 = vadd.f32 %v1708, 1e-05
    %v1717 = vadd.f32 %v1709, 1e-05
    %v1718 = vadd.f32 %v1710, 1e-05
    %v1719 = vadd.f32 %v1711, 1e-05
    %v1720 = vadd.f32 %v1712, 1e-05
    %v1721 = vadd.f32 %v1713, 1e-05
    %v1722 = vadd.f32 %v1714, 1e-05
    %v1723 = vadd.f32 %v1715, 1e-05
    %v1724 = vrsqrt.pop %v1716
    %v1725 = vrsqrt.pop %v1717
    %v1726 = vrsqrt.pop %v1718
    %v1727 = vrsqrt.pop %v1719
    %v1728 = vrsqrt.pop %v1720
    %v1729 = vrsqrt.pop %v1721
    %v1730 = vrsqrt.pop %v1722
    %v1731 = vrsqrt.pop %v1723
    %v1732 = vmul.f32 %v1668, %v1724
    %v1733 = vmul.f32 %v1669, %v1725
    %v1734 = vmul.f32 %v1670, %v1726
    %v1735 = vmul.f32 %v1671, %v1727
    %v1736 = vmul.f32 %v1672, %v1728
    %v1737 = vmul.f32 %v1673, %v1729
    %v1738 = vmul.f32 %v1674, %v1730
    %v1739 = vmul.f32 %v1675, %v1731
    %v1740 = vlaneseq
    %v1741 = vshrl.u32 %v1740, 7
    %v1742 = vsub.s32 0, %v1741
    %v1743 = vrot.slane %v1634, %v1742
    %v1744 = vmul.f32 %v1732, %v1743
    %v1745 = vmul.f32 %v1733, %v1743
    %v1746 = vmul.f32 %v1734, %v1743
    %v1747 = vmul.f32 %v1735, %v1743
    %v1748 = vmul.f32 %v1736, %v1743
    %v1749 = vmul.f32 %v1737, %v1743
    %v1750 = vmul.f32 %v1738, %v1743
    %v1751 = vmul.f32 %v1739, %v1743
    %v1752 = vlaneseq
    %v1753 = vshrl.u32 %v1752, 7
    %v1754 = vsub.s32 0, %v1753
    %v1755 = vrot.slane %v1635, %v1754
    %v1756 = vadd.f32 %v1744, %v1755
    %v1757 = vadd.f32 %v1745, %v1755
    %v1758 = vadd.f32 %v1746, %v1755
    %v1759 = vadd.f32 %v1747, %v1755
    %v1760 = vadd.f32 %v1748, %v1755
    %v1761 = vadd.f32 %v1749, %v1755
    %v1762 = vadd.f32 %v1750, %v1755
    %v1763 = vadd.f32 %v1751, %v1755
    %v1764 = vmax.f32 %v1756, 0.0
    %v1765 = vmax.f32 %v1757, 0.0
    %v1766 = vmax.f32 %v1758, 0.0
    %v1767 = vmax.f32 %v1759, 0.0
    %v1768 = vmax.f32 %v1760, 0.0
    %v1769 = vmax.f32 %v1761, 0.0
    %v1770 = vmax.f32 %v1762, 0.0
    %v1771 = vmax.f32 %v1763, 0.0
    %v1772 = vld [vmem:[#allocation4] sm:$0xff]
    %v1773 = vld [vmem:[#allocation4 + $0x8] sm:$0xff]
    %v1774 = vld [vmem:[#allocation4 + $0x10] sm:$0xff]
    %v1775 = vld [vmem:[#allocation4 + $0x18] sm:$0xff]
    %v1776 = vld [vmem:[#allocation4 + $0x20] sm:$0xff]
    %v1777 = vld [vmem:[#allocation4 + $0x28] sm:$0xff]
    %v1778 = vld [vmem:[#allocation4 + $0x30] sm:$0xff]
    %v1779 = vld [vmem:[#allocation4 + $0x38] sm:$0xff]
    %v1780 = vpack.c.bf16 %v1773, %v1772
    %v1781 = vpack.c.bf16 %v1775, %v1774
    %v1782 = vpack.c.bf16 %v1777, %v1776
    %v1783 = vpack.c.bf16 %v1779, %v1778
    %v1784 = vld [vmem:[%s27] sm:$0xf]
    %v1785 = vld [vmem:[%s27 + $0x4] sm:$0xf]
    %v1786 = vld [vmem:[#allocation22] sm:$0x1]
    %v1787 = vlaneseq
    %v1788 = vshrl.u32 %v1787, 7
    %v1789 = vsub.s32 0, %v1788
    %v1790 = vrot.slane %v1786, %v1789
    %v1793 = vunpack.c.l.b16 %v1784
    %v1794 = vunpack.c.l.b16 %v1785
    %v1795 = vpack.c.b16 %v1794, %v1793
    %vm1797 = vcmask 130048
    %v1799 = vsel %vm1797, %v1780, 0
    %v1802 = vsel %vm1797, %v1781, 0
    %v1805 = vsel %vm1797, %v1782, 0
    %v1808 = vsel %vm1797, %v1783, 0
    %1810 = vmatprep.subr.bf16.mxu0 0
    %1811 = vmatpush1.bf16.msra.mxu0 0
    %1812 = vmatprep.subr.bf16.mxu0 0
    %1813 = vmatpush1.bf16.msra.mxu0 0
    %1814 = vmatprep.subr.bf16.mxu0 0
    %1815 = vmatpush1.bf16.msra.mxu0 0
    %1816 = vmatprep.subr.bf16.mxu0 0
    %1817 = vmatpush1.bf16.msra.mxu0 0
    %1818 = vmatprep.subr.bf16.mxu0 0
    %1819 = vmatpush1.bf16.msra.mxu0 0
    %1820 = vmatprep.subr.bf16.mxu0 0
    %1821 = vmatpush1.bf16.msra.mxu0 0
    %1822 = vmatprep.subr.bf16.mxu0 0
    %1823 = vmatpush1.bf16.msra.mxu0 0
    %1824 = vmatprep.subr.bf16.mxu0 0
    %1825 = vmatpush1.bf16.msra.mxu0 %v1795
    %1826 = vmatprep.subr.bf16.mxu0 0
    %1827 = vmatpush2.bf16.msra.mxu0 0
    %1828 = vmatprep.subr.bf16.mxu0 0
    %1829 = vmatpush2.bf16.msra.mxu0 0
    %1830 = vmatprep.subr.bf16.mxu0 0
    %1831 = vmatpush2.bf16.msra.mxu0 0
    %1832 = vmatprep.subr.bf16.mxu0 0
    %1833 = vmatpush2.bf16.msra.mxu0 0
    %1834 = vmatprep.subr.bf16.mxu0 0
    %1835 = vmatpush2.bf16.msra.mxu0 0
    %1836 = vmatprep.subr.bf16.mxu0 0
    %1837 = vmatpush2.bf16.msra.mxu0 0
    %1838 = vmatprep.subr.bf16.mxu0 0
    %1839 = vmatpush2.bf16.msra.mxu0 0
    %1840 = vmatprep.subr.bf16.mxu0 0
    %1841 = vmatpush2.bf16.msra.mxu0 0
    %1842 = vmatprep.mubr.bf16.mxu0 0
    %1843 = vmatmul.mubr.bf16.gmra.mxu0 %v1799
    %v1844 = vpop.f32.mrf.mxu0
    %v1845 = vadd.f32 %v1790, %v1844
    %v1846 = vpop.f32.mrf.mxu0
    %v1847 = vpop.f32.mrf.mxu0
    %v1848 = vadd.f32 %v1790, %v1847
    %v1849 = vpop.f32.mrf.mxu0
    %1850 = vmatprep.mubr.bf16.mxu0 0
    %1851 = vmatmul.mubr.bf16.gmra.mxu0 %v1802
    %v1852 = vpop.f32.mrf.mxu0
    %v1853 = vadd.f32 %v1790, %v1852
    %v1854 = vpop.f32.mrf.mxu0
    %v1855 = vpop.f32.mrf.mxu0
    %v1856 = vadd.f32 %v1790, %v1855
    %v1857 = vpop.f32.mrf.mxu0
    %1858 = vmatprep.mubr.bf16.mxu0 0
    %1859 = vmatmul.mubr.bf16.gmra.mxu0 %v1805
    %v1860 = vpop.f32.mrf.mxu0
    %v1861 = vadd.f32 %v1790, %v1860
    %v1862 = vpop.f32.mrf.mxu0
    %v1863 = vpop.f32.mrf.mxu0
    %v1864 = vadd.f32 %v1790, %v1863
    %v1865 = vpop.f32.mrf.mxu0
    %1866 = vmatprep.mubr.bf16.mxu0 0
    %1867 = vmatmul.mubr.bf16.gmra.mxu0 %v1808
    %v1868 = vpop.f32.mrf.mxu0
    %v1869 = vadd.f32 %v1790, %v1868
    %v1870 = vpop.f32.mrf.mxu0
    %v1871 = vpop.f32.mrf.mxu0
    %v1872 = vadd.f32 %v1790, %v1871
    %v1873 = vpop.f32.mrf.mxu0
    %1874 = vdwg.mxu0
    %v1875 = vld [vmem:[#allocation24] sm:$0x1]
    %v1876 = vld [vmem:[#allocation25] sm:$0x1]
    %v1877 = vsel %vm458, %v1845, 0.0
    %1878 = vadd.xlane.f32.xlu0 %v1877
    %v1879 = vpop.xlane.xlu0 %1878
    %v1880 = vsel %vm458, %v1848, 0.0
    %1881 = vadd.xlane.f32.xlu0 %v1880
    %v1882 = vpop.xlane.xlu0 %1881
    %v1883 = vsel %vm458, %v1853, 0.0
    %1884 = vadd.xlane.f32.xlu0 %v1883
    %v1885 = vpop.xlane.xlu0 %1884
    %v1886 = vsel %vm458, %v1856, 0.0
    %1887 = vadd.xlane.f32.xlu0 %v1886
    %v1888 = vpop.xlane.xlu0 %1887
    %v1889 = vsel %vm458, %v1861, 0.0
    %1890 = vadd.xlane.f32.xlu0 %v1889
    %v1891 = vpop.xlane.xlu0 %1890
    %v1892 = vsel %vm458, %v1864, 0.0
    %1893 = vadd.xlane.f32.xlu0 %v1892
    %v1894 = vpop.xlane.xlu0 %1893
    %v1895 = vsel %vm458, %v1869, 0.0
    %1896 = vadd.xlane.f32.xlu0 %v1895
    %v1897 = vpop.xlane.xlu0 %1896
    %v1898 = vsel %vm458, %v1872, 0.0
    %1899 = vadd.xlane.f32.xlu0 %v1898
    %v1900 = vpop.xlane.xlu0 %1899
    %v1901 = vmul.f32 %v1879, %v483
    %v1902 = vmul.f32 %v1882, %v483
    %v1903 = vmul.f32 %v1885, %v483
    %v1904 = vmul.f32 %v1888, %v483
    %v1905 = vmul.f32 %v1891, %v483
    %v1906 = vmul.f32 %v1894, %v483
    %v1907 = vmul.f32 %v1897, %v483
    %v1908 = vmul.f32 %v1900, %v483
    %v1909 = vsub.f32 %v1845, %v1901
    %v1910 = vsub.f32 %v1848, %v1902
    %v1911 = vsub.f32 %v1853, %v1903
    %v1912 = vsub.f32 %v1856, %v1904
    %v1913 = vsub.f32 %v1861, %v1905
    %v1914 = vsub.f32 %v1864, %v1906
    %v1915 = vsub.f32 %v1869, %v1907
    %v1916 = vsub.f32 %v1872, %v1908
    %v1917 = vmul.f32 %v1909, %v1909
    %v1918 = vmul.f32 %v1910, %v1910
    %v1919 = vmul.f32 %v1911, %v1911
    %v1920 = vmul.f32 %v1912, %v1912
    %v1921 = vmul.f32 %v1913, %v1913
    %v1922 = vmul.f32 %v1914, %v1914
    %v1923 = vmul.f32 %v1915, %v1915
    %v1924 = vmul.f32 %v1916, %v1916
    %v1925 = vsel %vm458, %v1917, 0.0
    %1926 = vadd.xlane.f32.xlu0 %v1925
    %v1927 = vpop.xlane.xlu0 %1926
    %v1928 = vsel %vm458, %v1918, 0.0
    %1929 = vadd.xlane.f32.xlu0 %v1928
    %v1930 = vpop.xlane.xlu0 %1929
    %v1931 = vsel %vm458, %v1919, 0.0
    %1932 = vadd.xlane.f32.xlu0 %v1931
    %v1933 = vpop.xlane.xlu0 %1932
    %v1934 = vsel %vm458, %v1920, 0.0
    %1935 = vadd.xlane.f32.xlu0 %v1934
    %v1936 = vpop.xlane.xlu0 %1935
    %v1937 = vsel %vm458, %v1921, 0.0
    %1938 = vadd.xlane.f32.xlu0 %v1937
    %v1939 = vpop.xlane.xlu0 %1938
    %v1940 = vsel %vm458, %v1922, 0.0
    %1941 = vadd.xlane.f32.xlu0 %v1940
    %v1942 = vpop.xlane.xlu0 %1941
    %v1943 = vsel %vm458, %v1923, 0.0
    %1944 = vadd.xlane.f32.xlu0 %v1943
    %v1945 = vpop.xlane.xlu0 %1944
    %v1946 = vsel %vm458, %v1924, 0.0
    %1947 = vadd.xlane.f32.xlu0 %v1946
    %v1948 = vpop.xlane.xlu0 %1947
    %v1949 = vmul.f32 %v1927, %v483
    %v1950 = vmul.f32 %v1930, %v483
    %v1951 = vmul.f32 %v1933, %v483
    %v1952 = vmul.f32 %v1936, %v483
    %v1953 = vmul.f32 %v1939, %v483
    %v1954 = vmul.f32 %v1942, %v483
    %v1955 = vmul.f32 %v1945, %v483
    %v1956 = vmul.f32 %v1948, %v483
    %v1957 = vadd.f32 %v1949, 1e-05
    %v1958 = vadd.f32 %v1950, 1e-05
    %v1959 = vadd.f32 %v1951, 1e-05
    %v1960 = vadd.f32 %v1952, 1e-05
    %v1961 = vadd.f32 %v1953, 1e-05
    %v1962 = vadd.f32 %v1954, 1e-05
    %v1963 = vadd.f32 %v1955, 1e-05
    %v1964 = vadd.f32 %v1956, 1e-05
    %v1965 = vrsqrt.pop %v1957
    %v1966 = vrsqrt.pop %v1958
    %v1967 = vrsqrt.pop %v1959
    %v1968 = vrsqrt.pop %v1960
    %v1969 = vrsqrt.pop %v1961
    %v1970 = vrsqrt.pop %v1962
    %v1971 = vrsqrt.pop %v1963
    %v1972 = vrsqrt.pop %v1964
    %v1973 = vmul.f32 %v1909, %v1965
    %v1974 = vmul.f32 %v1910, %v1966
    %v1975 = vmul.f32 %v1911, %v1967
    %v1976 = vmul.f32 %v1912, %v1968
    %v1977 = vmul.f32 %v1913, %v1969
    %v1978 = vmul.f32 %v1914, %v1970
    %v1979 = vmul.f32 %v1915, %v1971
    %v1980 = vmul.f32 %v1916, %v1972
    %v1981 = vlaneseq
    %v1982 = vshrl.u32 %v1981, 7
    %v1983 = vsub.s32 0, %v1982
    %v1984 = vrot.slane %v1875, %v1983
    %v1985 = vmul.f32 %v1973, %v1984
    %v1986 = vmul.f32 %v1974, %v1984
    %v1987 = vmul.f32 %v1975, %v1984
    %v1988 = vmul.f32 %v1976, %v1984
    %v1989 = vmul.f32 %v1977, %v1984
    %v1990 = vmul.f32 %v1978, %v1984
    %v1991 = vmul.f32 %v1979, %v1984
    %v1992 = vmul.f32 %v1980, %v1984
    %v1993 = vlaneseq
    %v1994 = vshrl.u32 %v1993, 7
    %v1995 = vsub.s32 0, %v1994
    %v1996 = vrot.slane %v1876, %v1995
    %v1997 = vadd.f32 %v1985, %v1996
    %v1998 = vadd.f32 %v1986, %v1996
    %v1999 = vadd.f32 %v1987, %v1996
    %v2000 = vadd.f32 %v1988, %v1996
    %v2001 = vadd.f32 %v1989, %v1996
    %v2002 = vadd.f32 %v1990, %v1996
    %v2003 = vadd.f32 %v1991, %v1996
    %v2004 = vadd.f32 %v1992, %v1996
    %v2005 = vmax.f32 %v1997, 0.0
    %v2006 = vmax.f32 %v1998, 0.0
    %v2007 = vmax.f32 %v1999, 0.0
    %v2008 = vmax.f32 %v2000, 0.0
    %v2009 = vmax.f32 %v2001, 0.0
    %v2010 = vmax.f32 %v2002, 0.0
    %v2011 = vmax.f32 %v2003, 0.0
    %v2012 = vmax.f32 %v2004, 0.0
    %v2013 = vpack.c.bf16 %v2006, %v2005
    %v2014 = vpack.c.bf16 %v2008, %v2007
    %v2015 = vpack.c.bf16 %v2010, %v2009
    %v2016 = vpack.c.bf16 %v2012, %v2011
    %v2017 = vld [vmem:[#allocation21] sm:$0xf]
    %v2018 = vld [vmem:[#allocation21 + $0x4] sm:$0xf]
    %v2019 = vld [vmem:[#allocation21 + $0x8] sm:$0xf]
    %v2020 = vld [vmem:[#allocation21 + $0xc] sm:$0xf]
    %v2021 = vld [vmem:[#allocation22 + $0x1] sm:$0x1]
    %v2022 = vlaneseq
    %v2023 = vshrl.u32 %v2022, 7
    %v2024 = vsub.s32 0, %v2023
    %v2025 = vrot.slane %v2021, %v2024
    %v2030 = vunpack.c.l.b16 %v2017
    %v2031 = vunpack.c.l.b16 %v2018
    %v2032 = vunpack.c.l.b16 %v2019
    %v2033 = vunpack.c.l.b16 %v2020
    %v2034 = vpack.c.b16 %v2031, %v2030
    %v2035 = vpack.c.b16 %v2033, %v2032
    %v2039 = vsel %vm458, %v2013, 0
    %v2042 = vsel %vm458, %v2014, 0
    %v2045 = vsel %vm458, %v2015, 0
    %v2048 = vsel %vm458, %v2016, 0
    %2050 = vmatprep.subr.bf16.mxu0 0
    %2051 = vmatpush1.bf16.msra.mxu0 0
    %2052 = vmatprep.subr.bf16.mxu0 0
    %2053 = vmatpush1.bf16.msra.mxu0 0
    %2054 = vmatprep.subr.bf16.mxu0 0
    %2055 = vmatpush1.bf16.msra.mxu0 0
    %2056 = vmatprep.subr.bf16.mxu0 0
    %2057 = vmatpush1.bf16.msra.mxu0 0
    %2058 = vmatprep.subr.bf16.mxu0 0
    %2059 = vmatpush1.bf16.msra.mxu0 0
    %2060 = vmatprep.subr.bf16.mxu0 0
    %2061 = vmatpush1.bf16.msra.mxu0 0
    %2062 = vmatprep.subr.bf16.mxu0 0
    %2063 = vmatpush1.bf16.msra.mxu0 %v2035
    %2064 = vmatprep.subr.bf16.mxu0 0
    %2065 = vmatpush1.bf16.msra.mxu0 %v2034
    %2066 = vmatprep.subr.bf16.mxu0 0
    %2067 = vmatpush2.bf16.msra.mxu0 0
    %2068 = vmatprep.subr.bf16.mxu0 0
    %2069 = vmatpush2.bf16.msra.mxu0 0
    %2070 = vmatprep.subr.bf16.mxu0 0
    %2071 = vmatpush2.bf16.msra.mxu0 0
    %2072 = vmatprep.subr.bf16.mxu0 0
    %2073 = vmatpush2.bf16.msra.mxu0 0
    %2074 = vmatprep.subr.bf16.mxu0 0
    %2075 = vmatpush2.bf16.msra.mxu0 0
    %2076 = vmatprep.subr.bf16.mxu0 0
    %2077 = vmatpush2.bf16.msra.mxu0 0
    %2078 = vmatprep.subr.bf16.mxu0 0
    %2079 = vmatpush2.bf16.msra.mxu0 0
    %2080 = vmatprep.subr.bf16.mxu0 0
    %2081 = vmatpush2.bf16.msra.mxu0 0
    %2082 = vmatprep.mubr.bf16.mxu0 0
    %2083 = vmatmul.mubr.bf16.gmra.mxu0 %v2039
    %v2084 = vpop.f32.mrf.mxu0
    %v2085 = vadd.f32 %v2025, %v2084
    %v2086 = vpop.f32.mrf.mxu0
    %v2087 = vpop.f32.mrf.mxu0
    %v2088 = vadd.f32 %v2025, %v2087
    %v2089 = vpop.f32.mrf.mxu0
    %2090 = vmatprep.mubr.bf16.mxu0 0
    %2091 = vmatmul.mubr.bf16.gmra.mxu0 %v2042
    %v2092 = vpop.f32.mrf.mxu0
    %v2093 = vadd.f32 %v2025, %v2092
    %v2094 = vpop.f32.mrf.mxu0
    %v2095 = vpop.f32.mrf.mxu0
    %v2096 = vadd.f32 %v2025, %v2095
    %v2097 = vpop.f32.mrf.mxu0
    %2098 = vmatprep.mubr.bf16.mxu0 0
    %2099 = vmatmul.mubr.bf16.gmra.mxu0 %v2045
    %v2100 = vpop.f32.mrf.mxu0
    %v2101 = vadd.f32 %v2025, %v2100
    %v2102 = vpop.f32.mrf.mxu0
    %v2103 = vpop.f32.mrf.mxu0
    %v2104 = vadd.f32 %v2025, %v2103
    %v2105 = vpop.f32.mrf.mxu0
    %2106 = vmatprep.mubr.bf16.mxu0 0
    %2107 = vmatmul.mubr.bf16.gmra.mxu0 %v2048
    %v2108 = vpop.f32.mrf.mxu0
    %v2109 = vadd.f32 %v2025, %v2108
    %v2110 = vpop.f32.mrf.mxu0
    %v2111 = vpop.f32.mrf.mxu0
    %v2112 = vadd.f32 %v2025, %v2111
    %v2113 = vpop.f32.mrf.mxu0
    %2114 = vdwg.mxu0
    %v2115 = vld [vmem:[#allocation24 + $0x1] sm:$0x1]
    %v2116 = vld [vmem:[#allocation25 + $0x1] sm:$0x1]
    %v2117 = vsel %vm458, %v2085, 0.0
    %2118 = vadd.xlane.f32.xlu0 %v2117
    %v2119 = vpop.xlane.xlu0 %2118
    %v2120 = vsel %vm458, %v2088, 0.0
    %2121 = vadd.xlane.f32.xlu0 %v2120
    %v2122 = vpop.xlane.xlu0 %2121
    %v2123 = vsel %vm458, %v2093, 0.0
    %2124 = vadd.xlane.f32.xlu0 %v2123
    %v2125 = vpop.xlane.xlu0 %2124
    %v2126 = vsel %vm458, %v2096, 0.0
    %2127 = vadd.xlane.f32.xlu0 %v2126
    %v2128 = vpop.xlane.xlu0 %2127
    %v2129 = vsel %vm458, %v2101, 0.0
    %2130 = vadd.xlane.f32.xlu0 %v2129
    %v2131 = vpop.xlane.xlu0 %2130
    %v2132 = vsel %vm458, %v2104, 0.0
    %2133 = vadd.xlane.f32.xlu0 %v2132
    %v2134 = vpop.xlane.xlu0 %2133
    %v2135 = vsel %vm458, %v2109, 0.0
    %2136 = vadd.xlane.f32.xlu0 %v2135
    %v2137 = vpop.xlane.xlu0 %2136
    %v2138 = vsel %vm458, %v2112, 0.0
    %2139 = vadd.xlane.f32.xlu0 %v2138
    %v2140 = vpop.xlane.xlu0 %2139
    %v2141 = vmul.f32 %v2119, %v483
    %v2142 = vmul.f32 %v2122, %v483
    %v2143 = vmul.f32 %v2125, %v483
    %v2144 = vmul.f32 %v2128, %v483
    %v2145 = vmul.f32 %v2131, %v483
    %v2146 = vmul.f32 %v2134, %v483
    %v2147 = vmul.f32 %v2137, %v483
    %v2148 = vmul.f32 %v2140, %v483
    %v2149 = vsub.f32 %v2085, %v2141
    %v2150 = vsub.f32 %v2088, %v2142
    %v2151 = vsub.f32 %v2093, %v2143
    %v2152 = vsub.f32 %v2096, %v2144
    %v2153 = vsub.f32 %v2101, %v2145
    %v2154 = vsub.f32 %v2104, %v2146
    %v2155 = vsub.f32 %v2109, %v2147
    %v2156 = vsub.f32 %v2112, %v2148
    %v2157 = vmul.f32 %v2149, %v2149
    %v2158 = vmul.f32 %v2150, %v2150
    %v2159 = vmul.f32 %v2151, %v2151
    %v2160 = vmul.f32 %v2152, %v2152
    %v2161 = vmul.f32 %v2153, %v2153
    %v2162 = vmul.f32 %v2154, %v2154
    %v2163 = vmul.f32 %v2155, %v2155
    %v2164 = vmul.f32 %v2156, %v2156
    %v2165 = vsel %vm458, %v2157, 0.0
    %2166 = vadd.xlane.f32.xlu0 %v2165
    %v2167 = vpop.xlane.xlu0 %2166
    %v2168 = vsel %vm458, %v2158, 0.0
    %2169 = vadd.xlane.f32.xlu0 %v2168
    %v2170 = vpop.xlane.xlu0 %2169
    %v2171 = vsel %vm458, %v2159, 0.0
    %2172 = vadd.xlane.f32.xlu0 %v2171
    %v2173 = vpop.xlane.xlu0 %2172
    %v2174 = vsel %vm458, %v2160, 0.0
    %2175 = vadd.xlane.f32.xlu0 %v2174
    %v2176 = vpop.xlane.xlu0 %2175
    %v2177 = vsel %vm458, %v2161, 0.0
    %2178 = vadd.xlane.f32.xlu0 %v2177
    %v2179 = vpop.xlane.xlu0 %2178
    %v2180 = vsel %vm458, %v2162, 0.0
    %2181 = vadd.xlane.f32.xlu0 %v2180
    %v2182 = vpop.xlane.xlu0 %2181
    %v2183 = vsel %vm458, %v2163, 0.0
    %2184 = vadd.xlane.f32.xlu0 %v2183
    %v2185 = vpop.xlane.xlu0 %2184
    %v2186 = vsel %vm458, %v2164, 0.0
    %2187 = vadd.xlane.f32.xlu0 %v2186
    %v2188 = vpop.xlane.xlu0 %2187
    %v2189 = vmul.f32 %v2167, %v483
    %v2190 = vmul.f32 %v2170, %v483
    %v2191 = vmul.f32 %v2173, %v483
    %v2192 = vmul.f32 %v2176, %v483
    %v2193 = vmul.f32 %v2179, %v483
    %v2194 = vmul.f32 %v2182, %v483
    %v2195 = vmul.f32 %v2185, %v483
    %v2196 = vmul.f32 %v2188, %v483
    %v2197 = vadd.f32 %v2189, 1e-05
    %v2198 = vadd.f32 %v2190, 1e-05
    %v2199 = vadd.f32 %v2191, 1e-05
    %v2200 = vadd.f32 %v2192, 1e-05
    %v2201 = vadd.f32 %v2193, 1e-05
    %v2202 = vadd.f32 %v2194, 1e-05
    %v2203 = vadd.f32 %v2195, 1e-05
    %v2204 = vadd.f32 %v2196, 1e-05
    %v2205 = vrsqrt.pop %v2197
    %v2206 = vrsqrt.pop %v2198
    %v2207 = vrsqrt.pop %v2199
    %v2208 = vrsqrt.pop %v2200
    %v2209 = vrsqrt.pop %v2201
    %v2210 = vrsqrt.pop %v2202
    %v2211 = vrsqrt.pop %v2203
    %v2212 = vrsqrt.pop %v2204
    %v2213 = vmul.f32 %v2149, %v2205
    %v2214 = vmul.f32 %v2150, %v2206
    %v2215 = vmul.f32 %v2151, %v2207
    %v2216 = vmul.f32 %v2152, %v2208
    %v2217 = vmul.f32 %v2153, %v2209
    %v2218 = vmul.f32 %v2154, %v2210
    %v2219 = vmul.f32 %v2155, %v2211
    %v2220 = vmul.f32 %v2156, %v2212
    %v2221 = vlaneseq
    %v2222 = vshrl.u32 %v2221, 7
    %v2223 = vsub.s32 0, %v2222
    %v2224 = vrot.slane %v2115, %v2223
    %v2225 = vmul.f32 %v2213, %v2224
    %v2226 = vmul.f32 %v2214, %v2224
    %v2227 = vmul.f32 %v2215, %v2224
    %v2228 = vmul.f32 %v2216, %v2224
    %v2229 = vmul.f32 %v2217, %v2224
    %v2230 = vmul.f32 %v2218, %v2224
    %v2231 = vmul.f32 %v2219, %v2224
    %v2232 = vmul.f32 %v2220, %v2224
    %v2233 = vlaneseq
    %v2234 = vshrl.u32 %v2233, 7
    %v2235 = vsub.s32 0, %v2234
    %v2236 = vrot.slane %v2116, %v2235
    %v2237 = vadd.f32 %v2225, %v2236
    %v2238 = vadd.f32 %v2226, %v2236
    %v2239 = vadd.f32 %v2227, %v2236
    %v2240 = vadd.f32 %v2228, %v2236
    %v2241 = vadd.f32 %v2229, %v2236
    %v2242 = vadd.f32 %v2230, %v2236
    %v2243 = vadd.f32 %v2231, %v2236
    %v2244 = vadd.f32 %v2232, %v2236
    %v2245 = vmax.f32 %v2237, 0.0
    %v2246 = vmax.f32 %v2238, 0.0
    %v2247 = vmax.f32 %v2239, 0.0
    %v2248 = vmax.f32 %v2240, 0.0
    %v2249 = vmax.f32 %v2241, 0.0
    %v2250 = vmax.f32 %v2242, 0.0
    %v2251 = vmax.f32 %v2243, 0.0
    %v2252 = vmax.f32 %v2244, 0.0
    %v2253 = vpack.c.bf16 %v2246, %v2245
    %v2254 = vpack.c.bf16 %v2248, %v2247
    %v2255 = vpack.c.bf16 %v2250, %v2249
    %v2256 = vpack.c.bf16 %v2252, %v2251
    %s2257 = scalar_lea.vmem [#allocation21], 16
    %v2258 = vld [vmem:[%s2257] sm:$0xf]
    %v2259 = vld [vmem:[%s2257 + $0x4] sm:$0xf]
    %v2260 = vld [vmem:[%s2257 + $0x8] sm:$0xf]
    %v2261 = vld [vmem:[%s2257 + $0xc] sm:$0xf]
    %v2262 = vld [vmem:[#allocation22 + $0x2] sm:$0x1]
    %v2263 = vlaneseq
    %v2264 = vshrl.u32 %v2263, 7
    %v2265 = vsub.s32 0, %v2264
    %v2266 = vrot.slane %v2262, %v2265
    %v2271 = vunpack.c.l.b16 %v2258
    %v2272 = vunpack.c.l.b16 %v2259
    %v2273 = vunpack.c.l.b16 %v2260
    %v2274 = vunpack.c.l.b16 %v2261
    %v2275 = vpack.c.b16 %v2272, %v2271
    %v2276 = vpack.c.b16 %v2274, %v2273
    %v2280 = vsel %vm458, %v2253, 0
    %v2283 = vsel %vm458, %v2254, 0
    %v2286 = vsel %vm458, %v2255, 0
    %v2289 = vsel %vm458, %v2256, 0
    %2291 = vmatprep.subr.bf16.mxu0 0
    %2292 = vmatpush1.bf16.msra.mxu0 0
    %2293 = vmatprep.subr.bf16.mxu0 0
    %2294 = vmatpush1.bf16.msra.mxu0 0
    %2295 = vmatprep.subr.bf16.mxu0 0
    %2296 = vmatpush1.bf16.msra.mxu0 0
    %2297 = vmatprep.subr.bf16.mxu0 0
    %2298 = vmatpush1.bf16.msra.mxu0 0
    %2299 = vmatprep.subr.bf16.mxu0 0
    %2300 = vmatpush1.bf16.msra.mxu0 0
    %2301 = vmatprep.subr.bf16.mxu0 0
    %2302 = vmatpush1.bf16.msra.mxu0 0
    %2303 = vmatprep.subr.bf16.mxu0 0
    %2304 = vmatpush1.bf16.msra.mxu0 %v2276
    %2305 = vmatprep.subr.bf16.mxu0 0
    %2306 = vmatpush1.bf16.msra.mxu0 %v2275
    %2307 = vmatprep.subr.bf16.mxu0 0
    %2308 = vmatpush2.bf16.msra.mxu0 0
    %2309 = vmatprep.subr.bf16.mxu0 0
    %2310 = vmatpush2.bf16.msra.mxu0 0
    %2311 = vmatprep.subr.bf16.mxu0 0
    %2312 = vmatpush2.bf16.msra.mxu0 0
    %2313 = vmatprep.subr.bf16.mxu0 0
    %2314 = vmatpush2.bf16.msra.mxu0 0
    %2315 = vmatprep.subr.bf16.mxu0 0
    %2316 = vmatpush2.bf16.msra.mxu0 0
    %2317 = vmatprep.subr.bf16.mxu0 0
    %2318 = vmatpush2.bf16.msra.mxu0 0
    %2319 = vmatprep.subr.bf16.mxu0 0
    %2320 = vmatpush2.bf16.msra.mxu0 0
    %2321 = vmatprep.subr.bf16.mxu0 0
    %2322 = vmatpush2.bf16.msra.mxu0 0
    %2323 = vmatprep.mubr.bf16.mxu0 0
    %2324 = vmatmul.mubr.bf16.gmra.mxu0 %v2280
    %v2325 = vpop.f32.mrf.mxu0
    %v2326 = vadd.f32 %v2266, %v2325
    %v2327 = vpop.f32.mrf.mxu0
    %v2328 = vpop.f32.mrf.mxu0
    %v2329 = vadd.f32 %v2266, %v2328
    %v2330 = vpop.f32.mrf.mxu0
    %2331 = vmatprep.mubr.bf16.mxu0 0
    %2332 = vmatmul.mubr.bf16.gmra.mxu0 %v2283
    %v2333 = vpop.f32.mrf.mxu0
    %v2334 = vadd.f32 %v2266, %v2333
    %v2335 = vpop.f32.mrf.mxu0
    %v2336 = vpop.f32.mrf.mxu0
    %v2337 = vadd.f32 %v2266, %v2336
    %v2338 = vpop.f32.mrf.mxu0
    %2339 = vmatprep.mubr.bf16.mxu0 0
    %2340 = vmatmul.mubr.bf16.gmra.mxu0 %v2286
    %v2341 = vpop.f32.mrf.mxu0
    %v2342 = vadd.f32 %v2266, %v2341
    %v2343 = vpop.f32.mrf.mxu0
    %v2344 = vpop.f32.mrf.mxu0
    %v2345 = vadd.f32 %v2266, %v2344
    %v2346 = vpop.f32.mrf.mxu0
    %2347 = vmatprep.mubr.bf16.mxu0 0
    %2348 = vmatmul.mubr.bf16.gmra.mxu0 %v2289
    %v2349 = vpop.f32.mrf.mxu0
    %v2350 = vadd.f32 %v2266, %v2349
    %v2351 = vpop.f32.mrf.mxu0
    %v2352 = vpop.f32.mrf.mxu0
    %v2353 = vadd.f32 %v2266, %v2352
    %v2354 = vpop.f32.mrf.mxu0
    %2355 = vdwg.mxu0
    %v2356 = vld [vmem:[#allocation24 + $0x2] sm:$0x1]
    %v2357 = vld [vmem:[#allocation25 + $0x2] sm:$0x1]
    %v2358 = vsel %vm458, %v2326, 0.0
    %2359 = vadd.xlane.f32.xlu0 %v2358
    %v2360 = vpop.xlane.xlu0 %2359
    %v2361 = vsel %vm458, %v2329, 0.0
    %2362 = vadd.xlane.f32.xlu0 %v2361
    %v2363 = vpop.xlane.xlu0 %2362
    %v2364 = vsel %vm458, %v2334, 0.0
    %2365 = vadd.xlane.f32.xlu0 %v2364
    %v2366 = vpop.xlane.xlu0 %2365
    %v2367 = vsel %vm458, %v2337, 0.0
    %2368 = vadd.xlane.f32.xlu0 %v2367
    %v2369 = vpop.xlane.xlu0 %2368
    %v2370 = vsel %vm458, %v2342, 0.0
    %2371 = vadd.xlane.f32.xlu0 %v2370
    %v2372 = vpop.xlane.xlu0 %2371
    %v2373 = vsel %vm458, %v2345, 0.0
    %2374 = vadd.xlane.f32.xlu0 %v2373
    %v2375 = vpop.xlane.xlu0 %2374
    %v2376 = vsel %vm458, %v2350, 0.0
    %2377 = vadd.xlane.f32.xlu0 %v2376
    %v2378 = vpop.xlane.xlu0 %2377
    %v2379 = vsel %vm458, %v2353, 0.0
    %2380 = vadd.xlane.f32.xlu0 %v2379
    %v2381 = vpop.xlane.xlu0 %2380
    %v2382 = vmul.f32 %v2360, %v483
    %v2383 = vmul.f32 %v2363, %v483
    %v2384 = vmul.f32 %v2366, %v483
    %v2385 = vmul.f32 %v2369, %v483
    %v2386 = vmul.f32 %v2372, %v483
    %v2387 = vmul.f32 %v2375, %v483
    %v2388 = vmul.f32 %v2378, %v483
    %v2389 = vmul.f32 %v2381, %v483
    %v2390 = vsub.f32 %v2326, %v2382
    %v2391 = vsub.f32 %v2329, %v2383
    %v2392 = vsub.f32 %v2334, %v2384
    %v2393 = vsub.f32 %v2337, %v2385
    %v2394 = vsub.f32 %v2342, %v2386
    %v2395 = vsub.f32 %v2345, %v2387
    %v2396 = vsub.f32 %v2350, %v2388
    %v2397 = vsub.f32 %v2353, %v2389
    %v2398 = vmul.f32 %v2390, %v2390
    %v2399 = vmul.f32 %v2391, %v2391
    %v2400 = vmul.f32 %v2392, %v2392
    %v2401 = vmul.f32 %v2393, %v2393
    %v2402 = vmul.f32 %v2394, %v2394
    %v2403 = vmul.f32 %v2395, %v2395
    %v2404 = vmul.f32 %v2396, %v2396
    %v2405 = vmul.f32 %v2397, %v2397
    %v2406 = vsel %vm458, %v2398, 0.0
    %2407 = vadd.xlane.f32.xlu0 %v2406
    %v2408 = vpop.xlane.xlu0 %2407
    %v2409 = vsel %vm458, %v2399, 0.0
    %2410 = vadd.xlane.f32.xlu0 %v2409
    %v2411 = vpop.xlane.xlu0 %2410
    %v2412 = vsel %vm458, %v2400, 0.0
    %2413 = vadd.xlane.f32.xlu0 %v2412
    %v2414 = vpop.xlane.xlu0 %2413
    %v2415 = vsel %vm458, %v2401, 0.0
    %2416 = vadd.xlane.f32.xlu0 %v2415
    %v2417 = vpop.xlane.xlu0 %2416
    %v2418 = vsel %vm458, %v2402, 0.0
    %2419 = vadd.xlane.f32.xlu0 %v2418
    %v2420 = vpop.xlane.xlu0 %2419
    %v2421 = vsel %vm458, %v2403, 0.0
    %2422 = vadd.xlane.f32.xlu0 %v2421
    %v2423 = vpop.xlane.xlu0 %2422
    %v2424 = vsel %vm458, %v2404, 0.0
    %2425 = vadd.xlane.f32.xlu0 %v2424
    %v2426 = vpop.xlane.xlu0 %2425
    %v2427 = vsel %vm458, %v2405, 0.0
    %2428 = vadd.xlane.f32.xlu0 %v2427
    %v2429 = vpop.xlane.xlu0 %2428
    %v2430 = vmul.f32 %v2408, %v483
    %v2431 = vmul.f32 %v2411, %v483
    %v2432 = vmul.f32 %v2414, %v483
    %v2433 = vmul.f32 %v2417, %v483
    %v2434 = vmul.f32 %v2420, %v483
    %v2435 = vmul.f32 %v2423, %v483
    %v2436 = vmul.f32 %v2426, %v483
    %v2437 = vmul.f32 %v2429, %v483
    %v2438 = vadd.f32 %v2430, 1e-05
    %v2439 = vadd.f32 %v2431, 1e-05
    %v2440 = vadd.f32 %v2432, 1e-05
    %v2441 = vadd.f32 %v2433, 1e-05
    %v2442 = vadd.f32 %v2434, 1e-05
    %v2443 = vadd.f32 %v2435, 1e-05
    %v2444 = vadd.f32 %v2436, 1e-05
    %v2445 = vadd.f32 %v2437, 1e-05
    %v2446 = vrsqrt.pop %v2438
    %v2447 = vrsqrt.pop %v2439
    %v2448 = vrsqrt.pop %v2440
    %v2449 = vrsqrt.pop %v2441
    %v2450 = vrsqrt.pop %v2442
    %v2451 = vrsqrt.pop %v2443
    %v2452 = vrsqrt.pop %v2444
    %v2453 = vrsqrt.pop %v2445
    %v2454 = vmul.f32 %v2390, %v2446
    %v2455 = vmul.f32 %v2391, %v2447
    %v2456 = vmul.f32 %v2392, %v2448
    %v2457 = vmul.f32 %v2393, %v2449
    %v2458 = vmul.f32 %v2394, %v2450
    %v2459 = vmul.f32 %v2395, %v2451
    %v2460 = vmul.f32 %v2396, %v2452
    %v2461 = vmul.f32 %v2397, %v2453
    %v2462 = vlaneseq
    %v2463 = vshrl.u32 %v2462, 7
    %v2464 = vsub.s32 0, %v2463
    %v2465 = vrot.slane %v2356, %v2464
    %v2466 = vmul.f32 %v2454, %v2465
    %v2467 = vmul.f32 %v2455, %v2465
    %v2468 = vmul.f32 %v2456, %v2465
    %v2469 = vmul.f32 %v2457, %v2465
    %v2470 = vmul.f32 %v2458, %v2465
    %v2471 = vmul.f32 %v2459, %v2465
    %v2472 = vmul.f32 %v2460, %v2465
    %v2473 = vmul.f32 %v2461, %v2465
    %v2474 = vlaneseq
    %v2475 = vshrl.u32 %v2474, 7
    %v2476 = vsub.s32 0, %v2475
    %v2477 = vrot.slane %v2357, %v2476
    %v2478 = vadd.f32 %v2466, %v2477
    %v2479 = vadd.f32 %v2467, %v2477
    %v2480 = vadd.f32 %v2468, %v2477
    %v2481 = vadd.f32 %v2469, %v2477
    %v2482 = vadd.f32 %v2470, %v2477
    %v2483 = vadd.f32 %v2471, %v2477
    %v2484 = vadd.f32 %v2472, %v2477
    %v2485 = vadd.f32 %v2473, %v2477
    %v2486 = vmax.f32 %v2478, 0.0
    %v2487 = vmax.f32 %v2479, 0.0
    %v2488 = vmax.f32 %v2480, 0.0
    %v2489 = vmax.f32 %v2481, 0.0
    %v2490 = vmax.f32 %v2482, 0.0
    %v2491 = vmax.f32 %v2483, 0.0
    %v2492 = vmax.f32 %v2484, 0.0
    %v2493 = vmax.f32 %v2485, 0.0
    %v2494 = vpack.c.bf16 %v2487, %v2486
    %v2495 = vpack.c.bf16 %v2489, %v2488
    %v2496 = vpack.c.bf16 %v2491, %v2490
    %v2497 = vpack.c.bf16 %v2493, %v2492
    %v2498 = vpack.c.bf16 %v1070, %v1069
    %v2499 = vpack.c.bf16 %v1072, %v1071
    %v2500 = vpack.c.bf16 %v1074, %v1073
    %v2501 = vpack.c.bf16 %v1076, %v1075
    %v2502 = vpack.c.bf16 %v1765, %v1764
    %v2503 = vpack.c.bf16 %v1767, %v1766
    %v2504 = vpack.c.bf16 %v1769, %v1768
    %v2505 = vpack.c.bf16 %v1771, %v1770
    %v2506 = vld [vmem:[%s47] sm:$0xf]
    %v2507 = vld [vmem:[%s47 + $0x4] sm:$0xf]
    %v2508 = vld [vmem:[%s47 + $0x8] sm:$0xf]
    %v2509 = vld [vmem:[%s47 + $0xc] sm:$0xf]
    %s2510 = scalar_lea.vmem %s47, 48
    %v2511 = vld [vmem:[%s2510] sm:$0xf]
    %v2512 = vld [vmem:[%s2510 + $0x4] sm:$0xf]
    %v2513 = vld [vmem:[%s2510 + $0x8] sm:$0xf]
    %v2514 = vld [vmem:[%s2510 + $0xc] sm:$0xf]
    %v2519 = vunpack.c.l.b16 %v2511
    %v2520 = vunpack.c.l.b16 %v2512
    %v2521 = vunpack.c.l.b16 %v2513
    %v2522 = vunpack.c.l.b16 %v2514
    %v2523 = vpack.c.b16 %v2520, %v2519
    %v2524 = vpack.c.b16 %v2522, %v2521
    %v2528 = vsel %vm458, %v2498, 0
    %v2531 = vsel %vm458, %v2499, 0
    %v2534 = vsel %vm458, %v2500, 0
    %v2537 = vsel %vm458, %v2501, 0
    %2539 = vmatprep.subr.bf16.mxu0 0
    %2540 = vmatpush1.bf16.msra.mxu0 0
    %2541 = vmatprep.subr.bf16.mxu0 0
    %2542 = vmatpush1.bf16.msra.mxu0 0
    %2543 = vmatprep.subr.bf16.mxu0 0
    %2544 = vmatpush1.bf16.msra.mxu0 0
    %2545 = vmatprep.subr.bf16.mxu0 0
    %2546 = vmatpush1.bf16.msra.mxu0 0
    %2547 = vmatprep.subr.bf16.mxu0 0
    %2548 = vmatpush1.bf16.msra.mxu0 0
    %2549 = vmatprep.subr.bf16.mxu0 0
    %2550 = vmatpush1.bf16.msra.mxu0 0
    %2551 = vmatprep.subr.bf16.mxu0 0
    %2552 = vmatpush1.bf16.msra.mxu0 %v2524
    %2553 = vmatprep.subr.bf16.mxu0 0
    %2554 = vmatpush1.bf16.msra.mxu0 %v2523
    %2555 = vmatprep.subr.bf16.mxu0 0
    %2556 = vmatpush2.bf16.msra.mxu0 0
    %2557 = vmatprep.subr.bf16.mxu0 0
    %2558 = vmatpush2.bf16.msra.mxu0 0
    %2559 = vmatprep.subr.bf16.mxu0 0
    %2560 = vmatpush2.bf16.msra.mxu0 0
    %2561 = vmatprep.subr.bf16.mxu0 0
    %2562 = vmatpush2.bf16.msra.mxu0 0
    %2563 = vmatprep.subr.bf16.mxu0 0
    %2564 = vmatpush2.bf16.msra.mxu0 0
    %2565 = vmatprep.subr.bf16.mxu0 0
    %2566 = vmatpush2.bf16.msra.mxu0 0
    %2567 = vmatprep.subr.bf16.mxu0 0
    %2568 = vmatpush2.bf16.msra.mxu0 0
    %2569 = vmatprep.subr.bf16.mxu0 0
    %2570 = vmatpush2.bf16.msra.mxu0 0
    %2571 = vmatprep.mubr.bf16.mxu0 0
    %2572 = vmatmul.mubr.bf16.gmra.mxu0 %v2528
    %v2573 = vpop.f32.mrf.mxu0
    %v2574 = vadd.f32 0.0, %v2573
    %v2575 = vpop.f32.mrf.mxu0
    %v2576 = vpop.f32.mrf.mxu0
    %v2577 = vadd.f32 0.0, %v2576
    %v2578 = vpop.f32.mrf.mxu0
    %2579 = vmatprep.mubr.bf16.mxu0 0
    %2580 = vmatmul.mubr.bf16.gmra.mxu0 %v2531
    %v2581 = vpop.f32.mrf.mxu0
    %v2582 = vadd.f32 0.0, %v2581
    %v2583 = vpop.f32.mrf.mxu0
    %v2584 = vpop.f32.mrf.mxu0
    %v2585 = vadd.f32 0.0, %v2584
    %v2586 = vpop.f32.mrf.mxu0
    %2587 = vmatprep.mubr.bf16.mxu0 0
    %2588 = vmatmul.mubr.bf16.gmra.mxu0 %v2534
    %v2589 = vpop.f32.mrf.mxu0
    %v2590 = vadd.f32 0.0, %v2589
    %v2591 = vpop.f32.mrf.mxu0
    %v2592 = vpop.f32.mrf.mxu0
    %v2593 = vadd.f32 0.0, %v2592
    %v2594 = vpop.f32.mrf.mxu0
    %2595 = vmatprep.mubr.bf16.mxu0 0
    %2596 = vmatmul.mubr.bf16.gmra.mxu0 %v2537
    %v2597 = vpop.f32.mrf.mxu0
    %v2598 = vadd.f32 0.0, %v2597
    %v2599 = vpop.f32.mrf.mxu0
    %v2600 = vpop.f32.mrf.mxu0
    %v2601 = vadd.f32 0.0, %v2600
    %v2602 = vpop.f32.mrf.mxu0
    %2603 = vdwg.mxu0
    %v2608 = vunpack.c.l.b16 %v2506
    %v2609 = vunpack.c.l.b16 %v2507
    %v2610 = vunpack.c.l.b16 %v2508
    %v2611 = vunpack.c.l.b16 %v2509
    %v2612 = vpack.c.b16 %v2609, %v2608
    %v2613 = vpack.c.b16 %v2611, %v2610
    %v2617 = vsel %vm458, %v2494, 0
    %v2620 = vsel %vm458, %v2495, 0
    %v2623 = vsel %vm458, %v2496, 0
    %v2626 = vsel %vm458, %v2497, 0
    %2628 = vmatprep.subr.bf16.mxu0 0
    %2629 = vmatpush1.bf16.msra.mxu0 0
    %2630 = vmatprep.subr.bf16.mxu0 0
    %2631 = vmatpush1.bf16.msra.mxu0 0
    %2632 = vmatprep.subr.bf16.mxu0 0
    %2633 = vmatpush1.bf16.msra.mxu0 0
    %2634 = vmatprep.subr.bf16.mxu0 0
    %2635 = vmatpush1.bf16.msra.mxu0 0
    %2636 = vmatprep.subr.bf16.mxu0 0
    %2637 = vmatpush1.bf16.msra.mxu0 0
    %2638 = vmatprep.subr.bf16.mxu0 0
    %2639 = vmatpush1.bf16.msra.mxu0 0
    %2640 = vmatprep.subr.bf16.mxu0 0
    %2641 = vmatpush1.bf16.msra.mxu0 %v2613
    %2642 = vmatprep.subr.bf16.mxu0 0
    %2643 = vmatpush1.bf16.msra.mxu0 %v2612
    %2644 = vmatprep.subr.bf16.mxu0 0
    %2645 = vmatpush2.bf16.msra.mxu0 0
    %2646 = vmatprep.subr.bf16.mxu0 0
    %2647 = vmatpush2.bf16.msra.mxu0 0
    %2648 = vmatprep.subr.bf16.mxu0 0
    %2649 = vmatpush2.bf16.msra.mxu0 0
    %2650 = vmatprep.subr.bf16.mxu0 0
    %2651 = vmatpush2.bf16.msra.mxu0 0
    %2652 = vmatprep.subr.bf16.mxu0 0
    %2653 = vmatpush2.bf16.msra.mxu0 0
    %2654 = vmatprep.subr.bf16.mxu0 0
    %2655 = vmatpush2.bf16.msra.mxu0 0
    %2656 = vmatprep.subr.bf16.mxu0 0
    %2657 = vmatpush2.bf16.msra.mxu0 0
    %2658 = vmatprep.subr.bf16.mxu0 0
    %2659 = vmatpush2.bf16.msra.mxu0 0
    %2660 = vmatprep.mubr.bf16.mxu0 0
    %2661 = vmatmul.mubr.bf16.gmra.mxu0 %v2617
    %v2662 = vpop.f32.mrf.mxu0
    %v2663 = vadd.f32 %v2574, %v2662
    %v2664 = vpop.f32.mrf.mxu0
    %v2665 = vpop.f32.mrf.mxu0
    %v2666 = vadd.f32 %v2577, %v2665
    %v2667 = vpop.f32.mrf.mxu0
    %2668 = vmatprep.mubr.bf16.mxu0 0
    %2669 = vmatmul.mubr.bf16.gmra.mxu0 %v2620
    %v2670 = vpop.f32.mrf.mxu0
    %v2671 = vadd.f32 %v2582, %v2670
    %v2672 = vpop.f32.mrf.mxu0
    %v2673 = vpop.f32.mrf.mxu0
    %v2674 = vadd.f32 %v2585, %v2673
    %v2675 = vpop.f32.mrf.mxu0
    %2676 = vmatprep.mubr.bf16.mxu0 0
    %2677 = vmatmul.mubr.bf16.gmra.mxu0 %v2623
    %v2678 = vpop.f32.mrf.mxu0
    %v2679 = vadd.f32 %v2590, %v2678
    %v2680 = vpop.f32.mrf.mxu0
    %v2681 = vpop.f32.mrf.mxu0
    %v2682 = vadd.f32 %v2593, %v2681
    %v2683 = vpop.f32.mrf.mxu0
    %2684 = vmatprep.mubr.bf16.mxu0 0
    %2685 = vmatmul.mubr.bf16.gmra.mxu0 %v2626
    %v2686 = vpop.f32.mrf.mxu0
    %v2687 = vadd.f32 %v2598, %v2686
    %v2688 = vpop.f32.mrf.mxu0
    %v2689 = vpop.f32.mrf.mxu0
    %v2690 = vadd.f32 %v2601, %v2689
    %v2691 = vpop.f32.mrf.mxu0
    %2692 = vdwg.mxu0
    %s2693 = scalar_lea.vmem %s47, 96
    %v2694 = vld [vmem:[%s2693] sm:$0xf]
    %v2695 = vld [vmem:[%s2693 + $0x4] sm:$0xf]
    %v2696 = vld [vmem:[%s2693 + $0x8] sm:$0xf]
    %v2697 = vld [vmem:[%s2693 + $0xc] sm:$0xf]
    %v2702 = vunpack.c.l.b16 %v2694
    %v2703 = vunpack.c.l.b16 %v2695
    %v2704 = vunpack.c.l.b16 %v2696
    %v2705 = vunpack.c.l.b16 %v2697
    %v2706 = vpack.c.b16 %v2703, %v2702
    %v2707 = vpack.c.b16 %v2705, %v2704
    %v2711 = vsel %vm458, %v2502, 0
    %v2714 = vsel %vm458, %v2503, 0
    %v2717 = vsel %vm458, %v2504, 0
    %v2720 = vsel %vm458, %v2505, 0
    %2722 = vmatprep.subr.bf16.mxu0 0
    %2723 = vmatpush1.bf16.msra.mxu0 0
    %2724 = vmatprep.subr.bf16.mxu0 0
    %2725 = vmatpush1.bf16.msra.mxu0 0
    %2726 = vmatprep.subr.bf16.mxu0 0
    %2727 = vmatpush1.bf16.msra.mxu0 0
    %2728 = vmatprep.subr.bf16.mxu0 0
    %2729 = vmatpush1.bf16.msra.mxu0 0
    %2730 = vmatprep.subr.bf16.mxu0 0
    %2731 = vmatpush1.bf16.msra.mxu0 0
    %2732 = vmatprep.subr.bf16.mxu0 0
    %2733 = vmatpush1.bf16.msra.mxu0 0
    %2734 = vmatprep.subr.bf16.mxu0 0
    %2735 = vmatpush1.bf16.msra.mxu0 %v2707
    %2736 = vmatprep.subr.bf16.mxu0 0
    %2737 = vmatpush1.bf16.msra.mxu0 %v2706
    %2738 = vmatprep.subr.bf16.mxu0 0
    %2739 = vmatpush2.bf16.msra.mxu0 0
    %2740 = vmatprep.subr.bf16.mxu0 0
    %2741 = vmatpush2.bf16.msra.mxu0 0
    %2742 = vmatprep.subr.bf16.mxu0 0
    %2743 = vmatpush2.bf16.msra.mxu0 0
    %2744 = vmatprep.subr.bf16.mxu0 0
    %2745 = vmatpush2.bf16.msra.mxu0 0
    %2746 = vmatprep.subr.bf16.mxu0 0
    %2747 = vmatpush2.bf16.msra.mxu0 0
    %2748 = vmatprep.subr.bf16.mxu0 0
    %2749 = vmatpush2.bf16.msra.mxu0 0
    %2750 = vmatprep.subr.bf16.mxu0 0
    %2751 = vmatpush2.bf16.msra.mxu0 0
    %2752 = vmatprep.subr.bf16.mxu0 0
    %2753 = vmatpush2.bf16.msra.mxu0 0
    %2754 = vmatprep.mubr.bf16.mxu0 0
    %2755 = vmatmul.mubr.bf16.gmra.mxu0 %v2711
    %v2756 = vpop.f32.mrf.mxu0
    %v2757 = vadd.f32 0.0, %v2756
    %v2758 = vpop.f32.mrf.mxu0
    %v2759 = vpop.f32.mrf.mxu0
    %v2760 = vadd.f32 0.0, %v2759
    %v2761 = vpop.f32.mrf.mxu0
    %2762 = vmatprep.mubr.bf16.mxu0 0
    %2763 = vmatmul.mubr.bf16.gmra.mxu0 %v2714
    %v2764 = vpop.f32.mrf.mxu0
    %v2765 = vadd.f32 0.0, %v2764
    %v2766 = vpop.f32.mrf.mxu0
    %v2767 = vpop.f32.mrf.mxu0
    %v2768 = vadd.f32 0.0, %v2767
    %v2769 = vpop.f32.mrf.mxu0
    %2770 = vmatprep.mubr.bf16.mxu0 0
    %2771 = vmatmul.mubr.bf16.gmra.mxu0 %v2717
    %v2772 = vpop.f32.mrf.mxu0
    %v2773 = vadd.f32 0.0, %v2772
    %v2774 = vpop.f32.mrf.mxu0
    %v2775 = vpop.f32.mrf.mxu0
    %v2776 = vadd.f32 0.0, %v2775
    %v2777 = vpop.f32.mrf.mxu0
    %2778 = vmatprep.mubr.bf16.mxu0 0
    %2779 = vmatmul.mubr.bf16.gmra.mxu0 %v2720
    %v2780 = vpop.f32.mrf.mxu0
    %v2781 = vadd.f32 0.0, %v2780
    %v2782 = vpop.f32.mrf.mxu0
    %v2783 = vpop.f32.mrf.mxu0
    %v2784 = vadd.f32 0.0, %v2783
    %v2785 = vpop.f32.mrf.mxu0
    %2786 = vdwg.mxu0
    %v2787 = vadd.f32 %v2663, %v2757
    %v2788 = vadd.f32 %v2666, %v2760
    %v2789 = vadd.f32 %v2671, %v2765
    %v2790 = vadd.f32 %v2674, %v2768
    %v2791 = vadd.f32 %v2679, %v2773
    %v2792 = vadd.f32 %v2682, %v2776
    %v2793 = vadd.f32 %v2687, %v2781
    %v2794 = vadd.f32 %v2690, %v2784
    %v2795 = vld [vmem:[%s51] sm:$0x1]
    %v2797 = vlaneseq
    %v2798 = vshrl.u32 %v2797, 7
    %v2799 = vsub.s32 0, %v2798
    %v2800 = vrot.slane %v2795, %v2799
    %v2802 = vadd.f32 %v2787, %v2800
    %v2803 = vadd.f32 %v2788, %v2800
    %v2804 = vadd.f32 %v2789, %v2800
    %v2805 = vadd.f32 %v2790, %v2800
    %v2806 = vadd.f32 %v2791, %v2800
    %v2807 = vadd.f32 %v2792, %v2800
    %v2808 = vadd.f32 %v2793, %v2800
    %v2809 = vadd.f32 %v2794, %v2800
    %2810 = vst.msk [vmem:[#allocation2] sm:$0xff] %vm458, %v2802
    %2811 = vst.msk [vmem:[#allocation2 + $0x8] sm:$0xff] %vm458, %v2803
    %2812 = vst.msk [vmem:[#allocation2 + $0x10] sm:$0xff] %vm458, %v2804
    %2813 = vst.msk [vmem:[#allocation2 + $0x18] sm:$0xff] %vm458, %v2805
    %2814 = vst.msk [vmem:[#allocation2 + $0x20] sm:$0xff] %vm458, %v2806
    %2815 = vst.msk [vmem:[#allocation2 + $0x28] sm:$0xff] %vm458, %v2807
    %2816 = vst.msk [vmem:[#allocation2 + $0x30] sm:$0xff] %vm458, %v2808
    %2817 = vst.msk [vmem:[#allocation2 + $0x38] sm:$0xff] %vm458, %v2809
    %s2818 = scalar_lea.vmem %s47, 16
    %v2819 = vld [vmem:[%s2818] sm:$0xf]
    %v2820 = vld [vmem:[%s2818 + $0x4] sm:$0xf]
    %v2821 = vld [vmem:[%s2818 + $0x8] sm:$0xf]
    %v2822 = vld [vmem:[%s2818 + $0xc] sm:$0xf]
    %s2823 = scalar_lea.vmem %s47, 64
    %v2824 = vld [vmem:[%s2823] sm:$0xf]
    %v2825 = vld [vmem:[%s2823 + $0x4] sm:$0xf]
    %v2826 = vld [vmem:[%s2823 + $0x8] sm:$0xf]
    %v2827 = vld [vmem:[%s2823 + $0xc] sm:$0xf]
    %v2832 = vunpack.c.l.b16 %v2824
    %v2833 = vunpack.c.l.b16 %v2825
    %v2834 = vunpack.c.l.b16 %v2826
    %v2835 = vunpack.c.l.b16 %v2827
    %v2836 = vpack.c.b16 %v2833, %v2832
    %v2837 = vpack.c.b16 %v2835, %v2834
    %2840 = vmatprep.subr.bf16.mxu0 0
    %2841 = vmatpush1.bf16.msra.mxu0 0
    %2842 = vmatprep.subr.bf16.mxu0 0
    %2843 = vmatpush1.bf16.msra.mxu0 0
    %2844 = vmatprep.subr.bf16.mxu0 0
    %2845 = vmatpush1.bf16.msra.mxu0 0
    %2846 = vmatprep.subr.bf16.mxu0 0
    %2847 = vmatpush1.bf16.msra.mxu0 0
    %2848 = vmatprep.subr.bf16.mxu0 0
    %2849 = vmatpush1.bf16.msra.mxu0 0
    %2850 = vmatprep.subr.bf16.mxu0 0
    %2851 = vmatpush1.bf16.msra.mxu0 0
    %2852 = vmatprep.subr.bf16.mxu0 0
    %2853 = vmatpush1.bf16.msra.mxu0 %v2837
    %2854 = vmatprep.subr.bf16.mxu0 0
    %2855 = vmatpush1.bf16.msra.mxu0 %v2836
    %2856 = vmatprep.subr.bf16.mxu0 0
    %2857 = vmatpush2.bf16.msra.mxu0 0
    %2858 = vmatprep.subr.bf16.mxu0 0
    %2859 = vmatpush2.bf16.msra.mxu0 0
    %2860 = vmatprep.subr.bf16.mxu0 0
    %2861 = vmatpush2.bf16.msra.mxu0 0
    %2862 = vmatprep.subr.bf16.mxu0 0
    %2863 = vmatpush2.bf16.msra.mxu0 0
    %2864 = vmatprep.subr.bf16.mxu0 0
    %2865 = vmatpush2.bf16.msra.mxu0 0
    %2866 = vmatprep.subr.bf16.mxu0 0
    %2867 = vmatpush2.bf16.msra.mxu0 0
    %2868 = vmatprep.subr.bf16.mxu0 0
    %2869 = vmatpush2.bf16.msra.mxu0 0
    %2870 = vmatprep.subr.bf16.mxu0 0
    %2871 = vmatpush2.bf16.msra.mxu0 0
    %2872 = vmatprep.mubr.bf16.mxu0 0
    %2873 = vmatmul.mubr.bf16.gmra.mxu0 %v2528
    %v2874 = vpop.f32.mrf.mxu0
    %v2875 = vadd.f32 0.0, %v2874
    %v2876 = vpop.f32.mrf.mxu0
    %v2877 = vpop.f32.mrf.mxu0
    %v2878 = vadd.f32 0.0, %v2877
    %v2879 = vpop.f32.mrf.mxu0
    %2880 = vmatprep.mubr.bf16.mxu0 0
    %2881 = vmatmul.mubr.bf16.gmra.mxu0 %v2531
    %v2882 = vpop.f32.mrf.mxu0
    %v2883 = vadd.f32 0.0, %v2882
    %v2884 = vpop.f32.mrf.mxu0
    %v2885 = vpop.f32.mrf.mxu0
    %v2886 = vadd.f32 0.0, %v2885
    %v2887 = vpop.f32.mrf.mxu0
    %2888 = vmatprep.mubr.bf16.mxu0 0
    %2889 = vmatmul.mubr.bf16.gmra.mxu0 %v2534
    %v2890 = vpop.f32.mrf.mxu0
    %v2891 = vadd.f32 0.0, %v2890
    %v2892 = vpop.f32.mrf.mxu0
    %v2893 = vpop.f32.mrf.mxu0
    %v2894 = vadd.f32 0.0, %v2893
    %v2895 = vpop.f32.mrf.mxu0
    %2896 = vmatprep.mubr.bf16.mxu0 0
    %2897 = vmatmul.mubr.bf16.gmra.mxu0 %v2537
    %v2898 = vpop.f32.mrf.mxu0
    %v2899 = vadd.f32 0.0, %v2898
    %v2900 = vpop.f32.mrf.mxu0
    %v2901 = vpop.f32.mrf.mxu0
    %v2902 = vadd.f32 0.0, %v2901
    %v2903 = vpop.f32.mrf.mxu0
    %2904 = vdwg.mxu0
    %v2909 = vunpack.c.l.b16 %v2819
    %v2910 = vunpack.c.l.b16 %v2820
    %v2911 = vunpack.c.l.b16 %v2821
    %v2912 = vunpack.c.l.b16 %v2822
    %v2913 = vpack.c.b16 %v2910, %v2909
    %v2914 = vpack.c.b16 %v2912, %v2911
    %2917 = vmatprep.subr.bf16.mxu0 0
    %2918 = vmatpush1.bf16.msra.mxu0 0
    %2919 = vmatprep.subr.bf16.mxu0 0
    %2920 = vmatpush1.bf16.msra.mxu0 0
    %2921 = vmatprep.subr.bf16.mxu0 0
    %2922 = vmatpush1.bf16.msra.mxu0 0
    %2923 = vmatprep.subr.bf16.mxu0 0
    %2924 = vmatpush1.bf16.msra.mxu0 0
    %2925 = vmatprep.subr.bf16.mxu0 0
    %2926 = vmatpush1.bf16.msra.mxu0 0
    %2927 = vmatprep.subr.bf16.mxu0 0
    %2928 = vmatpush1.bf16.msra.mxu0 0
    %2929 = vmatprep.subr.bf16.mxu0 0
    %2930 = vmatpush1.bf16.msra.mxu0 %v2914
    %2931 = vmatprep.subr.bf16.mxu0 0
    %2932 = vmatpush1.bf16.msra.mxu0 %v2913
    %2933 = vmatprep.subr.bf16.mxu0 0
    %2934 = vmatpush2.bf16.msra.mxu0 0
    %2935 = vmatprep.subr.bf16.mxu0 0
    %2936 = vmatpush2.bf16.msra.mxu0 0
    %2937 = vmatprep.subr.bf16.mxu0 0
    %2938 = vmatpush2.bf16.msra.mxu0 0
    %2939 = vmatprep.subr.bf16.mxu0 0
    %2940 = vmatpush2.bf16.msra.mxu0 0
    %2941 = vmatprep.subr.bf16.mxu0 0
    %2942 = vmatpush2.bf16.msra.mxu0 0
    %2943 = vmatprep.subr.bf16.mxu0 0
    %2944 = vmatpush2.bf16.msra.mxu0 0
    %2945 = vmatprep.subr.bf16.mxu0 0
    %2946 = vmatpush2.bf16.msra.mxu0 0
    %2947 = vmatprep.subr.bf16.mxu0 0
    %2948 = vmatpush2.bf16.msra.mxu0 0
    %2949 = vmatprep.mubr.bf16.mxu0 0
    %2950 = vmatmul.mubr.bf16.gmra.mxu0 %v2617
    %v2951 = vpop.f32.mrf.mxu0
    %v2952 = vadd.f32 %v2875, %v2951
    %v2953 = vpop.f32.mrf.mxu0
    %v2954 = vpop.f32.mrf.mxu0
    %v2955 = vadd.f32 %v2878, %v2954
    %v2956 = vpop.f32.mrf.mxu0
    %2957 = vmatprep.mubr.bf16.mxu0 0
    %2958 = vmatmul.mubr.bf16.gmra.mxu0 %v2620
    %v2959 = vpop.f32.mrf.mxu0
    %v2960 = vadd.f32 %v2883, %v2959
    %v2961 = vpop.f32.mrf.mxu0
    %v2962 = vpop.f32.mrf.mxu0
    %v2963 = vadd.f32 %v2886, %v2962
    %v2964 = vpop.f32.mrf.mxu0
    %2965 = vmatprep.mubr.bf16.mxu0 0
    %2966 = vmatmul.mubr.bf16.gmra.mxu0 %v2623
    %v2967 = vpop.f32.mrf.mxu0
    %v2968 = vadd.f32 %v2891, %v2967
    %v2969 = vpop.f32.mrf.mxu0
    %v2970 = vpop.f32.mrf.mxu0
    %v2971 = vadd.f32 %v2894, %v2970
    %v2972 = vpop.f32.mrf.mxu0
    %2973 = vmatprep.mubr.bf16.mxu0 0
    %2974 = vmatmul.mubr.bf16.gmra.mxu0 %v2626
    %v2975 = vpop.f32.mrf.mxu0
    %v2976 = vadd.f32 %v2899, %v2975
    %v2977 = vpop.f32.mrf.mxu0
    %v2978 = vpop.f32.mrf.mxu0
    %v2979 = vadd.f32 %v2902, %v2978
    %v2980 = vpop.f32.mrf.mxu0
    %2981 = vdwg.mxu0
    %s2982 = scalar_lea.vmem %s47, 112
    %v2983 = vld [vmem:[%s2982] sm:$0xf]
    %v2984 = vld [vmem:[%s2982 + $0x4] sm:$0xf]
    %v2985 = vld [vmem:[%s2982 + $0x8] sm:$0xf]
    %v2986 = vld [vmem:[%s2982 + $0xc] sm:$0xf]
    %v2991 = vunpack.c.l.b16 %v2983
    %v2992 = vunpack.c.l.b16 %v2984
    %v2993 = vunpack.c.l.b16 %v2985
    %v2994 = vunpack.c.l.b16 %v2986
    %v2995 = vpack.c.b16 %v2992, %v2991
    %v2996 = vpack.c.b16 %v2994, %v2993
    %2999 = vmatprep.subr.bf16.mxu0 0
    %3000 = vmatpush1.bf16.msra.mxu0 0
    %3001 = vmatprep.subr.bf16.mxu0 0
    %3002 = vmatpush1.bf16.msra.mxu0 0
    %3003 = vmatprep.subr.bf16.mxu0 0
    %3004 = vmatpush1.bf16.msra.mxu0 0
    %3005 = vmatprep.subr.bf16.mxu0 0
    %3006 = vmatpush1.bf16.msra.mxu0 0
    %3007 = vmatprep.subr.bf16.mxu0 0
    %3008 = vmatpush1.bf16.msra.mxu0 0
    %3009 = vmatprep.subr.bf16.mxu0 0
    %3010 = vmatpush1.bf16.msra.mxu0 0
    %3011 = vmatprep.subr.bf16.mxu0 0
    %3012 = vmatpush1.bf16.msra.mxu0 %v2996
    %3013 = vmatprep.subr.bf16.mxu0 0
    %3014 = vmatpush1.bf16.msra.mxu0 %v2995
    %3015 = vmatprep.subr.bf16.mxu0 0
    %3016 = vmatpush2.bf16.msra.mxu0 0
    %3017 = vmatprep.subr.bf16.mxu0 0
    %3018 = vmatpush2.bf16.msra.mxu0 0
    %3019 = vmatprep.subr.bf16.mxu0 0
    %3020 = vmatpush2.bf16.msra.mxu0 0
    %3021 = vmatprep.subr.bf16.mxu0 0
    %3022 = vmatpush2.bf16.msra.mxu0 0
    %3023 = vmatprep.subr.bf16.mxu0 0
    %3024 = vmatpush2.bf16.msra.mxu0 0
    %3025 = vmatprep.subr.bf16.mxu0 0
    %3026 = vmatpush2.bf16.msra.mxu0 0
    %3027 = vmatprep.subr.bf16.mxu0 0
    %3028 = vmatpush2.bf16.msra.mxu0 0
    %3029 = vmatprep.subr.bf16.mxu0 0
    %3030 = vmatpush2.bf16.msra.mxu0 0
    %3031 = vmatprep.mubr.bf16.mxu0 0
    %3032 = vmatmul.mubr.bf16.gmra.mxu0 %v2711
    %v3033 = vpop.f32.mrf.mxu0
    %v3034 = vadd.f32 0.0, %v3033
    %v3035 = vpop.f32.mrf.mxu0
    %v3036 = vpop.f32.mrf.mxu0
    %v3037 = vadd.f32 0.0, %v3036
    %v3038 = vpop.f32.mrf.mxu0
    %3039 = vmatprep.mubr.bf16.mxu0 0
    %3040 = vmatmul.mubr.bf16.gmra.mxu0 %v2714
    %v3041 = vpop.f32.mrf.mxu0
    %v3042 = vadd.f32 0.0, %v3041
    %v3043 = vpop.f32.mrf.mxu0
    %v3044 = vpop.f32.mrf.mxu0
    %v3045 = vadd.f32 0.0, %v3044
    %v3046 = vpop.f32.mrf.mxu0
    %3047 = vmatprep.mubr.bf16.mxu0 0
    %3048 = vmatmul.mubr.bf16.gmra.mxu0 %v2717
    %v3049 = vpop.f32.mrf.mxu0
    %v3050 = vadd.f32 0.0, %v3049
    %v3051 = vpop.f32.mrf.mxu0
    %v3052 = vpop.f32.mrf.mxu0
    %v3053 = vadd.f32 0.0, %v3052
    %v3054 = vpop.f32.mrf.mxu0
    %3055 = vmatprep.mubr.bf16.mxu0 0
    %3056 = vmatmul.mubr.bf16.gmra.mxu0 %v2720
    %v3057 = vpop.f32.mrf.mxu0
    %v3058 = vadd.f32 0.0, %v3057
    %v3059 = vpop.f32.mrf.mxu0
    %v3060 = vpop.f32.mrf.mxu0
    %v3061 = vadd.f32 0.0, %v3060
    %v3062 = vpop.f32.mrf.mxu0
    %3063 = vdwg.mxu0
    %v3064 = vadd.f32 %v2952, %v3034
    %v3065 = vadd.f32 %v2955, %v3037
    %v3066 = vadd.f32 %v2960, %v3042
    %v3067 = vadd.f32 %v2963, %v3045
    %v3068 = vadd.f32 %v2968, %v3050
    %v3069 = vadd.f32 %v2971, %v3053
    %v3070 = vadd.f32 %v2976, %v3058
    %v3071 = vadd.f32 %v2979, %v3061
    %s3072 = scalar_lea.vmem %s51, 1
    %v3073 = vld [vmem:[%s3072] sm:$0x1]
    %v3075 = vlaneseq
    %v3076 = vshrl.u32 %v3075, 7
    %v3077 = vsub.s32 0, %v3076
    %v3078 = vrot.slane %v3073, %v3077
    %v3080 = vadd.f32 %v3064, %v3078
    %v3081 = vadd.f32 %v3065, %v3078
    %v3082 = vadd.f32 %v3066, %v3078
    %v3083 = vadd.f32 %v3067, %v3078
    %v3084 = vadd.f32 %v3068, %v3078
    %v3085 = vadd.f32 %v3069, %v3078
    %v3086 = vadd.f32 %v3070, %v3078
    %v3087 = vadd.f32 %v3071, %v3078
    %s3088 = scalar_lea.vmem [#allocation2], 64
    %3089 = vst.msk [vmem:[%s3088] sm:$0xff] %vm458, %v3080
    %3090 = vst.msk [vmem:[%s3088 + $0x8] sm:$0xff] %vm458, %v3081
    %3091 = vst.msk [vmem:[%s3088 + $0x10] sm:$0xff] %vm458, %v3082
    %3092 = vst.msk [vmem:[%s3088 + $0x18] sm:$0xff] %vm458, %v3083
    %3093 = vst.msk [vmem:[%s3088 + $0x20] sm:$0xff] %vm458, %v3084
    %3094 = vst.msk [vmem:[%s3088 + $0x28] sm:$0xff] %vm458, %v3085
    %3095 = vst.msk [vmem:[%s3088 + $0x30] sm:$0xff] %vm458, %v3086
    %3096 = vst.msk [vmem:[%s3088 + $0x38] sm:$0xff] %vm458, %v3087
    %s3097 = scalar_lea.vmem %s47, 32
    %v3098 = vld [vmem:[%s3097] sm:$0xf]
    %v3099 = vld [vmem:[%s3097 + $0x4] sm:$0xf]
    %v3100 = vld [vmem:[%s3097 + $0x8] sm:$0xf]
    %v3101 = vld [vmem:[%s3097 + $0xc] sm:$0xf]
    %s3102 = scalar_lea.vmem %s47, 80
    %v3103 = vld [vmem:[%s3102] sm:$0xf]
    %v3104 = vld [vmem:[%s3102 + $0x4] sm:$0xf]
    %v3105 = vld [vmem:[%s3102 + $0x8] sm:$0xf]
    %v3106 = vld [vmem:[%s3102 + $0xc] sm:$0xf]
    %v3111 = vunpack.c.l.b16 %v3103
    %v3112 = vunpack.c.l.b16 %v3104
    %v3113 = vunpack.c.l.b16 %v3105
    %v3114 = vunpack.c.l.b16 %v3106
    %v3115 = vpack.c.b16 %v3112, %v3111
    %v3116 = vpack.c.b16 %v3114, %v3113
    %3119 = vmatprep.subr.bf16.mxu0 0
    %3120 = vmatpush1.bf16.msra.mxu0 0
    %3121 = vmatprep.subr.bf16.mxu0 0
    %3122 = vmatpush1.bf16.msra.mxu0 0
    %3123 = vmatprep.subr.bf16.mxu0 0
    %3124 = vmatpush1.bf16.msra.mxu0 0
    %3125 = vmatprep.subr.bf16.mxu0 0
    %3126 = vmatpush1.bf16.msra.mxu0 0
    %3127 = vmatprep.subr.bf16.mxu0 0
    %3128 = vmatpush1.bf16.msra.mxu0 0
    %3129 = vmatprep.subr.bf16.mxu0 0
    %3130 = vmatpush1.bf16.msra.mxu0 0
    %3131 = vmatprep.subr.bf16.mxu0 0
    %3132 = vmatpush1.bf16.msra.mxu0 %v3116
    %3133 = vmatprep.subr.bf16.mxu0 0
    %3134 = vmatpush1.bf16.msra.mxu0 %v3115
    %3135 = vmatprep.subr.bf16.mxu0 0
    %3136 = vmatpush2.bf16.msra.mxu0 0
    %3137 = vmatprep.subr.bf16.mxu0 0
    %3138 = vmatpush2.bf16.msra.mxu0 0
    %3139 = vmatprep.subr.bf16.mxu0 0
    %3140 = vmatpush2.bf16.msra.mxu0 0
    %3141 = vmatprep.subr.bf16.mxu0 0
    %3142 = vmatpush2.bf16.msra.mxu0 0
    %3143 = vmatprep.subr.bf16.mxu0 0
    %3144 = vmatpush2.bf16.msra.mxu0 0
    %3145 = vmatprep.subr.bf16.mxu0 0
    %3146 = vmatpush2.bf16.msra.mxu0 0
    %3147 = vmatprep.subr.bf16.mxu0 0
    %3148 = vmatpush2.bf16.msra.mxu0 0
    %3149 = vmatprep.subr.bf16.mxu0 0
    %3150 = vmatpush2.bf16.msra.mxu0 0
    %3151 = vmatprep.mubr.bf16.mxu0 0
    %3152 = vmatmul.mubr.bf16.gmra.mxu0 %v2528
    %v3153 = vpop.f32.mrf.mxu0
    %v3154 = vadd.f32 0.0, %v3153
    %v3155 = vpop.f32.mrf.mxu0
    %v3156 = vpop.f32.mrf.mxu0
    %v3157 = vadd.f32 0.0, %v3156
    %v3158 = vpop.f32.mrf.mxu0
    %3159 = vmatprep.mubr.bf16.mxu0 0
    %3160 = vmatmul.mubr.bf16.gmra.mxu0 %v2531
    %v3161 = vpop.f32.mrf.mxu0
    %v3162 = vadd.f32 0.0, %v3161
    %v3163 = vpop.f32.mrf.mxu0
    %v3164 = vpop.f32.mrf.mxu0
    %v3165 = vadd.f32 0.0, %v3164
    %v3166 = vpop.f32.mrf.mxu0
    %3167 = vmatprep.mubr.bf16.mxu0 0
    %3168 = vmatmul.mubr.bf16.gmra.mxu0 %v2534
    %v3169 = vpop.f32.mrf.mxu0
    %v3170 = vadd.f32 0.0, %v3169
    %v3171 = vpop.f32.mrf.mxu0
    %v3172 = vpop.f32.mrf.mxu0
    %v3173 = vadd.f32 0.0, %v3172
    %v3174 = vpop.f32.mrf.mxu0
    %3175 = vmatprep.mubr.bf16.mxu0 0
    %3176 = vmatmul.mubr.bf16.gmra.mxu0 %v2537
    %v3177 = vpop.f32.mrf.mxu0
    %v3178 = vadd.f32 0.0, %v3177
    %v3179 = vpop.f32.mrf.mxu0
    %v3180 = vpop.f32.mrf.mxu0
    %v3181 = vadd.f32 0.0, %v3180
    %v3182 = vpop.f32.mrf.mxu0
    %3183 = vdwg.mxu0
    %v3188 = vunpack.c.l.b16 %v3098
    %v3189 = vunpack.c.l.b16 %v3099
    %v3190 = vunpack.c.l.b16 %v3100
    %v3191 = vunpack.c.l.b16 %v3101
    %v3192 = vpack.c.b16 %v3189, %v3188
    %v3193 = vpack.c.b16 %v3191, %v3190
    %3196 = vmatprep.subr.bf16.mxu0 0
    %3197 = vmatpush1.bf16.msra.mxu0 0
    %3198 = vmatprep.subr.bf16.mxu0 0
    %3199 = vmatpush1.bf16.msra.mxu0 0
    %3200 = vmatprep.subr.bf16.mxu0 0
    %3201 = vmatpush1.bf16.msra.mxu0 0
    %3202 = vmatprep.subr.bf16.mxu0 0
    %3203 = vmatpush1.bf16.msra.mxu0 0
    %3204 = vmatprep.subr.bf16.mxu0 0
    %3205 = vmatpush1.bf16.msra.mxu0 0
    %3206 = vmatprep.subr.bf16.mxu0 0
    %3207 = vmatpush1.bf16.msra.mxu0 0
    %3208 = vmatprep.subr.bf16.mxu0 0
    %3209 = vmatpush1.bf16.msra.mxu0 %v3193
    %3210 = vmatprep.subr.bf16.mxu0 0
    %3211 = vmatpush1.bf16.msra.mxu0 %v3192
    %3212 = vmatprep.subr.bf16.mxu0 0
    %3213 = vmatpush2.bf16.msra.mxu0 0
    %3214 = vmatprep.subr.bf16.mxu0 0
    %3215 = vmatpush2.bf16.msra.mxu0 0
    %3216 = vmatprep.subr.bf16.mxu0 0
    %3217 = vmatpush2.bf16.msra.mxu0 0
    %3218 = vmatprep.subr.bf16.mxu0 0
    %3219 = vmatpush2.bf16.msra.mxu0 0
    %3220 = vmatprep.subr.bf16.mxu0 0
    %3221 = vmatpush2.bf16.msra.mxu0 0
    %3222 = vmatprep.subr.bf16.mxu0 0
    %3223 = vmatpush2.bf16.msra.mxu0 0
    %3224 = vmatprep.subr.bf16.mxu0 0
    %3225 = vmatpush2.bf16.msra.mxu0 0
    %3226 = vmatprep.subr.bf16.mxu0 0
    %3227 = vmatpush2.bf16.msra.mxu0 0
    %3228 = vmatprep.mubr.bf16.mxu0 0
    %3229 = vmatmul.mubr.bf16.gmra.mxu0 %v2617
    %v3230 = vpop.f32.mrf.mxu0
    %v3231 = vadd.f32 %v3154, %v3230
    %v3232 = vpop.f32.mrf.mxu0
    %v3233 = vpop.f32.mrf.mxu0
    %v3234 = vadd.f32 %v3157, %v3233
    %v3235 = vpop.f32.mrf.mxu0
    %3236 = vmatprep.mubr.bf16.mxu0 0
    %3237 = vmatmul.mubr.bf16.gmra.mxu0 %v2620
    %v3238 = vpop.f32.mrf.mxu0
    %v3239 = vadd.f32 %v3162, %v3238
    %v3240 = vpop.f32.mrf.mxu0
    %v3241 = vpop.f32.mrf.mxu0
    %v3242 = vadd.f32 %v3165, %v3241
    %v3243 = vpop.f32.mrf.mxu0
    %3244 = vmatprep.mubr.bf16.mxu0 0
    %3245 = vmatmul.mubr.bf16.gmra.mxu0 %v2623
    %v3246 = vpop.f32.mrf.mxu0
    %v3247 = vadd.f32 %v3170, %v3246
    %v3248 = vpop.f32.mrf.mxu0
    %v3249 = vpop.f32.mrf.mxu0
    %v3250 = vadd.f32 %v3173, %v3249
    %v3251 = vpop.f32.mrf.mxu0
    %3252 = vmatprep.mubr.bf16.mxu0 0
    %3253 = vmatmul.mubr.bf16.gmra.mxu0 %v2626
    %v3254 = vpop.f32.mrf.mxu0
    %v3255 = vadd.f32 %v3178, %v3254
    %v3256 = vpop.f32.mrf.mxu0
    %v3257 = vpop.f32.mrf.mxu0
    %v3258 = vadd.f32 %v3181, %v3257
    %v3259 = vpop.f32.mrf.mxu0
    %3260 = vdwg.mxu0
    %s3261 = scalar_lea.vmem %s47, 128
    %v3262 = vld [vmem:[%s3261] sm:$0xf]
    %v3263 = vld [vmem:[%s3261 + $0x4] sm:$0xf]
    %v3264 = vld [vmem:[%s3261 + $0x8] sm:$0xf]
    %v3265 = vld [vmem:[%s3261 + $0xc] sm:$0xf]
    %v3270 = vunpack.c.l.b16 %v3262
    %v3271 = vunpack.c.l.b16 %v3263
    %v3272 = vunpack.c.l.b16 %v3264
    %v3273 = vunpack.c.l.b16 %v3265
    %v3274 = vpack.c.b16 %v3271, %v3270
    %v3275 = vpack.c.b16 %v3273, %v3272
    %3278 = vmatprep.subr.bf16.mxu0 0
    %3279 = vmatpush1.bf16.msra.mxu0 0
    %3280 = vmatprep.subr.bf16.mxu0 0
    %3281 = vmatpush1.bf16.msra.mxu0 0
    %3282 = vmatprep.subr.bf16.mxu0 0
    %3283 = vmatpush1.bf16.msra.mxu0 0
    %3284 = vmatprep.subr.bf16.mxu0 0
    %3285 = vmatpush1.bf16.msra.mxu0 0
    %3286 = vmatprep.subr.bf16.mxu0 0
    %3287 = vmatpush1.bf16.msra.mxu0 0
    %3288 = vmatprep.subr.bf16.mxu0 0
    %3289 = vmatpush1.bf16.msra.mxu0 0
    %3290 = vmatprep.subr.bf16.mxu0 0
    %3291 = vmatpush1.bf16.msra.mxu0 %v3275
    %3292 = vmatprep.subr.bf16.mxu0 0
    %3293 = vmatpush1.bf16.msra.mxu0 %v3274
    %3294 = vmatprep.subr.bf16.mxu0 0
    %3295 = vmatpush2.bf16.msra.mxu0 0
    %3296 = vmatprep.subr.bf16.mxu0 0
    %3297 = vmatpush2.bf16.msra.mxu0 0
    %3298 = vmatprep.subr.bf16.mxu0 0
    %3299 = vmatpush2.bf16.msra.mxu0 0
    %3300 = vmatprep.subr.bf16.mxu0 0
    %3301 = vmatpush2.bf16.msra.mxu0 0
    %3302 = vmatprep.subr.bf16.mxu0 0
    %3303 = vmatpush2.bf16.msra.mxu0 0
    %3304 = vmatprep.subr.bf16.mxu0 0
    %3305 = vmatpush2.bf16.msra.mxu0 0
    %3306 = vmatprep.subr.bf16.mxu0 0
    %3307 = vmatpush2.bf16.msra.mxu0 0
    %3308 = vmatprep.subr.bf16.mxu0 0
    %3309 = vmatpush2.bf16.msra.mxu0 0
    %3310 = vmatprep.mubr.bf16.mxu0 0
    %3311 = vmatmul.mubr.bf16.gmra.mxu0 %v2711
    %v3312 = vpop.f32.mrf.mxu0
    %v3313 = vadd.f32 0.0, %v3312
    %v3314 = vpop.f32.mrf.mxu0
    %v3315 = vpop.f32.mrf.mxu0
    %v3316 = vadd.f32 0.0, %v3315
    %v3317 = vpop.f32.mrf.mxu0
    %3318 = vmatprep.mubr.bf16.mxu0 0
    %3319 = vmatmul.mubr.bf16.gmra.mxu0 %v2714
    %v3320 = vpop.f32.mrf.mxu0
    %v3321 = vadd.f32 0.0, %v3320
    %v3322 = vpop.f32.mrf.mxu0
    %v3323 = vpop.f32.mrf.mxu0
    %v3324 = vadd.f32 0.0, %v3323
    %v3325 = vpop.f32.mrf.mxu0
    %3326 = vmatprep.mubr.bf16.mxu0 0
    %3327 = vmatmul.mubr.bf16.gmra.mxu0 %v2717
    %v3328 = vpop.f32.mrf.mxu0
    %v3329 = vadd.f32 0.0, %v3328
    %v3330 = vpop.f32.mrf.mxu0
    %v3331 = vpop.f32.mrf.mxu0
    %v3332 = vadd.f32 0.0, %v3331
    %v3333 = vpop.f32.mrf.mxu0
    %3334 = vmatprep.mubr.bf16.mxu0 0
    %3335 = vmatmul.mubr.bf16.gmra.mxu0 %v2720
    %v3336 = vpop.f32.mrf.mxu0
    %v3337 = vadd.f32 0.0, %v3336
    %v3338 = vpop.f32.mrf.mxu0
    %v3339 = vpop.f32.mrf.mxu0
    %v3340 = vadd.f32 0.0, %v3339
    %v3341 = vpop.f32.mrf.mxu0
    %3342 = vdwg.mxu0
    %v3343 = vadd.f32 %v3231, %v3313
    %v3344 = vadd.f32 %v3234, %v3316
    %v3345 = vadd.f32 %v3239, %v3321
    %v3346 = vadd.f32 %v3242, %v3324
    %v3347 = vadd.f32 %v3247, %v3329
    %v3348 = vadd.f32 %v3250, %v3332
    %v3349 = vadd.f32 %v3255, %v3337
    %v3350 = vadd.f32 %v3258, %v3340
    %s3351 = scalar_lea.vmem %s51, 2
    %v3352 = vld [vmem:[%s3351] sm:$0x1]
    %v3354 = vlaneseq
    %v3355 = vshrl.u32 %v3354, 7
    %v3356 = vsub.s32 0, %v3355
    %v3357 = vrot.slane %v3352, %v3356
    %v3359 = vadd.f32 %v3343, %v3357
    %v3360 = vadd.f32 %v3344, %v3357
    %v3361 = vadd.f32 %v3345, %v3357
    %v3362 = vadd.f32 %v3346, %v3357
    %v3363 = vadd.f32 %v3347, %v3357
    %v3364 = vadd.f32 %v3348, %v3357
    %v3365 = vadd.f32 %v3349, %v3357
    %v3366 = vadd.f32 %v3350, %v3357
    %s3367 = scalar_lea.vmem [#allocation2], 128
    %3368 = vst.msk [vmem:[%s3367] sm:$0xff] %vm458, %v3359
    %3369 = vst.msk [vmem:[%s3367 + $0x8] sm:$0xff] %vm458, %v3360
    %3370 = vst.msk [vmem:[%s3367 + $0x10] sm:$0xff] %vm458, %v3361
    %3371 = vst.msk [vmem:[%s3367 + $0x18] sm:$0xff] %vm458, %v3362
    %3372 = vst.msk [vmem:[%s3367 + $0x20] sm:$0xff] %vm458, %v3363
    %3373 = vst.msk [vmem:[%s3367 + $0x28] sm:$0xff] %vm458, %v3364
    %3374 = vst.msk [vmem:[%s3367 + $0x30] sm:$0xff] %vm458, %v3365
    %3375 = vst.msk [vmem:[%s3367 + $0x38] sm:$0xff] %vm458, %v3366
    %v3376 = vld [vmem:[#allocation34] sm:$0xf]
    %v3377 = vld [vmem:[#allocation34 + $0x4] sm:$0xf]
    %v3378 = vld [vmem:[#allocation34 + $0x8] sm:$0xf]
    %v3379 = vld [vmem:[#allocation34 + $0xc] sm:$0xf]
    %s3380 = scalar_lea.vmem [#allocation34], 16
    %v3381 = vld [vmem:[%s3380] sm:$0xf]
    %v3382 = vld [vmem:[%s3380 + $0x4] sm:$0xf]
    %v3383 = vld [vmem:[%s3380 + $0x8] sm:$0xf]
    %v3384 = vld [vmem:[%s3380 + $0xc] sm:$0xf]
    %s3385 = scalar_lea.vmem [#allocation34], 32
    %v3386 = vld [vmem:[%s3385] sm:$0xf]
    %v3387 = vld [vmem:[%s3385 + $0x4] sm:$0xf]
    %v3388 = vld [vmem:[%s3385 + $0x8] sm:$0xf]
    %v3389 = vld [vmem:[%s3385 + $0xc] sm:$0xf]
    %v3390 = vld [vmem:[%s53] sm:$0x1]
    %s3391 = scalar_lea.vmem %s53, 1
    %v3392 = vld [vmem:[%s3391] sm:$0x1]
    %s3393 = scalar_lea.vmem %s53, 2
    %v3394 = vld [vmem:[%s3393] sm:$0x1]
    %v3396 = vlaneseq
    %v3397 = vshrl.u32 %v3396, 7
    %v3398 = vsub.s32 0, %v3397
    %v3399 = vrot.slane %v3390, %v3398
    %v3405 = vunpack.c.l.b16 %v3376
    %v3406 = vunpack.c.l.b16 %v3377
    %v3407 = vunpack.c.l.b16 %v3378
    %v3408 = vunpack.c.l.b16 %v3379
    %v3409 = vpack.c.b16 %v3406, %v3405
    %v3410 = vpack.c.b16 %v3408, %v3407
    %v3414 = vsel %vm458, 0, 0
    %3416 = vmatprep.subr.bf16.mxu0 0
    %3417 = vmatpush1.bf16.msra.mxu0 0
    %3418 = vmatprep.subr.bf16.mxu0 0
    %3419 = vmatpush1.bf16.msra.mxu0 0
    %3420 = vmatprep.subr.bf16.mxu0 0
    %3421 = vmatpush1.bf16.msra.mxu0 0
    %3422 = vmatprep.subr.bf16.mxu0 0
    %3423 = vmatpush1.bf16.msra.mxu0 0
    %3424 = vmatprep.subr.bf16.mxu0 0
    %3425 = vmatpush1.bf16.msra.mxu0 0
    %3426 = vmatprep.subr.bf16.mxu0 0
    %3427 = vmatpush1.bf16.msra.mxu0 0
    %3428 = vmatprep.subr.bf16.mxu0 0
    %3429 = vmatpush1.bf16.msra.mxu0 %v3410
    %3430 = vmatprep.subr.bf16.mxu0 0
    %3431 = vmatpush1.bf16.msra.mxu0 %v3409
    %3432 = vmatprep.subr.bf16.mxu0 0
    %3433 = vmatpush2.bf16.msra.mxu0 0
    %3434 = vmatprep.subr.bf16.mxu0 0
    %3435 = vmatpush2.bf16.msra.mxu0 0
    %3436 = vmatprep.subr.bf16.mxu0 0
    %3437 = vmatpush2.bf16.msra.mxu0 0
    %3438 = vmatprep.subr.bf16.mxu0 0
    %3439 = vmatpush2.bf16.msra.mxu0 0
    %3440 = vmatprep.subr.bf16.mxu0 0
    %3441 = vmatpush2.bf16.msra.mxu0 0
    %3442 = vmatprep.subr.bf16.mxu0 0
    %3443 = vmatpush2.bf16.msra.mxu0 0
    %3444 = vmatprep.subr.bf16.mxu0 0
    %3445 = vmatpush2.bf16.msra.mxu0 0
    %3446 = vmatprep.subr.bf16.mxu0 0
    %3447 = vmatpush2.bf16.msra.mxu0 0
    %3448 = vmatprep.mubr.bf16.mxu0 0
    %3449 = vmatmul.mubr.bf16.gmra.mxu0 %v3414
    %v3450 = vpop.f32.mrf.mxu0
    %v3451 = vadd.f32 %v3399, %v3450
    %v3452 = vpop.f32.mrf.mxu0
    %v3453 = vpop.f32.mrf.mxu0
    %v3454 = vpop.f32.mrf.mxu0
    %3455 = vdwg.mxu0
    %v3457 = vlaneseq
    %v3458 = vshrl.u32 %v3457, 7
    %v3459 = vsub.s32 0, %v3458
    %v3460 = vrot.slane %v3392, %v3459
    %v3466 = vunpack.c.l.b16 %v3381
    %v3467 = vunpack.c.l.b16 %v3382
    %v3468 = vunpack.c.l.b16 %v3383
    %v3469 = vunpack.c.l.b16 %v3384
    %v3470 = vpack.c.b16 %v3467, %v3466
    %v3471 = vpack.c.b16 %v3469, %v3468
    %3474 = vmatprep.subr.bf16.mxu0 0
    %3475 = vmatpush1.bf16.msra.mxu0 0
    %3476 = vmatprep.subr.bf16.mxu0 0
    %3477 = vmatpush1.bf16.msra.mxu0 0
    %3478 = vmatprep.subr.bf16.mxu0 0
    %3479 = vmatpush1.bf16.msra.mxu0 0
    %3480 = vmatprep.subr.bf16.mxu0 0
    %3481 = vmatpush1.bf16.msra.mxu0 0
    %3482 = vmatprep.subr.bf16.mxu0 0
    %3483 = vmatpush1.bf16.msra.mxu0 0
    %3484 = vmatprep.subr.bf16.mxu0 0
    %3485 = vmatpush1.bf16.msra.mxu0 0
    %3486 = vmatprep.subr.bf16.mxu0 0
    %3487 = vmatpush1.bf16.msra.mxu0 %v3471
    %3488 = vmatprep.subr.bf16.mxu0 0
    %3489 = vmatpush1.bf16.msra.mxu0 %v3470
    %3490 = vmatprep.subr.bf16.mxu0 0
    %3491 = vmatpush2.bf16.msra.mxu0 0
    %3492 = vmatprep.subr.bf16.mxu0 0
    %3493 = vmatpush2.bf16.msra.mxu0 0
    %3494 = vmatprep.subr.bf16.mxu0 0
    %3495 = vmatpush2.bf16.msra.mxu0 0
    %3496 = vmatprep.subr.bf16.mxu0 0
    %3497 = vmatpush2.bf16.msra.mxu0 0
    %3498 = vmatprep.subr.bf16.mxu0 0
    %3499 = vmatpush2.bf16.msra.mxu0 0
    %3500 = vmatprep.subr.bf16.mxu0 0
    %3501 = vmatpush2.bf16.msra.mxu0 0
    %3502 = vmatprep.subr.bf16.mxu0 0
    %3503 = vmatpush2.bf16.msra.mxu0 0
    %3504 = vmatprep.subr.bf16.mxu0 0
    %3505 = vmatpush2.bf16.msra.mxu0 0
    %3506 = vmatprep.mubr.bf16.mxu0 0
    %3507 = vmatmul.mubr.bf16.gmra.mxu0 %v3414
    %v3508 = vpop.f32.mrf.mxu0
    %v3509 = vadd.f32 %v3460, %v3508
    %v3510 = vpop.f32.mrf.mxu0
    %v3511 = vpop.f32.mrf.mxu0
    %v3512 = vpop.f32.mrf.mxu0
    %3513 = vdwg.mxu0
    %v3515 = vlaneseq
    %v3516 = vshrl.u32 %v3515, 7
    %v3517 = vsub.s32 0, %v3516
    %v3518 = vrot.slane %v3394, %v3517
    %v3524 = vunpack.c.l.b16 %v3386
    %v3525 = vunpack.c.l.b16 %v3387
    %v3526 = vunpack.c.l.b16 %v3388
    %v3527 = vunpack.c.l.b16 %v3389
    %v3528 = vpack.c.b16 %v3525, %v3524
    %v3529 = vpack.c.b16 %v3527, %v3526
    %3532 = vmatprep.subr.bf16.mxu0 0
    %3533 = vmatpush1.bf16.msra.mxu0 0
    %3534 = vmatprep.subr.bf16.mxu0 0
    %3535 = vmatpush1.bf16.msra.mxu0 0
    %3536 = vmatprep.subr.bf16.mxu0 0
    %3537 = vmatpush1.bf16.msra.mxu0 0
    %3538 = vmatprep.subr.bf16.mxu0 0
    %3539 = vmatpush1.bf16.msra.mxu0 0
    %3540 = vmatprep.subr.bf16.mxu0 0
    %3541 = vmatpush1.bf16.msra.mxu0 0
    %3542 = vmatprep.subr.bf16.mxu0 0
    %3543 = vmatpush1.bf16.msra.mxu0 0
    %3544 = vmatprep.subr.bf16.mxu0 0
    %3545 = vmatpush1.bf16.msra.mxu0 %v3529
    %3546 = vmatprep.subr.bf16.mxu0 0
    %3547 = vmatpush1.bf16.msra.mxu0 %v3528
    %3548 = vmatprep.subr.bf16.mxu0 0
    %3549 = vmatpush2.bf16.msra.mxu0 0
    %3550 = vmatprep.subr.bf16.mxu0 0
    %3551 = vmatpush2.bf16.msra.mxu0 0
    %3552 = vmatprep.subr.bf16.mxu0 0
    %3553 = vmatpush2.bf16.msra.mxu0 0
    %3554 = vmatprep.subr.bf16.mxu0 0
    %3555 = vmatpush2.bf16.msra.mxu0 0
    %3556 = vmatprep.subr.bf16.mxu0 0
    %3557 = vmatpush2.bf16.msra.mxu0 0
    %3558 = vmatprep.subr.bf16.mxu0 0
    %3559 = vmatpush2.bf16.msra.mxu0 0
    %3560 = vmatprep.subr.bf16.mxu0 0
    %3561 = vmatpush2.bf16.msra.mxu0 0
    %3562 = vmatprep.subr.bf16.mxu0 0
    %3563 = vmatpush2.bf16.msra.mxu0 0
    %3564 = vmatprep.mubr.bf16.mxu0 0
    %3565 = vmatmul.mubr.bf16.gmra.mxu0 %v3414
    %v3566 = vpop.f32.mrf.mxu0
    %v3567 = vadd.f32 %v3518, %v3566
    %v3568 = vpop.f32.mrf.mxu0
    %v3569 = vpop.f32.mrf.mxu0
    %v3570 = vpop.f32.mrf.mxu0
    %3571 = vdwg.mxu0
    %v3572 = vld [vmem:[#allocation2] sm:$0xff]
    %v3573 = vadd.f32 %v3572, %v3451
    %v3574 = vxor.u32 %v3573, 2147483648
    %v3575 = vmul.f32 %v3574, 1.442695
    %v3576 = vpow.pop %v3575
    %v3577 = vadd.f32 %v3576, 1.0
    %v3578 = vrcp.pop %v3577
    %v3579 = vmul.f32 1.0, %v3578
    %v3580 = vld [vmem:[%s3088] sm:$0xff]
    %v3581 = vadd.f32 %v3580, %v3509
    %v3582 = vxor.u32 %v3581, 2147483648
    %v3583 = vmul.f32 %v3582, 1.442695
    %v3584 = vpow.pop %v3583
    %v3585 = vadd.f32 %v3584, 1.0
    %v3586 = vrcp.pop %v3585
    %v3587 = vmul.f32 1.0, %v3586
    %v3588 = vld [vmem:[%s3367] sm:$0xff]
    %v3589 = vmul.f32 %v3579, %v3567
    %v3590 = vadd.f32 %v3588, %v3589
    %v3591 = vtanh.pop %v3590
    %v3592 = vsub.f32 1.0, %v3587
    %v3593 = vmul.f32 %v3592, %v3591
    %v3594 = vmul.f32 %v3587, 0.0
    %v3595 = vadd.f32 %v3593, %v3594
    %3596 = vst.msk [vmem:[#allocation3] sm:$0xff] %vm458, %v3595
    %v3597 = vpack.c.bf16 %v3595, %v3595
    %v3599 = vsel %vm458, %v3597, 0
    %3601 = vmatprep.subr.bf16.mxu0 0
    %3602 = vmatpush1.bf16.msra.mxu0 0
    %3603 = vmatprep.subr.bf16.mxu0 0
    %3604 = vmatpush1.bf16.msra.mxu0 0
    %3605 = vmatprep.subr.bf16.mxu0 0
    %3606 = vmatpush1.bf16.msra.mxu0 0
    %3607 = vmatprep.subr.bf16.mxu0 0
    %3608 = vmatpush1.bf16.msra.mxu0 0
    %3609 = vmatprep.subr.bf16.mxu0 0
    %3610 = vmatpush1.bf16.msra.mxu0 0
    %3611 = vmatprep.subr.bf16.mxu0 0
    %3612 = vmatpush1.bf16.msra.mxu0 0
    %3613 = vmatprep.subr.bf16.mxu0 0
    %3614 = vmatpush1.bf16.msra.mxu0 %v3410
    %3615 = vmatprep.subr.bf16.mxu0 0
    %3616 = vmatpush1.bf16.msra.mxu0 %v3409
    %3617 = vmatprep.subr.bf16.mxu0 0
    %3618 = vmatpush2.bf16.msra.mxu0 0
    %3619 = vmatprep.subr.bf16.mxu0 0
    %3620 = vmatpush2.bf16.msra.mxu0 0
    %3621 = vmatprep.subr.bf16.mxu0 0
    %3622 = vmatpush2.bf16.msra.mxu0 0
    %3623 = vmatprep.subr.bf16.mxu0 0
    %3624 = vmatpush2.bf16.msra.mxu0 0
    %3625 = vmatprep.subr.bf16.mxu0 0
    %3626 = vmatpush2.bf16.msra.mxu0 0
    %3627 = vmatprep.subr.bf16.mxu0 0
    %3628 = vmatpush2.bf16.msra.mxu0 0
    %3629 = vmatprep.subr.bf16.mxu0 0
    %3630 = vmatpush2.bf16.msra.mxu0 0
    %3631 = vmatprep.subr.bf16.mxu0 0
    %3632 = vmatpush2.bf16.msra.mxu0 0
    %3633 = vmatprep.mubr.bf16.mxu0 0
    %3634 = vmatmul.mubr.bf16.gmra.mxu0 %v3599
    %v3635 = vpop.f32.mrf.mxu0
    %v3636 = vadd.f32 %v3399, %v3635
    %v3637 = vpop.f32.mrf.mxu0
    %v3638 = vpop.f32.mrf.mxu0
    %v3639 = vpop.f32.mrf.mxu0
    %3640 = vdwg.mxu0
    %3641 = vmatprep.subr.bf16.mxu0 0
    %3642 = vmatpush1.bf16.msra.mxu0 0
    %3643 = vmatprep.subr.bf16.mxu0 0
    %3644 = vmatpush1.bf16.msra.mxu0 0
    %3645 = vmatprep.subr.bf16.mxu0 0
    %3646 = vmatpush1.bf16.msra.mxu0 0
    %3647 = vmatprep.subr.bf16.mxu0 0
    %3648 = vmatpush1.bf16.msra.mxu0 0
    %3649 = vmatprep.subr.bf16.mxu0 0
    %3650 = vmatpush1.bf16.msra.mxu0 0
    %3651 = vmatprep.subr.bf16.mxu0 0
    %3652 = vmatpush1.bf16.msra.mxu0 0
    %3653 = vmatprep.subr.bf16.mxu0 0
    %3654 = vmatpush1.bf16.msra.mxu0 %v3471
    %3655 = vmatprep.subr.bf16.mxu0 0
    %3656 = vmatpush1.bf16.msra.mxu0 %v3470
    %3657 = vmatprep.subr.bf16.mxu0 0
    %3658 = vmatpush2.bf16.msra.mxu0 0
    %3659 = vmatprep.subr.bf16.mxu0 0
    %3660 = vmatpush2.bf16.msra.mxu0 0
    %3661 = vmatprep.subr.bf16.mxu0 0
    %3662 = vmatpush2.bf16.msra.mxu0 0
    %3663 = vmatprep.subr.bf16.mxu0 0
    %3664 = vmatpush2.bf16.msra.mxu0 0
    %3665 = vmatprep.subr.bf16.mxu0 0
    %3666 = vmatpush2.bf16.msra.mxu0 0
    %3667 = vmatprep.subr.bf16.mxu0 0
    %3668 = vmatpush2.bf16.msra.mxu0 0
    %3669 = vmatprep.subr.bf16.mxu0 0
    %3670 = vmatpush2.bf16.msra.mxu0 0
    %3671 = vmatprep.subr.bf16.mxu0 0
    %3672 = vmatpush2.bf16.msra.mxu0 0
    %3673 = vmatprep.mubr.bf16.mxu0 0
    %3674 = vmatmul.mubr.bf16.gmra.mxu0 %v3599
    %v3675 = vpop.f32.mrf.mxu0
    %v3676 = vadd.f32 %v3460, %v3675
    %v3677 = vpop.f32.mrf.mxu0
    %v3678 = vpop.f32.mrf.mxu0
    %v3679 = vpop.f32.mrf.mxu0
    %3680 = vdwg.mxu0
    %3681 = vmatprep.subr.bf16.mxu0 0
    %3682 = vmatpush1.bf16.msra.mxu0 0
    %3683 = vmatprep.subr.bf16.mxu0 0
    %3684 = vmatpush1.bf16.msra.mxu0 0
    %3685 = vmatprep.subr.bf16.mxu0 0
    %3686 = vmatpush1.bf16.msra.mxu0 0
    %3687 = vmatprep.subr.bf16.mxu0 0
    %3688 = vmatpush1.bf16.msra.mxu0 0
    %3689 = vmatprep.subr.bf16.mxu0 0
    %3690 = vmatpush1.bf16.msra.mxu0 0
    %3691 = vmatprep.subr.bf16.mxu0 0
    %3692 = vmatpush1.bf16.msra.mxu0 0
    %3693 = vmatprep.subr.bf16.mxu0 0
    %3694 = vmatpush1.bf16.msra.mxu0 %v3529
    %3695 = vmatprep.subr.bf16.mxu0 0
    %3696 = vmatpush1.bf16.msra.mxu0 %v3528
    %3697 = vmatprep.subr.bf16.mxu0 0
    %3698 = vmatpush2.bf16.msra.mxu0 0
    %3699 = vmatprep.subr.bf16.mxu0 0
    %3700 = vmatpush2.bf16.msra.mxu0 0
    %3701 = vmatprep.subr.bf16.mxu0 0
    %3702 = vmatpush2.bf16.msra.mxu0 0
    %3703 = vmatprep.subr.bf16.mxu0 0
    %3704 = vmatpush2.bf16.msra.mxu0 0
    %3705 = vmatprep.subr.bf16.mxu0 0
    %3706 = vmatpush2.bf16.msra.mxu0 0
    %3707 = vmatprep.subr.bf16.mxu0 0
    %3708 = vmatpush2.bf16.msra.mxu0 0
    %3709 = vmatprep.subr.bf16.mxu0 0
    %3710 = vmatpush2.bf16.msra.mxu0 0
    %3711 = vmatprep.subr.bf16.mxu0 0
    %3712 = vmatpush2.bf16.msra.mxu0 0
    %3713 = vmatprep.mubr.bf16.mxu0 0
    %3714 = vmatmul.mubr.bf16.gmra.mxu0 %v3599
    %v3715 = vpop.f32.mrf.mxu0
    %v3716 = vadd.f32 %v3518, %v3715
    %v3717 = vpop.f32.mrf.mxu0
    %v3718 = vpop.f32.mrf.mxu0
    %v3719 = vpop.f32.mrf.mxu0
    %3720 = vdwg.mxu0
    %s3721 = scalar_lea.vmem [#allocation2], 8
    %v3722 = vld [vmem:[%s3721] sm:$0xff]
    %v3723 = vadd.f32 %v3722, %v3636
    %v3724 = vxor.u32 %v3723, 2147483648
    %v3725 = vmul.f32 %v3724, 1.442695
    %v3726 = vpow.pop %v3725
    %v3727 = vadd.f32 %v3726, 1.0
    %v3728 = vrcp.pop %v3727
    %v3729 = vmul.f32 1.0, %v3728
    %s3730 = scalar_lea.vmem [#allocation2], 72
    %v3731 = vld [vmem:[%s3730] sm:$0xff]
    %v3732 = vadd.f32 %v3731, %v3676
    %v3733 = vxor.u32 %v3732, 2147483648
    %v3734 = vmul.f32 %v3733, 1.442695
    %v3735 = vpow.pop %v3734
    %v3736 = vadd.f32 %v3735, 1.0
    %v3737 = vrcp.pop %v3736
    %v3738 = vmul.f32 1.0, %v3737
    %s3739 = scalar_lea.vmem [#allocation2], 136
    %v3740 = vld [vmem:[%s3739] sm:$0xff]
    %v3741 = vmul.f32 %v3729, %v3716
    %v3742 = vadd.f32 %v3740, %v3741
    %v3743 = vtanh.pop %v3742
    %v3744 = vsub.f32 1.0, %v3738
    %v3745 = vmul.f32 %v3744, %v3743
    %v3746 = vmul.f32 %v3738, %v3595
    %v3747 = vadd.f32 %v3745, %v3746
    %s3748 = scalar_lea.vmem [#allocation3], 8
    %3749 = vst.msk [vmem:[%s3748] sm:$0xff] %vm458, %v3747
    %v3750 = vpack.c.bf16 %v3747, %v3747
    %v3752 = vsel %vm458, %v3750, 0
    %3754 = vmatprep.subr.bf16.mxu0 0
    %3755 = vmatpush1.bf16.msra.mxu0 0
    %3756 = vmatprep.subr.bf16.mxu0 0
    %3757 = vmatpush1.bf16.msra.mxu0 0
    %3758 = vmatprep.subr.bf16.mxu0 0
    %3759 = vmatpush1.bf16.msra.mxu0 0
    %3760 = vmatprep.subr.bf16.mxu0 0
    %3761 = vmatpush1.bf16.msra.mxu0 0
    %3762 = vmatprep.subr.bf16.mxu0 0
    %3763 = vmatpush1.bf16.msra.mxu0 0
    %3764 = vmatprep.subr.bf16.mxu0 0
    %3765 = vmatpush1.bf16.msra.mxu0 0
    %3766 = vmatprep.subr.bf16.mxu0 0
    %3767 = vmatpush1.bf16.msra.mxu0 %v3410
    %3768 = vmatprep.subr.bf16.mxu0 0
    %3769 = vmatpush1.bf16.msra.mxu0 %v3409
    %3770 = vmatprep.subr.bf16.mxu0 0
    %3771 = vmatpush2.bf16.msra.mxu0 0
    %3772 = vmatprep.subr.bf16.mxu0 0
    %3773 = vmatpush2.bf16.msra.mxu0 0
    %3774 = vmatprep.subr.bf16.mxu0 0
    %3775 = vmatpush2.bf16.msra.mxu0 0
    %3776 = vmatprep.subr.bf16.mxu0 0
    %3777 = vmatpush2.bf16.msra.mxu0 0
    %3778 = vmatprep.subr.bf16.mxu0 0
    %3779 = vmatpush2.bf16.msra.mxu0 0
    %3780 = vmatprep.subr.bf16.mxu0 0
    %3781 = vmatpush2.bf16.msra.mxu0 0
    %3782 = vmatprep.subr.bf16.mxu0 0
    %3783 = vmatpush2.bf16.msra.mxu0 0
    %3784 = vmatprep.subr.bf16.mxu0 0
    %3785 = vmatpush2.bf16.msra.mxu0 0
    %3786 = vmatprep.mubr.bf16.mxu0 0
    %3787 = vmatmul.mubr.bf16.gmra.mxu0 %v3752
    %v3788 = vpop.f32.mrf.mxu0
    %v3789 = vadd.f32 %v3399, %v3788
    %v3790 = vpop.f32.mrf.mxu0
    %v3791 = vpop.f32.mrf.mxu0
    %v3792 = vpop.f32.mrf.mxu0
    %3793 = vdwg.mxu0
    %3794 = vmatprep.subr.bf16.mxu0 0
    %3795 = vmatpush1.bf16.msra.mxu0 0
    %3796 = vmatprep.subr.bf16.mxu0 0
    %3797 = vmatpush1.bf16.msra.mxu0 0
    %3798 = vmatprep.subr.bf16.mxu0 0
    %3799 = vmatpush1.bf16.msra.mxu0 0
    %3800 = vmatprep.subr.bf16.mxu0 0
    %3801 = vmatpush1.bf16.msra.mxu0 0
    %3802 = vmatprep.subr.bf16.mxu0 0
    %3803 = vmatpush1.bf16.msra.mxu0 0
    %3804 = vmatprep.subr.bf16.mxu0 0
    %3805 = vmatpush1.bf16.msra.mxu0 0
    %3806 = vmatprep.subr.bf16.mxu0 0
    %3807 = vmatpush1.bf16.msra.mxu0 %v3471
    %3808 = vmatprep.subr.bf16.mxu0 0
    %3809 = vmatpush1.bf16.msra.mxu0 %v3470
    %3810 = vmatprep.subr.bf16.mxu0 0
    %3811 = vmatpush2.bf16.msra.mxu0 0
    %3812 = vmatprep.subr.bf16.mxu0 0
    %3813 = vmatpush2.bf16.msra.mxu0 0
    %3814 = vmatprep.subr.bf16.mxu0 0
    %3815 = vmatpush2.bf16.msra.mxu0 0
    %3816 = vmatprep.subr.bf16.mxu0 0
    %3817 = vmatpush2.bf16.msra.mxu0 0
    %3818 = vmatprep.subr.bf16.mxu0 0
    %3819 = vmatpush2.bf16.msra.mxu0 0
    %3820 = vmatprep.subr.bf16.mxu0 0
    %3821 = vmatpush2.bf16.msra.mxu0 0
    %3822 = vmatprep.subr.bf16.mxu0 0
    %3823 = vmatpush2.bf16.msra.mxu0 0
    %3824 = vmatprep.subr.bf16.mxu0 0
    %3825 = vmatpush2.bf16.msra.mxu0 0
    %3826 = vmatprep.mubr.bf16.mxu0 0
    %3827 = vmatmul.mubr.bf16.gmra.mxu0 %v3752
    %v3828 = vpop.f32.mrf.mxu0
    %v3829 = vadd.f32 %v3460, %v3828
    %v3830 = vpop.f32.mrf.mxu0
    %v3831 = vpop.f32.mrf.mxu0
    %v3832 = vpop.f32.mrf.mxu0
    %3833 = vdwg.mxu0
    %3834 = vmatprep.subr.bf16.mxu0 0
    %3835 = vmatpush1.bf16.msra.mxu0 0
    %3836 = vmatprep.subr.bf16.mxu0 0
    %3837 = vmatpush1.bf16.msra.mxu0 0
    %3838 = vmatprep.subr.bf16.mxu0 0
    %3839 = vmatpush1.bf16.msra.mxu0 0
    %3840 = vmatprep.subr.bf16.mxu0 0
    %3841 = vmatpush1.bf16.msra.mxu0 0
    %3842 = vmatprep.subr.bf16.mxu0 0
    %3843 = vmatpush1.bf16.msra.mxu0 0
    %3844 = vmatprep.subr.bf16.mxu0 0
    %3845 = vmatpush1.bf16.msra.mxu0 0
    %3846 = vmatprep.subr.bf16.mxu0 0
    %3847 = vmatpush1.bf16.msra.mxu0 %v3529
    %3848 = vmatprep.subr.bf16.mxu0 0
    %3849 = vmatpush1.bf16.msra.mxu0 %v3528
    %3850 = vmatprep.subr.bf16.mxu0 0
    %3851 = vmatpush2.bf16.msra.mxu0 0
    %3852 = vmatprep.subr.bf16.mxu0 0
    %3853 = vmatpush2.bf16.msra.mxu0 0
    %3854 = vmatprep.subr.bf16.mxu0 0
    %3855 = vmatpush2.bf16.msra.mxu0 0
    %3856 = vmatprep.subr.bf16.mxu0 0
    %3857 = vmatpush2.bf16.msra.mxu0 0
    %3858 = vmatprep.subr.bf16.mxu0 0
    %3859 = vmatpush2.bf16.msra.mxu0 0
    %3860 = vmatprep.subr.bf16.mxu0 0
    %3861 = vmatpush2.bf16.msra.mxu0 0
    %3862 = vmatprep.subr.bf16.mxu0 0
    %3863 = vmatpush2.bf16.msra.mxu0 0
    %3864 = vmatprep.subr.bf16.mxu0 0
    %3865 = vmatpush2.bf16.msra.mxu0 0
    %3866 = vmatprep.mubr.bf16.mxu0 0
    %3867 = vmatmul.mubr.bf16.gmra.mxu0 %v3752
    %v3868 = vpop.f32.mrf.mxu0
    %v3869 = vadd.f32 %v3518, %v3868
    %v3870 = vpop.f32.mrf.mxu0
    %v3871 = vpop.f32.mrf.mxu0
    %v3872 = vpop.f32.mrf.mxu0
    %3873 = vdwg.mxu0
    %s3874 = scalar_lea.vmem [#allocation2], 16
    %v3875 = vld [vmem:[%s3874] sm:$0xff]
    %v3876 = vadd.f32 %v3875, %v3789
    %v3877 = vxor.u32 %v3876, 2147483648
    %v3878 = vmul.f32 %v3877, 1.442695
    %v3879 = vpow.pop %v3878
    %v3880 = vadd.f32 %v3879, 1.0
    %v3881 = vrcp.pop %v3880
    %v3882 = vmul.f32 1.0, %v3881
    %s3883 = scalar_lea.vmem [#allocation2], 80
    %v3884 = vld [vmem:[%s3883] sm:$0xff]
    %v3885 = vadd.f32 %v3884, %v3829
    %v3886 = vxor.u32 %v3885, 2147483648
    %v3887 = vmul.f32 %v3886, 1.442695
    %v3888 = vpow.pop %v3887
    %v3889 = vadd.f32 %v3888, 1.0
    %v3890 = vrcp.pop %v3889
    %v3891 = vmul.f32 1.0, %v3890
    %s3892 = scalar_lea.vmem [#allocation2], 144
    %v3893 = vld [vmem:[%s3892] sm:$0xff]
    %v3894 = vmul.f32 %v3882, %v3869
    %v3895 = vadd.f32 %v3893, %v3894
    %v3896 = vtanh.pop %v3895
    %v3897 = vsub.f32 1.0, %v3891
    %v3898 = vmul.f32 %v3897, %v3896
    %v3899 = vmul.f32 %v3891, %v3747
    %v3900 = vadd.f32 %v3898, %v3899
    %s3901 = scalar_lea.vmem [#allocation3], 16
    %3902 = vst.msk [vmem:[%s3901] sm:$0xff] %vm458, %v3900
    %v3903 = vpack.c.bf16 %v3900, %v3900
    %v3905 = vsel %vm458, %v3903, 0
    %3907 = vmatprep.subr.bf16.mxu0 0
    %3908 = vmatpush1.bf16.msra.mxu0 0
    %3909 = vmatprep.subr.bf16.mxu0 0
    %3910 = vmatpush1.bf16.msra.mxu0 0
    %3911 = vmatprep.subr.bf16.mxu0 0
    %3912 = vmatpush1.bf16.msra.mxu0 0
    %3913 = vmatprep.subr.bf16.mxu0 0
    %3914 = vmatpush1.bf16.msra.mxu0 0
    %3915 = vmatprep.subr.bf16.mxu0 0
    %3916 = vmatpush1.bf16.msra.mxu0 0
    %3917 = vmatprep.subr.bf16.mxu0 0
    %3918 = vmatpush1.bf16.msra.mxu0 0
    %3919 = vmatprep.subr.bf16.mxu0 0
    %3920 = vmatpush1.bf16.msra.mxu0 %v3410
    %3921 = vmatprep.subr.bf16.mxu0 0
    %3922 = vmatpush1.bf16.msra.mxu0 %v3409
    %3923 = vmatprep.subr.bf16.mxu0 0
    %3924 = vmatpush2.bf16.msra.mxu0 0
    %3925 = vmatprep.subr.bf16.mxu0 0
    %3926 = vmatpush2.bf16.msra.mxu0 0
    %3927 = vmatprep.subr.bf16.mxu0 0
    %3928 = vmatpush2.bf16.msra.mxu0 0
    %3929 = vmatprep.subr.bf16.mxu0 0
    %3930 = vmatpush2.bf16.msra.mxu0 0
    %3931 = vmatprep.subr.bf16.mxu0 0
    %3932 = vmatpush2.bf16.msra.mxu0 0
    %3933 = vmatprep.subr.bf16.mxu0 0
    %3934 = vmatpush2.bf16.msra.mxu0 0
    %3935 = vmatprep.subr.bf16.mxu0 0
    %3936 = vmatpush2.bf16.msra.mxu0 0
    %3937 = vmatprep.subr.bf16.mxu0 0
    %3938 = vmatpush2.bf16.msra.mxu0 0
    %3939 = vmatprep.mubr.bf16.mxu0 0
    %3940 = vmatmul.mubr.bf16.gmra.mxu0 %v3905
    %v3941 = vpop.f32.mrf.mxu0
    %v3942 = vadd.f32 %v3399, %v3941
    %v3943 = vpop.f32.mrf.mxu0
    %v3944 = vpop.f32.mrf.mxu0
    %v3945 = vpop.f32.mrf.mxu0
    %3946 = vdwg.mxu0
    %3947 = vmatprep.subr.bf16.mxu0 0
    %3948 = vmatpush1.bf16.msra.mxu0 0
    %3949 = vmatprep.subr.bf16.mxu0 0
    %3950 = vmatpush1.bf16.msra.mxu0 0
    %3951 = vmatprep.subr.bf16.mxu0 0
    %3952 = vmatpush1.bf16.msra.mxu0 0
    %3953 = vmatprep.subr.bf16.mxu0 0
    %3954 = vmatpush1.bf16.msra.mxu0 0
    %3955 = vmatprep.subr.bf16.mxu0 0
    %3956 = vmatpush1.bf16.msra.mxu0 0
    %3957 = vmatprep.subr.bf16.mxu0 0
    %3958 = vmatpush1.bf16.msra.mxu0 0
    %3959 = vmatprep.subr.bf16.mxu0 0
    %3960 = vmatpush1.bf16.msra.mxu0 %v3471
    %3961 = vmatprep.subr.bf16.mxu0 0
    %3962 = vmatpush1.bf16.msra.mxu0 %v3470
    %3963 = vmatprep.subr.bf16.mxu0 0
    %3964 = vmatpush2.bf16.msra.mxu0 0
    %3965 = vmatprep.subr.bf16.mxu0 0
    %3966 = vmatpush2.bf16.msra.mxu0 0
    %3967 = vmatprep.subr.bf16.mxu0 0
    %3968 = vmatpush2.bf16.msra.mxu0 0
    %3969 = vmatprep.subr.bf16.mxu0 0
    %3970 = vmatpush2.bf16.msra.mxu0 0
    %3971 = vmatprep.subr.bf16.mxu0 0
    %3972 = vmatpush2.bf16.msra.mxu0 0
    %3973 = vmatprep.subr.bf16.mxu0 0
    %3974 = vmatpush2.bf16.msra.mxu0 0
    %3975 = vmatprep.subr.bf16.mxu0 0
    %3976 = vmatpush2.bf16.msra.mxu0 0
    %3977 = vmatprep.subr.bf16.mxu0 0
    %3978 = vmatpush2.bf16.msra.mxu0 0
    %3979 = vmatprep.mubr.bf16.mxu0 0
    %3980 = vmatmul.mubr.bf16.gmra.mxu0 %v3905
    %v3981 = vpop.f32.mrf.mxu0
    %v3982 = vadd.f32 %v3460, %v3981
    %v3983 = vpop.f32.mrf.mxu0
    %v3984 = vpop.f32.mrf.mxu0
    %v3985 = vpop.f32.mrf.mxu0
    %3986 = vdwg.mxu0
    %3987 = vmatprep.subr.bf16.mxu0 0
    %3988 = vmatpush1.bf16.msra.mxu0 0
    %3989 = vmatprep.subr.bf16.mxu0 0
    %3990 = vmatpush1.bf16.msra.mxu0 0
    %3991 = vmatprep.subr.bf16.mxu0 0
    %3992 = vmatpush1.bf16.msra.mxu0 0
    %3993 = vmatprep.subr.bf16.mxu0 0
    %3994 = vmatpush1.bf16.msra.mxu0 0
    %3995 = vmatprep.subr.bf16.mxu0 0
    %3996 = vmatpush1.bf16.msra.mxu0 0
    %3997 = vmatprep.subr.bf16.mxu0 0
    %3998 = vmatpush1.bf16.msra.mxu0 0
    %3999 = vmatprep.subr.bf16.mxu0 0
    %4000 = vmatpush1.bf16.msra.mxu0 %v3529
    %4001 = vmatprep.subr.bf16.mxu0 0
    %4002 = vmatpush1.bf16.msra.mxu0 %v3528
    %4003 = vmatprep.subr.bf16.mxu0 0
    %4004 = vmatpush2.bf16.msra.mxu0 0
    %4005 = vmatprep.subr.bf16.mxu0 0
    %4006 = vmatpush2.bf16.msra.mxu0 0
    %4007 = vmatprep.subr.bf16.mxu0 0
    %4008 = vmatpush2.bf16.msra.mxu0 0
    %4009 = vmatprep.subr.bf16.mxu0 0
    %4010 = vmatpush2.bf16.msra.mxu0 0
    %4011 = vmatprep.subr.bf16.mxu0 0
    %4012 = vmatpush2.bf16.msra.mxu0 0
    %4013 = vmatprep.subr.bf16.mxu0 0
    %4014 = vmatpush2.bf16.msra.mxu0 0
    %4015 = vmatprep.subr.bf16.mxu0 0
    %4016 = vmatpush2.bf16.msra.mxu0 0
    %4017 = vmatprep.subr.bf16.mxu0 0
    %4018 = vmatpush2.bf16.msra.mxu0 0
    %4019 = vmatprep.mubr.bf16.mxu0 0
    %4020 = vmatmul.mubr.bf16.gmra.mxu0 %v3905
    %v4021 = vpop.f32.mrf.mxu0
    %v4022 = vadd.f32 %v3518, %v4021
    %v4023 = vpop.f32.mrf.mxu0
    %v4024 = vpop.f32.mrf.mxu0
    %v4025 = vpop.f32.mrf.mxu0
    %4026 = vdwg.mxu0
    %s4027 = scalar_lea.vmem [#allocation2], 24
    %v4028 = vld [vmem:[%s4027] sm:$0xff]
    %v4029 = vadd.f32 %v4028, %v3942
    %v4030 = vxor.u32 %v4029, 2147483648
    %v4031 = vmul.f32 %v4030, 1.442695
    %v4032 = vpow.pop %v4031
    %v4033 = vadd.f32 %v4032, 1.0
    %v4034 = vrcp.pop %v4033
    %v4035 = vmul.f32 1.0, %v4034
    %s4036 = scalar_lea.vmem [#allocation2], 88
    %v4037 = vld [vmem:[%s4036] sm:$0xff]
    %v4038 = vadd.f32 %v4037, %v3982
    %v4039 = vxor.u32 %v4038, 2147483648
    %v4040 = vmul.f32 %v4039, 1.442695
    %v4041 = vpow.pop %v4040
    %v4042 = vadd.f32 %v4041, 1.0
    %v4043 = vrcp.pop %v4042
    %v4044 = vmul.f32 1.0, %v4043
    %s4045 = scalar_lea.vmem [#allocation2], 152
    %v4046 = vld [vmem:[%s4045] sm:$0xff]
    %v4047 = vmul.f32 %v4035, %v4022
    %v4048 = vadd.f32 %v4046, %v4047
    %v4049 = vtanh.pop %v4048
    %v4050 = vsub.f32 1.0, %v4044
    %v4051 = vmul.f32 %v4050, %v4049
    %v4052 = vmul.f32 %v4044, %v3900
    %v4053 = vadd.f32 %v4051, %v4052
    %s4054 = scalar_lea.vmem [#allocation3], 24
    %4055 = vst.msk [vmem:[%s4054] sm:$0xff] %vm458, %v4053
    %v4056 = vpack.c.bf16 %v4053, %v4053
    %v4058 = vsel %vm458, %v4056, 0
    %4060 = vmatprep.subr.bf16.mxu0 0
    %4061 = vmatpush1.bf16.msra.mxu0 0
    %4062 = vmatprep.subr.bf16.mxu0 0
    %4063 = vmatpush1.bf16.msra.mxu0 0
    %4064 = vmatprep.subr.bf16.mxu0 0
    %4065 = vmatpush1.bf16.msra.mxu0 0
    %4066 = vmatprep.subr.bf16.mxu0 0
    %4067 = vmatpush1.bf16.msra.mxu0 0
    %4068 = vmatprep.subr.bf16.mxu0 0
    %4069 = vmatpush1.bf16.msra.mxu0 0
    %4070 = vmatprep.subr.bf16.mxu0 0
    %4071 = vmatpush1.bf16.msra.mxu0 0
    %4072 = vmatprep.subr.bf16.mxu0 0
    %4073 = vmatpush1.bf16.msra.mxu0 %v3410
    %4074 = vmatprep.subr.bf16.mxu0 0
    %4075 = vmatpush1.bf16.msra.mxu0 %v3409
    %4076 = vmatprep.subr.bf16.mxu0 0
    %4077 = vmatpush2.bf16.msra.mxu0 0
    %4078 = vmatprep.subr.bf16.mxu0 0
    %4079 = vmatpush2.bf16.msra.mxu0 0
    %4080 = vmatprep.subr.bf16.mxu0 0
    %4081 = vmatpush2.bf16.msra.mxu0 0
    %4082 = vmatprep.subr.bf16.mxu0 0
    %4083 = vmatpush2.bf16.msra.mxu0 0
    %4084 = vmatprep.subr.bf16.mxu0 0
    %4085 = vmatpush2.bf16.msra.mxu0 0
    %4086 = vmatprep.subr.bf16.mxu0 0
    %4087 = vmatpush2.bf16.msra.mxu0 0
    %4088 = vmatprep.subr.bf16.mxu0 0
    %4089 = vmatpush2.bf16.msra.mxu0 0
    %4090 = vmatprep.subr.bf16.mxu0 0
    %4091 = vmatpush2.bf16.msra.mxu0 0
    %4092 = vmatprep.mubr.bf16.mxu0 0
    %4093 = vmatmul.mubr.bf16.gmra.mxu0 %v4058
    %v4094 = vpop.f32.mrf.mxu0
    %v4095 = vadd.f32 %v3399, %v4094
    %v4096 = vpop.f32.mrf.mxu0
    %v4097 = vpop.f32.mrf.mxu0
    %v4098 = vpop.f32.mrf.mxu0
    %4099 = vdwg.mxu0
    %4100 = vmatprep.subr.bf16.mxu0 0
    %4101 = vmatpush1.bf16.msra.mxu0 0
    %4102 = vmatprep.subr.bf16.mxu0 0
    %4103 = vmatpush1.bf16.msra.mxu0 0
    %4104 = vmatprep.subr.bf16.mxu0 0
    %4105 = vmatpush1.bf16.msra.mxu0 0
    %4106 = vmatprep.subr.bf16.mxu0 0
    %4107 = vmatpush1.bf16.msra.mxu0 0
    %4108 = vmatprep.subr.bf16.mxu0 0
    %4109 = vmatpush1.bf16.msra.mxu0 0
    %4110 = vmatprep.subr.bf16.mxu0 0
    %4111 = vmatpush1.bf16.msra.mxu0 0
    %4112 = vmatprep.subr.bf16.mxu0 0
    %4113 = vmatpush1.bf16.msra.mxu0 %v3471
    %4114 = vmatprep.subr.bf16.mxu0 0
    %4115 = vmatpush1.bf16.msra.mxu0 %v3470
    %4116 = vmatprep.subr.bf16.mxu0 0
    %4117 = vmatpush2.bf16.msra.mxu0 0
    %4118 = vmatprep.subr.bf16.mxu0 0
    %4119 = vmatpush2.bf16.msra.mxu0 0
    %4120 = vmatprep.subr.bf16.mxu0 0
    %4121 = vmatpush2.bf16.msra.mxu0 0
    %4122 = vmatprep.subr.bf16.mxu0 0
    %4123 = vmatpush2.bf16.msra.mxu0 0
    %4124 = vmatprep.subr.bf16.mxu0 0
    %4125 = vmatpush2.bf16.msra.mxu0 0
    %4126 = vmatprep.subr.bf16.mxu0 0
    %4127 = vmatpush2.bf16.msra.mxu0 0
    %4128 = vmatprep.subr.bf16.mxu0 0
    %4129 = vmatpush2.bf16.msra.mxu0 0
    %4130 = vmatprep.subr.bf16.mxu0 0
    %4131 = vmatpush2.bf16.msra.mxu0 0
    %4132 = vmatprep.mubr.bf16.mxu0 0
    %4133 = vmatmul.mubr.bf16.gmra.mxu0 %v4058
    %v4134 = vpop.f32.mrf.mxu0
    %v4135 = vadd.f32 %v3460, %v4134
    %v4136 = vpop.f32.mrf.mxu0
    %v4137 = vpop.f32.mrf.mxu0
    %v4138 = vpop.f32.mrf.mxu0
    %4139 = vdwg.mxu0
    %4140 = vmatprep.subr.bf16.mxu0 0
    %4141 = vmatpush1.bf16.msra.mxu0 0
    %4142 = vmatprep.subr.bf16.mxu0 0
    %4143 = vmatpush1.bf16.msra.mxu0 0
    %4144 = vmatprep.subr.bf16.mxu0 0
    %4145 = vmatpush1.bf16.msra.mxu0 0
    %4146 = vmatprep.subr.bf16.mxu0 0
    %4147 = vmatpush1.bf16.msra.mxu0 0
    %4148 = vmatprep.subr.bf16.mxu0 0
    %4149 = vmatpush1.bf16.msra.mxu0 0
    %4150 = vmatprep.subr.bf16.mxu0 0
    %4151 = vmatpush1.bf16.msra.mxu0 0
    %4152 = vmatprep.subr.bf16.mxu0 0
    %4153 = vmatpush1.bf16.msra.mxu0 %v3529
    %4154 = vmatprep.subr.bf16.mxu0 0
    %4155 = vmatpush1.bf16.msra.mxu0 %v3528
    %4156 = vmatprep.subr.bf16.mxu0 0
    %4157 = vmatpush2.bf16.msra.mxu0 0
    %4158 = vmatprep.subr.bf16.mxu0 0
    %4159 = vmatpush2.bf16.msra.mxu0 0
    %4160 = vmatprep.subr.bf16.mxu0 0
    %4161 = vmatpush2.bf16.msra.mxu0 0
    %4162 = vmatprep.subr.bf16.mxu0 0
    %4163 = vmatpush2.bf16.msra.mxu0 0
    %4164 = vmatprep.subr.bf16.mxu0 0
    %4165 = vmatpush2.bf16.msra.mxu0 0
    %4166 = vmatprep.subr.bf16.mxu0 0
    %4167 = vmatpush2.bf16.msra.mxu0 0
    %4168 = vmatprep.subr.bf16.mxu0 0
    %4169 = vmatpush2.bf16.msra.mxu0 0
    %4170 = vmatprep.subr.bf16.mxu0 0
    %4171 = vmatpush2.bf16.msra.mxu0 0
    %4172 = vmatprep.mubr.bf16.mxu0 0
    %4173 = vmatmul.mubr.bf16.gmra.mxu0 %v4058
    %v4174 = vpop.f32.mrf.mxu0
    %v4175 = vadd.f32 %v3518, %v4174
    %v4176 = vpop.f32.mrf.mxu0
    %v4177 = vpop.f32.mrf.mxu0
    %v4178 = vpop.f32.mrf.mxu0
    %4179 = vdwg.mxu0
    %s4180 = scalar_lea.vmem [#allocation2], 32
    %v4181 = vld [vmem:[%s4180] sm:$0xff]
    %v4182 = vadd.f32 %v4181, %v4095
    %v4183 = vxor.u32 %v4182, 2147483648
    %v4184 = vmul.f32 %v4183, 1.442695
    %v4185 = vpow.pop %v4184
    %v4186 = vadd.f32 %v4185, 1.0
    %v4187 = vrcp.pop %v4186
    %v4188 = vmul.f32 1.0, %v4187
    %s4189 = scalar_lea.vmem [#allocation2], 96
    %v4190 = vld [vmem:[%s4189] sm:$0xff]
    %v4191 = vadd.f32 %v4190, %v4135
    %v4192 = vxor.u32 %v4191, 2147483648
    %v4193 = vmul.f32 %v4192, 1.442695
    %v4194 = vpow.pop %v4193
    %v4195 = vadd.f32 %v4194, 1.0
    %v4196 = vrcp.pop %v4195
    %v4197 = vmul.f32 1.0, %v4196
    %s4198 = scalar_lea.vmem [#allocation2], 160
    %v4199 = vld [vmem:[%s4198] sm:$0xff]
    %v4200 = vmul.f32 %v4188, %v4175
    %v4201 = vadd.f32 %v4199, %v4200
    %v4202 = vtanh.pop %v4201
    %v4203 = vsub.f32 1.0, %v4197
    %v4204 = vmul.f32 %v4203, %v4202
    %v4205 = vmul.f32 %v4197, %v4053
    %v4206 = vadd.f32 %v4204, %v4205
    %s4207 = scalar_lea.vmem [#allocation3], 32
    %4208 = vst.msk [vmem:[%s4207] sm:$0xff] %vm458, %v4206
    %v4209 = vpack.c.bf16 %v4206, %v4206
    %v4211 = vsel %vm458, %v4209, 0
    %4213 = vmatprep.subr.bf16.mxu0 0
    %4214 = vmatpush1.bf16.msra.mxu0 0
    %4215 = vmatprep.subr.bf16.mxu0 0
    %4216 = vmatpush1.bf16.msra.mxu0 0
    %4217 = vmatprep.subr.bf16.mxu0 0
    %4218 = vmatpush1.bf16.msra.mxu0 0
    %4219 = vmatprep.subr.bf16.mxu0 0
    %4220 = vmatpush1.bf16.msra.mxu0 0
    %4221 = vmatprep.subr.bf16.mxu0 0
    %4222 = vmatpush1.bf16.msra.mxu0 0
    %4223 = vmatprep.subr.bf16.mxu0 0
    %4224 = vmatpush1.bf16.msra.mxu0 0
    %4225 = vmatprep.subr.bf16.mxu0 0
    %4226 = vmatpush1.bf16.msra.mxu0 %v3410
    %4227 = vmatprep.subr.bf16.mxu0 0
    %4228 = vmatpush1.bf16.msra.mxu0 %v3409
    %4229 = vmatprep.subr.bf16.mxu0 0
    %4230 = vmatpush2.bf16.msra.mxu0 0
    %4231 = vmatprep.subr.bf16.mxu0 0
    %4232 = vmatpush2.bf16.msra.mxu0 0
    %4233 = vmatprep.subr.bf16.mxu0 0
    %4234 = vmatpush2.bf16.msra.mxu0 0
    %4235 = vmatprep.subr.bf16.mxu0 0
    %4236 = vmatpush2.bf16.msra.mxu0 0
    %4237 = vmatprep.subr.bf16.mxu0 0
    %4238 = vmatpush2.bf16.msra.mxu0 0
    %4239 = vmatprep.subr.bf16.mxu0 0
    %4240 = vmatpush2.bf16.msra.mxu0 0
    %4241 = vmatprep.subr.bf16.mxu0 0
    %4242 = vmatpush2.bf16.msra.mxu0 0
    %4243 = vmatprep.subr.bf16.mxu0 0
    %4244 = vmatpush2.bf16.msra.mxu0 0
    %4245 = vmatprep.mubr.bf16.mxu0 0
    %4246 = vmatmul.mubr.bf16.gmra.mxu0 %v4211
    %v4247 = vpop.f32.mrf.mxu0
    %v4248 = vadd.f32 %v3399, %v4247
    %v4249 = vpop.f32.mrf.mxu0
    %v4250 = vpop.f32.mrf.mxu0
    %v4251 = vpop.f32.mrf.mxu0
    %4252 = vdwg.mxu0
    %4253 = vmatprep.subr.bf16.mxu0 0
    %4254 = vmatpush1.bf16.msra.mxu0 0
    %4255 = vmatprep.subr.bf16.mxu0 0
    %4256 = vmatpush1.bf16.msra.mxu0 0
    %4257 = vmatprep.subr.bf16.mxu0 0
    %4258 = vmatpush1.bf16.msra.mxu0 0
    %4259 = vmatprep.subr.bf16.mxu0 0
    %4260 = vmatpush1.bf16.msra.mxu0 0
    %4261 = vmatprep.subr.bf16.mxu0 0
    %4262 = vmatpush1.bf16.msra.mxu0 0
    %4263 = vmatprep.subr.bf16.mxu0 0
    %4264 = vmatpush1.bf16.msra.mxu0 0
    %4265 = vmatprep.subr.bf16.mxu0 0
    %4266 = vmatpush1.bf16.msra.mxu0 %v3471
    %4267 = vmatprep.subr.bf16.mxu0 0
    %4268 = vmatpush1.bf16.msra.mxu0 %v3470
    %4269 = vmatprep.subr.bf16.mxu0 0
    %4270 = vmatpush2.bf16.msra.mxu0 0
    %4271 = vmatprep.subr.bf16.mxu0 0
    %4272 = vmatpush2.bf16.msra.mxu0 0
    %4273 = vmatprep.subr.bf16.mxu0 0
    %4274 = vmatpush2.bf16.msra.mxu0 0
    %4275 = vmatprep.subr.bf16.mxu0 0
    %4276 = vmatpush2.bf16.msra.mxu0 0
    %4277 = vmatprep.subr.bf16.mxu0 0
    %4278 = vmatpush2.bf16.msra.mxu0 0
    %4279 = vmatprep.subr.bf16.mxu0 0
    %4280 = vmatpush2.bf16.msra.mxu0 0
    %4281 = vmatprep.subr.bf16.mxu0 0
    %4282 = vmatpush2.bf16.msra.mxu0 0
    %4283 = vmatprep.subr.bf16.mxu0 0
    %4284 = vmatpush2.bf16.msra.mxu0 0
    %4285 = vmatprep.mubr.bf16.mxu0 0
    %4286 = vmatmul.mubr.bf16.gmra.mxu0 %v4211
    %v4287 = vpop.f32.mrf.mxu0
    %v4288 = vadd.f32 %v3460, %v4287
    %v4289 = vpop.f32.mrf.mxu0
    %v4290 = vpop.f32.mrf.mxu0
    %v4291 = vpop.f32.mrf.mxu0
    %4292 = vdwg.mxu0
    %4293 = vmatprep.subr.bf16.mxu0 0
    %4294 = vmatpush1.bf16.msra.mxu0 0
    %4295 = vmatprep.subr.bf16.mxu0 0
    %4296 = vmatpush1.bf16.msra.mxu0 0
    %4297 = vmatprep.subr.bf16.mxu0 0
    %4298 = vmatpush1.bf16.msra.mxu0 0
    %4299 = vmatprep.subr.bf16.mxu0 0
    %4300 = vmatpush1.bf16.msra.mxu0 0
    %4301 = vmatprep.subr.bf16.mxu0 0
    %4302 = vmatpush1.bf16.msra.mxu0 0
    %4303 = vmatprep.subr.bf16.mxu0 0
    %4304 = vmatpush1.bf16.msra.mxu0 0
    %4305 = vmatprep.subr.bf16.mxu0 0
    %4306 = vmatpush1.bf16.msra.mxu0 %v3529
    %4307 = vmatprep.subr.bf16.mxu0 0
    %4308 = vmatpush1.bf16.msra.mxu0 %v3528
    %4309 = vmatprep.subr.bf16.mxu0 0
    %4310 = vmatpush2.bf16.msra.mxu0 0
    %4311 = vmatprep.subr.bf16.mxu0 0
    %4312 = vmatpush2.bf16.msra.mxu0 0
    %4313 = vmatprep.subr.bf16.mxu0 0
    %4314 = vmatpush2.bf16.msra.mxu0 0
    %4315 = vmatprep.subr.bf16.mxu0 0
    %4316 = vmatpush2.bf16.msra.mxu0 0
    %4317 = vmatprep.subr.bf16.mxu0 0
    %4318 = vmatpush2.bf16.msra.mxu0 0
    %4319 = vmatprep.subr.bf16.mxu0 0
    %4320 = vmatpush2.bf16.msra.mxu0 0
    %4321 = vmatprep.subr.bf16.mxu0 0
    %4322 = vmatpush2.bf16.msra.mxu0 0
    %4323 = vmatprep.subr.bf16.mxu0 0
    %4324 = vmatpush2.bf16.msra.mxu0 0
    %4325 = vmatprep.mubr.bf16.mxu0 0
    %4326 = vmatmul.mubr.bf16.gmra.mxu0 %v4211
    %v4327 = vpop.f32.mrf.mxu0
    %v4328 = vadd.f32 %v3518, %v4327
    %v4329 = vpop.f32.mrf.mxu0
    %v4330 = vpop.f32.mrf.mxu0
    %v4331 = vpop.f32.mrf.mxu0
    %4332 = vdwg.mxu0
    %s4333 = scalar_lea.vmem [#allocation2], 40
    %v4334 = vld [vmem:[%s4333] sm:$0xff]
    %v4335 = vadd.f32 %v4334, %v4248
    %v4336 = vxor.u32 %v4335, 2147483648
    %v4337 = vmul.f32 %v4336, 1.442695
    %v4338 = vpow.pop %v4337
    %v4339 = vadd.f32 %v4338, 1.0
    %v4340 = vrcp.pop %v4339
    %v4341 = vmul.f32 1.0, %v4340
    %s4342 = scalar_lea.vmem [#allocation2], 104
    %v4343 = vld [vmem:[%s4342] sm:$0xff]
    %v4344 = vadd.f32 %v4343, %v4288
    %v4345 = vxor.u32 %v4344, 2147483648
    %v4346 = vmul.f32 %v4345, 1.442695
    %v4347 = vpow.pop %v4346
    %v4348 = vadd.f32 %v4347, 1.0
    %v4349 = vrcp.pop %v4348
    %v4350 = vmul.f32 1.0, %v4349
    %s4351 = scalar_lea.vmem [#allocation2], 168
    %v4352 = vld [vmem:[%s4351] sm:$0xff]
    %v4353 = vmul.f32 %v4341, %v4328
    %v4354 = vadd.f32 %v4352, %v4353
    %v4355 = vtanh.pop %v4354
    %v4356 = vsub.f32 1.0, %v4350
    %v4357 = vmul.f32 %v4356, %v4355
    %v4358 = vmul.f32 %v4350, %v4206
    %v4359 = vadd.f32 %v4357, %v4358
    %s4360 = scalar_lea.vmem [#allocation3], 40
    %4361 = vst.msk [vmem:[%s4360] sm:$0xff] %vm458, %v4359
    %v4362 = vpack.c.bf16 %v4359, %v4359
    %v4364 = vsel %vm458, %v4362, 0
    %4366 = vmatprep.subr.bf16.mxu0 0
    %4367 = vmatpush1.bf16.msra.mxu0 0
    %4368 = vmatprep.subr.bf16.mxu0 0
    %4369 = vmatpush1.bf16.msra.mxu0 0
    %4370 = vmatprep.subr.bf16.mxu0 0
    %4371 = vmatpush1.bf16.msra.mxu0 0
    %4372 = vmatprep.subr.bf16.mxu0 0
    %4373 = vmatpush1.bf16.msra.mxu0 0
    %4374 = vmatprep.subr.bf16.mxu0 0
    %4375 = vmatpush1.bf16.msra.mxu0 0
    %4376 = vmatprep.subr.bf16.mxu0 0
    %4377 = vmatpush1.bf16.msra.mxu0 0
    %4378 = vmatprep.subr.bf16.mxu0 0
    %4379 = vmatpush1.bf16.msra.mxu0 %v3410
    %4380 = vmatprep.subr.bf16.mxu0 0
    %4381 = vmatpush1.bf16.msra.mxu0 %v3409
    %4382 = vmatprep.subr.bf16.mxu0 0
    %4383 = vmatpush2.bf16.msra.mxu0 0
    %4384 = vmatprep.subr.bf16.mxu0 0
    %4385 = vmatpush2.bf16.msra.mxu0 0
    %4386 = vmatprep.subr.bf16.mxu0 0
    %4387 = vmatpush2.bf16.msra.mxu0 0
    %4388 = vmatprep.subr.bf16.mxu0 0
    %4389 = vmatpush2.bf16.msra.mxu0 0
    %4390 = vmatprep.subr.bf16.mxu0 0
    %4391 = vmatpush2.bf16.msra.mxu0 0
    %4392 = vmatprep.subr.bf16.mxu0 0
    %4393 = vmatpush2.bf16.msra.mxu0 0
    %4394 = vmatprep.subr.bf16.mxu0 0
    %4395 = vmatpush2.bf16.msra.mxu0 0
    %4396 = vmatprep.subr.bf16.mxu0 0
    %4397 = vmatpush2.bf16.msra.mxu0 0
    %4398 = vmatprep.mubr.bf16.mxu0 0
    %4399 = vmatmul.mubr.bf16.gmra.mxu0 %v4364
    %v4400 = vpop.f32.mrf.mxu0
    %v4401 = vadd.f32 %v3399, %v4400
    %v4402 = vpop.f32.mrf.mxu0
    %v4403 = vpop.f32.mrf.mxu0
    %v4404 = vpop.f32.mrf.mxu0
    %4405 = vdwg.mxu0
    %4406 = vmatprep.subr.bf16.mxu0 0
    %4407 = vmatpush1.bf16.msra.mxu0 0
    %4408 = vmatprep.subr.bf16.mxu0 0
    %4409 = vmatpush1.bf16.msra.mxu0 0
    %4410 = vmatprep.subr.bf16.mxu0 0
    %4411 = vmatpush1.bf16.msra.mxu0 0
    %4412 = vmatprep.subr.bf16.mxu0 0
    %4413 = vmatpush1.bf16.msra.mxu0 0
    %4414 = vmatprep.subr.bf16.mxu0 0
    %4415 = vmatpush1.bf16.msra.mxu0 0
    %4416 = vmatprep.subr.bf16.mxu0 0
    %4417 = vmatpush1.bf16.msra.mxu0 0
    %4418 = vmatprep.subr.bf16.mxu0 0
    %4419 = vmatpush1.bf16.msra.mxu0 %v3471
    %4420 = vmatprep.subr.bf16.mxu0 0
    %4421 = vmatpush1.bf16.msra.mxu0 %v3470
    %4422 = vmatprep.subr.bf16.mxu0 0
    %4423 = vmatpush2.bf16.msra.mxu0 0
    %4424 = vmatprep.subr.bf16.mxu0 0
    %4425 = vmatpush2.bf16.msra.mxu0 0
    %4426 = vmatprep.subr.bf16.mxu0 0
    %4427 = vmatpush2.bf16.msra.mxu0 0
    %4428 = vmatprep.subr.bf16.mxu0 0
    %4429 = vmatpush2.bf16.msra.mxu0 0
    %4430 = vmatprep.subr.bf16.mxu0 0
    %4431 = vmatpush2.bf16.msra.mxu0 0
    %4432 = vmatprep.subr.bf16.mxu0 0
    %4433 = vmatpush2.bf16.msra.mxu0 0
    %4434 = vmatprep.subr.bf16.mxu0 0
    %4435 = vmatpush2.bf16.msra.mxu0 0
    %4436 = vmatprep.subr.bf16.mxu0 0
    %4437 = vmatpush2.bf16.msra.mxu0 0
    %4438 = vmatprep.mubr.bf16.mxu0 0
    %4439 = vmatmul.mubr.bf16.gmra.mxu0 %v4364
    %v4440 = vpop.f32.mrf.mxu0
    %v4441 = vadd.f32 %v3460, %v4440
    %v4442 = vpop.f32.mrf.mxu0
    %v4443 = vpop.f32.mrf.mxu0
    %v4444 = vpop.f32.mrf.mxu0
    %4445 = vdwg.mxu0
    %4446 = vmatprep.subr.bf16.mxu0 0
    %4447 = vmatpush1.bf16.msra.mxu0 0
    %4448 = vmatprep.subr.bf16.mxu0 0
    %4449 = vmatpush1.bf16.msra.mxu0 0
    %4450 = vmatprep.subr.bf16.mxu0 0
    %4451 = vmatpush1.bf16.msra.mxu0 0
    %4452 = vmatprep.subr.bf16.mxu0 0
    %4453 = vmatpush1.bf16.msra.mxu0 0
    %4454 = vmatprep.subr.bf16.mxu0 0
    %4455 = vmatpush1.bf16.msra.mxu0 0
    %4456 = vmatprep.subr.bf16.mxu0 0
    %4457 = vmatpush1.bf16.msra.mxu0 0
    %4458 = vmatprep.subr.bf16.mxu0 0
    %4459 = vmatpush1.bf16.msra.mxu0 %v3529
    %4460 = vmatprep.subr.bf16.mxu0 0
    %4461 = vmatpush1.bf16.msra.mxu0 %v3528
    %4462 = vmatprep.subr.bf16.mxu0 0
    %4463 = vmatpush2.bf16.msra.mxu0 0
    %4464 = vmatprep.subr.bf16.mxu0 0
    %4465 = vmatpush2.bf16.msra.mxu0 0
    %4466 = vmatprep.subr.bf16.mxu0 0
    %4467 = vmatpush2.bf16.msra.mxu0 0
    %4468 = vmatprep.subr.bf16.mxu0 0
    %4469 = vmatpush2.bf16.msra.mxu0 0
    %4470 = vmatprep.subr.bf16.mxu0 0
    %4471 = vmatpush2.bf16.msra.mxu0 0
    %4472 = vmatprep.subr.bf16.mxu0 0
    %4473 = vmatpush2.bf16.msra.mxu0 0
    %4474 = vmatprep.subr.bf16.mxu0 0
    %4475 = vmatpush2.bf16.msra.mxu0 0
    %4476 = vmatprep.subr.bf16.mxu0 0
    %4477 = vmatpush2.bf16.msra.mxu0 0
    %4478 = vmatprep.mubr.bf16.mxu0 0
    %4479 = vmatmul.mubr.bf16.gmra.mxu0 %v4364
    %v4480 = vpop.f32.mrf.mxu0
    %v4481 = vadd.f32 %v3518, %v4480
    %v4482 = vpop.f32.mrf.mxu0
    %v4483 = vpop.f32.mrf.mxu0
    %v4484 = vpop.f32.mrf.mxu0
    %4485 = vdwg.mxu0
    %s4486 = scalar_lea.vmem [#allocation2], 48
    %v4487 = vld [vmem:[%s4486] sm:$0xff]
    %v4488 = vadd.f32 %v4487, %v4401
    %v4489 = vxor.u32 %v4488, 2147483648
    %v4490 = vmul.f32 %v4489, 1.442695
    %v4491 = vpow.pop %v4490
    %v4492 = vadd.f32 %v4491, 1.0
    %v4493 = vrcp.pop %v4492
    %v4494 = vmul.f32 1.0, %v4493
    %s4495 = scalar_lea.vmem [#allocation2], 112
    %v4496 = vld [vmem:[%s4495] sm:$0xff]
    %v4497 = vadd.f32 %v4496, %v4441
    %v4498 = vxor.u32 %v4497, 2147483648
    %v4499 = vmul.f32 %v4498, 1.442695
    %v4500 = vpow.pop %v4499
    %v4501 = vadd.f32 %v4500, 1.0
    %v4502 = vrcp.pop %v4501
    %v4503 = vmul.f32 1.0, %v4502
    %s4504 = scalar_lea.vmem [#allocation2], 176
    %v4505 = vld [vmem:[%s4504] sm:$0xff]
    %v4506 = vmul.f32 %v4494, %v4481
    %v4507 = vadd.f32 %v4505, %v4506
    %v4508 = vtanh.pop %v4507
    %v4509 = vsub.f32 1.0, %v4503
    %v4510 = vmul.f32 %v4509, %v4508
    %v4511 = vmul.f32 %v4503, %v4359
    %v4512 = vadd.f32 %v4510, %v4511
    %s4513 = scalar_lea.vmem [#allocation3], 48
    %4514 = vst.msk [vmem:[%s4513] sm:$0xff] %vm458, %v4512
    %v4515 = vpack.c.bf16 %v4512, %v4512
    %v4517 = vsel %vm458, %v4515, 0
    %4519 = vmatprep.subr.bf16.mxu0 0
    %4520 = vmatpush1.bf16.msra.mxu0 0
    %4521 = vmatprep.subr.bf16.mxu0 0
    %4522 = vmatpush1.bf16.msra.mxu0 0
    %4523 = vmatprep.subr.bf16.mxu0 0
    %4524 = vmatpush1.bf16.msra.mxu0 0
    %4525 = vmatprep.subr.bf16.mxu0 0
    %4526 = vmatpush1.bf16.msra.mxu0 0
    %4527 = vmatprep.subr.bf16.mxu0 0
    %4528 = vmatpush1.bf16.msra.mxu0 0
    %4529 = vmatprep.subr.bf16.mxu0 0
    %4530 = vmatpush1.bf16.msra.mxu0 0
    %4531 = vmatprep.subr.bf16.mxu0 0
    %4532 = vmatpush1.bf16.msra.mxu0 %v3410
    %4533 = vmatprep.subr.bf16.mxu0 0
    %4534 = vmatpush1.bf16.msra.mxu0 %v3409
    %4535 = vmatprep.subr.bf16.mxu0 0
    %4536 = vmatpush2.bf16.msra.mxu0 0
    %4537 = vmatprep.subr.bf16.mxu0 0
    %4538 = vmatpush2.bf16.msra.mxu0 0
    %4539 = vmatprep.subr.bf16.mxu0 0
    %4540 = vmatpush2.bf16.msra.mxu0 0
    %4541 = vmatprep.subr.bf16.mxu0 0
    %4542 = vmatpush2.bf16.msra.mxu0 0
    %4543 = vmatprep.subr.bf16.mxu0 0
    %4544 = vmatpush2.bf16.msra.mxu0 0
    %4545 = vmatprep.subr.bf16.mxu0 0
    %4546 = vmatpush2.bf16.msra.mxu0 0
    %4547 = vmatprep.subr.bf16.mxu0 0
    %4548 = vmatpush2.bf16.msra.mxu0 0
    %4549 = vmatprep.subr.bf16.mxu0 0
    %4550 = vmatpush2.bf16.msra.mxu0 0
    %4551 = vmatprep.mubr.bf16.mxu0 0
    %4552 = vmatmul.mubr.bf16.gmra.mxu0 %v4517
    %v4553 = vpop.f32.mrf.mxu0
    %v4554 = vadd.f32 %v3399, %v4553
    %v4555 = vpop.f32.mrf.mxu0
    %v4556 = vpop.f32.mrf.mxu0
    %v4557 = vpop.f32.mrf.mxu0
    %4558 = vdwg.mxu0
    %4559 = vmatprep.subr.bf16.mxu0 0
    %4560 = vmatpush1.bf16.msra.mxu0 0
    %4561 = vmatprep.subr.bf16.mxu0 0
    %4562 = vmatpush1.bf16.msra.mxu0 0
    %4563 = vmatprep.subr.bf16.mxu0 0
    %4564 = vmatpush1.bf16.msra.mxu0 0
    %4565 = vmatprep.subr.bf16.mxu0 0
    %4566 = vmatpush1.bf16.msra.mxu0 0
    %4567 = vmatprep.subr.bf16.mxu0 0
    %4568 = vmatpush1.bf16.msra.mxu0 0
    %4569 = vmatprep.subr.bf16.mxu0 0
    %4570 = vmatpush1.bf16.msra.mxu0 0
    %4571 = vmatprep.subr.bf16.mxu0 0
    %4572 = vmatpush1.bf16.msra.mxu0 %v3471
    %4573 = vmatprep.subr.bf16.mxu0 0
    %4574 = vmatpush1.bf16.msra.mxu0 %v3470
    %4575 = vmatprep.subr.bf16.mxu0 0
    %4576 = vmatpush2.bf16.msra.mxu0 0
    %4577 = vmatprep.subr.bf16.mxu0 0
    %4578 = vmatpush2.bf16.msra.mxu0 0
    %4579 = vmatprep.subr.bf16.mxu0 0
    %4580 = vmatpush2.bf16.msra.mxu0 0
    %4581 = vmatprep.subr.bf16.mxu0 0
    %4582 = vmatpush2.bf16.msra.mxu0 0
    %4583 = vmatprep.subr.bf16.mxu0 0
    %4584 = vmatpush2.bf16.msra.mxu0 0
    %4585 = vmatprep.subr.bf16.mxu0 0
    %4586 = vmatpush2.bf16.msra.mxu0 0
    %4587 = vmatprep.subr.bf16.mxu0 0
    %4588 = vmatpush2.bf16.msra.mxu0 0
    %4589 = vmatprep.subr.bf16.mxu0 0
    %4590 = vmatpush2.bf16.msra.mxu0 0
    %4591 = vmatprep.mubr.bf16.mxu0 0
    %4592 = vmatmul.mubr.bf16.gmra.mxu0 %v4517
    %v4593 = vpop.f32.mrf.mxu0
    %v4594 = vadd.f32 %v3460, %v4593
    %v4595 = vpop.f32.mrf.mxu0
    %v4596 = vpop.f32.mrf.mxu0
    %v4597 = vpop.f32.mrf.mxu0
    %4598 = vdwg.mxu0
    %4599 = vmatprep.subr.bf16.mxu0 0
    %4600 = vmatpush1.bf16.msra.mxu0 0
    %4601 = vmatprep.subr.bf16.mxu0 0
    %4602 = vmatpush1.bf16.msra.mxu0 0
    %4603 = vmatprep.subr.bf16.mxu0 0
    %4604 = vmatpush1.bf16.msra.mxu0 0
    %4605 = vmatprep.subr.bf16.mxu0 0
    %4606 = vmatpush1.bf16.msra.mxu0 0
    %4607 = vmatprep.subr.bf16.mxu0 0
    %4608 = vmatpush1.bf16.msra.mxu0 0
    %4609 = vmatprep.subr.bf16.mxu0 0
    %4610 = vmatpush1.bf16.msra.mxu0 0
    %4611 = vmatprep.subr.bf16.mxu0 0
    %4612 = vmatpush1.bf16.msra.mxu0 %v3529
    %4613 = vmatprep.subr.bf16.mxu0 0
    %4614 = vmatpush1.bf16.msra.mxu0 %v3528
    %4615 = vmatprep.subr.bf16.mxu0 0
    %4616 = vmatpush2.bf16.msra.mxu0 0
    %4617 = vmatprep.subr.bf16.mxu0 0
    %4618 = vmatpush2.bf16.msra.mxu0 0
    %4619 = vmatprep.subr.bf16.mxu0 0
    %4620 = vmatpush2.bf16.msra.mxu0 0
    %4621 = vmatprep.subr.bf16.mxu0 0
    %4622 = vmatpush2.bf16.msra.mxu0 0
    %4623 = vmatprep.subr.bf16.mxu0 0
    %4624 = vmatpush2.bf16.msra.mxu0 0
    %4625 = vmatprep.subr.bf16.mxu0 0
    %4626 = vmatpush2.bf16.msra.mxu0 0
    %4627 = vmatprep.subr.bf16.mxu0 0
    %4628 = vmatpush2.bf16.msra.mxu0 0
    %4629 = vmatprep.subr.bf16.mxu0 0
    %4630 = vmatpush2.bf16.msra.mxu0 0
    %4631 = vmatprep.mubr.bf16.mxu0 0
    %4632 = vmatmul.mubr.bf16.gmra.mxu0 %v4517
    %v4633 = vpop.f32.mrf.mxu0
    %v4634 = vadd.f32 %v3518, %v4633
    %v4635 = vpop.f32.mrf.mxu0
    %v4636 = vpop.f32.mrf.mxu0
    %v4637 = vpop.f32.mrf.mxu0
    %4638 = vdwg.mxu0
    %s4639 = scalar_lea.vmem [#allocation2], 56
    %v4640 = vld [vmem:[%s4639] sm:$0xff]
    %v4641 = vadd.f32 %v4640, %v4554
    %v4642 = vxor.u32 %v4641, 2147483648
    %v4643 = vmul.f32 %v4642, 1.442695
    %v4644 = vpow.pop %v4643
    %v4645 = vadd.f32 %v4644, 1.0
    %v4646 = vrcp.pop %v4645
    %v4647 = vmul.f32 1.0, %v4646
    %s4648 = scalar_lea.vmem [#allocation2], 120
    %v4649 = vld [vmem:[%s4648] sm:$0xff]
    %v4650 = vadd.f32 %v4649, %v4594
    %v4651 = vxor.u32 %v4650, 2147483648
    %v4652 = vmul.f32 %v4651, 1.442695
    %v4653 = vpow.pop %v4652
    %v4654 = vadd.f32 %v4653, 1.0
    %v4655 = vrcp.pop %v4654
    %v4656 = vmul.f32 1.0, %v4655
    %s4657 = scalar_lea.vmem [#allocation2], 184
    %v4658 = vld [vmem:[%s4657] sm:$0xff]
    %v4659 = vmul.f32 %v4647, %v4634
    %v4660 = vadd.f32 %v4658, %v4659
    %v4661 = vtanh.pop %v4660
    %v4662 = vsub.f32 1.0, %v4656
    %v4663 = vmul.f32 %v4662, %v4661
    %v4664 = vmul.f32 %v4656, %v4512
    %v4665 = vadd.f32 %v4663, %v4664
    %s4666 = scalar_lea.vmem [#allocation3], 56
    %4667 = vst.msk [vmem:[%s4666] sm:$0xff] %vm458, %v4665
    %v4668 = vld [vmem:[#allocation3] sm:$0xff]
    %v4669 = vld [vmem:[#allocation3 + $0x8] sm:$0xff]
    %v4670 = vld [vmem:[#allocation3 + $0x10] sm:$0xff]
    %v4671 = vld [vmem:[#allocation3 + $0x18] sm:$0xff]
    %v4672 = vld [vmem:[#allocation3 + $0x20] sm:$0xff]
    %v4673 = vld [vmem:[#allocation3 + $0x28] sm:$0xff]
    %v4674 = vld [vmem:[#allocation3 + $0x30] sm:$0xff]
    %v4675 = vld [vmem:[#allocation3 + $0x38] sm:$0xff]
    %v4676 = vpack.c.bf16 %v4669, %v4668
    %v4677 = vpack.c.bf16 %v4671, %v4670
    %v4678 = vpack.c.bf16 %v4673, %v4672
    %v4679 = vpack.c.bf16 %v4675, %v4674
    %v4680 = vld [vmem:[#allocation27] sm:$0xf]
    %v4681 = vld [vmem:[#allocation27 + $0x4] sm:$0xf]
    %v4682 = vld [vmem:[#allocation27 + $0x8] sm:$0xf]
    %v4683 = vld [vmem:[#allocation27 + $0xc] sm:$0xf]
    %v4684 = vld [vmem:[#allocation30] sm:$0x1]
    %v4685 = vlaneseq
    %v4686 = vshrl.u32 %v4685, 7
    %v4687 = vsub.s32 0, %v4686
    %v4688 = vrot.slane %v4684, %v4687
    %v4693 = vunpack.c.l.b16 %v4680
    %v4694 = vunpack.c.l.b16 %v4681
    %v4695 = vunpack.c.l.b16 %v4682
    %v4696 = vunpack.c.l.b16 %v4683
    %v4697 = vpack.c.b16 %v4694, %v4693
    %v4698 = vpack.c.b16 %v4696, %v4695
    %v4702 = vsel %vm458, %v4676, 0
    %v4705 = vsel %vm458, %v4677, 0
    %v4708 = vsel %vm458, %v4678, 0
    %v4711 = vsel %vm458, %v4679, 0
    %4713 = vmatprep.subr.bf16.mxu0 0
    %4714 = vmatpush1.bf16.msra.mxu0 0
    %4715 = vmatprep.subr.bf16.mxu0 0
    %4716 = vmatpush1.bf16.msra.mxu0 0
    %4717 = vmatprep.subr.bf16.mxu0 0
    %4718 = vmatpush1.bf16.msra.mxu0 0
    %4719 = vmatprep.subr.bf16.mxu0 0
    %4720 = vmatpush1.bf16.msra.mxu0 0
    %4721 = vmatprep.subr.bf16.mxu0 0
    %4722 = vmatpush1.bf16.msra.mxu0 0
    %4723 = vmatprep.subr.bf16.mxu0 0
    %4724 = vmatpush1.bf16.msra.mxu0 0
    %4725 = vmatprep.subr.bf16.mxu0 0
    %4726 = vmatpush1.bf16.msra.mxu0 %v4698
    %4727 = vmatprep.subr.bf16.mxu0 0
    %4728 = vmatpush1.bf16.msra.mxu0 %v4697
    %4729 = vmatprep.subr.bf16.mxu0 0
    %4730 = vmatpush2.bf16.msra.mxu0 0
    %4731 = vmatprep.subr.bf16.mxu0 0
    %4732 = vmatpush2.bf16.msra.mxu0 0
    %4733 = vmatprep.subr.bf16.mxu0 0
    %4734 = vmatpush2.bf16.msra.mxu0 0
    %4735 = vmatprep.subr.bf16.mxu0 0
    %4736 = vmatpush2.bf16.msra.mxu0 0
    %4737 = vmatprep.subr.bf16.mxu0 0
    %4738 = vmatpush2.bf16.msra.mxu0 0
    %4739 = vmatprep.subr.bf16.mxu0 0
    %4740 = vmatpush2.bf16.msra.mxu0 0
    %4741 = vmatprep.subr.bf16.mxu0 0
    %4742 = vmatpush2.bf16.msra.mxu0 0
    %4743 = vmatprep.subr.bf16.mxu0 0
    %4744 = vmatpush2.bf16.msra.mxu0 0
    %4745 = vmatprep.mubr.bf16.mxu0 0
    %4746 = vmatmul.mubr.bf16.gmra.mxu0 %v4702
    %v4747 = vpop.f32.mrf.mxu0
    %v4748 = vadd.f32 %v4688, %v4747
    %v4749 = vpop.f32.mrf.mxu0
    %v4750 = vpop.f32.mrf.mxu0
    %v4751 = vadd.f32 %v4688, %v4750
    %v4752 = vpop.f32.mrf.mxu0
    %4753 = vmatprep.mubr.bf16.mxu0 0
    %4754 = vmatmul.mubr.bf16.gmra.mxu0 %v4705
    %v4755 = vpop.f32.mrf.mxu0
    %v4756 = vadd.f32 %v4688, %v4755
    %v4757 = vpop.f32.mrf.mxu0
    %v4758 = vpop.f32.mrf.mxu0
    %v4759 = vadd.f32 %v4688, %v4758
    %v4760 = vpop.f32.mrf.mxu0
    %4761 = vmatprep.mubr.bf16.mxu0 0
    %4762 = vmatmul.mubr.bf16.gmra.mxu0 %v4708
    %v4763 = vpop.f32.mrf.mxu0
    %v4764 = vadd.f32 %v4688, %v4763
    %v4765 = vpop.f32.mrf.mxu0
    %v4766 = vpop.f32.mrf.mxu0
    %v4767 = vadd.f32 %v4688, %v4766
    %v4768 = vpop.f32.mrf.mxu0
    %4769 = vmatprep.mubr.bf16.mxu0 0
    %4770 = vmatmul.mubr.bf16.gmra.mxu0 %v4711
    %v4771 = vpop.f32.mrf.mxu0
    %v4772 = vadd.f32 %v4688, %v4771
    %v4773 = vpop.f32.mrf.mxu0
    %v4774 = vpop.f32.mrf.mxu0
    %v4775 = vadd.f32 %v4688, %v4774
    %v4776 = vpop.f32.mrf.mxu0
    %4777 = vdwg.mxu0
    %v4778 = vld [vmem:[#allocation31] sm:$0x1]
    %v4779 = vld [vmem:[#allocation33] sm:$0x1]
    %v4780 = vsel %vm458, %v4748, 0.0
    %4781 = vadd.xlane.f32.xlu0 %v4780
    %v4782 = vpop.xlane.xlu0 %4781
    %v4783 = vsel %vm458, %v4751, 0.0
    %4784 = vadd.xlane.f32.xlu0 %v4783
    %v4785 = vpop.xlane.xlu0 %4784
    %v4786 = vsel %vm458, %v4756, 0.0
    %4787 = vadd.xlane.f32.xlu0 %v4786
    %v4788 = vpop.xlane.xlu0 %4787
    %v4789 = vsel %vm458, %v4759, 0.0
    %4790 = vadd.xlane.f32.xlu0 %v4789
    %v4791 = vpop.xlane.xlu0 %4790
    %v4792 = vsel %vm458, %v4764, 0.0
    %4793 = vadd.xlane.f32.xlu0 %v4792
    %v4794 = vpop.xlane.xlu0 %4793
    %v4795 = vsel %vm458, %v4767, 0.0
    %4796 = vadd.xlane.f32.xlu0 %v4795
    %v4797 = vpop.xlane.xlu0 %4796
    %v4798 = vsel %vm458, %v4772, 0.0
    %4799 = vadd.xlane.f32.xlu0 %v4798
    %v4800 = vpop.xlane.xlu0 %4799
    %v4801 = vsel %vm458, %v4775, 0.0
    %4802 = vadd.xlane.f32.xlu0 %v4801
    %v4803 = vpop.xlane.xlu0 %4802
    %v4804 = vmul.f32 %v4782, %v483
    %v4805 = vmul.f32 %v4785, %v483
    %v4806 = vmul.f32 %v4788, %v483
    %v4807 = vmul.f32 %v4791, %v483
    %v4808 = vmul.f32 %v4794, %v483
    %v4809 = vmul.f32 %v4797, %v483
    %v4810 = vmul.f32 %v4800, %v483
    %v4811 = vmul.f32 %v4803, %v483
    %v4812 = vsub.f32 %v4748, %v4804
    %v4813 = vsub.f32 %v4751, %v4805
    %v4814 = vsub.f32 %v4756, %v4806
    %v4815 = vsub.f32 %v4759, %v4807
    %v4816 = vsub.f32 %v4764, %v4808
    %v4817 = vsub.f32 %v4767, %v4809
    %v4818 = vsub.f32 %v4772, %v4810
    %v4819 = vsub.f32 %v4775, %v4811
    %v4820 = vmul.f32 %v4812, %v4812
    %v4821 = vmul.f32 %v4813, %v4813
    %v4822 = vmul.f32 %v4814, %v4814
    %v4823 = vmul.f32 %v4815, %v4815
    %v4824 = vmul.f32 %v4816, %v4816
    %v4825 = vmul.f32 %v4817, %v4817
    %v4826 = vmul.f32 %v4818, %v4818
    %v4827 = vmul.f32 %v4819, %v4819
    %v4828 = vsel %vm458, %v4820, 0.0
    %4829 = vadd.xlane.f32.xlu0 %v4828
    %v4830 = vpop.xlane.xlu0 %4829
    %v4831 = vsel %vm458, %v4821, 0.0
    %4832 = vadd.xlane.f32.xlu0 %v4831
    %v4833 = vpop.xlane.xlu0 %4832
    %v4834 = vsel %vm458, %v4822, 0.0
    %4835 = vadd.xlane.f32.xlu0 %v4834
    %v4836 = vpop.xlane.xlu0 %4835
    %v4837 = vsel %vm458, %v4823, 0.0
    %4838 = vadd.xlane.f32.xlu0 %v4837
    %v4839 = vpop.xlane.xlu0 %4838
    %v4840 = vsel %vm458, %v4824, 0.0
    %4841 = vadd.xlane.f32.xlu0 %v4840
    %v4842 = vpop.xlane.xlu0 %4841
    %v4843 = vsel %vm458, %v4825, 0.0
    %4844 = vadd.xlane.f32.xlu0 %v4843
    %v4845 = vpop.xlane.xlu0 %4844
    %v4846 = vsel %vm458, %v4826, 0.0
    %4847 = vadd.xlane.f32.xlu0 %v4846
    %v4848 = vpop.xlane.xlu0 %4847
    %v4849 = vsel %vm458, %v4827, 0.0
    %4850 = vadd.xlane.f32.xlu0 %v4849
    %v4851 = vpop.xlane.xlu0 %4850
    %v4852 = vmul.f32 %v4830, %v483
    %v4853 = vmul.f32 %v4833, %v483
    %v4854 = vmul.f32 %v4836, %v483
    %v4855 = vmul.f32 %v4839, %v483
    %v4856 = vmul.f32 %v4842, %v483
    %v4857 = vmul.f32 %v4845, %v483
    %v4858 = vmul.f32 %v4848, %v483
    %v4859 = vmul.f32 %v4851, %v483
    %v4860 = vadd.f32 %v4852, 1e-05
    %v4861 = vadd.f32 %v4853, 1e-05
    %v4862 = vadd.f32 %v4854, 1e-05
    %v4863 = vadd.f32 %v4855, 1e-05
    %v4864 = vadd.f32 %v4856, 1e-05
    %v4865 = vadd.f32 %v4857, 1e-05
    %v4866 = vadd.f32 %v4858, 1e-05
    %v4867 = vadd.f32 %v4859, 1e-05
    %v4868 = vrsqrt.pop %v4860
    %v4869 = vrsqrt.pop %v4861
    %v4870 = vrsqrt.pop %v4862
    %v4871 = vrsqrt.pop %v4863
    %v4872 = vrsqrt.pop %v4864
    %v4873 = vrsqrt.pop %v4865
    %v4874 = vrsqrt.pop %v4866
    %v4875 = vrsqrt.pop %v4867
    %v4876 = vmul.f32 %v4812, %v4868
    %v4877 = vmul.f32 %v4813, %v4869
    %v4878 = vmul.f32 %v4814, %v4870
    %v4879 = vmul.f32 %v4815, %v4871
    %v4880 = vmul.f32 %v4816, %v4872
    %v4881 = vmul.f32 %v4817, %v4873
    %v4882 = vmul.f32 %v4818, %v4874
    %v4883 = vmul.f32 %v4819, %v4875
    %v4884 = vlaneseq
    %v4885 = vshrl.u32 %v4884, 7
    %v4886 = vsub.s32 0, %v4885
    %v4887 = vrot.slane %v4778, %v4886
    %v4888 = vmul.f32 %v4876, %v4887
    %v4889 = vmul.f32 %v4877, %v4887
    %v4890 = vmul.f32 %v4878, %v4887
    %v4891 = vmul.f32 %v4879, %v4887
    %v4892 = vmul.f32 %v4880, %v4887
    %v4893 = vmul.f32 %v4881, %v4887
    %v4894 = vmul.f32 %v4882, %v4887
    %v4895 = vmul.f32 %v4883, %v4887
    %v4896 = vlaneseq
    %v4897 = vshrl.u32 %v4896, 7
    %v4898 = vsub.s32 0, %v4897
    %v4899 = vrot.slane %v4779, %v4898
    %v4900 = vadd.f32 %v4888, %v4899
    %v4901 = vadd.f32 %v4889, %v4899
    %v4902 = vadd.f32 %v4890, %v4899
    %v4903 = vadd.f32 %v4891, %v4899
    %v4904 = vadd.f32 %v4892, %v4899
    %v4905 = vadd.f32 %v4893, %v4899
    %v4906 = vadd.f32 %v4894, %v4899
    %v4907 = vadd.f32 %v4895, %v4899
    %v4908 = vmax.f32 %v4900, 0.0
    %v4909 = vmax.f32 %v4901, 0.0
    %v4910 = vmax.f32 %v4902, 0.0
    %v4911 = vmax.f32 %v4903, 0.0
    %v4912 = vmax.f32 %v4904, 0.0
    %v4913 = vmax.f32 %v4905, 0.0
    %v4914 = vmax.f32 %v4906, 0.0
    %v4915 = vmax.f32 %v4907, 0.0
    %v4916 = vpack.c.bf16 %v4909, %v4908
    %v4917 = vpack.c.bf16 %v4911, %v4910
    %v4918 = vpack.c.bf16 %v4913, %v4912
    %v4919 = vpack.c.bf16 %v4915, %v4914
    %v4920 = vld [vmem:[#allocation28] sm:$0xf]
    %v4921 = vld [vmem:[#allocation28 + $0x4] sm:$0xf]
    %v4922 = vld [vmem:[#allocation28 + $0x8] sm:$0xf]
    %v4923 = vld [vmem:[#allocation28 + $0xc] sm:$0xf]
    %v4924 = vld [vmem:[#allocation30 + $0x1] sm:$0x1]
    %v4925 = vlaneseq
    %v4926 = vshrl.u32 %v4925, 7
    %v4927 = vsub.s32 0, %v4926
    %v4928 = vrot.slane %v4924, %v4927
    %v4933 = vunpack.c.l.b16 %v4920
    %v4934 = vunpack.c.l.b16 %v4921
    %v4935 = vunpack.c.l.b16 %v4922
    %v4936 = vunpack.c.l.b16 %v4923
    %v4937 = vpack.c.b16 %v4934, %v4933
    %v4938 = vpack.c.b16 %v4936, %v4935
    %v4942 = vsel %vm458, %v4916, 0
    %v4945 = vsel %vm458, %v4917, 0
    %v4948 = vsel %vm458, %v4918, 0
    %v4951 = vsel %vm458, %v4919, 0
    %4953 = vmatprep.subr.bf16.mxu0 0
    %4954 = vmatpush1.bf16.msra.mxu0 0
    %4955 = vmatprep.subr.bf16.mxu0 0
    %4956 = vmatpush1.bf16.msra.mxu0 0
    %4957 = vmatprep.subr.bf16.mxu0 0
    %4958 = vmatpush1.bf16.msra.mxu0 0
    %4959 = vmatprep.subr.bf16.mxu0 0
    %4960 = vmatpush1.bf16.msra.mxu0 0
    %4961 = vmatprep.subr.bf16.mxu0 0
    %4962 = vmatpush1.bf16.msra.mxu0 0
    %4963 = vmatprep.subr.bf16.mxu0 0
    %4964 = vmatpush1.bf16.msra.mxu0 0
    %4965 = vmatprep.subr.bf16.mxu0 0
    %4966 = vmatpush1.bf16.msra.mxu0 %v4938
    %4967 = vmatprep.subr.bf16.mxu0 0
    %4968 = vmatpush1.bf16.msra.mxu0 %v4937
    %4969 = vmatprep.subr.bf16.mxu0 0
    %4970 = vmatpush2.bf16.msra.mxu0 0
    %4971 = vmatprep.subr.bf16.mxu0 0
    %4972 = vmatpush2.bf16.msra.mxu0 0
    %4973 = vmatprep.subr.bf16.mxu0 0
    %4974 = vmatpush2.bf16.msra.mxu0 0
    %4975 = vmatprep.subr.bf16.mxu0 0
    %4976 = vmatpush2.bf16.msra.mxu0 0
    %4977 = vmatprep.subr.bf16.mxu0 0
    %4978 = vmatpush2.bf16.msra.mxu0 0
    %4979 = vmatprep.subr.bf16.mxu0 0
    %4980 = vmatpush2.bf16.msra.mxu0 0
    %4981 = vmatprep.subr.bf16.mxu0 0
    %4982 = vmatpush2.bf16.msra.mxu0 0
    %4983 = vmatprep.subr.bf16.mxu0 0
    %4984 = vmatpush2.bf16.msra.mxu0 0
    %4985 = vmatprep.mubr.bf16.mxu0 0
    %4986 = vmatmul.mubr.bf16.gmra.mxu0 %v4942
    %v4987 = vpop.f32.mrf.mxu0
    %v4988 = vadd.f32 %v4928, %v4987
    %v4989 = vpop.f32.mrf.mxu0
    %v4990 = vpop.f32.mrf.mxu0
    %v4991 = vadd.f32 %v4928, %v4990
    %v4992 = vpop.f32.mrf.mxu0
    %4993 = vmatprep.mubr.bf16.mxu0 0
    %4994 = vmatmul.mubr.bf16.gmra.mxu0 %v4945
    %v4995 = vpop.f32.mrf.mxu0
    %v4996 = vadd.f32 %v4928, %v4995
    %v4997 = vpop.f32.mrf.mxu0
    %v4998 = vpop.f32.mrf.mxu0
    %v4999 = vadd.f32 %v4928, %v4998
    %v5000 = vpop.f32.mrf.mxu0
    %5001 = vmatprep.mubr.bf16.mxu0 0
    %5002 = vmatmul.mubr.bf16.gmra.mxu0 %v4948
    %v5003 = vpop.f32.mrf.mxu0
    %v5004 = vadd.f32 %v4928, %v5003
    %v5005 = vpop.f32.mrf.mxu0
    %v5006 = vpop.f32.mrf.mxu0
    %v5007 = vadd.f32 %v4928, %v5006
    %v5008 = vpop.f32.mrf.mxu0
    %5009 = vmatprep.mubr.bf16.mxu0 0
    %5010 = vmatmul.mubr.bf16.gmra.mxu0 %v4951
    %v5011 = vpop.f32.mrf.mxu0
    %v5012 = vadd.f32 %v4928, %v5011
    %v5013 = vpop.f32.mrf.mxu0
    %v5014 = vpop.f32.mrf.mxu0
    %v5015 = vadd.f32 %v4928, %v5014
    %v5016 = vpop.f32.mrf.mxu0
    %5017 = vdwg.mxu0
    %v5018 = vld [vmem:[#allocation31 + $0x1] sm:$0x1]
    %v5019 = vld [vmem:[#allocation33 + $0x1] sm:$0x1]
    %v5020 = vsel %vm458, %v4988, 0.0
    %5021 = vadd.xlane.f32.xlu0 %v5020
    %v5022 = vpop.xlane.xlu0 %5021
    %v5023 = vsel %vm458, %v4991, 0.0
    %5024 = vadd.xlane.f32.xlu0 %v5023
    %v5025 = vpop.xlane.xlu0 %5024
    %v5026 = vsel %vm458, %v4996, 0.0
    %5027 = vadd.xlane.f32.xlu0 %v5026
    %v5028 = vpop.xlane.xlu0 %5027
    %v5029 = vsel %vm458, %v4999, 0.0
    %5030 = vadd.xlane.f32.xlu0 %v5029
    %v5031 = vpop.xlane.xlu0 %5030
    %v5032 = vsel %vm458, %v5004, 0.0
    %5033 = vadd.xlane.f32.xlu0 %v5032
    %v5034 = vpop.xlane.xlu0 %5033
    %v5035 = vsel %vm458, %v5007, 0.0
    %5036 = vadd.xlane.f32.xlu0 %v5035
    %v5037 = vpop.xlane.xlu0 %5036
    %v5038 = vsel %vm458, %v5012, 0.0
    %5039 = vadd.xlane.f32.xlu0 %v5038
    %v5040 = vpop.xlane.xlu0 %5039
    %v5041 = vsel %vm458, %v5015, 0.0
    %5042 = vadd.xlane.f32.xlu0 %v5041
    %v5043 = vpop.xlane.xlu0 %5042
    %v5044 = vmul.f32 %v5022, %v483
    %v5045 = vmul.f32 %v5025, %v483
    %v5046 = vmul.f32 %v5028, %v483
    %v5047 = vmul.f32 %v5031, %v483
    %v5048 = vmul.f32 %v5034, %v483
    %v5049 = vmul.f32 %v5037, %v483
    %v5050 = vmul.f32 %v5040, %v483
    %v5051 = vmul.f32 %v5043, %v483
    %v5052 = vsub.f32 %v4988, %v5044
    %v5053 = vsub.f32 %v4991, %v5045
    %v5054 = vsub.f32 %v4996, %v5046
    %v5055 = vsub.f32 %v4999, %v5047
    %v5056 = vsub.f32 %v5004, %v5048
    %v5057 = vsub.f32 %v5007, %v5049
    %v5058 = vsub.f32 %v5012, %v5050
    %v5059 = vsub.f32 %v5015, %v5051
    %v5060 = vmul.f32 %v5052, %v5052
    %v5061 = vmul.f32 %v5053, %v5053
    %v5062 = vmul.f32 %v5054, %v5054
    %v5063 = vmul.f32 %v5055, %v5055
    %v5064 = vmul.f32 %v5056, %v5056
    %v5065 = vmul.f32 %v5057, %v5057
    %v5066 = vmul.f32 %v5058, %v5058
    %v5067 = vmul.f32 %v5059, %v5059
    %v5068 = vsel %vm458, %v5060, 0.0
    %5069 = vadd.xlane.f32.xlu0 %v5068
    %v5070 = vpop.xlane.xlu0 %5069
    %v5071 = vsel %vm458, %v5061, 0.0
    %5072 = vadd.xlane.f32.xlu0 %v5071
    %v5073 = vpop.xlane.xlu0 %5072
    %v5074 = vsel %vm458, %v5062, 0.0
    %5075 = vadd.xlane.f32.xlu0 %v5074
    %v5076 = vpop.xlane.xlu0 %5075
    %v5077 = vsel %vm458, %v5063, 0.0
    %5078 = vadd.xlane.f32.xlu0 %v5077
    %v5079 = vpop.xlane.xlu0 %5078
    %v5080 = vsel %vm458, %v5064, 0.0
    %5081 = vadd.xlane.f32.xlu0 %v5080
    %v5082 = vpop.xlane.xlu0 %5081
    %v5083 = vsel %vm458, %v5065, 0.0
    %5084 = vadd.xlane.f32.xlu0 %v5083
    %v5085 = vpop.xlane.xlu0 %5084
    %v5086 = vsel %vm458, %v5066, 0.0
    %5087 = vadd.xlane.f32.xlu0 %v5086
    %v5088 = vpop.xlane.xlu0 %5087
    %v5089 = vsel %vm458, %v5067, 0.0
    %5090 = vadd.xlane.f32.xlu0 %v5089
    %v5091 = vpop.xlane.xlu0 %5090
    %v5092 = vmul.f32 %v5070, %v483
    %v5093 = vmul.f32 %v5073, %v483
    %v5094 = vmul.f32 %v5076, %v483
    %v5095 = vmul.f32 %v5079, %v483
    %v5096 = vmul.f32 %v5082, %v483
    %v5097 = vmul.f32 %v5085, %v483
    %v5098 = vmul.f32 %v5088, %v483
    %v5099 = vmul.f32 %v5091, %v483
    %v5100 = vadd.f32 %v5092, 1e-05
    %v5101 = vadd.f32 %v5093, 1e-05
    %v5102 = vadd.f32 %v5094, 1e-05
    %v5103 = vadd.f32 %v5095, 1e-05
    %v5104 = vadd.f32 %v5096, 1e-05
    %v5105 = vadd.f32 %v5097, 1e-05
    %v5106 = vadd.f32 %v5098, 1e-05
    %v5107 = vadd.f32 %v5099, 1e-05
    %v5108 = vrsqrt.pop %v5100
    %v5109 = vrsqrt.pop %v5101
    %v5110 = vrsqrt.pop %v5102
    %v5111 = vrsqrt.pop %v5103
    %v5112 = vrsqrt.pop %v5104
    %v5113 = vrsqrt.pop %v5105
    %v5114 = vrsqrt.pop %v5106
    %v5115 = vrsqrt.pop %v5107
    %v5116 = vmul.f32 %v5052, %v5108
    %v5117 = vmul.f32 %v5053, %v5109
    %v5118 = vmul.f32 %v5054, %v5110
    %v5119 = vmul.f32 %v5055, %v5111
    %v5120 = vmul.f32 %v5056, %v5112
    %v5121 = vmul.f32 %v5057, %v5113
    %v5122 = vmul.f32 %v5058, %v5114
    %v5123 = vmul.f32 %v5059, %v5115
    %v5124 = vlaneseq
    %v5125 = vshrl.u32 %v5124, 7
    %v5126 = vsub.s32 0, %v5125
    %v5127 = vrot.slane %v5018, %v5126
    %v5128 = vmul.f32 %v5116, %v5127
    %v5129 = vmul.f32 %v5117, %v5127
    %v5130 = vmul.f32 %v5118, %v5127
    %v5131 = vmul.f32 %v5119, %v5127
    %v5132 = vmul.f32 %v5120, %v5127
    %v5133 = vmul.f32 %v5121, %v5127
    %v5134 = vmul.f32 %v5122, %v5127
    %v5135 = vmul.f32 %v5123, %v5127
    %v5136 = vlaneseq
    %v5137 = vshrl.u32 %v5136, 7
    %v5138 = vsub.s32 0, %v5137
    %v5139 = vrot.slane %v5019, %v5138
    %v5140 = vadd.f32 %v5128, %v5139
    %v5141 = vadd.f32 %v5129, %v5139
    %v5142 = vadd.f32 %v5130, %v5139
    %v5143 = vadd.f32 %v5131, %v5139
    %v5144 = vadd.f32 %v5132, %v5139
    %v5145 = vadd.f32 %v5133, %v5139
    %v5146 = vadd.f32 %v5134, %v5139
    %v5147 = vadd.f32 %v5135, %v5139
    %v5148 = vmax.f32 %v5140, 0.0
    %v5149 = vmax.f32 %v5141, 0.0
    %v5150 = vmax.f32 %v5142, 0.0
    %v5151 = vmax.f32 %v5143, 0.0
    %v5152 = vmax.f32 %v5144, 0.0
    %v5153 = vmax.f32 %v5145, 0.0
    %v5154 = vmax.f32 %v5146, 0.0
    %v5155 = vmax.f32 %v5147, 0.0
    %v5156 = vpack.c.bf16 %v5149, %v5148
    %v5157 = vpack.c.bf16 %v5151, %v5150
    %v5158 = vpack.c.bf16 %v5153, %v5152
    %v5159 = vpack.c.bf16 %v5155, %v5154
    %s5160 = scalar_lea.vmem [#allocation28], 16
    %v5161 = vld [vmem:[%s5160] sm:$0xf]
    %v5162 = vld [vmem:[%s5160 + $0x4] sm:$0xf]
    %v5163 = vld [vmem:[%s5160 + $0x8] sm:$0xf]
    %v5164 = vld [vmem:[%s5160 + $0xc] sm:$0xf]
    %v5165 = vld [vmem:[#allocation30 + $0x2] sm:$0x1]
    %v5166 = vlaneseq
    %v5167 = vshrl.u32 %v5166, 7
    %v5168 = vsub.s32 0, %v5167
    %v5169 = vrot.slane %v5165, %v5168
    %v5174 = vunpack.c.l.b16 %v5161
    %v5175 = vunpack.c.l.b16 %v5162
    %v5176 = vunpack.c.l.b16 %v5163
    %v5177 = vunpack.c.l.b16 %v5164
    %v5178 = vpack.c.b16 %v5175, %v5174
    %v5179 = vpack.c.b16 %v5177, %v5176
    %v5183 = vsel %vm458, %v5156, 0
    %v5186 = vsel %vm458, %v5157, 0
    %v5189 = vsel %vm458, %v5158, 0
    %v5192 = vsel %vm458, %v5159, 0
    %5194 = vmatprep.subr.bf16.mxu0 0
    %5195 = vmatpush1.bf16.msra.mxu0 0
    %5196 = vmatprep.subr.bf16.mxu0 0
    %5197 = vmatpush1.bf16.msra.mxu0 0
    %5198 = vmatprep.subr.bf16.mxu0 0
    %5199 = vmatpush1.bf16.msra.mxu0 0
    %5200 = vmatprep.subr.bf16.mxu0 0
    %5201 = vmatpush1.bf16.msra.mxu0 0
    %5202 = vmatprep.subr.bf16.mxu0 0
    %5203 = vmatpush1.bf16.msra.mxu0 0
    %5204 = vmatprep.subr.bf16.mxu0 0
    %5205 = vmatpush1.bf16.msra.mxu0 0
    %5206 = vmatprep.subr.bf16.mxu0 0
    %5207 = vmatpush1.bf16.msra.mxu0 %v5179
    %5208 = vmatprep.subr.bf16.mxu0 0
    %5209 = vmatpush1.bf16.msra.mxu0 %v5178
    %5210 = vmatprep.subr.bf16.mxu0 0
    %5211 = vmatpush2.bf16.msra.mxu0 0
    %5212 = vmatprep.subr.bf16.mxu0 0
    %5213 = vmatpush2.bf16.msra.mxu0 0
    %5214 = vmatprep.subr.bf16.mxu0 0
    %5215 = vmatpush2.bf16.msra.mxu0 0
    %5216 = vmatprep.subr.bf16.mxu0 0
    %5217 = vmatpush2.bf16.msra.mxu0 0
    %5218 = vmatprep.subr.bf16.mxu0 0
    %5219 = vmatpush2.bf16.msra.mxu0 0
    %5220 = vmatprep.subr.bf16.mxu0 0
    %5221 = vmatpush2.bf16.msra.mxu0 0
    %5222 = vmatprep.subr.bf16.mxu0 0
    %5223 = vmatpush2.bf16.msra.mxu0 0
    %5224 = vmatprep.subr.bf16.mxu0 0
    %5225 = vmatpush2.bf16.msra.mxu0 0
    %5226 = vmatprep.mubr.bf16.mxu0 0
    %5227 = vmatmul.mubr.bf16.gmra.mxu0 %v5183
    %v5228 = vpop.f32.mrf.mxu0
    %v5229 = vadd.f32 %v5169, %v5228
    %v5230 = vpop.f32.mrf.mxu0
    %v5231 = vpop.f32.mrf.mxu0
    %v5232 = vadd.f32 %v5169, %v5231
    %v5233 = vpop.f32.mrf.mxu0
    %5234 = vmatprep.mubr.bf16.mxu0 0
    %5235 = vmatmul.mubr.bf16.gmra.mxu0 %v5186
    %v5236 = vpop.f32.mrf.mxu0
    %v5237 = vadd.f32 %v5169, %v5236
    %v5238 = vpop.f32.mrf.mxu0
    %v5239 = vpop.f32.mrf.mxu0
    %v5240 = vadd.f32 %v5169, %v5239
    %v5241 = vpop.f32.mrf.mxu0
    %5242 = vmatprep.mubr.bf16.mxu0 0
    %5243 = vmatmul.mubr.bf16.gmra.mxu0 %v5189
    %v5244 = vpop.f32.mrf.mxu0
    %v5245 = vadd.f32 %v5169, %v5244
    %v5246 = vpop.f32.mrf.mxu0
    %v5247 = vpop.f32.mrf.mxu0
    %v5248 = vadd.f32 %v5169, %v5247
    %v5249 = vpop.f32.mrf.mxu0
    %5250 = vmatprep.mubr.bf16.mxu0 0
    %5251 = vmatmul.mubr.bf16.gmra.mxu0 %v5192
    %v5252 = vpop.f32.mrf.mxu0
    %v5253 = vadd.f32 %v5169, %v5252
    %v5254 = vpop.f32.mrf.mxu0
    %v5255 = vpop.f32.mrf.mxu0
    %v5256 = vadd.f32 %v5169, %v5255
    %v5257 = vpop.f32.mrf.mxu0
    %5258 = vdwg.mxu0
    %v5259 = vld [vmem:[#allocation31 + $0x2] sm:$0x1]
    %v5260 = vld [vmem:[#allocation33 + $0x2] sm:$0x1]
    %v5261 = vsel %vm458, %v5229, 0.0
    %5262 = vadd.xlane.f32.xlu0 %v5261
    %v5263 = vpop.xlane.xlu0 %5262
    %v5264 = vsel %vm458, %v5232, 0.0
    %5265 = vadd.xlane.f32.xlu0 %v5264
    %v5266 = vpop.xlane.xlu0 %5265
    %v5267 = vsel %vm458, %v5237, 0.0
    %5268 = vadd.xlane.f32.xlu0 %v5267
    %v5269 = vpop.xlane.xlu0 %5268
    %v5270 = vsel %vm458, %v5240, 0.0
    %5271 = vadd.xlane.f32.xlu0 %v5270
    %v5272 = vpop.xlane.xlu0 %5271
    %v5273 = vsel %vm458, %v5245, 0.0
    %5274 = vadd.xlane.f32.xlu0 %v5273
    %v5275 = vpop.xlane.xlu0 %5274
    %v5276 = vsel %vm458, %v5248, 0.0
    %5277 = vadd.xlane.f32.xlu0 %v5276
    %v5278 = vpop.xlane.xlu0 %5277
    %v5279 = vsel %vm458, %v5253, 0.0
    %5280 = vadd.xlane.f32.xlu0 %v5279
    %v5281 = vpop.xlane.xlu0 %5280
    %v5282 = vsel %vm458, %v5256, 0.0
    %5283 = vadd.xlane.f32.xlu0 %v5282
    %v5284 = vpop.xlane.xlu0 %5283
    %v5285 = vmul.f32 %v5263, %v483
    %v5286 = vmul.f32 %v5266, %v483
    %v5287 = vmul.f32 %v5269, %v483
    %v5288 = vmul.f32 %v5272, %v483
    %v5289 = vmul.f32 %v5275, %v483
    %v5290 = vmul.f32 %v5278, %v483
    %v5291 = vmul.f32 %v5281, %v483
    %v5292 = vmul.f32 %v5284, %v483
    %v5293 = vsub.f32 %v5229, %v5285
    %v5294 = vsub.f32 %v5232, %v5286
    %v5295 = vsub.f32 %v5237, %v5287
    %v5296 = vsub.f32 %v5240, %v5288
    %v5297 = vsub.f32 %v5245, %v5289
    %v5298 = vsub.f32 %v5248, %v5290
    %v5299 = vsub.f32 %v5253, %v5291
    %v5300 = vsub.f32 %v5256, %v5292
    %v5301 = vmul.f32 %v5293, %v5293
    %v5302 = vmul.f32 %v5294, %v5294
    %v5303 = vmul.f32 %v5295, %v5295
    %v5304 = vmul.f32 %v5296, %v5296
    %v5305 = vmul.f32 %v5297, %v5297
    %v5306 = vmul.f32 %v5298, %v5298
    %v5307 = vmul.f32 %v5299, %v5299
    %v5308 = vmul.f32 %v5300, %v5300
    %v5309 = vsel %vm458, %v5301, 0.0
    %5310 = vadd.xlane.f32.xlu0 %v5309
    %v5311 = vpop.xlane.xlu0 %5310
    %v5312 = vsel %vm458, %v5302, 0.0
    %5313 = vadd.xlane.f32.xlu0 %v5312
    %v5314 = vpop.xlane.xlu0 %5313
    %v5315 = vsel %vm458, %v5303, 0.0
    %5316 = vadd.xlane.f32.xlu0 %v5315
    %v5317 = vpop.xlane.xlu0 %5316
    %v5318 = vsel %vm458, %v5304, 0.0
    %5319 = vadd.xlane.f32.xlu0 %v5318
    %v5320 = vpop.xlane.xlu0 %5319
    %v5321 = vsel %vm458, %v5305, 0.0
    %5322 = vadd.xlane.f32.xlu0 %v5321
    %v5323 = vpop.xlane.xlu0 %5322
    %v5324 = vsel %vm458, %v5306, 0.0
    %5325 = vadd.xlane.f32.xlu0 %v5324
    %v5326 = vpop.xlane.xlu0 %5325
    %v5327 = vsel %vm458, %v5307, 0.0
    %5328 = vadd.xlane.f32.xlu0 %v5327
    %v5329 = vpop.xlane.xlu0 %5328
    %v5330 = vsel %vm458, %v5308, 0.0
    %5331 = vadd.xlane.f32.xlu0 %v5330
    %v5332 = vpop.xlane.xlu0 %5331
    %v5333 = vmul.f32 %v5311, %v483
    %v5334 = vmul.f32 %v5314, %v483
    %v5335 = vmul.f32 %v5317, %v483
    %v5336 = vmul.f32 %v5320, %v483
    %v5337 = vmul.f32 %v5323, %v483
    %v5338 = vmul.f32 %v5326, %v483
    %v5339 = vmul.f32 %v5329, %v483
    %v5340 = vmul.f32 %v5332, %v483
    %v5341 = vadd.f32 %v5333, 1e-05
    %v5342 = vadd.f32 %v5334, 1e-05
    %v5343 = vadd.f32 %v5335, 1e-05
    %v5344 = vadd.f32 %v5336, 1e-05
    %v5345 = vadd.f32 %v5337, 1e-05
    %v5346 = vadd.f32 %v5338, 1e-05
    %v5347 = vadd.f32 %v5339, 1e-05
    %v5348 = vadd.f32 %v5340, 1e-05
    %v5349 = vrsqrt.pop %v5341
    %v5350 = vrsqrt.pop %v5342
    %v5351 = vrsqrt.pop %v5343
    %v5352 = vrsqrt.pop %v5344
    %v5353 = vrsqrt.pop %v5345
    %v5354 = vrsqrt.pop %v5346
    %v5355 = vrsqrt.pop %v5347
    %v5356 = vrsqrt.pop %v5348
    %v5357 = vmul.f32 %v5293, %v5349
    %v5358 = vmul.f32 %v5294, %v5350
    %v5359 = vmul.f32 %v5295, %v5351
    %v5360 = vmul.f32 %v5296, %v5352
    %v5361 = vmul.f32 %v5297, %v5353
    %v5362 = vmul.f32 %v5298, %v5354
    %v5363 = vmul.f32 %v5299, %v5355
    %v5364 = vmul.f32 %v5300, %v5356
    %v5365 = vlaneseq
    %v5366 = vshrl.u32 %v5365, 7
    %v5367 = vsub.s32 0, %v5366
    %v5368 = vrot.slane %v5259, %v5367
    %v5369 = vmul.f32 %v5357, %v5368
    %v5370 = vmul.f32 %v5358, %v5368
    %v5371 = vmul.f32 %v5359, %v5368
    %v5372 = vmul.f32 %v5360, %v5368
    %v5373 = vmul.f32 %v5361, %v5368
    %v5374 = vmul.f32 %v5362, %v5368
    %v5375 = vmul.f32 %v5363, %v5368
    %v5376 = vmul.f32 %v5364, %v5368
    %v5377 = vlaneseq
    %v5378 = vshrl.u32 %v5377, 7
    %v5379 = vsub.s32 0, %v5378
    %v5380 = vrot.slane %v5260, %v5379
    %v5381 = vadd.f32 %v5369, %v5380
    %v5382 = vadd.f32 %v5370, %v5380
    %v5383 = vadd.f32 %v5371, %v5380
    %v5384 = vadd.f32 %v5372, %v5380
    %v5385 = vadd.f32 %v5373, %v5380
    %v5386 = vadd.f32 %v5374, %v5380
    %v5387 = vadd.f32 %v5375, %v5380
    %v5388 = vadd.f32 %v5376, %v5380
    %v5389 = vmax.f32 %v5381, 0.0
    %v5390 = vmax.f32 %v5382, 0.0
    %v5391 = vmax.f32 %v5383, 0.0
    %v5392 = vmax.f32 %v5384, 0.0
    %v5393 = vmax.f32 %v5385, 0.0
    %v5394 = vmax.f32 %v5386, 0.0
    %v5395 = vmax.f32 %v5387, 0.0
    %v5396 = vmax.f32 %v5388, 0.0
    %v5397 = vpack.c.bf16 %v5390, %v5389
    %v5398 = vpack.c.bf16 %v5392, %v5391
    %v5399 = vpack.c.bf16 %v5394, %v5393
    %v5400 = vpack.c.bf16 %v5396, %v5395
    %v5401 = vld [vmem:[#allocation36] sm:$0xf]
    %v5402 = vld [vmem:[#allocation36 + $0x4] sm:$0xf]
    %v5403 = vld [vmem:[#allocation36 + $0x8] sm:$0xf]
    %v5404 = vld [vmem:[#allocation36 + $0xc] sm:$0xf]
    %v5405 = vld [vmem:[%s57] sm:$0x1]
    %v5407 = vlaneseq
    %v5408 = vshrl.u32 %v5407, 7
    %v5409 = vsub.s32 0, %v5408
    %v5410 = vrot.slane %v5405, %v5409
    %v5416 = vunpack.c.l.b16 %v5401
    %v5417 = vunpack.c.l.b16 %v5402
    %v5418 = vunpack.c.l.b16 %v5403
    %v5419 = vunpack.c.l.b16 %v5404
    %v5420 = vpack.c.b16 %v5417, %v5416
    %v5421 = vpack.c.b16 %v5419, %v5418
    %v5425 = vsel %vm458, %v5397, 0
    %v5428 = vsel %vm458, %v5398, 0
    %v5431 = vsel %vm458, %v5399, 0
    %v5434 = vsel %vm458, %v5400, 0
    %5436 = vmatprep.subr.bf16.mxu0 0
    %5437 = vmatpush1.bf16.msra.mxu0 0
    %5438 = vmatprep.subr.bf16.mxu0 0
    %5439 = vmatpush1.bf16.msra.mxu0 0
    %5440 = vmatprep.subr.bf16.mxu0 0
    %5441 = vmatpush1.bf16.msra.mxu0 0
    %5442 = vmatprep.subr.bf16.mxu0 0
    %5443 = vmatpush1.bf16.msra.mxu0 0
    %5444 = vmatprep.subr.bf16.mxu0 0
    %5445 = vmatpush1.bf16.msra.mxu0 0
    %5446 = vmatprep.subr.bf16.mxu0 0
    %5447 = vmatpush1.bf16.msra.mxu0 0
    %5448 = vmatprep.subr.bf16.mxu0 0
    %5449 = vmatpush1.bf16.msra.mxu0 %v5421
    %5450 = vmatprep.subr.bf16.mxu0 0
    %5451 = vmatpush1.bf16.msra.mxu0 %v5420
    %5452 = vmatprep.subr.bf16.mxu0 0
    %5453 = vmatpush2.bf16.msra.mxu0 0
    %5454 = vmatprep.subr.bf16.mxu0 0
    %5455 = vmatpush2.bf16.msra.mxu0 0
    %5456 = vmatprep.subr.bf16.mxu0 0
    %5457 = vmatpush2.bf16.msra.mxu0 0
    %5458 = vmatprep.subr.bf16.mxu0 0
    %5459 = vmatpush2.bf16.msra.mxu0 0
    %5460 = vmatprep.subr.bf16.mxu0 0
    %5461 = vmatpush2.bf16.msra.mxu0 0
    %5462 = vmatprep.subr.bf16.mxu0 0
    %5463 = vmatpush2.bf16.msra.mxu0 0
    %5464 = vmatprep.subr.bf16.mxu0 0
    %5465 = vmatpush2.bf16.msra.mxu0 0
    %5466 = vmatprep.subr.bf16.mxu0 0
    %5467 = vmatpush2.bf16.msra.mxu0 0
    %5468 = vmatprep.mubr.bf16.mxu0 0
    %5469 = vmatmul.mubr.bf16.gmra.mxu0 %v5425
    %v5470 = vpop.f32.mrf.mxu0
    %v5471 = vadd.f32 %v5410, %v5470
    %v5472 = vpop.f32.mrf.mxu0
    %v5473 = vpop.f32.mrf.mxu0
    %v5474 = vadd.f32 %v5410, %v5473
    %v5475 = vpop.f32.mrf.mxu0
    %5476 = vmatprep.mubr.bf16.mxu0 0
    %5477 = vmatmul.mubr.bf16.gmra.mxu0 %v5428
    %v5478 = vpop.f32.mrf.mxu0
    %v5479 = vadd.f32 %v5410, %v5478
    %v5480 = vpop.f32.mrf.mxu0
    %v5481 = vpop.f32.mrf.mxu0
    %v5482 = vadd.f32 %v5410, %v5481
    %v5483 = vpop.f32.mrf.mxu0
    %5484 = vmatprep.mubr.bf16.mxu0 0
    %5485 = vmatmul.mubr.bf16.gmra.mxu0 %v5431
    %v5486 = vpop.f32.mrf.mxu0
    %v5487 = vadd.f32 %v5410, %v5486
    %v5488 = vpop.f32.mrf.mxu0
    %v5489 = vpop.f32.mrf.mxu0
    %v5490 = vadd.f32 %v5410, %v5489
    %v5491 = vpop.f32.mrf.mxu0
    %5492 = vmatprep.mubr.bf16.mxu0 0
    %5493 = vmatmul.mubr.bf16.gmra.mxu0 %v5434
    %v5494 = vpop.f32.mrf.mxu0
    %v5495 = vadd.f32 %v5410, %v5494
    %v5496 = vpop.f32.mrf.mxu0
    %v5497 = vpop.f32.mrf.mxu0
    %v5498 = vadd.f32 %v5410, %v5497
    %v5499 = vpop.f32.mrf.mxu0
    %5500 = vdwg.mxu0
    %v5501 = vlaneseq
    %v5502 = vand.u32 %v5501, 127
    %vm5503 = vcmp.ge.f32.partialorder %v5471, 0.0
    %vm5504 = vcmp.ge.f32.partialorder %v5474, 0.0
    %vm5505 = vcmp.ge.f32.partialorder %v5479, 0.0
    %vm5506 = vcmp.ge.f32.partialorder %v5482, 0.0
    %vm5507 = vcmp.ge.f32.partialorder %v5487, 0.0
    %vm5508 = vcmp.ge.f32.partialorder %v5490, 0.0
    %vm5509 = vcmp.ge.f32.partialorder %v5495, 0.0
    %vm5510 = vcmp.ge.f32.partialorder %v5498, 0.0
    %v5511 = vsel %vm5503, 0.0, %v5471
    %v5512 = vsel %vm5504, 0.0, %v5474
    %v5513 = vsel %vm5505, 0.0, %v5479
    %v5514 = vsel %vm5506, 0.0, %v5482
    %v5515 = vsel %vm5507, 0.0, %v5487
    %v5516 = vsel %vm5508, 0.0, %v5490
    %v5517 = vsel %vm5509, 0.0, %v5495
    %v5518 = vsel %vm5510, 0.0, %v5498
    %v5519 = vand.u32 2147483647, %v5471
    %v5520 = vand.u32 2147483647, %v5474
    %v5521 = vand.u32 2147483647, %v5479
    %v5522 = vand.u32 2147483647, %v5482
    %v5523 = vand.u32 2147483647, %v5487
    %v5524 = vand.u32 2147483647, %v5490
    %v5525 = vand.u32 2147483647, %v5495
    %v5526 = vand.u32 2147483647, %v5498
    %v5527 = vsub.f32 0.0, %v5519
    %v5528 = vsub.f32 0.0, %v5520
    %v5529 = vsub.f32 0.0, %v5521
    %v5530 = vsub.f32 0.0, %v5522
    %v5531 = vsub.f32 0.0, %v5523
    %v5532 = vsub.f32 0.0, %v5524
    %v5533 = vsub.f32 0.0, %v5525
    %v5534 = vsub.f32 0.0, %v5526
    %v5535 = vmul.f32 %v5527, 1.442695
    %v5536 = vpow.pop %v5535
    %v5537 = vmul.f32 %v5528, 1.442695
    %v5538 = vpow.pop %v5537
    %v5539 = vmul.f32 %v5529, 1.442695
    %v5540 = vpow.pop %v5539
    %v5541 = vmul.f32 %v5530, 1.442695
    %v5542 = vpow.pop %v5541
    %v5543 = vmul.f32 %v5531, 1.442695
    %v5544 = vpow.pop %v5543
    %v5545 = vmul.f32 %v5532, 1.442695
    %v5546 = vpow.pop %v5545
    %v5547 = vmul.f32 %v5533, 1.442695
    %v5548 = vpow.pop %v5547
    %v5549 = vmul.f32 %v5534, 1.442695
    %v5550 = vpow.pop %v5549
    %v5551 = vadd.f32 %v5536, 1.0
    %v5552 = vadd.f32 %v5538, 1.0
    %v5553 = vadd.f32 %v5540, 1.0
    %v5554 = vadd.f32 %v5542, 1.0
    %v5555 = vadd.f32 %v5544, 1.0
    %v5556 = vadd.f32 %v5546, 1.0
    %v5557 = vadd.f32 %v5548, 1.0
    %v5558 = vadd.f32 %v5550, 1.0
    %v5559 = vlog2.pop %v5551
    %v5560 = vmul.f32 %v5559, 0.6931472
    %v5561 = vlog2.pop %v5552
    %v5562 = vmul.f32 %v5561, 0.6931472
    %v5563 = vlog2.pop %v5553
    %v5564 = vmul.f32 %v5563, 0.6931472
    %v5565 = vlog2.pop %v5554
    %v5566 = vmul.f32 %v5565, 0.6931472
    %v5567 = vlog2.pop %v5555
    %v5568 = vmul.f32 %v5567, 0.6931472
    %v5569 = vlog2.pop %v5556
    %v5570 = vmul.f32 %v5569, 0.6931472
    %v5571 = vlog2.pop %v5557
    %v5572 = vmul.f32 %v5571, 0.6931472
    %v5573 = vlog2.pop %v5558
    %v5574 = vmul.f32 %v5573, 0.6931472
    %v5575 = vsub.f32 %v5511, %v5560
    %v5576 = vsub.f32 %v5512, %v5562
    %v5577 = vsub.f32 %v5513, %v5564
    %v5578 = vsub.f32 %v5514, %v5566
    %v5579 = vsub.f32 %v5515, %v5568
    %v5580 = vsub.f32 %v5516, %v5570
    %v5581 = vsub.f32 %v5517, %v5572
    %v5582 = vsub.f32 %v5518, %v5574
    %v5583 = vmul.f32 %v5575, 2.3025851
    %v5584 = vmul.f32 %v5576, 2.3025851
    %v5585 = vmul.f32 %v5577, 2.3025851
    %v5586 = vmul.f32 %v5578, 2.3025851
    %v5587 = vmul.f32 %v5579, 2.3025851
    %v5588 = vmul.f32 %v5580, 2.3025851
    %v5589 = vmul.f32 %v5581, 2.3025851
    %v5590 = vmul.f32 %v5582, 2.3025851
    %v5591 = vmul.f32 %v5583, 1.442695
    %v5592 = vpow.pop %v5591
    %v5593 = vmul.f32 %v5584, 1.442695
    %v5594 = vpow.pop %v5593
    %v5595 = vmul.f32 %v5585, 1.442695
    %v5596 = vpow.pop %v5595
    %v5597 = vmul.f32 %v5586, 1.442695
    %v5598 = vpow.pop %v5597
    %v5599 = vmul.f32 %v5587, 1.442695
    %v5600 = vpow.pop %v5599
    %v5601 = vmul.f32 %v5588, 1.442695
    %v5602 = vpow.pop %v5601
    %v5603 = vmul.f32 %v5589, 1.442695
    %v5604 = vpow.pop %v5603
    %v5605 = vmul.f32 %v5590, 1.442695
    %v5606 = vpow.pop %v5605
    %v5607 = vmul.f32 %v5592, 2.0
    %v5608 = vmul.f32 %v5594, 2.0
    %v5609 = vmul.f32 %v5596, 2.0
    %v5610 = vmul.f32 %v5598, 2.0
    %v5611 = vmul.f32 %v5600, 2.0
    %v5612 = vmul.f32 %v5602, 2.0
    %v5613 = vmul.f32 %v5604, 2.0
    %v5614 = vmul.f32 %v5606, 2.0
    %v5615 = vadd.f32 %v5607, 1e-07
    %v5616 = vadd.f32 %v5608, 1e-07
    %v5617 = vadd.f32 %v5609, 1e-07
    %v5618 = vadd.f32 %v5610, 1e-07
    %v5619 = vadd.f32 %v5611, 1e-07
    %v5620 = vadd.f32 %v5612, 1e-07
    %v5621 = vadd.f32 %v5613, 1e-07
    %v5622 = vadd.f32 %v5614, 1e-07
    %vm5623 = vcmp.lt.s32.totalorder %v5502, 42
    %v5624 = vsel %vm5623, %v5615, %v5471
    %v5625 = vsel %vm5623, %v5616, %v5474
    %v5626 = vsel %vm5623, %v5617, %v5479
    %v5627 = vsel %vm5623, %v5618, %v5482
    %v5628 = vsel %vm5623, %v5619, %v5487
    %v5629 = vsel %vm5623, %v5620, %v5490
    %v5630 = vsel %vm5623, %v5621, %v5495
    %v5631 = vsel %vm5623, %v5622, %v5498
    %vm5632 = vcmp.ge.s32.totalorder %v5502, 1
    %vm5633 = vcmp.lt.s32.totalorder %v5502, 9
    %vm5634 = vmand %vm5632, %vm5633
    %v5635 = vsel %vm5634, %v5624, 0.0
    %v5636 = vsel %vm5634, %v5625, 0.0
    %v5637 = vsel %vm5634, %v5626, 0.0
    %v5638 = vsel %vm5634, %v5627, 0.0
    %v5639 = vsel %vm5634, %v5628, 0.0
    %v5640 = vsel %vm5634, %v5629, 0.0
    %v5641 = vsel %vm5634, %v5630, 0.0
    %v5642 = vsel %vm5634, %v5631, 0.0
    %5643 = vadd.xlane.f32.xlu0 %v5635
    %v5644 = vpop.xlane.xlu0 %5643
    %5645 = vadd.xlane.f32.xlu0 %v5636
    %v5646 = vpop.xlane.xlu0 %5645
    %5647 = vadd.xlane.f32.xlu0 %v5637
    %v5648 = vpop.xlane.xlu0 %5647
    %5649 = vadd.xlane.f32.xlu0 %v5638
    %v5650 = vpop.xlane.xlu0 %5649
    %5651 = vadd.xlane.f32.xlu0 %v5639
    %v5652 = vpop.xlane.xlu0 %5651
    %5653 = vadd.xlane.f32.xlu0 %v5640
    %v5654 = vpop.xlane.xlu0 %5653
    %5655 = vadd.xlane.f32.xlu0 %v5641
    %v5656 = vpop.xlane.xlu0 %5655
    %5657 = vadd.xlane.f32.xlu0 %v5642
    %v5658 = vpop.xlane.xlu0 %5657
    %v5659 = vrcp.pop %v5644
    %v5660 = vrcp.pop %v5646
    %v5661 = vrcp.pop %v5648
    %v5662 = vrcp.pop %v5650
    %v5663 = vrcp.pop %v5652
    %v5664 = vrcp.pop %v5654
    %v5665 = vrcp.pop %v5656
    %v5666 = vrcp.pop %v5658
    %v5667 = vmul.f32 %v5624, %v5659
    %v5668 = vmul.f32 %v5625, %v5660
    %v5669 = vmul.f32 %v5626, %v5661
    %v5670 = vmul.f32 %v5627, %v5662
    %v5671 = vmul.f32 %v5628, %v5663
    %v5672 = vmul.f32 %v5629, %v5664
    %v5673 = vmul.f32 %v5630, %v5665
    %v5674 = vmul.f32 %v5631, %v5666
    %v5675 = vsel %vm5634, %v5667, %v5624
    %v5676 = vsel %vm5634, %v5668, %v5625
    %v5677 = vsel %vm5634, %v5669, %v5626
    %v5678 = vsel %vm5634, %v5670, %v5627
    %v5679 = vsel %vm5634, %v5671, %v5628
    %v5680 = vsel %vm5634, %v5672, %v5629
    %v5681 = vsel %vm5634, %v5673, %v5630
    %v5682 = vsel %vm5634, %v5674, %v5631
    %5683 = vst [vmem:[#allocation37] sm:$0xff] %v5675
    %5684 = vst [vmem:[#allocation37 + $0x8] sm:$0xff] %v5676
    %5685 = vst [vmem:[#allocation37 + $0x10] sm:$0xff] %v5677
    %5686 = vst [vmem:[#allocation37 + $0x18] sm:$0xff] %v5678
    %5687 = vst [vmem:[#allocation37 + $0x20] sm:$0xff] %v5679
    %5688 = vst [vmem:[#allocation37 + $0x28] sm:$0xff] %v5680
    %5689 = vst [vmem:[#allocation37 + $0x30] sm:$0xff] %v5681
    %5690 = vst [vmem:[#allocation37 + $0x38] sm:$0xff] %v5682
    // Predicated region
    $region202: #{tpu_custom_call.1} parent=1 // pred_check
      _
    $region203: #{tpu_custom_call.1} parent=1 // pred_check_branch
      %5692 = sbr.rel (0) target = $region205
    $region204: #{tpu_custom_call.1} parent=1 // pred_region
      %s5694 = ssub.s32 1024, 1024
      %5695 = vsyncadd [#allocation6], %s5694
      %s5696 = sshll.u32 [#allocation37], 4
      %s5697 = int_to_ptr.vmem [resolvable:$true] %s5696
      %5702 = dma.vmem_to_hbm [thread:$0]  %s5697, 1024, %s59, [#allocation6], 128, 128, 8
    $region205: #{tpu_custom_call.1} parent=1 // pred_fallthru
      _
    // Predicated region
    $region206: #{tpu_custom_call.1} parent=1 // pred_check
      _
    $region207: #{tpu_custom_call.1} parent=1 // pred_check_branch
      %5704 = sbr.rel (0) target = $region209
    $region208: #{tpu_custom_call.1} parent=1 // pred_region
      %5705 = dma.done [#allocation6], 1024
    $region209: #{tpu_custom_call.1} parent=1 // pred_fallthru
      _
    %5706 = vsyncpa [#allocation5], 1
    %5707 = vsyncpa [#allocation8], 1
    %5708 = vsyncpa [#allocation11], 1
    %5709 = vsyncpa [#allocation14], 1
    %5710 = vsyncpa [#allocation17], 1
    %5711 = vsyncpa [#allocation20], 1
    %5712 = vsyncpa [#allocation23], 1
    %5713 = vsyncpa [#allocation26], 1
    %5714 = vsyncpa [#allocation29], 1
    %5715 = vsyncpa [#allocation32], 1
    %5716 = vsyncpa [#allocation35], 1
    %5717 = vsyncpa [#allocation6], 1

</llo_original>
